<compile_context>
chip_gen: v5e
topology: v5e:2x2
jax: 0.10.0
libtpu: 0.0.40
codegen_flags: <defaults>
</compile_context>

<pallas_src>
import math
import functools

import jax
import jax.numpy as jnp
from jax import lax
from jax.experimental import pallas as pl
from jax.experimental.pallas import tpu as pltpu


# ----------------------------------------------------------------------------
# Fused kernel: per-batch-item QKV projection + per-head attention + output
# projection accumulation.  grid = (B,); weights are resident VMEM blocks.
# ----------------------------------------------------------------------------
def _mha_kernel(x1_ref, x2_ref,
                wq_ref, bq_ref, wk_ref, bk_ref, wv_ref, bv_ref,
                wo_ref, bo_ref,
                o_ref, *, num_heads, inv_scale):
    S = x1_ref.shape[1]
    D = x1_ref.shape[2]
    d_k = D // num_heads

    x1 = x1_ref[0]                                    # (S, D) f32
    x2 = x2_ref[0]                                    # (S, D) f32

    # Full-width projections (N = 768, lane-dense).  Weights stream as bf16;
    # upcast in-register so accumulation / VPU math stays f32.
    q = jnp.dot(x1, wq_ref[...].astype(jnp.float32),
                preferred_element_type=jnp.float32) + bq_ref[...]
    k = jnp.dot(x2, wk_ref[...].astype(jnp.float32),
                preferred_element_type=jnp.float32) + bk_ref[...]
    v = jnp.dot(x2, wv_ref[...].astype(jnp.float32),
                preferred_element_type=jnp.float32) + bv_ref[...]

    # Unrolled per-head attention; accumulate each head's output-projection
    # contribution into a local f32 (S, D) value.
    acc = jnp.zeros((S, D), jnp.float32)
    for h in range(num_heads):
        lo, hi = h * d_k, (h + 1) * d_k
        qh, kh, vh = q[:, lo:hi], k[:, lo:hi], v[:, lo:hi]

        # Scores: contract the d_k axes directly (no explicit transpose of k).
        s = lax.dot_general(qh, kh,
                            dimension_numbers=(((1,), (1,)), ((), ())),
                            preferred_element_type=jnp.float32) * inv_scale
        s = s - jnp.max(s, axis=-1, keepdims=True)
        p = jnp.exp(s)
        p = p / jnp.sum(p, axis=-1, keepdims=True)

        attn_h = jnp.dot(p, vh, preferred_element_type=jnp.float32)   # (S, d_k)

        wo_h = wo_ref[lo:hi, :].astype(jnp.float32)                   # (d_k, D)
        acc = acc + jnp.dot(attn_h, wo_h, preferred_element_type=jnp.float32)

    o_ref[0] = (acc + bo_ref[...]).astype(o_ref.dtype)


def mha_forward(x1, x2, params, *, num_heads):
    B, S, D = x1.shape
    assert D % num_heads == 0
    inv_scale = 1.0 / math.sqrt(D // num_heads)

    x_spec = pl.BlockSpec((1, S, D), lambda b: (b, 0, 0))
    w_spec = pl.BlockSpec((D, D), lambda b: (0, 0))     # constant index -> resident
    b_spec = pl.BlockSpec((1, D), lambda b: (0, 0))

    return pl.pallas_call(
        functools.partial(_mha_kernel, num_heads=num_heads, inv_scale=inv_scale),
        out_shape=jax.ShapeDtypeStruct((B, S, D), x1.dtype),
        grid_spec=pltpu.PrefetchScalarGridSpec(
            num_scalar_prefetch=0,
            grid=(B,),
            in_specs=[x_spec, x_spec,
                      w_spec, b_spec, w_spec, b_spec, w_spec, b_spec,
                      w_spec, b_spec],
            out_specs=pl.BlockSpec((1, S, D), lambda b: (b, 0, 0)),
        ),
        compiler_params=pltpu.CompilerParams(
            dimension_semantics=("parallel",),
            vmem_limit_bytes=48 * 1024 * 1024),
    )(x1, x2,
      params["wq"], params["bq"], params["wk"], params["bk"],
      params["wv"], params["bv"], params["wo"], params["bo"])


def prepare_params(params, weight_dtype=jnp.bfloat16):
    """One-time (init-time) cast of the streamed matmul weights.

    Halves per-forward weight HBM traffic (the dominant cost at these shapes).
    Biases stay f32 (VPU adds; v5e has no bf16 VPU) and all in-kernel math
    is carried out in f32.
    """
    out = dict(params)
    for name in ("wq", "wk", "wv", "wo"):
        out[name] = params[name].astype(weight_dtype)
    return out


def mha_reference(x1, x2, params, *, num_heads):
    """Pure-JAX reference (uses the same prepared weights, upcast to f32)."""
    B, S, D = x1.shape
    d_k = D // num_heads
    wq = params["wq"].astype(jnp.float32)
    wk = params["wk"].astype(jnp.float32)
    wv = params["wv"].astype(jnp.float32)
    wo = params["wo"].astype(jnp.float32)
    q = x1 @ wq + params["bq"]
    k = x2 @ wk + params["bk"]
    v = x2 @ wv + params["bv"]
    q = q.reshape(B, S, num_heads, d_k).transpose(0, 2, 1, 3)
    k = k.reshape(B, S, num_heads, d_k).transpose(0, 2, 1, 3)
    v = v.reshape(B, S, num_heads, d_k).transpose(0, 2, 1, 3)
    s = jnp.einsum("bhqd,bhkd->bhqk", q, k) / math.sqrt(d_k)
    p = jax.nn.softmax(s, axis=-1)
    a = jnp.einsum("bhqk,bhkd->bhqd", p, v)
    a = a.transpose(0, 2, 1, 3).reshape(B, S, D)
    return a @ wo + params["bo"]


def init_params(key, d_model):
    ks = jax.random.split(key, 8)
    bound = 1.0 / math.sqrt(d_model)

    def u(k, shape):
        return jax.random.uniform(k, shape, jnp.float32, -bound, bound)

    return {
        "wq": u(ks[0], (d_model, d_model)), "bq": u(ks[1], (1, d_model)),
        "wk": u(ks[2], (d_model, d_model)), "bk": u(ks[3], (1, d_model)),
        "wv": u(ks[4], (d_model, d_model)), "bv": u(ks[5], (1, d_model)),
        "wo": u(ks[6], (d_model, d_model)), "bo": u(ks[7], (1, d_model)),
    }


if __name__ == "__main__":
    # Shapes matching the module spec: x1, x2 = (2, 16, 768), 8 heads (d_k=96).
    B, S, d_model, num_heads = 2, 16, 768, 8

    key = jax.random.PRNGKey(0)
    k1, k2, kp = jax.random.split(key, 3)
    x1 = jax.random.normal(k1, (B, S, d_model), jnp.float32)
    x2 = jax.random.normal(k2, (B, S, d_model), jnp.float32)

    # One-time weight preparation (init-time), NOT a per-call relayout.
    params = prepare_params(init_params(kp, d_model))

    y = mha_forward(x1, x2, params, num_heads=num_heads)
    y = jax.block_until_ready(y)

    y_ref = mha_reference(x1, x2, params, num_heads=num_heads)
    assert y.shape == (B, S, d_model)
    assert jnp.allclose(y, y_ref, atol=5e-3, rtol=5e-3), "mismatch vs reference"

    print("KERNEL_OK")
</pallas_src>

<mosaic_0001>
module attributes {stable_mosaic.version = 11 : i64} {
  func.func @_mha_kernel(%arg0: i32, %arg1: memref<1x16x768xf32, #tpu.memory_space<vmem>>, %arg2: memref<1x16x768xf32, #tpu.memory_space<vmem>>, %arg3: memref<768x768xbf16, #tpu.memory_space<vmem>>, %arg4: memref<1x768xf32, #tpu.memory_space<vmem>>, %arg5: memref<768x768xbf16, #tpu.memory_space<vmem>>, %arg6: memref<1x768xf32, #tpu.memory_space<vmem>>, %arg7: memref<768x768xbf16, #tpu.memory_space<vmem>>, %arg8: memref<1x768xf32, #tpu.memory_space<vmem>>, %arg9: memref<768x768xbf16, #tpu.memory_space<vmem>>, %arg10: memref<1x768xf32, #tpu.memory_space<vmem>>, %arg11: memref<1x16x768xf32, #tpu.memory_space<vmem>>) attributes {dimension_semantics = [#tpu.dimension_semantics<parallel>], iteration_bounds = array<i64: 2>, scalar_prefetch = 0 : i64, scratch_operands = 0 : i64, tpu.core_type = #tpu.core_type<tc>, window_params = [{transform_indices = @transform_0, window_bounds = array<i64: 1, 16, 768>}, {transform_indices = @transform_1, window_bounds = array<i64: 1, 16, 768>}, {pipeline_mode = #tpu.pipeline_mode<synchronous>, transform_indices = @transform_2, window_bounds = array<i64: 768, 768>}, {pipeline_mode = #tpu.pipeline_mode<synchronous>, transform_indices = @transform_3, window_bounds = array<i64: 1, 768>}, {pipeline_mode = #tpu.pipeline_mode<synchronous>, transform_indices = @transform_4, window_bounds = array<i64: 768, 768>}, {pipeline_mode = #tpu.pipeline_mode<synchronous>, transform_indices = @transform_5, window_bounds = array<i64: 1, 768>}, {pipeline_mode = #tpu.pipeline_mode<synchronous>, transform_indices = @transform_6, window_bounds = array<i64: 768, 768>}, {pipeline_mode = #tpu.pipeline_mode<synchronous>, transform_indices = @transform_7, window_bounds = array<i64: 1, 768>}, {pipeline_mode = #tpu.pipeline_mode<synchronous>, transform_indices = @transform_8, window_bounds = array<i64: 768, 768>}, {pipeline_mode = #tpu.pipeline_mode<synchronous>, transform_indices = @transform_9, window_bounds = array<i64: 1, 768>}, {transform_indices = @transform_10, window_bounds = array<i64: 1, 16, 768>}]} {
    %c0 = arith.constant 0 : index
    %c0_0 = arith.constant 0 : index
    %c0_1 = arith.constant 0 : index
    %0 = vector.load %arg1[%c0, %c0_0, %c0_1] : memref<1x16x768xf32, #tpu.memory_space<vmem>>, vector<1x16x768xf32>
    %1 = vector.shape_cast %0 : vector<1x16x768xf32> to vector<16x768xf32>
    %c0_2 = arith.constant 0 : index
    %c0_3 = arith.constant 0 : index
    %c0_4 = arith.constant 0 : index
    %2 = vector.load %arg2[%c0_2, %c0_3, %c0_4] : memref<1x16x768xf32, #tpu.memory_space<vmem>>, vector<1x16x768xf32>
    %3 = vector.shape_cast %2 : vector<1x16x768xf32> to vector<16x768xf32>
    %c0_5 = arith.constant 0 : index
    %c0_6 = arith.constant 0 : index
    %4 = vector.load %arg3[%c0_5, %c0_6] : memref<768x768xbf16, #tpu.memory_space<vmem>>, vector<768x768xbf16>
    %5 = arith.extf %4 : vector<768x768xbf16> to vector<768x768xf32>
    %cst = arith.constant dense<0.000000e+00> : vector<16x768xf32>
    %6 = tpu.matmul %1, %5, %cst {dimension_numbers = #tpu.dot_dimension_numbers<[1], [0], [0], [1], [0, 0, 1, 1], [], []>} : vector<16x768xf32>, vector<768x768xf32>, vector<16x768xf32> -> vector<16x768xf32>
    %c0_7 = arith.constant 0 : index
    %c0_8 = arith.constant 0 : index
    %7 = vector.load %arg4[%c0_7, %c0_8] : memref<1x768xf32, #tpu.memory_space<vmem>>, vector<1x768xf32>
    %8 = vector.broadcast %7 : vector<1x768xf32> to vector<16x768xf32>
    %9 = arith.addf %6, %8 : vector<16x768xf32>
    %c0_9 = arith.constant 0 : index
    %c0_10 = arith.constant 0 : index
    %10 = vector.load %arg5[%c0_9, %c0_10] : memref<768x768xbf16, #tpu.memory_space<vmem>>, vector<768x768xbf16>
    %11 = arith.extf %10 : vector<768x768xbf16> to vector<768x768xf32>
    %cst_11 = arith.constant dense<0.000000e+00> : vector<16x768xf32>
    %12 = tpu.matmul %3, %11, %cst_11 {dimension_numbers = #tpu.dot_dimension_numbers<[1], [0], [0], [1], [0, 0, 1, 1], [], []>} : vector<16x768xf32>, vector<768x768xf32>, vector<16x768xf32> -> vector<16x768xf32>
    %c0_12 = arith.constant 0 : index
    %c0_13 = arith.constant 0 : index
    %13 = vector.load %arg6[%c0_12, %c0_13] : memref<1x768xf32, #tpu.memory_space<vmem>>, vector<1x768xf32>
    %14 = vector.broadcast %13 : vector<1x768xf32> to vector<16x768xf32>
    %15 = arith.addf %12, %14 : vector<16x768xf32>
    %c0_14 = arith.constant 0 : index
    %c0_15 = arith.constant 0 : index
    %16 = vector.load %arg7[%c0_14, %c0_15] : memref<768x768xbf16, #tpu.memory_space<vmem>>, vector<768x768xbf16>
    %17 = arith.extf %16 : vector<768x768xbf16> to vector<768x768xf32>
    %cst_16 = arith.constant dense<0.000000e+00> : vector<16x768xf32>
    %18 = tpu.matmul %3, %17, %cst_16 {dimension_numbers = #tpu.dot_dimension_numbers<[1], [0], [0], [1], [0, 0, 1, 1], [], []>} : vector<16x768xf32>, vector<768x768xf32>, vector<16x768xf32> -> vector<16x768xf32>
    %c0_17 = arith.constant 0 : index
    %c0_18 = arith.constant 0 : index
    %19 = vector.load %arg8[%c0_17, %c0_18] : memref<1x768xf32, #tpu.memory_space<vmem>>, vector<1x768xf32>
    %20 = vector.broadcast %19 : vector<1x768xf32> to vector<16x768xf32>
    %21 = arith.addf %18, %20 : vector<16x768xf32>
    %cst_19 = arith.constant 0.000000e+00 : f32
    %22 = vector.broadcast %cst_19 : f32 to vector<16x768xf32>
    %23 = vector.extract_strided_slice %9 {offsets = [0, 0], sizes = [16, 96], strides = [1, 1]} : vector<16x768xf32> to vector<16x96xf32>
    %24 = vector.extract_strided_slice %15 {offsets = [0, 0], sizes = [16, 96], strides = [1, 1]} : vector<16x768xf32> to vector<16x96xf32>
    %25 = vector.extract_strided_slice %21 {offsets = [0, 0], sizes = [16, 96], strides = [1, 1]} : vector<16x768xf32> to vector<16x96xf32>
    %cst_20 = arith.constant dense<0.000000e+00> : vector<16x16xf32>
    %26 = tpu.matmul %23, %24, %cst_20 {dimension_numbers = #tpu.dot_dimension_numbers<[1], [1], [0], [0], [0, 0, 1, 0], [], []>} : vector<16x96xf32>, vector<16x96xf32>, vector<16x16xf32> -> vector<16x16xf32>
    %cst_21 = arith.constant 0.102062076 : f32
    %27 = vector.broadcast %cst_21 : f32 to vector<16x16xf32>
    %28 = arith.mulf %26, %27 : vector<16x16xf32>
    %cst_22 = arith.constant dense<0xFF800000> : vector<16xf32>
    %29 = vector.multi_reduction <maximumf>, %28, %cst_22 [1] : vector<16x16xf32> to vector<16xf32>
    %30 = vector.shape_cast %29 : vector<16xf32> to vector<16x1xf32>
    %31 = vector.broadcast %30 : vector<16x1xf32> to vector<16x16xf32>
    %32 = arith.subf %28, %31 : vector<16x16xf32>
    %33 = math.exp %32 : vector<16x16xf32>
    %cst_23 = arith.constant dense<0.000000e+00> : vector<16xf32>
    %34 = vector.multi_reduction <add>, %33, %cst_23 [1] : vector<16x16xf32> to vector<16xf32>
    %35 = vector.shape_cast %34 : vector<16xf32> to vector<16x1xf32>
    %36 = vector.broadcast %35 : vector<16x1xf32> to vector<16x16xf32>
    %37 = arith.divf %33, %36 : vector<16x16xf32>
    %cst_24 = arith.constant dense<0.000000e+00> : vector<16x96xf32>
    %38 = tpu.matmul %37, %25, %cst_24 {dimension_numbers = #tpu.dot_dimension_numbers<[1], [0], [0], [1], [0, 0, 1, 1], [], []>} : vector<16x16xf32>, vector<16x96xf32>, vector<16x96xf32> -> vector<16x96xf32>
    %c0_25 = arith.constant 0 : index
    %c0_26 = arith.constant 0 : index
    %39 = vector.load %arg9[%c0_25, %c0_26] : memref<768x768xbf16, #tpu.memory_space<vmem>>, vector<96x768xbf16>
    %40 = arith.extf %39 : vector<96x768xbf16> to vector<96x768xf32>
    %cst_27 = arith.constant dense<0.000000e+00> : vector<16x768xf32>
    %41 = tpu.matmul %38, %40, %cst_27 {dimension_numbers = #tpu.dot_dimension_numbers<[1], [0], [0], [1], [0, 0, 1, 1], [], []>} : vector<16x96xf32>, vector<96x768xf32>, vector<16x768xf32> -> vector<16x768xf32>
    %42 = arith.addf %22, %41 : vector<16x768xf32>
    %43 = vector.extract_strided_slice %9 {offsets = [0, 96], sizes = [16, 96], strides = [1, 1]} : vector<16x768xf32> to vector<16x96xf32>
    %44 = vector.extract_strided_slice %15 {offsets = [0, 96], sizes = [16, 96], strides = [1, 1]} : vector<16x768xf32> to vector<16x96xf32>
    %45 = vector.extract_strided_slice %21 {offsets = [0, 96], sizes = [16, 96], strides = [1, 1]} : vector<16x768xf32> to vector<16x96xf32>
    %cst_28 = arith.constant dense<0.000000e+00> : vector<16x16xf32>
    %46 = tpu.matmul %43, %44, %cst_28 {dimension_numbers = #tpu.dot_dimension_numbers<[1], [1], [0], [0], [0, 0, 1, 0], [], []>} : vector<16x96xf32>, vector<16x96xf32>, vector<16x16xf32> -> vector<16x16xf32>
    %cst_29 = arith.constant 0.102062076 : f32
    %47 = vector.broadcast %cst_29 : f32 to vector<16x16xf32>
    %48 = arith.mulf %46, %47 : vector<16x16xf32>
    %cst_30 = arith.constant dense<0xFF800000> : vector<16xf32>
    %49 = vector.multi_reduction <maximumf>, %48, %cst_30 [1] : vector<16x16xf32> to vector<16xf32>
    %50 = vector.shape_cast %49 : vector<16xf32> to vector<16x1xf32>
    %51 = vector.broadcast %50 : vector<16x1xf32> to vector<16x16xf32>
    %52 = arith.subf %48, %51 : vector<16x16xf32>
    %53 = math.exp %52 : vector<16x16xf32>
    %cst_31 = arith.constant dense<0.000000e+00> : vector<16xf32>
    %54 = vector.multi_reduction <add>, %53, %cst_31 [1] : vector<16x16xf32> to vector<16xf32>
    %55 = vector.shape_cast %54 : vector<16xf32> to vector<16x1xf32>
    %56 = vector.broadcast %55 : vector<16x1xf32> to vector<16x16xf32>
    %57 = arith.divf %53, %56 : vector<16x16xf32>
    %cst_32 = arith.constant dense<0.000000e+00> : vector<16x96xf32>
    %58 = tpu.matmul %57, %45, %cst_32 {dimension_numbers = #tpu.dot_dimension_numbers<[1], [0], [0], [1], [0, 0, 1, 1], [], []>} : vector<16x16xf32>, vector<16x96xf32>, vector<16x96xf32> -> vector<16x96xf32>
    %c96 = arith.constant 96 : index
    %c0_33 = arith.constant 0 : index
    %59 = vector.load %arg9[%c96, %c0_33] : memref<768x768xbf16, #tpu.memory_space<vmem>>, vector<96x768xbf16>
    %60 = arith.extf %59 : vector<96x768xbf16> to vector<96x768xf32>
    %cst_34 = arith.constant dense<0.000000e+00> : vector<16x768xf32>
    %61 = tpu.matmul %58, %60, %cst_34 {dimension_numbers = #tpu.dot_dimension_numbers<[1], [0], [0], [1], [0, 0, 1, 1], [], []>} : vector<16x96xf32>, vector<96x768xf32>, vector<16x768xf32> -> vector<16x768xf32>
    %62 = arith.addf %42, %61 : vector<16x768xf32>
    %63 = vector.extract_strided_slice %9 {offsets = [0, 192], sizes = [16, 96], strides = [1, 1]} : vector<16x768xf32> to vector<16x96xf32>
    %64 = vector.extract_strided_slice %15 {offsets = [0, 192], sizes = [16, 96], strides = [1, 1]} : vector<16x768xf32> to vector<16x96xf32>
    %65 = vector.extract_strided_slice %21 {offsets = [0, 192], sizes = [16, 96], strides = [1, 1]} : vector<16x768xf32> to vector<16x96xf32>
    %cst_35 = arith.constant dense<0.000000e+00> : vector<16x16xf32>
    %66 = tpu.matmul %63, %64, %cst_35 {dimension_numbers = #tpu.dot_dimension_numbers<[1], [1], [0], [0], [0, 0, 1, 0], [], []>} : vector<16x96xf32>, vector<16x96xf32>, vector<16x16xf32> -> vector<16x16xf32>
    %cst_36 = arith.constant 0.102062076 : f32
    %67 = vector.broadcast %cst_36 : f32 to vector<16x16xf32>
    %68 = arith.mulf %66, %67 : vector<16x16xf32>
    %cst_37 = arith.constant dense<0xFF800000> : vector<16xf32>
    %69 = vector.multi_reduction <maximumf>, %68, %cst_37 [1] : vector<16x16xf32> to vector<16xf32>
    %70 = vector.shape_cast %69 : vector<16xf32> to vector<16x1xf32>
    %71 = vector.broadcast %70 : vector<16x1xf32> to vector<16x16xf32>
    %72 = arith.subf %68, %71 : vector<16x16xf32>
    %73 = math.exp %72 : vector<16x16xf32>
    %cst_38 = arith.constant dense<0.000000e+00> : vector<16xf32>
    %74 = vector.multi_reduction <add>, %73, %cst_38 [1] : vector<16x16xf32> to vector<16xf32>
    %75 = vector.shape_cast %74 : vector<16xf32> to vector<16x1xf32>
    %76 = vector.broadcast %75 : vector<16x1xf32> to vector<16x16xf32>
    %77 = arith.divf %73, %76 : vector<16x16xf32>
    %cst_39 = arith.constant dense<0.000000e+00> : vector<16x96xf32>
    %78 = tpu.matmul %77, %65, %cst_39 {dimension_numbers = #tpu.dot_dimension_numbers<[1], [0], [0], [1], [0, 0, 1, 1], [], []>} : vector<16x16xf32>, vector<16x96xf32>, vector<16x96xf32> -> vector<16x96xf32>
    %c192 = arith.constant 192 : index
    %c0_40 = arith.constant 0 : index
    %79 = vector.load %arg9[%c192, %c0_40] : memref<768x768xbf16, #tpu.memory_space<vmem>>, vector<96x768xbf16>
    %80 = arith.extf %79 : vector<96x768xbf16> to vector<96x768xf32>
    %cst_41 = arith.constant dense<0.000000e+00> : vector<16x768xf32>
    %81 = tpu.matmul %78, %80, %cst_41 {dimension_numbers = #tpu.dot_dimension_numbers<[1], [0], [0], [1], [0, 0, 1, 1], [], []>} : vector<16x96xf32>, vector<96x768xf32>, vector<16x768xf32> -> vector<16x768xf32>
    %82 = arith.addf %62, %81 : vector<16x768xf32>
    %83 = vector.extract_strided_slice %9 {offsets = [0, 288], sizes = [16, 96], strides = [1, 1]} : vector<16x768xf32> to vector<16x96xf32>
    %84 = vector.extract_strided_slice %15 {offsets = [0, 288], sizes = [16, 96], strides = [1, 1]} : vector<16x768xf32> to vector<16x96xf32>
    %85 = vector.extract_strided_slice %21 {offsets = [0, 288], sizes = [16, 96], strides = [1, 1]} : vector<16x768xf32> to vector<16x96xf32>
    %cst_42 = arith.constant dense<0.000000e+00> : vector<16x16xf32>
    %86 = tpu.matmul %83, %84, %cst_42 {dimension_numbers = #tpu.dot_dimension_numbers<[1], [1], [0], [0], [0, 0, 1, 0], [], []>} : vector<16x96xf32>, vector<16x96xf32>, vector<16x16xf32> -> vector<16x16xf32>
    %cst_43 = arith.constant 0.102062076 : f32
    %87 = vector.broadcast %cst_43 : f32 to vector<16x16xf32>
    %88 = arith.mulf %86, %87 : vector<16x16xf32>
    %cst_44 = arith.constant dense<0xFF800000> : vector<16xf32>
    %89 = vector.multi_reduction <maximumf>, %88, %cst_44 [1] : vector<16x16xf32> to vector<16xf32>
    %90 = vector.shape_cast %89 : vector<16xf32> to vector<16x1xf32>
    %91 = vector.broadcast %90 : vector<16x1xf32> to vector<16x16xf32>
    %92 = arith.subf %88, %91 : vector<16x16xf32>
    %93 = math.exp %92 : vector<16x16xf32>
    %cst_45 = arith.constant dense<0.000000e+00> : vector<16xf32>
    %94 = vector.multi_reduction <add>, %93, %cst_45 [1] : vector<16x16xf32> to vector<16xf32>
    %95 = vector.shape_cast %94 : vector<16xf32> to vector<16x1xf32>
    %96 = vector.broadcast %95 : vector<16x1xf32> to vector<16x16xf32>
    %97 = arith.divf %93, %96 : vector<16x16xf32>
    %cst_46 = arith.constant dense<0.000000e+00> : vector<16x96xf32>
    %98 = tpu.matmul %97, %85, %cst_46 {dimension_numbers = #tpu.dot_dimension_numbers<[1], [0], [0], [1], [0, 0, 1, 1], [], []>} : vector<16x16xf32>, vector<16x96xf32>, vector<16x96xf32> -> vector<16x96xf32>
    %c288 = arith.constant 288 : index
    %c0_47 = arith.constant 0 : index
    %99 = vector.load %arg9[%c288, %c0_47] : memref<768x768xbf16, #tpu.memory_space<vmem>>, vector<96x768xbf16>
    %100 = arith.extf %99 : vector<96x768xbf16> to vector<96x768xf32>
    %cst_48 = arith.constant dense<0.000000e+00> : vector<16x768xf32>
    %101 = tpu.matmul %98, %100, %cst_48 {dimension_numbers = #tpu.dot_dimension_numbers<[1], [0], [0], [1], [0, 0, 1, 1], [], []>} : vector<16x96xf32>, vector<96x768xf32>, vector<16x768xf32> -> vector<16x768xf32>
    %102 = arith.addf %82, %101 : vector<16x768xf32>
    %103 = vector.extract_strided_slice %9 {offsets = [0, 384], sizes = [16, 96], strides = [1, 1]} : vector<16x768xf32> to vector<16x96xf32>
    %104 = vector.extract_strided_slice %15 {offsets = [0, 384], sizes = [16, 96], strides = [1, 1]} : vector<16x768xf32> to vector<16x96xf32>
    %105 = vector.extract_strided_slice %21 {offsets = [0, 384], sizes = [16, 96], strides = [1, 1]} : vector<16x768xf32> to vector<16x96xf32>
    %cst_49 = arith.constant dense<0.000000e+00> : vector<16x16xf32>
    %106 = tpu.matmul %103, %104, %cst_49 {dimension_numbers = #tpu.dot_dimension_numbers<[1], [1], [0], [0], [0, 0, 1, 0], [], []>} : vector<16x96xf32>, vector<16x96xf32>, vector<16x16xf32> -> vector<16x16xf32>
    %cst_50 = arith.constant 0.102062076 : f32
    %107 = vector.broadcast %cst_50 : f32 to vector<16x16xf32>
    %108 = arith.mulf %106, %107 : vector<16x16xf32>
    %cst_51 = arith.constant dense<0xFF800000> : vector<16xf32>
    %109 = vector.multi_reduction <maximumf>, %108, %cst_51 [1] : vector<16x16xf32> to vector<16xf32>
    %110 = vector.shape_cast %109 : vector<16xf32> to vector<16x1xf32>
    %111 = vector.broadcast %110 : vector<16x1xf32> to vector<16x16xf32>
    %112 = arith.subf %108, %111 : vector<16x16xf32>
    %113 = math.exp %112 : vector<16x16xf32>
    %cst_52 = arith.constant dense<0.000000e+00> : vector<16xf32>
    %114 = vector.multi_reduction <add>, %113, %cst_52 [1] : vector<16x16xf32> to vector<16xf32>
    %115 = vector.shape_cast %114 : vector<16xf32> to vector<16x1xf32>
    %116 = vector.broadcast %115 : vector<16x1xf32> to vector<16x16xf32>
    %117 = arith.divf %113, %116 : vector<16x16xf32>
    %cst_53 = arith.constant dense<0.000000e+00> : vector<16x96xf32>
    %118 = tpu.matmul %117, %105, %cst_53 {dimension_numbers = #tpu.dot_dimension_numbers<[1], [0], [0], [1], [0, 0, 1, 1], [], []>} : vector<16x16xf32>, vector<16x96xf32>, vector<16x96xf32> -> vector<16x96xf32>
    %c384 = arith.constant 384 : index
    %c0_54 = arith.constant 0 : index
    %119 = vector.load %arg9[%c384, %c0_54] : memref<768x768xbf16, #tpu.memory_space<vmem>>, vector<96x768xbf16>
    %120 = arith.extf %119 : vector<96x768xbf16> to vector<96x768xf32>
    %cst_55 = arith.constant dense<0.000000e+00> : vector<16x768xf32>
    %121 = tpu.matmul %118, %120, %cst_55 {dimension_numbers = #tpu.dot_dimension_numbers<[1], [0], [0], [1], [0, 0, 1, 1], [], []>} : vector<16x96xf32>, vector<96x768xf32>, vector<16x768xf32> -> vector<16x768xf32>
    %122 = arith.addf %102, %121 : vector<16x768xf32>
    %123 = vector.extract_strided_slice %9 {offsets = [0, 480], sizes = [16, 96], strides = [1, 1]} : vector<16x768xf32> to vector<16x96xf32>
    %124 = vector.extract_strided_slice %15 {offsets = [0, 480], sizes = [16, 96], strides = [1, 1]} : vector<16x768xf32> to vector<16x96xf32>
    %125 = vector.extract_strided_slice %21 {offsets = [0, 480], sizes = [16, 96], strides = [1, 1]} : vector<16x768xf32> to vector<16x96xf32>
    %cst_56 = arith.constant dense<0.000000e+00> : vector<16x16xf32>
    %126 = tpu.matmul %123, %124, %cst_56 {dimension_numbers = #tpu.dot_dimension_numbers<[1], [1], [0], [0], [0, 0, 1, 0], [], []>} : vector<16x96xf32>, vector<16x96xf32>, vector<16x16xf32> -> vector<16x16xf32>
    %cst_57 = arith.constant 0.102062076 : f32
    %127 = vector.broadcast %cst_57 : f32 to vector<16x16xf32>
    %128 = arith.mulf %126, %127 : vector<16x16xf32>
    %cst_58 = arith.constant dense<0xFF800000> : vector<16xf32>
    %129 = vector.multi_reduction <maximumf>, %128, %cst_58 [1] : vector<16x16xf32> to vector<16xf32>
    %130 = vector.shape_cast %129 : vector<16xf32> to vector<16x1xf32>
    %131 = vector.broadcast %130 : vector<16x1xf32> to vector<16x16xf32>
    %132 = arith.subf %128, %131 : vector<16x16xf32>
    %133 = math.exp %132 : vector<16x16xf32>
    %cst_59 = arith.constant dense<0.000000e+00> : vector<16xf32>
    %134 = vector.multi_reduction <add>, %133, %cst_59 [1] : vector<16x16xf32> to vector<16xf32>
    %135 = vector.shape_cast %134 : vector<16xf32> to vector<16x1xf32>
    %136 = vector.broadcast %135 : vector<16x1xf32> to vector<16x16xf32>
    %137 = arith.divf %133, %136 : vector<16x16xf32>
    %cst_60 = arith.constant dense<0.000000e+00> : vector<16x96xf32>
    %138 = tpu.matmul %137, %125, %cst_60 {dimension_numbers = #tpu.dot_dimension_numbers<[1], [0], [0], [1], [0, 0, 1, 1], [], []>} : vector<16x16xf32>, vector<16x96xf32>, vector<16x96xf32> -> vector<16x96xf32>
    %c480 = arith.constant 480 : index
    %c0_61 = arith.constant 0 : index
    %139 = vector.load %arg9[%c480, %c0_61] : memref<768x768xbf16, #tpu.memory_space<vmem>>, vector<96x768xbf16>
    %140 = arith.extf %139 : vector<96x768xbf16> to vector<96x768xf32>
    %cst_62 = arith.constant dense<0.000000e+00> : vector<16x768xf32>
    %141 = tpu.matmul %138, %140, %cst_62 {dimension_numbers = #tpu.dot_dimension_numbers<[1], [0], [0], [1], [0, 0, 1, 1], [], []>} : vector<16x96xf32>, vector<96x768xf32>, vector<16x768xf32> -> vector<16x768xf32>
    %142 = arith.addf %122, %141 : vector<16x768xf32>
    %143 = vector.extract_strided_slice %9 {offsets = [0, 576], sizes = [16, 96], strides = [1, 1]} : vector<16x768xf32> to vector<16x96xf32>
    %144 = vector.extract_strided_slice %15 {offsets = [0, 576], sizes = [16, 96], strides = [1, 1]} : vector<16x768xf32> to vector<16x96xf32>
    %145 = vector.extract_strided_slice %21 {offsets = [0, 576], sizes = [16, 96], strides = [1, 1]} : vector<16x768xf32> to vector<16x96xf32>
    %cst_63 = arith.constant dense<0.000000e+00> : vector<16x16xf32>
    %146 = tpu.matmul %143, %144, %cst_63 {dimension_numbers = #tpu.dot_dimension_numbers<[1], [1], [0], [0], [0, 0, 1, 0], [], []>} : vector<16x96xf32>, vector<16x96xf32>, vector<16x16xf32> -> vector<16x16xf32>
    %cst_64 = arith.constant 0.102062076 : f32
    %147 = vector.broadcast %cst_64 : f32 to vector<16x16xf32>
    %148 = arith.mulf %146, %147 : vector<16x16xf32>
    %cst_65 = arith.constant dense<0xFF800000> : vector<16xf32>
    %149 = vector.multi_reduction <maximumf>, %148, %cst_65 [1] : vector<16x16xf32> to vector<16xf32>
    %150 = vector.shape_cast %149 : vector<16xf32> to vector<16x1xf32>
    %151 = vector.broadcast %150 : vector<16x1xf32> to vector<16x16xf32>
    %152 = arith.subf %148, %151 : vector<16x16xf32>
    %153 = math.exp %152 : vector<16x16xf32>
    %cst_66 = arith.constant dense<0.000000e+00> : vector<16xf32>
    %154 = vector.multi_reduction <add>, %153, %cst_66 [1] : vector<16x16xf32> to vector<16xf32>
    %155 = vector.shape_cast %154 : vector<16xf32> to vector<16x1xf32>
    %156 = vector.broadcast %155 : vector<16x1xf32> to vector<16x16xf32>
    %157 = arith.divf %153, %156 : vector<16x16xf32>
    %cst_67 = arith.constant dense<0.000000e+00> : vector<16x96xf32>
    %158 = tpu.matmul %157, %145, %cst_67 {dimension_numbers = #tpu.dot_dimension_numbers<[1], [0], [0], [1], [0, 0, 1, 1], [], []>} : vector<16x16xf32>, vector<16x96xf32>, vector<16x96xf32> -> vector<16x96xf32>
    %c576 = arith.constant 576 : index
    %c0_68 = arith.constant 0 : index
    %159 = vector.load %arg9[%c576, %c0_68] : memref<768x768xbf16, #tpu.memory_space<vmem>>, vector<96x768xbf16>
    %160 = arith.extf %159 : vector<96x768xbf16> to vector<96x768xf32>
    %cst_69 = arith.constant dense<0.000000e+00> : vector<16x768xf32>
    %161 = tpu.matmul %158, %160, %cst_69 {dimension_numbers = #tpu.dot_dimension_numbers<[1], [0], [0], [1], [0, 0, 1, 1], [], []>} : vector<16x96xf32>, vector<96x768xf32>, vector<16x768xf32> -> vector<16x768xf32>
    %162 = arith.addf %142, %161 : vector<16x768xf32>
    %163 = vector.extract_strided_slice %9 {offsets = [0, 672], sizes = [16, 96], strides = [1, 1]} : vector<16x768xf32> to vector<16x96xf32>
    %164 = vector.extract_strided_slice %15 {offsets = [0, 672], sizes = [16, 96], strides = [1, 1]} : vector<16x768xf32> to vector<16x96xf32>
    %165 = vector.extract_strided_slice %21 {offsets = [0, 672], sizes = [16, 96], strides = [1, 1]} : vector<16x768xf32> to vector<16x96xf32>
    %cst_70 = arith.constant dense<0.000000e+00> : vector<16x16xf32>
    %166 = tpu.matmul %163, %164, %cst_70 {dimension_numbers = #tpu.dot_dimension_numbers<[1], [1], [0], [0], [0, 0, 1, 0], [], []>} : vector<16x96xf32>, vector<16x96xf32>, vector<16x16xf32> -> vector<16x16xf32>
    %cst_71 = arith.constant 0.102062076 : f32
    %167 = vector.broadcast %cst_71 : f32 to vector<16x16xf32>
    %168 = arith.mulf %166, %167 : vector<16x16xf32>
    %cst_72 = arith.constant dense<0xFF800000> : vector<16xf32>
    %169 = vector.multi_reduction <maximumf>, %168, %cst_72 [1] : vector<16x16xf32> to vector<16xf32>
    %170 = vector.shape_cast %169 : vector<16xf32> to vector<16x1xf32>
    %171 = vector.broadcast %170 : vector<16x1xf32> to vector<16x16xf32>
    %172 = arith.subf %168, %171 : vector<16x16xf32>
    %173 = math.exp %172 : vector<16x16xf32>
    %cst_73 = arith.constant dense<0.000000e+00> : vector<16xf32>
    %174 = vector.multi_reduction <add>, %173, %cst_73 [1] : vector<16x16xf32> to vector<16xf32>
    %175 = vector.shape_cast %174 : vector<16xf32> to vector<16x1xf32>
    %176 = vector.broadcast %175 : vector<16x1xf32> to vector<16x16xf32>
    %177 = arith.divf %173, %176 : vector<16x16xf32>
    %cst_74 = arith.constant dense<0.000000e+00> : vector<16x96xf32>
    %178 = tpu.matmul %177, %165, %cst_74 {dimension_numbers = #tpu.dot_dimension_numbers<[1], [0], [0], [1], [0, 0, 1, 1], [], []>} : vector<16x16xf32>, vector<16x96xf32>, vector<16x96xf32> -> vector<16x96xf32>
    %c672 = arith.constant 672 : index
    %c0_75 = arith.constant 0 : index
    %179 = vector.load %arg9[%c672, %c0_75] : memref<768x768xbf16, #tpu.memory_space<vmem>>, vector<96x768xbf16>
    %180 = arith.extf %179 : vector<96x768xbf16> to vector<96x768xf32>
    %cst_76 = arith.constant dense<0.000000e+00> : vector<16x768xf32>
    %181 = tpu.matmul %178, %180, %cst_76 {dimension_numbers = #tpu.dot_dimension_numbers<[1], [0], [0], [1], [0, 0, 1, 1], [], []>} : vector<16x96xf32>, vector<96x768xf32>, vector<16x768xf32> -> vector<16x768xf32>
    %182 = arith.addf %162, %181 : vector<16x768xf32>
    %c0_77 = arith.constant 0 : index
    %c0_78 = arith.constant 0 : index
    %183 = vector.load %arg10[%c0_77, %c0_78] : memref<1x768xf32, #tpu.memory_space<vmem>>, vector<1x768xf32>
    %184 = vector.broadcast %183 : vector<1x768xf32> to vector<16x768xf32>
    %185 = arith.addf %182, %184 : vector<16x768xf32>
    %c0_79 = arith.constant 0 : index
    %c0_80 = arith.constant 0 : index
    %c0_81 = arith.constant 0 : index
    %186 = vector.load %arg11[%c0_79, %c0_80, %c0_81] : memref<1x16x768xf32, #tpu.memory_space<vmem>>, vector<1x16x768xf32>
    %187 = vector.shape_cast %186 : vector<1x16x768xf32> to vector<16x768xf32>
    %188 = vector.shape_cast %185 : vector<16x768xf32> to vector<1x16x768xf32>
    tpu.vector_store %arg11[%c0_79, %c0_80, %c0_81], %188 {strides = array<i32>} : memref<1x16x768xf32, #tpu.memory_space<vmem>>, vector<1x16x768xf32>,
    return
  }
  func.func @transform_0(%arg0: i32) -> (i32, i32, i32) {
    %c0_i32 = arith.constant 0 : i32
    %c0_i32_0 = arith.constant 0 : i32
    %c0_i32_1 = arith.constant 0 : i32
    return %arg0, %c0_i32, %c0_i32_0 : i32, i32, i32
  }
  func.func @transform_1(%arg0: i32) -> (i32, i32, i32) {
    %c0_i32 = arith.constant 0 : i32
    %c0_i32_0 = arith.constant 0 : i32
    %c0_i32_1 = arith.constant 0 : i32
    return %arg0, %c0_i32, %c0_i32_0 : i32, i32, i32
  }
  func.func @transform_2(%arg0: i32) -> (i32, i32) {
    %c0_i32 = arith.constant 0 : i32
    %c0_i32_0 = arith.constant 0 : i32
    %c0_i32_1 = arith.constant 0 : i32
    return %c0_i32, %c0_i32_0 : i32, i32
  }
  func.func @transform_3(%arg0: i32) -> (i32, i32) {
    %c0_i32 = arith.constant 0 : i32
    %c0_i32_0 = arith.constant 0 : i32
    %c0_i32_1 = arith.constant 0 : i32
    return %c0_i32, %c0_i32_0 : i32, i32
  }
  func.func @transform_4(%arg0: i32) -> (i32, i32) {
    %c0_i32 = arith.constant 0 : i32
    %c0_i32_0 = arith.constant 0 : i32
    %c0_i32_1 = arith.constant 0 : i32
    return %c0_i32, %c0_i32_0 : i32, i32
  }
  func.func @transform_5(%arg0: i32) -> (i32, i32) {
    %c0_i32 = arith.constant 0 : i32
    %c0_i32_0 = arith.constant 0 : i32
    %c0_i32_1 = arith.constant 0 : i32
    return %c0_i32, %c0_i32_0 : i32, i32
  }
  func.func @transform_6(%arg0: i32) -> (i32, i32) {
    %c0_i32 = arith.constant 0 : i32
    %c0_i32_0 = arith.constant 0 : i32
    %c0_i32_1 = arith.constant 0 : i32
    return %c0_i32, %c0_i32_0 : i32, i32
  }
  func.func @transform_7(%arg0: i32) -> (i32, i32) {
    %c0_i32 = arith.constant 0 : i32
    %c0_i32_0 = arith.constant 0 : i32
    %c0_i32_1 = arith.constant 0 : i32
    return %c0_i32, %c0_i32_0 : i32, i32
  }
  func.func @transform_8(%arg0: i32) -> (i32, i32) {
    %c0_i32 = arith.constant 0 : i32
    %c0_i32_0 = arith.constant 0 : i32
    %c0_i32_1 = arith.constant 0 : i32
    return %c0_i32, %c0_i32_0 : i32, i32
  }
  func.func @transform_9(%arg0: i32) -> (i32, i32) {
    %c0_i32 = arith.constant 0 : i32
    %c0_i32_0 = arith.constant 0 : i32
    %c0_i32_1 = arith.constant 0 : i32
    return %c0_i32, %c0_i32_0 : i32, i32
  }
  func.func @transform_10(%arg0: i32) -> (i32, i32, i32) {
    %c0_i32 = arith.constant 0 : i32
    %c0_i32_0 = arith.constant 0 : i32
    %c0_i32_1 = arith.constant 0 : i32
    return %arg0, %c0_i32, %c0_i32_0 : i32, i32, i32
  }
}

</mosaic_0001>

<llo_original>
// kernel: tpu_custom_call.1
$region0: #{tpu_custom_call.1}
  #allocation0 [shape = 'u32[]', space=smem, size = 0x4, offset = 0x4, fixed_abs, tag = 'smem constant byte address 0x4 - core index']
  #allocation1 [shape = 'u32[72,128]{1,0:T(1,128)}', space=vmem, size = 0x9000, scoped, tag = 'internal scratch']
  %s0 = inlined_call_operand.hbm [shape: f32[2,16,768], index: 0, kind: input, shape index: {}]
  %s1 = inlined_call_operand.hbm [shape: f32[2,16,768], index: 1, kind: input, shape index: {}]
  %s2 = inlined_call_operand.hbm [shape: bf16[768,768], index: 2, kind: input, shape index: {}]
  %s3 = inlined_call_operand.hbm [shape: f32[1,768], index: 3, kind: input, shape index: {}]
  %s4 = inlined_call_operand.hbm [shape: bf16[768,768], index: 4, kind: input, shape index: {}]
  %s5 = inlined_call_operand.hbm [shape: f32[1,768], index: 5, kind: input, shape index: {}]
  %s6 = inlined_call_operand.hbm [shape: bf16[768,768], index: 6, kind: input, shape index: {}]
  %s7 = inlined_call_operand.hbm [shape: f32[1,768], index: 7, kind: input, shape index: {}]
  %s8 = inlined_call_operand.hbm [shape: bf16[768,768], index: 8, kind: input, shape index: {}]
  %s9 = inlined_call_operand.hbm [shape: f32[1,768], index: 9, kind: input, shape index: {}]
  %s10 = inlined_call_operand.hbm [shape: f32[2,16,768], index: 10, kind: output, shape index: {}]
  %s11 = sld [smem:[#allocation0]]
  $region113: #{tpu_custom_call.1} parent=0
    _
  %s13 = ssub.s32 1, %s11
  %s14 = scalar_select 0, %s13, %s11
  $region1: #{tpu_custom_call.1} parent=0
    #allocation2 [shape = 'u8[98304]{0}', space=vmem, size = 0x18000, scoped, tag = 'input window, operand 0']
    #allocation3 [shape = 's32[2]{0}', space=sflag, size = 0x8, scoped, tag = 'scoped memory for tpu_custom_call.1']
    #allocation4 [shape = 's32[2]{0}', space=sflag, size = 0x8, scoped, tag = 'scoped memory for tpu_custom_call.1']
    #allocation5 [shape = 'u8[98304]{0}', space=vmem, size = 0x18000, scoped, tag = 'input window, operand 1']
    #allocation6 [shape = 's32[2]{0}', space=sflag, size = 0x8, scoped, tag = 'scoped memory for tpu_custom_call.1']
    #allocation7 [shape = 'u8[1179648]{0}', space=vmem, size = 0x120000, scoped, tag = 'input window, operand 2, single buffered']
    #allocation8 [shape = 'u8[3072]{0}', space=vmem, size = 0xc00, scoped, tag = 'input window, operand 3, single buffered']
    #allocation9 [shape = 's32[1]{0}', space=sflag, size = 0x4, scoped, tag = 'scoped memory for tpu_custom_call.1']
    #allocation10 [shape = 'u8[1179648]{0}', space=vmem, size = 0x120000, scoped, tag = 'input window, operand 4, single buffered']
    #allocation11 [shape = 'u8[3072]{0}', space=vmem, size = 0xc00, scoped, tag = 'input window, operand 5, single buffered']
    #allocation12 [shape = 's32[1]{0}', space=sflag, size = 0x4, scoped, tag = 'scoped memory for tpu_custom_call.1']
    #allocation13 [shape = 'u8[1179648]{0}', space=vmem, size = 0x120000, scoped, tag = 'input window, operand 6, single buffered']
    #allocation14 [shape = 'u8[3072]{0}', space=vmem, size = 0xc00, scoped, tag = 'input window, operand 7, single buffered']
    #allocation15 [shape = 's32[1]{0}', space=sflag, size = 0x4, scoped, tag = 'scoped memory for tpu_custom_call.1']
    #allocation16 [shape = 'u8[1179648]{0}', space=vmem, size = 0x120000, scoped, tag = 'input window, operand 8, single buffered']
    #allocation17 [shape = 'u8[3072]{0}', space=vmem, size = 0xc00, scoped, tag = 'input window, operand 9, single buffered']
    #allocation18 [shape = 's32[1]{0}', space=sflag, size = 0x4, scoped, tag = 'scoped memory for tpu_custom_call.1']
    #allocation19 [shape = 'u8[98304]{0}', space=vmem, size = 0x18000, scoped, tag = 'output window, operand 0']
    %15 = vsyncpa [#allocation3], 0
    %s16 = scalar_lea.sflag [#allocation3], 1
    %17 = vsyncpa %s16, 0
    %18 = vsyncpa [#allocation6], 0
    %s19 = scalar_lea.sflag [#allocation6], 1
    %20 = vsyncpa %s19, 0
    %21 = vsyncpa [#allocation9], 0
    %22 = vsyncpa [#allocation12], 0
    %23 = vsyncpa [#allocation15], 0
    %24 = vsyncpa [#allocation18], 0
    %25 = vsyncpa [#allocation4], 0
    %s26 = scalar_lea.sflag [#allocation4], 1
    %27 = vsyncpa %s26, 0
    loop: start=0, step=1, limit=4
    $region2: #{tpu_custom_call.1} parent=1 // loop_pre_header
      _
    $region3: #{tpu_custom_call.1} parent=1 // loop_header
      %s29 = sphi 0, %s33
      %p30 = scmp.ge.s32.totalorder %s29, 4
      %s39 = sphi 0, %s41
      %s42 = sphi 0, %s39
      %s43 = sphi 0, %s42
      %s59 = sphi 0, %s43
      %s65 = sphi 0, %s67
      %s68 = sphi 0, %s65
      %s69 = sphi 0, %s68
      %s85 = sphi 0, %s69
      %s89 = sphi 0, %s89
      %s91 = sphi 0, %s89
      %s92 = sphi 0, %s91
      %s106 = sphi 0, %s92
      %s110 = sphi 0, %s110
      %s112 = sphi 0, %s110
      %s113 = sphi 0, %s112
      %s127 = sphi 0, %s113
      %s131 = sphi 0, %s131
      %s133 = sphi 0, %s131
      %s134 = sphi 0, %s133
      %s148 = sphi 0, %s134
      %s152 = sphi 0, %s152
      %s154 = sphi 0, %s152
      %s155 = sphi 0, %s154
      %s169 = sphi 0, %s155
      %s173 = sphi 0, %s173
      %s175 = sphi 0, %s173
      %s176 = sphi 0, %s175
      %s190 = sphi 0, %s176
      %s194 = sphi 0, %s194
      %s196 = sphi 0, %s194
      %s197 = sphi 0, %s196
      %s211 = sphi 0, %s197
      %s215 = sphi 0, %s215
      %s217 = sphi 0, %s215
      %s218 = sphi 0, %s217
      %s232 = sphi 0, %s218
      %s236 = sphi 0, %s236
      %s238 = sphi 0, %s236
      %s239 = sphi 0, %s238
      %s253 = sphi 0, %s239
      %s259 = sphi 0, %s261
      %s262 = sphi 0, %s259
      %s263 = sphi 0, %s262
      %s279 = sphi 0, %s263
    $region4: #{tpu_custom_call.1} parent=1 // loop_header_branch
      %32 = sbr.rel (%p30) target = $region8
    $region5: #{tpu_custom_call.1} parent=1 // loop_body
      %s34 = ssub.s32 %s29, 1
      %s35 = ssub.s32 %s29, 2
      %s36 = sadd.s32 %s29, 1
      %s37 = ssub.s32 %s29, %s36
      %p38 = scmp.eq.s32.totalorder %s37, 0
      %s40 = sadd.s32 %s39, 1
      %s41 = scalar_select %p38, %s39, %s40
      %p44 = pneg %p38
      %p45 = scmp.eq.s32.totalorder %s29, 1
      %p46 = por %p44, %p45
      %p47 = scmp.ne.s32.totalorder %s39, %s42
      %p48 = scmp.eq.s32.totalorder %s29, 0
      %p49 = por %p47, %p48
      %p50 = scmp.ne.s32.totalorder %s39, %s42
      %p51 = scmp.eq.s32.totalorder %s34, 1
      %p52 = por %p50, %p51
      %p53 = scmp.ne.s32.totalorder %s42, %s43
      %p54 = scmp.eq.s32.totalorder %s34, 0
      %p55 = por %p53, %p54
      %p56 = scmp.ne.s32.totalorder %s42, %s43
      %p57 = scmp.eq.s32.totalorder %s35, 1
      %p58 = por %p56, %p57
      %p60 = scmp.ne.s32.totalorder %s43, %s59
      %p61 = scmp.eq.s32.totalorder %s35, 0
      %p62 = por %p60, %p61
      %s63 = ssub.s32 %s29, %s36
      %p64 = scmp.eq.s32.totalorder %s63, 0
      %s66 = sadd.s32 %s65, 1
      %s67 = scalar_select %p64, %s65, %s66
      %p70 = pneg %p64
      %p71 = scmp.eq.s32.totalorder %s29, 1
      %p72 = por %p70, %p71
      %p73 = scmp.ne.s32.totalorder %s65, %s68
      %p74 = scmp.eq.s32.totalorder %s29, 0
      %p75 = por %p73, %p74
      %p76 = scmp.ne.s32.totalorder %s65, %s68
      %p77 = scmp.eq.s32.totalorder %s34, 1
      %p78 = por %p76, %p77
      %p79 = scmp.ne.s32.totalorder %s68, %s69
      %p80 = scmp.eq.s32.totalorder %s34, 0
      %p81 = por %p79, %p80
      %p82 = scmp.ne.s32.totalorder %s68, %s69
      %p83 = scmp.eq.s32.totalorder %s35, 1
      %p84 = por %p82, %p83
      %p86 = scmp.ne.s32.totalorder %s69, %s85
      %p87 = scmp.eq.s32.totalorder %s35, 0
      %p88 = por %p86, %p87
      %s90 = sadd.s32 %s89, 1
      %p93 = scmp.eq.s32.totalorder %s29, 1
      %p94 = scmp.ne.s32.totalorder %s89, %s91
      %p95 = scmp.eq.s32.totalorder %s29, 0
      %p96 = por %p94, %p95
      %p97 = scmp.ne.s32.totalorder %s89, %s91
      %p98 = scmp.eq.s32.totalorder %s34, 1
      %p99 = por %p97, %p98
      %p100 = scmp.ne.s32.totalorder %s91, %s92
      %p101 = scmp.eq.s32.totalorder %s34, 0
      %p102 = por %p100, %p101
      %p103 = scmp.ne.s32.totalorder %s91, %s92
      %p104 = scmp.eq.s32.totalorder %s35, 1
      %p105 = por %p103, %p104
      %p107 = scmp.ne.s32.totalorder %s92, %s106
      %p108 = scmp.eq.s32.totalorder %s35, 0
      %p109 = por %p107, %p108
      %s111 = sadd.s32 %s110, 1
      %p114 = scmp.eq.s32.totalorder %s29, 1
      %p115 = scmp.ne.s32.totalorder %s110, %s112
      %p116 = scmp.eq.s32.totalorder %s29, 0
      %p117 = por %p115, %p116
      %p118 = scmp.ne.s32.totalorder %s110, %s112
      %p119 = scmp.eq.s32.totalorder %s34, 1
      %p120 = por %p118, %p119
      %p121 = scmp.ne.s32.totalorder %s112, %s113
      %p122 = scmp.eq.s32.totalorder %s34, 0
      %p123 = por %p121, %p122
      %p124 = scmp.ne.s32.totalorder %s112, %s113
      %p125 = scmp.eq.s32.totalorder %s35, 1
      %p126 = por %p124, %p125
      %p128 = scmp.ne.s32.totalorder %s113, %s127
      %p129 = scmp.eq.s32.totalorder %s35, 0
      %p130 = por %p128, %p129
      %s132 = sadd.s32 %s131, 1
      %p135 = scmp.eq.s32.totalorder %s29, 1
      %p136 = scmp.ne.s32.totalorder %s131, %s133
      %p137 = scmp.eq.s32.totalorder %s29, 0
      %p138 = por %p136, %p137
      %p139 = scmp.ne.s32.totalorder %s131, %s133
      %p140 = scmp.eq.s32.totalorder %s34, 1
      %p141 = por %p139, %p140
      %p142 = scmp.ne.s32.totalorder %s133, %s134
      %p143 = scmp.eq.s32.totalorder %s34, 0
      %p144 = por %p142, %p143
      %p145 = scmp.ne.s32.totalorder %s133, %s134
      %p146 = scmp.eq.s32.totalorder %s35, 1
      %p147 = por %p145, %p146
      %p149 = scmp.ne.s32.totalorder %s134, %s148
      %p150 = scmp.eq.s32.totalorder %s35, 0
      %p151 = por %p149, %p150
      %s153 = sadd.s32 %s152, 1
      %p156 = scmp.eq.s32.totalorder %s29, 1
      %p157 = scmp.ne.s32.totalorder %s152, %s154
      %p158 = scmp.eq.s32.totalorder %s29, 0
      %p159 = por %p157, %p158
      %p160 = scmp.ne.s32.totalorder %s152, %s154
      %p161 = scmp.eq.s32.totalorder %s34, 1
      %p162 = por %p160, %p161
      %p163 = scmp.ne.s32.totalorder %s154, %s155
      %p164 = scmp.eq.s32.totalorder %s34, 0
      %p165 = por %p163, %p164
      %p166 = scmp.ne.s32.totalorder %s154, %s155
      %p167 = scmp.eq.s32.totalorder %s35, 1
      %p168 = por %p166, %p167
      %p170 = scmp.ne.s32.totalorder %s155, %s169
      %p171 = scmp.eq.s32.totalorder %s35, 0
      %p172 = por %p170, %p171
      %s174 = sadd.s32 %s173, 1
      %p177 = scmp.eq.s32.totalorder %s29, 1
      %p178 = scmp.ne.s32.totalorder %s173, %s175
      %p179 = scmp.eq.s32.totalorder %s29, 0
      %p180 = por %p178, %p179
      %p181 = scmp.ne.s32.totalorder %s173, %s175
      %p182 = scmp.eq.s32.totalorder %s34, 1
      %p183 = por %p181, %p182
      %p184 = scmp.ne.s32.totalorder %s175, %s176
      %p185 = scmp.eq.s32.totalorder %s34, 0
      %p186 = por %p184, %p185
      %p187 = scmp.ne.s32.totalorder %s175, %s176
      %p188 = scmp.eq.s32.totalorder %s35, 1
      %p189 = por %p187, %p188
      %p191 = scmp.ne.s32.totalorder %s176, %s190
      %p192 = scmp.eq.s32.totalorder %s35, 0
      %p193 = por %p191, %p192
      %s195 = sadd.s32 %s194, 1
      %p198 = scmp.eq.s32.totalorder %s29, 1
      %p199 = scmp.ne.s32.totalorder %s194, %s196
      %p200 = scmp.eq.s32.totalorder %s29, 0
      %p201 = por %p199, %p200
      %p202 = scmp.ne.s32.totalorder %s194, %s196
      %p203 = scmp.eq.s32.totalorder %s34, 1
      %p204 = por %p202, %p203
      %p205 = scmp.ne.s32.totalorder %s196, %s197
      %p206 = scmp.eq.s32.totalorder %s34, 0
      %p207 = por %p205, %p206
      %p208 = scmp.ne.s32.totalorder %s196, %s197
      %p209 = scmp.eq.s32.totalorder %s35, 1
      %p210 = por %p208, %p209
      %p212 = scmp.ne.s32.totalorder %s197, %s211
      %p213 = scmp.eq.s32.totalorder %s35, 0
      %p214 = por %p212, %p213
      %s216 = sadd.s32 %s215, 1
      %p219 = scmp.eq.s32.totalorder %s29, 1
      %p220 = scmp.ne.s32.totalorder %s215, %s217
      %p221 = scmp.eq.s32.totalorder %s29, 0
      %p222 = por %p220, %p221
      %p223 = scmp.ne.s32.totalorder %s215, %s217
      %p224 = scmp.eq.s32.totalorder %s34, 1
      %p225 = por %p223, %p224
      %p226 = scmp.ne.s32.totalorder %s217, %s218
      %p227 = scmp.eq.s32.totalorder %s34, 0
      %p228 = por %p226, %p227
      %p229 = scmp.ne.s32.totalorder %s217, %s218
      %p230 = scmp.eq.s32.totalorder %s35, 1
      %p231 = por %p229, %p230
      %p233 = scmp.ne.s32.totalorder %s218, %s232
      %p234 = scmp.eq.s32.totalorder %s35, 0
      %p235 = por %p233, %p234
      %s237 = sadd.s32 %s236, 1
      %p240 = scmp.eq.s32.totalorder %s29, 1
      %p241 = scmp.ne.s32.totalorder %s236, %s238
      %p242 = scmp.eq.s32.totalorder %s29, 0
      %p243 = por %p241, %p242
      %p244 = scmp.ne.s32.totalorder %s236, %s238
      %p245 = scmp.eq.s32.totalorder %s34, 1
      %p246 = por %p244, %p245
      %p247 = scmp.ne.s32.totalorder %s238, %s239
      %p248 = scmp.eq.s32.totalorder %s34, 0
      %p249 = por %p247, %p248
      %p250 = scmp.ne.s32.totalorder %s238, %s239
      %p251 = scmp.eq.s32.totalorder %s35, 1
      %p252 = por %p250, %p251
      %p254 = scmp.ne.s32.totalorder %s239, %s253
      %p255 = scmp.eq.s32.totalorder %s35, 0
      %p256 = por %p254, %p255
      %s257 = ssub.s32 %s29, %s36
      %p258 = scmp.eq.s32.totalorder %s257, 0
      %s260 = sadd.s32 %s259, 1
      %s261 = scalar_select %p258, %s259, %s260
      %p264 = pneg %p258
      %p265 = scmp.eq.s32.totalorder %s29, 1
      %p266 = por %p264, %p265
      %p267 = scmp.ne.s32.totalorder %s259, %s262
      %p268 = scmp.eq.s32.totalorder %s29, 0
      %p269 = por %p267, %p268
      %p270 = scmp.ne.s32.totalorder %s259, %s262
      %p271 = scmp.eq.s32.totalorder %s34, 1
      %p272 = por %p270, %p271
      %p273 = scmp.ne.s32.totalorder %s262, %s263
      %p274 = scmp.eq.s32.totalorder %s34, 0
      %p275 = por %p273, %p274
      %p276 = scmp.ne.s32.totalorder %s262, %s263
      %p277 = scmp.eq.s32.totalorder %s35, 1
      %p278 = por %p276, %p277
      %p280 = scmp.ne.s32.totalorder %s263, %s279
      %p281 = scmp.eq.s32.totalorder %s35, 0
      %p282 = por %p280, %p281
      %p283 = scmp.le.s32.totalorder 1, %s29
      %p284 = scmp.lt.s32.totalorder %s29, 3
      %p285 = pnand %p283, %p284
      %p286 = pneg %p285
      // Predicated region
      $region9: #{tpu_custom_call.1} parent=5 // pred_check
        _
      $region10: #{tpu_custom_call.1} parent=5 // pred_check_branch
        %288 = sbr.rel (%p285) target = $region12
      $region11: #{tpu_custom_call.1} parent=5 // pred_region
        %s289 = ssub.s32 %s29, 1
        // Predicated region
        $region13: #{tpu_custom_call.1} parent=11 // pred_check
          %p290 = pneg %p102
        $region14: #{tpu_custom_call.1} parent=11 // pred_check_branch
          %292 = sbr.rel (%p290) target = $region16
        $region15: #{tpu_custom_call.1} parent=11 // pred_region
          %294 = vsyncadd [#allocation6], 0
          %s295 = sshll.u32 %s2, 4
          %s296 = int_to_ptr.hbm [resolvable:$true] %s295
          %s297 = sshll.u32 [#allocation7], 4
          %s298 = int_to_ptr.vmem [resolvable:$true] %s297
          %303 = dma.hbm_to_vmem [thread:$0]  %s296, 36864, %s298, [#allocation6], 384, 384, 24
        $region16: #{tpu_custom_call.1} parent=11 // pred_fallthru
          _
        // Predicated region
        $region17: #{tpu_custom_call.1} parent=11 // pred_check
          %p304 = pneg %p123
        $region18: #{tpu_custom_call.1} parent=11 // pred_check_branch
          %306 = sbr.rel (%p304) target = $region20
        $region19: #{tpu_custom_call.1} parent=11 // pred_region
          %308 = vsyncadd [#allocation9], 0
          %s310 = sshll.u32 %s3, 4
          %s311 = int_to_ptr.hbm [resolvable:$true] %s310
          %s312 = sshll.u32 [#allocation8], 4
          %s313 = int_to_ptr.vmem [resolvable:$true] %s312
          %315 = dma.hbm_to_vmem [thread:$0]  %s311, 96, %s313, [#allocation9]
        $region20: #{tpu_custom_call.1} parent=11 // pred_fallthru
          _
        // Predicated region
        $region21: #{tpu_custom_call.1} parent=11 // pred_check
          %p316 = pneg %p144
        $region22: #{tpu_custom_call.1} parent=11 // pred_check_branch
          %318 = sbr.rel (%p316) target = $region24
        $region23: #{tpu_custom_call.1} parent=11 // pred_region
          %320 = vsyncadd [#allocation9], 0
          %s321 = sshll.u32 %s4, 4
          %s322 = int_to_ptr.hbm [resolvable:$true] %s321
          %s323 = sshll.u32 [#allocation10], 4
          %s324 = int_to_ptr.vmem [resolvable:$true] %s323
          %329 = dma.hbm_to_vmem [thread:$0]  %s322, 36864, %s324, [#allocation9], 384, 384, 24
        $region24: #{tpu_custom_call.1} parent=11 // pred_fallthru
          _
        // Predicated region
        $region25: #{tpu_custom_call.1} parent=11 // pred_check
          %p330 = pneg %p165
        $region26: #{tpu_custom_call.1} parent=11 // pred_check_branch
          %332 = sbr.rel (%p330) target = $region28
        $region27: #{tpu_custom_call.1} parent=11 // pred_region
          %334 = vsyncadd [#allocation12], 0
          %s336 = sshll.u32 %s5, 4
          %s337 = int_to_ptr.hbm [resolvable:$true] %s336
          %s338 = sshll.u32 [#allocation11], 4
          %s339 = int_to_ptr.vmem [resolvable:$true] %s338
          %341 = dma.hbm_to_vmem [thread:$0]  %s337, 96, %s339, [#allocation12]
        $region28: #{tpu_custom_call.1} parent=11 // pred_fallthru
          _
        // Predicated region
        $region29: #{tpu_custom_call.1} parent=11 // pred_check
          %p342 = pneg %p186
        $region30: #{tpu_custom_call.1} parent=11 // pred_check_branch
          %344 = sbr.rel (%p342) target = $region32
        $region31: #{tpu_custom_call.1} parent=11 // pred_region
          %346 = vsyncadd [#allocation12], 0
          %s347 = sshll.u32 %s6, 4
          %s348 = int_to_ptr.hbm [resolvable:$true] %s347
          %s349 = sshll.u32 [#allocation13], 4
          %s350 = int_to_ptr.vmem [resolvable:$true] %s349
          %355 = dma.hbm_to_vmem [thread:$0]  %s348, 36864, %s350, [#allocation12], 384, 384, 24
        $region32: #{tpu_custom_call.1} parent=11 // pred_fallthru
          _
        // Predicated region
        $region33: #{tpu_custom_call.1} parent=11 // pred_check
          %p356 = pneg %p207
        $region34: #{tpu_custom_call.1} parent=11 // pred_check_branch
          %358 = sbr.rel (%p356) target = $region36
        $region35: #{tpu_custom_call.1} parent=11 // pred_region
          %360 = vsyncadd [#allocation15], 0
          %s362 = sshll.u32 %s7, 4
          %s363 = int_to_ptr.hbm [resolvable:$true] %s362
          %s364 = sshll.u32 [#allocation14], 4
          %s365 = int_to_ptr.vmem [resolvable:$true] %s364
          %367 = dma.hbm_to_vmem [thread:$0]  %s363, 96, %s365, [#allocation15]
        $region36: #{tpu_custom_call.1} parent=11 // pred_fallthru
          _
        // Predicated region
        $region37: #{tpu_custom_call.1} parent=11 // pred_check
          %p368 = pneg %p228
        $region38: #{tpu_custom_call.1} parent=11 // pred_check_branch
          %370 = sbr.rel (%p368) target = $region40
        $region39: #{tpu_custom_call.1} parent=11 // pred_region
          %372 = vsyncadd [#allocation15], 0
          %s373 = sshll.u32 %s8, 4
          %s374 = int_to_ptr.hbm [resolvable:$true] %s373
          %s375 = sshll.u32 [#allocation16], 4
          %s376 = int_to_ptr.vmem [resolvable:$true] %s375
          %381 = dma.hbm_to_vmem [thread:$0]  %s374, 36864, %s376, [#allocation15], 384, 384, 24
        $region40: #{tpu_custom_call.1} parent=11 // pred_fallthru
          _
        // Predicated region
        $region41: #{tpu_custom_call.1} parent=11 // pred_check
          %p382 = pneg %p249
        $region42: #{tpu_custom_call.1} parent=11 // pred_check_branch
          %384 = sbr.rel (%p382) target = $region44
        $region43: #{tpu_custom_call.1} parent=11 // pred_region
          %386 = vsyncadd [#allocation18], 0
          %s388 = sshll.u32 %s9, 4
          %s389 = int_to_ptr.hbm [resolvable:$true] %s388
          %s390 = sshll.u32 [#allocation17], 4
          %s391 = int_to_ptr.vmem [resolvable:$true] %s390
          %393 = dma.hbm_to_vmem [thread:$0]  %s389, 96, %s391, [#allocation18]
        $region44: #{tpu_custom_call.1} parent=11 // pred_fallthru
          _
      $region12: #{tpu_custom_call.1} parent=5 // pred_fallthru
        _
      %p394 = scmp.lt.s32.totalorder %s29, 2
      // Predicated region
      $region45: #{tpu_custom_call.1} parent=5 // pred_check
        %p395 = pneg %p394
      $region46: #{tpu_custom_call.1} parent=5 // pred_check_branch
        %397 = sbr.rel (%p395) target = $region48
      $region47: #{tpu_custom_call.1} parent=5 // pred_region
        // Predicated region
        $region49: #{tpu_custom_call.1} parent=47 // pred_check
          %p398 = pneg %p49
        $region50: #{tpu_custom_call.1} parent=47 // pred_check_branch
          %400 = sbr.rel (%p398) target = $region52
        $region51: #{tpu_custom_call.1} parent=47 // pred_region
          %s401 = sand.u32 %s39, 1
          %s402 = scalar_lea.sflag [#allocation3], %s401
          %s403 = sand.u32 %s39, 1
          %s404 = smul.addr %s403, 96
          %s405 = scalar_lea.vmem [#allocation2], %s404
          %407 = vsyncadd %s402, 0
          %s408 = smul.addr %s29, 12
          %s409 = smul.addr %s408, 8
          %s410 = scalar_lea.hbm %s0, %s409
          %s411 = sshll.u32 %s410, 4
          %s412 = int_to_ptr.hbm [resolvable:$true] %s411
          %s413 = sshll.u32 %s405, 4
          %s414 = int_to_ptr.vmem [resolvable:$true] %s413
          %419 = dma.hbm_to_vmem [thread:$0]  %s412, 1536, %s414, %s402, 768, 768, 48
        $region52: #{tpu_custom_call.1} parent=47 // pred_fallthru
          _
        // Predicated region
        $region53: #{tpu_custom_call.1} parent=47 // pred_check
          %p420 = pneg %p75
        $region54: #{tpu_custom_call.1} parent=47 // pred_check_branch
          %422 = sbr.rel (%p420) target = $region56
        $region55: #{tpu_custom_call.1} parent=47 // pred_region
          %s423 = sand.u32 %s29, 1
          %s424 = scalar_lea.sflag [#allocation6], %s423
          %s425 = sand.u32 %s65, 1
          %s426 = smul.addr %s425, 96
          %s427 = scalar_lea.vmem [#allocation5], %s426
          %429 = vsyncadd %s424, 0
          %s430 = smul.addr %s29, 12
          %s431 = smul.addr %s430, 8
          %s432 = scalar_lea.hbm %s1, %s431
          %s433 = sshll.u32 %s432, 4
          %s434 = int_to_ptr.hbm [resolvable:$true] %s433
          %s435 = sshll.u32 %s427, 4
          %s436 = int_to_ptr.vmem [resolvable:$true] %s435
          %441 = dma.hbm_to_vmem [thread:$0]  %s434, 1536, %s436, %s424, 768, 768, 48
        $region56: #{tpu_custom_call.1} parent=47 // pred_fallthru
          _
      $region48: #{tpu_custom_call.1} parent=5 // pred_fallthru
        _
      %p442 = scmp.le.s32.totalorder 1, %s29
      %p443 = scmp.lt.s32.totalorder %s29, 3
      %p444 = pnand %p442, %p443
      %p445 = pneg %p444
      // Predicated region
      $region57: #{tpu_custom_call.1} parent=5 // pred_check
        _
      $region58: #{tpu_custom_call.1} parent=5 // pred_check_branch
        %447 = sbr.rel (%p444) target = $region60
      $region59: #{tpu_custom_call.1} parent=5 // pred_region
        %s448 = ssub.s32 %s29, 1
        %s449 = sand.u32 %s42, 1
        %s450 = scalar_lea.sflag [#allocation3], %s449
        %s451 = sand.u32 %s42, 1
        %s452 = smul.addr %s451, 96
        %s453 = scalar_lea.vmem [#allocation2], %s452
        // Predicated region
        $region61: #{tpu_custom_call.1} parent=59 // pred_check
          %p454 = pneg %p55
        $region62: #{tpu_custom_call.1} parent=59 // pred_check_branch
          %456 = sbr.rel (%p454) target = $region64
        $region63: #{tpu_custom_call.1} parent=59 // pred_region
          %458 = dma.done %s450, 1536
        $region64: #{tpu_custom_call.1} parent=59 // pred_fallthru
          _
        %s459 = sand.u32 %s34, 1
        %s460 = scalar_lea.sflag [#allocation6], %s459
        %s461 = sand.u32 %s68, 1
        %s462 = smul.addr %s461, 96
        %s463 = scalar_lea.vmem [#allocation5], %s462
        // Predicated region
        $region65: #{tpu_custom_call.1} parent=59 // pred_check
          %p464 = pneg %p81
        $region66: #{tpu_custom_call.1} parent=59 // pred_check_branch
          %466 = sbr.rel (%p464) target = $region68
        $region67: #{tpu_custom_call.1} parent=59 // pred_region
          %468 = dma.done %s460, 1536
        $region68: #{tpu_custom_call.1} parent=59 // pred_fallthru
          _
        // Predicated region
        $region69: #{tpu_custom_call.1} parent=59 // pred_check
          %p469 = pneg %p102
        $region70: #{tpu_custom_call.1} parent=59 // pred_check_branch
          %471 = sbr.rel (%p469) target = $region72
        $region71: #{tpu_custom_call.1} parent=59 // pred_region
          %473 = dma.done [#allocation6], 36864
        $region72: #{tpu_custom_call.1} parent=59 // pred_fallthru
          _
        // Predicated region
        $region73: #{tpu_custom_call.1} parent=59 // pred_check
          %p474 = pneg %p123
        $region74: #{tpu_custom_call.1} parent=59 // pred_check_branch
          %476 = sbr.rel (%p474) target = $region76
        $region75: #{tpu_custom_call.1} parent=59 // pred_region
          %478 = dma.done [#allocation9], 96
        $region76: #{tpu_custom_call.1} parent=59 // pred_fallthru
          _
        // Predicated region
        $region77: #{tpu_custom_call.1} parent=59 // pred_check
          %p479 = pneg %p144
        $region78: #{tpu_custom_call.1} parent=59 // pred_check_branch
          %481 = sbr.rel (%p479) target = $region80
        $region79: #{tpu_custom_call.1} parent=59 // pred_region
          %483 = dma.done [#allocation9], 36864
        $region80: #{tpu_custom_call.1} parent=59 // pred_fallthru
          _
        // Predicated region
        $region81: #{tpu_custom_call.1} parent=59 // pred_check
          %p484 = pneg %p165
        $region82: #{tpu_custom_call.1} parent=59 // pred_check_branch
          %486 = sbr.rel (%p484) target = $region84
        $region83: #{tpu_custom_call.1} parent=59 // pred_region
          %488 = dma.done [#allocation12], 96
        $region84: #{tpu_custom_call.1} parent=59 // pred_fallthru
          _
        // Predicated region
        $region85: #{tpu_custom_call.1} parent=59 // pred_check
          %p489 = pneg %p186
        $region86: #{tpu_custom_call.1} parent=59 // pred_check_branch
          %491 = sbr.rel (%p489) target = $region88
        $region87: #{tpu_custom_call.1} parent=59 // pred_region
          %493 = dma.done [#allocation12], 36864
        $region88: #{tpu_custom_call.1} parent=59 // pred_fallthru
          _
        // Predicated region
        $region89: #{tpu_custom_call.1} parent=59 // pred_check
          %p494 = pneg %p207
        $region90: #{tpu_custom_call.1} parent=59 // pred_check_branch
          %496 = sbr.rel (%p494) target = $region92
        $region91: #{tpu_custom_call.1} parent=59 // pred_region
          %498 = dma.done [#allocation15], 96
        $region92: #{tpu_custom_call.1} parent=59 // pred_fallthru
          _
        // Predicated region
        $region93: #{tpu_custom_call.1} parent=59 // pred_check
          %p499 = pneg %p228
        $region94: #{tpu_custom_call.1} parent=59 // pred_check_branch
          %501 = sbr.rel (%p499) target = $region96
        $region95: #{tpu_custom_call.1} parent=59 // pred_region
          %503 = dma.done [#allocation15], 36864
        $region96: #{tpu_custom_call.1} parent=59 // pred_fallthru
          _
        // Predicated region
        $region97: #{tpu_custom_call.1} parent=59 // pred_check
          %p504 = pneg %p249
        $region98: #{tpu_custom_call.1} parent=59 // pred_check_branch
          %506 = sbr.rel (%p504) target = $region100
        $region99: #{tpu_custom_call.1} parent=59 // pred_region
          %508 = dma.done [#allocation18], 96
        $region100: #{tpu_custom_call.1} parent=59 // pred_fallthru
          _
        %s509 = sand.u32 %s42, 1
        %s510 = scalar_lea.sflag [#allocation3], %s509
        %s511 = sand.u32 %s42, 1
        %s512 = smul.addr %s511, 96
        %s513 = scalar_lea.vmem [#allocation2], %s512
        %p514 = pneg %p55
        %p515 = pneg %p52
        %s516 = sand.u32 %s34, 1
        %s517 = scalar_lea.sflag [#allocation6], %s516
        %s518 = sand.u32 %s68, 1
        %s519 = smul.addr %s518, 96
        %s520 = scalar_lea.vmem [#allocation5], %s519
        %p521 = pneg %p81
        %p522 = pneg %p78
        %p523 = pneg %p102
        %p524 = pneg %p99
        %p525 = pneg %p123
        %p526 = pneg %p120
        %p527 = pneg %p144
        %p528 = pneg %p141
        %p529 = pneg %p165
        %p530 = pneg %p162
        %p531 = pneg %p186
        %p532 = pneg %p183
        %p533 = pneg %p207
        %p534 = pneg %p204
        %p535 = pneg %p228
        %p536 = pneg %p225
        %p537 = pneg %p249
        %p538 = pneg %p246
        %p539 = pneg %p275
        %p540 = pneg %p272
        %s541 = sand.u32 %s262, 1
        %s542 = scalar_lea.sflag [#allocation4], %s541
        %s543 = sand.u32 %s262, 1
        %s544 = smul.addr %s543, 96
        %s545 = scalar_lea.vmem [#allocation19], %s544
        %v546 = vld [vmem:[%s453] sm:$0xff]
        %v547 = vld [vmem:[%s453 + $0x8] sm:$0xff]
        %v548 = vld [vmem:[%s453 + $0x10] sm:$0xff]
        %v549 = vld [vmem:[%s453 + $0x18] sm:$0xff]
        %v550 = vld [vmem:[%s453 + $0x20] sm:$0xff]
        %v551 = vld [vmem:[%s453 + $0x28] sm:$0xff]
        %v552 = vld [vmem:[%s453 + $0x30] sm:$0xff]
        %v553 = vld [vmem:[%s453 + $0x38] sm:$0xff]
        %v554 = vld [vmem:[%s453 + $0x40] sm:$0xff]
        %v555 = vld [vmem:[%s453 + $0x48] sm:$0xff]
        %v556 = vld [vmem:[%s453 + $0x50] sm:$0xff]
        %v557 = vld [vmem:[%s453 + $0x58] sm:$0xff]
        %v558 = vld [vmem:[%s463] sm:$0xff]
        %v559 = vld [vmem:[%s463 + $0x8] sm:$0xff]
        %v560 = vld [vmem:[%s463 + $0x10] sm:$0xff]
        %v561 = vld [vmem:[%s463 + $0x18] sm:$0xff]
        %v562 = vld [vmem:[%s463 + $0x20] sm:$0xff]
        %v563 = vld [vmem:[%s463 + $0x28] sm:$0xff]
        %v564 = vld [vmem:[%s463 + $0x30] sm:$0xff]
        %v565 = vld [vmem:[%s463 + $0x38] sm:$0xff]
        %v566 = vld [vmem:[%s463 + $0x40] sm:$0xff]
        %v567 = vld [vmem:[%s463 + $0x48] sm:$0xff]
        %v568 = vld [vmem:[%s463 + $0x50] sm:$0xff]
        %v569 = vld [vmem:[%s463 + $0x58] sm:$0xff]
        %v570 = vld [vmem:[#allocation7] sm:$0xff]
        %v571 = vld [vmem:[#allocation7 + $0x8] sm:$0xff]
        %v572 = vld [vmem:[#allocation7 + $0x10] sm:$0xff]
        %v573 = vld [vmem:[#allocation7 + $0x18] sm:$0xff]
        %v574 = vld [vmem:[#allocation7 + $0x20] sm:$0xff]
        %v575 = vld [vmem:[#allocation7 + $0x28] sm:$0xff]
        %v576 = vld [vmem:[#allocation7 + $0x30] sm:$0xff]
        %v577 = vld [vmem:[#allocation7 + $0x38] sm:$0xff]
        %v578 = vld [vmem:[#allocation7 + $0x40] sm:$0xff]
        %v579 = vld [vmem:[#allocation7 + $0x48] sm:$0xff]
        %v580 = vld [vmem:[#allocation7 + $0x50] sm:$0xff]
        %v581 = vld [vmem:[#allocation7 + $0x58] sm:$0xff]
        %v582 = vld [vmem:[#allocation7 + $0x60] sm:$0xff]
        %v583 = vld [vmem:[#allocation7 + $0x68] sm:$0xff]
        %v584 = vld [vmem:[#allocation7 + $0x70] sm:$0xff]
        %v585 = vld [vmem:[#allocation7 + $0x78] sm:$0xff]
        %v586 = vld [vmem:[#allocation7 + $0x80] sm:$0xff]
        %v587 = vld [vmem:[#allocation7 + $0x88] sm:$0xff]
        %v588 = vld [vmem:[#allocation7 + $0x90] sm:$0xff]
        %v589 = vld [vmem:[#allocation7 + $0x98] sm:$0xff]
        %v590 = vld [vmem:[#allocation7 + $0xa0] sm:$0xff]
        %v591 = vld [vmem:[#allocation7 + $0xa8] sm:$0xff]
        %v592 = vld [vmem:[#allocation7 + $0xb0] sm:$0xff]
        %v593 = vld [vmem:[#allocation7 + $0xb8] sm:$0xff]
        %v594 = vld [vmem:[#allocation7 + $0xc0] sm:$0xff]
        %v595 = vld [vmem:[#allocation7 + $0xc8] sm:$0xff]
        %v596 = vld [vmem:[#allocation7 + $0xd0] sm:$0xff]
        %v597 = vld [vmem:[#allocation7 + $0xd8] sm:$0xff]
        %v598 = vld [vmem:[#allocation7 + $0xe0] sm:$0xff]
        %v599 = vld [vmem:[#allocation7 + $0xe8] sm:$0xff]
        %v600 = vld [vmem:[#allocation7 + $0xf0] sm:$0xff]
        %v601 = vld [vmem:[#allocation7 + $0xf8] sm:$0xff]
        %v602 = vld [vmem:[#allocation7 + $0x100] sm:$0xff]
        %v603 = vld [vmem:[#allocation7 + $0x108] sm:$0xff]
        %v604 = vld [vmem:[#allocation7 + $0x110] sm:$0xff]
        %v605 = vld [vmem:[#allocation7 + $0x118] sm:$0xff]
        %v606 = vld [vmem:[#allocation7 + $0x120] sm:$0xff]
        %v607 = vld [vmem:[#allocation7 + $0x128] sm:$0xff]
        %v608 = vld [vmem:[#allocation7 + $0x130] sm:$0xff]
        %v609 = vld [vmem:[#allocation7 + $0x138] sm:$0xff]
        %v610 = vld [vmem:[#allocation7 + $0x140] sm:$0xff]
        %v611 = vld [vmem:[#allocation7 + $0x148] sm:$0xff]
        %v612 = vld [vmem:[#allocation7 + $0x150] sm:$0xff]
        %v613 = vld [vmem:[#allocation7 + $0x158] sm:$0xff]
        %v614 = vld [vmem:[#allocation7 + $0x160] sm:$0xff]
        %v615 = vld [vmem:[#allocation7 + $0x168] sm:$0xff]
        %v616 = vld [vmem:[#allocation7 + $0x170] sm:$0xff]
        %v617 = vld [vmem:[#allocation7 + $0x178] sm:$0xff]
        %v618 = vld [vmem:[#allocation7 + $0x180] sm:$0xff]
        %v619 = vld [vmem:[#allocation7 + $0x188] sm:$0xff]
        %v620 = vld [vmem:[#allocation7 + $0x190] sm:$0xff]
        %v621 = vld [vmem:[#allocation7 + $0x198] sm:$0xff]
        %v622 = vld [vmem:[#allocation7 + $0x1a0] sm:$0xff]
        %v623 = vld [vmem:[#allocation7 + $0x1a8] sm:$0xff]
        %v624 = vld [vmem:[#allocation7 + $0x1b0] sm:$0xff]
        %v625 = vld [vmem:[#allocation7 + $0x1b8] sm:$0xff]
        %v626 = vld [vmem:[#allocation7 + $0x1c0] sm:$0xff]
        %v627 = vld [vmem:[#allocation7 + $0x1c8] sm:$0xff]
        %v628 = vld [vmem:[#allocation7 + $0x1d0] sm:$0xff]
        %v629 = vld [vmem:[#allocation7 + $0x1d8] sm:$0xff]
        %v630 = vld [vmem:[#allocation7 + $0x1e0] sm:$0xff]
        %v631 = vld [vmem:[#allocation7 + $0x1e8] sm:$0xff]
        %v632 = vld [vmem:[#allocation7 + $0x1f0] sm:$0xff]
        %v633 = vld [vmem:[#allocation7 + $0x1f8] sm:$0xff]
        %v634 = vld [vmem:[#allocation7 + $0x200] sm:$0xff]
        %v635 = vld [vmem:[#allocation7 + $0x208] sm:$0xff]
        %v636 = vld [vmem:[#allocation7 + $0x210] sm:$0xff]
        %v637 = vld [vmem:[#allocation7 + $0x218] sm:$0xff]
        %v638 = vld [vmem:[#allocation7 + $0x220] sm:$0xff]
        %v639 = vld [vmem:[#allocation7 + $0x228] sm:$0xff]
        %v640 = vld [vmem:[#allocation7 + $0x230] sm:$0xff]
        %v641 = vld [vmem:[#allocation7 + $0x238] sm:$0xff]
        %v642 = vld [vmem:[#allocation7 + $0x240] sm:$0xff]
        %v643 = vld [vmem:[#allocation7 + $0x248] sm:$0xff]
        %v644 = vld [vmem:[#allocation7 + $0x250] sm:$0xff]
        %v645 = vld [vmem:[#allocation7 + $0x258] sm:$0xff]
        %v646 = vld [vmem:[#allocation7 + $0x260] sm:$0xff]
        %v647 = vld [vmem:[#allocation7 + $0x268] sm:$0xff]
        %v648 = vld [vmem:[#allocation7 + $0x270] sm:$0xff]
        %v649 = vld [vmem:[#allocation7 + $0x278] sm:$0xff]
        %v650 = vld [vmem:[#allocation7 + $0x280] sm:$0xff]
        %v651 = vld [vmem:[#allocation7 + $0x288] sm:$0xff]
        %v652 = vld [vmem:[#allocation7 + $0x290] sm:$0xff]
        %v653 = vld [vmem:[#allocation7 + $0x298] sm:$0xff]
        %v654 = vld [vmem:[#allocation7 + $0x2a0] sm:$0xff]
        %v655 = vld [vmem:[#allocation7 + $0x2a8] sm:$0xff]
        %v656 = vld [vmem:[#allocation7 + $0x2b0] sm:$0xff]
        %v657 = vld [vmem:[#allocation7 + $0x2b8] sm:$0xff]
        %v658 = vld [vmem:[#allocation7 + $0x2c0] sm:$0xff]
        %v659 = vld [vmem:[#allocation7 + $0x2c8] sm:$0xff]
        %v660 = vld [vmem:[#allocation7 + $0x2d0] sm:$0xff]
        %v661 = vld [vmem:[#allocation7 + $0x2d8] sm:$0xff]
        %v662 = vld [vmem:[#allocation7 + $0x2e0] sm:$0xff]
        %v663 = vld [vmem:[#allocation7 + $0x2e8] sm:$0xff]
        %v664 = vld [vmem:[#allocation7 + $0x2f0] sm:$0xff]
        %v665 = vld [vmem:[#allocation7 + $0x2f8] sm:$0xff]
        %v666 = vld [vmem:[#allocation7 + $0x300] sm:$0xff]
        %v667 = vld [vmem:[#allocation7 + $0x308] sm:$0xff]
        %v668 = vld [vmem:[#allocation7 + $0x310] sm:$0xff]
        %v669 = vld [vmem:[#allocation7 + $0x318] sm:$0xff]
        %v670 = vld [vmem:[#allocation7 + $0x320] sm:$0xff]
        %v671 = vld [vmem:[#allocation7 + $0x328] sm:$0xff]
        %v672 = vld [vmem:[#allocation7 + $0x330] sm:$0xff]
        %v673 = vld [vmem:[#allocation7 + $0x338] sm:$0xff]
        %v674 = vld [vmem:[#allocation7 + $0x340] sm:$0xff]
        %v675 = vld [vmem:[#allocation7 + $0x348] sm:$0xff]
        %v676 = vld [vmem:[#allocation7 + $0x350] sm:$0xff]
        %v677 = vld [vmem:[#allocation7 + $0x358] sm:$0xff]
        %v678 = vld [vmem:[#allocation7 + $0x360] sm:$0xff]
        %v679 = vld [vmem:[#allocation7 + $0x368] sm:$0xff]
        %v680 = vld [vmem:[#allocation7 + $0x370] sm:$0xff]
        %v681 = vld [vmem:[#allocation7 + $0x378] sm:$0xff]
        %v682 = vld [vmem:[#allocation7 + $0x380] sm:$0xff]
        %v683 = vld [vmem:[#allocation7 + $0x388] sm:$0xff]
        %v684 = vld [vmem:[#allocation7 + $0x390] sm:$0xff]
        %v685 = vld [vmem:[#allocation7 + $0x398] sm:$0xff]
        %v686 = vld [vmem:[#allocation7 + $0x3a0] sm:$0xff]
        %v687 = vld [vmem:[#allocation7 + $0x3a8] sm:$0xff]
        %v688 = vld [vmem:[#allocation7 + $0x3b0] sm:$0xff]
        %v689 = vld [vmem:[#allocation7 + $0x3b8] sm:$0xff]
        %v690 = vld [vmem:[#allocation7 + $0x3c0] sm:$0xff]
        %v691 = vld [vmem:[#allocation7 + $0x3c8] sm:$0xff]
        %v692 = vld [vmem:[#allocation7 + $0x3d0] sm:$0xff]
        %v693 = vld [vmem:[#allocation7 + $0x3d8] sm:$0xff]
        %v694 = vld [vmem:[#allocation7 + $0x3e0] sm:$0xff]
        %v695 = vld [vmem:[#allocation7 + $0x3e8] sm:$0xff]
        %v696 = vld [vmem:[#allocation7 + $0x3f0] sm:$0xff]
        %v697 = vld [vmem:[#allocation7 + $0x3f8] sm:$0xff]
        %v698 = vld [vmem:[#allocation7 + $0x400] sm:$0xff]
        %v699 = vld [vmem:[#allocation7 + $0x408] sm:$0xff]
        %v700 = vld [vmem:[#allocation7 + $0x410] sm:$0xff]
        %v701 = vld [vmem:[#allocation7 + $0x418] sm:$0xff]
        %v702 = vld [vmem:[#allocation7 + $0x420] sm:$0xff]
        %v703 = vld [vmem:[#allocation7 + $0x428] sm:$0xff]
        %v704 = vld [vmem:[#allocation7 + $0x430] sm:$0xff]
        %v705 = vld [vmem:[#allocation7 + $0x438] sm:$0xff]
        %v706 = vld [vmem:[#allocation7 + $0x440] sm:$0xff]
        %v707 = vld [vmem:[#allocation7 + $0x448] sm:$0xff]
        %v708 = vld [vmem:[#allocation7 + $0x450] sm:$0xff]
        %v709 = vld [vmem:[#allocation7 + $0x458] sm:$0xff]
        %v710 = vld [vmem:[#allocation7 + $0x460] sm:$0xff]
        %v711 = vld [vmem:[#allocation7 + $0x468] sm:$0xff]
        %v712 = vld [vmem:[#allocation7 + $0x470] sm:$0xff]
        %v713 = vld [vmem:[#allocation7 + $0x478] sm:$0xff]
        %v714 = vld [vmem:[#allocation7 + $0x480] sm:$0xff]
        %v715 = vld [vmem:[#allocation7 + $0x488] sm:$0xff]
        %v716 = vld [vmem:[#allocation7 + $0x490] sm:$0xff]
        %v717 = vld [vmem:[#allocation7 + $0x498] sm:$0xff]
        %v718 = vld [vmem:[#allocation7 + $0x4a0] sm:$0xff]
        %v719 = vld [vmem:[#allocation7 + $0x4a8] sm:$0xff]
        %v720 = vld [vmem:[#allocation7 + $0x4b0] sm:$0xff]
        %v721 = vld [vmem:[#allocation7 + $0x4b8] sm:$0xff]
        %v722 = vld [vmem:[#allocation7 + $0x4c0] sm:$0xff]
        %v723 = vld [vmem:[#allocation7 + $0x4c8] sm:$0xff]
        %v724 = vld [vmem:[#allocation7 + $0x4d0] sm:$0xff]
        %v725 = vld [vmem:[#allocation7 + $0x4d8] sm:$0xff]
        %v726 = vld [vmem:[#allocation7 + $0x4e0] sm:$0xff]
        %v727 = vld [vmem:[#allocation7 + $0x4e8] sm:$0xff]
        %v728 = vld [vmem:[#allocation7 + $0x4f0] sm:$0xff]
        %v729 = vld [vmem:[#allocation7 + $0x4f8] sm:$0xff]
        %v730 = vld [vmem:[#allocation7 + $0x500] sm:$0xff]
        %v731 = vld [vmem:[#allocation7 + $0x508] sm:$0xff]
        %v732 = vld [vmem:[#allocation7 + $0x510] sm:$0xff]
        %v733 = vld [vmem:[#allocation7 + $0x518] sm:$0xff]
        %v734 = vld [vmem:[#allocation7 + $0x520] sm:$0xff]
        %v735 = vld [vmem:[#allocation7 + $0x528] sm:$0xff]
        %v736 = vld [vmem:[#allocation7 + $0x530] sm:$0xff]
        %v737 = vld [vmem:[#allocation7 + $0x538] sm:$0xff]
        %v738 = vld [vmem:[#allocation7 + $0x540] sm:$0xff]
        %v739 = vld [vmem:[#allocation7 + $0x548] sm:$0xff]
        %v740 = vld [vmem:[#allocation7 + $0x550] sm:$0xff]
        %v741 = vld [vmem:[#allocation7 + $0x558] sm:$0xff]
        %v742 = vld [vmem:[#allocation7 + $0x560] sm:$0xff]
        %v743 = vld [vmem:[#allocation7 + $0x568] sm:$0xff]
        %v744 = vld [vmem:[#allocation7 + $0x570] sm:$0xff]
        %v745 = vld [vmem:[#allocation7 + $0x578] sm:$0xff]
        %v746 = vld [vmem:[#allocation7 + $0x580] sm:$0xff]
        %v747 = vld [vmem:[#allocation7 + $0x588] sm:$0xff]
        %v748 = vld [vmem:[#allocation7 + $0x590] sm:$0xff]
        %v749 = vld [vmem:[#allocation7 + $0x598] sm:$0xff]
        %v750 = vld [vmem:[#allocation7 + $0x5a0] sm:$0xff]
        %v751 = vld [vmem:[#allocation7 + $0x5a8] sm:$0xff]
        %v752 = vld [vmem:[#allocation7 + $0x5b0] sm:$0xff]
        %v753 = vld [vmem:[#allocation7 + $0x5b8] sm:$0xff]
        %v754 = vld [vmem:[#allocation7 + $0x5c0] sm:$0xff]
        %v755 = vld [vmem:[#allocation7 + $0x5c8] sm:$0xff]
        %v756 = vld [vmem:[#allocation7 + $0x5d0] sm:$0xff]
        %v757 = vld [vmem:[#allocation7 + $0x5d8] sm:$0xff]
        %v758 = vld [vmem:[#allocation7 + $0x5e0] sm:$0xff]
        %v759 = vld [vmem:[#allocation7 + $0x5e8] sm:$0xff]
        %v760 = vld [vmem:[#allocation7 + $0x5f0] sm:$0xff]
        %v761 = vld [vmem:[#allocation7 + $0x5f8] sm:$0xff]
        %v762 = vld [vmem:[#allocation7 + $0x600] sm:$0xff]
        %v763 = vld [vmem:[#allocation7 + $0x608] sm:$0xff]
        %v764 = vld [vmem:[#allocation7 + $0x610] sm:$0xff]
        %v765 = vld [vmem:[#allocation7 + $0x618] sm:$0xff]
        %v766 = vld [vmem:[#allocation7 + $0x620] sm:$0xff]
        %v767 = vld [vmem:[#allocation7 + $0x628] sm:$0xff]
        %v768 = vld [vmem:[#allocation7 + $0x630] sm:$0xff]
        %v769 = vld [vmem:[#allocation7 + $0x638] sm:$0xff]
        %v770 = vld [vmem:[#allocation7 + $0x640] sm:$0xff]
        %v771 = vld [vmem:[#allocation7 + $0x648] sm:$0xff]
        %v772 = vld [vmem:[#allocation7 + $0x650] sm:$0xff]
        %v773 = vld [vmem:[#allocation7 + $0x658] sm:$0xff]
        %v774 = vld [vmem:[#allocation7 + $0x660] sm:$0xff]
        %v775 = vld [vmem:[#allocation7 + $0x668] sm:$0xff]
        %v776 = vld [vmem:[#allocation7 + $0x670] sm:$0xff]
        %v777 = vld [vmem:[#allocation7 + $0x678] sm:$0xff]
        %v778 = vld [vmem:[#allocation7 + $0x680] sm:$0xff]
        %v779 = vld [vmem:[#allocation7 + $0x688] sm:$0xff]
        %v780 = vld [vmem:[#allocation7 + $0x690] sm:$0xff]
        %v781 = vld [vmem:[#allocation7 + $0x698] sm:$0xff]
        %v782 = vld [vmem:[#allocation7 + $0x6a0] sm:$0xff]
        %v783 = vld [vmem:[#allocation7 + $0x6a8] sm:$0xff]
        %v784 = vld [vmem:[#allocation7 + $0x6b0] sm:$0xff]
        %v785 = vld [vmem:[#allocation7 + $0x6b8] sm:$0xff]
        %v786 = vld [vmem:[#allocation7 + $0x6c0] sm:$0xff]
        %v787 = vld [vmem:[#allocation7 + $0x6c8] sm:$0xff]
        %v788 = vld [vmem:[#allocation7 + $0x6d0] sm:$0xff]
        %v789 = vld [vmem:[#allocation7 + $0x6d8] sm:$0xff]
        %v790 = vld [vmem:[#allocation7 + $0x6e0] sm:$0xff]
        %v791 = vld [vmem:[#allocation7 + $0x6e8] sm:$0xff]
        %v792 = vld [vmem:[#allocation7 + $0x6f0] sm:$0xff]
        %v793 = vld [vmem:[#allocation7 + $0x6f8] sm:$0xff]
        %v794 = vld [vmem:[#allocation7 + $0x700] sm:$0xff]
        %v795 = vld [vmem:[#allocation7 + $0x708] sm:$0xff]
        %v796 = vld [vmem:[#allocation7 + $0x710] sm:$0xff]
        %v797 = vld [vmem:[#allocation7 + $0x718] sm:$0xff]
        %v798 = vld [vmem:[#allocation7 + $0x720] sm:$0xff]
        %v799 = vld [vmem:[#allocation7 + $0x728] sm:$0xff]
        %v800 = vld [vmem:[#allocation7 + $0x730] sm:$0xff]
        %v801 = vld [vmem:[#allocation7 + $0x738] sm:$0xff]
        %v802 = vld [vmem:[#allocation7 + $0x740] sm:$0xff]
        %v803 = vld [vmem:[#allocation7 + $0x748] sm:$0xff]
        %v804 = vld [vmem:[#allocation7 + $0x750] sm:$0xff]
        %v805 = vld [vmem:[#allocation7 + $0x758] sm:$0xff]
        %v806 = vld [vmem:[#allocation7 + $0x760] sm:$0xff]
        %v807 = vld [vmem:[#allocation7 + $0x768] sm:$0xff]
        %v808 = vld [vmem:[#allocation7 + $0x770] sm:$0xff]
        %v809 = vld [vmem:[#allocation7 + $0x778] sm:$0xff]
        %v810 = vld [vmem:[#allocation7 + $0x780] sm:$0xff]
        %v811 = vld [vmem:[#allocation7 + $0x788] sm:$0xff]
        %v812 = vld [vmem:[#allocation7 + $0x790] sm:$0xff]
        %v813 = vld [vmem:[#allocation7 + $0x798] sm:$0xff]
        %v814 = vld [vmem:[#allocation7 + $0x7a0] sm:$0xff]
        %v815 = vld [vmem:[#allocation7 + $0x7a8] sm:$0xff]
        %v816 = vld [vmem:[#allocation7 + $0x7b0] sm:$0xff]
        %v817 = vld [vmem:[#allocation7 + $0x7b8] sm:$0xff]
        %v818 = vld [vmem:[#allocation7 + $0x7c0] sm:$0xff]
        %v819 = vld [vmem:[#allocation7 + $0x7c8] sm:$0xff]
        %v820 = vld [vmem:[#allocation7 + $0x7d0] sm:$0xff]
        %v821 = vld [vmem:[#allocation7 + $0x7d8] sm:$0xff]
        %v822 = vld [vmem:[#allocation7 + $0x7e0] sm:$0xff]
        %v823 = vld [vmem:[#allocation7 + $0x7e8] sm:$0xff]
        %v824 = vld [vmem:[#allocation7 + $0x7f0] sm:$0xff]
        %v825 = vld [vmem:[#allocation7 + $0x7f8] sm:$0xff]
        %v826 = vld [vmem:[#allocation7 + $0x800] sm:$0xff]
        %v827 = vld [vmem:[#allocation7 + $0x808] sm:$0xff]
        %v828 = vld [vmem:[#allocation7 + $0x810] sm:$0xff]
        %v829 = vld [vmem:[#allocation7 + $0x818] sm:$0xff]
        %v830 = vld [vmem:[#allocation7 + $0x820] sm:$0xff]
        %v831 = vld [vmem:[#allocation7 + $0x828] sm:$0xff]
        %v832 = vld [vmem:[#allocation7 + $0x830] sm:$0xff]
        %v833 = vld [vmem:[#allocation7 + $0x838] sm:$0xff]
        %v834 = vld [vmem:[#allocation7 + $0x840] sm:$0xff]
        %v835 = vld [vmem:[#allocation7 + $0x848] sm:$0xff]
        %v836 = vld [vmem:[#allocation7 + $0x850] sm:$0xff]
        %v837 = vld [vmem:[#allocation7 + $0x858] sm:$0xff]
        %v838 = vld [vmem:[#allocation7 + $0x860] sm:$0xff]
        %v839 = vld [vmem:[#allocation7 + $0x868] sm:$0xff]
        %v840 = vld [vmem:[#allocation7 + $0x870] sm:$0xff]
        %v841 = vld [vmem:[#allocation7 + $0x878] sm:$0xff]
        %v842 = vld [vmem:[#allocation7 + $0x880] sm:$0xff]
        %v843 = vld [vmem:[#allocation7 + $0x888] sm:$0xff]
        %v844 = vld [vmem:[#allocation7 + $0x890] sm:$0xff]
        %v845 = vld [vmem:[#allocation7 + $0x898] sm:$0xff]
        %v846 = vld [vmem:[#allocation7 + $0x8a0] sm:$0xff]
        %v847 = vld [vmem:[#allocation7 + $0x8a8] sm:$0xff]
        %v848 = vld [vmem:[#allocation7 + $0x8b0] sm:$0xff]
        %v849 = vld [vmem:[#allocation7 + $0x8b8] sm:$0xff]
        %v850 = vld [vmem:[#allocation7 + $0x8c0] sm:$0xff]
        %v851 = vld [vmem:[#allocation7 + $0x8c8] sm:$0xff]
        %v852 = vld [vmem:[#allocation7 + $0x8d0] sm:$0xff]
        %v853 = vld [vmem:[#allocation7 + $0x8d8] sm:$0xff]
        %v854 = vld [vmem:[#allocation7 + $0x8e0] sm:$0xff]
        %v855 = vld [vmem:[#allocation7 + $0x8e8] sm:$0xff]
        %v856 = vld [vmem:[#allocation7 + $0x8f0] sm:$0xff]
        %v857 = vld [vmem:[#allocation7 + $0x8f8] sm:$0xff]
        %v858 = vunpack.c.l.bf16 %v570
        %v859 = vunpack.c.h.bf16 %v570
        %v860 = vunpack.c.l.bf16 %v571
        %v861 = vunpack.c.h.bf16 %v571
        %v862 = vunpack.c.l.bf16 %v572
        %v863 = vunpack.c.h.bf16 %v572
        %v864 = vunpack.c.l.bf16 %v573
        %v865 = vunpack.c.h.bf16 %v573
        %v866 = vunpack.c.l.bf16 %v574
        %v867 = vunpack.c.h.bf16 %v574
        %v868 = vunpack.c.l.bf16 %v575
        %v869 = vunpack.c.h.bf16 %v575
        %v870 = vunpack.c.l.bf16 %v576
        %v871 = vunpack.c.h.bf16 %v576
        %v872 = vunpack.c.l.bf16 %v577
        %v873 = vunpack.c.h.bf16 %v577
        %v874 = vunpack.c.l.bf16 %v578
        %v875 = vunpack.c.h.bf16 %v578
        %v876 = vunpack.c.l.bf16 %v579
        %v877 = vunpack.c.h.bf16 %v579
        %v878 = vunpack.c.l.bf16 %v580
        %v879 = vunpack.c.h.bf16 %v580
        %v880 = vunpack.c.l.bf16 %v581
        %v881 = vunpack.c.h.bf16 %v581
        %v882 = vunpack.c.l.bf16 %v582
        %v883 = vunpack.c.h.bf16 %v582
        %v884 = vunpack.c.l.bf16 %v583
        %v885 = vunpack.c.h.bf16 %v583
        %v886 = vunpack.c.l.bf16 %v584
        %v887 = vunpack.c.h.bf16 %v584
        %v888 = vunpack.c.l.bf16 %v585
        %v889 = vunpack.c.h.bf16 %v585
        %v890 = vunpack.c.l.bf16 %v586
        %v891 = vunpack.c.h.bf16 %v586
        %v892 = vunpack.c.l.bf16 %v587
        %v893 = vunpack.c.h.bf16 %v587
        %v894 = vunpack.c.l.bf16 %v588
        %v895 = vunpack.c.h.bf16 %v588
        %v896 = vunpack.c.l.bf16 %v589
        %v897 = vunpack.c.h.bf16 %v589
        %v898 = vunpack.c.l.bf16 %v590
        %v899 = vunpack.c.h.bf16 %v590
        %v900 = vunpack.c.l.bf16 %v591
        %v901 = vunpack.c.h.bf16 %v591
        %v902 = vunpack.c.l.bf16 %v592
        %v903 = vunpack.c.h.bf16 %v592
        %v904 = vunpack.c.l.bf16 %v593
        %v905 = vunpack.c.h.bf16 %v593
        %v906 = vunpack.c.l.bf16 %v594
        %v907 = vunpack.c.h.bf16 %v594
        %v908 = vunpack.c.l.bf16 %v595
        %v909 = vunpack.c.h.bf16 %v595
        %v910 = vunpack.c.l.bf16 %v596
        %v911 = vunpack.c.h.bf16 %v596
        %v912 = vunpack.c.l.bf16 %v597
        %v913 = vunpack.c.h.bf16 %v597
        %v914 = vunpack.c.l.bf16 %v598
        %v915 = vunpack.c.h.bf16 %v598
        %v916 = vunpack.c.l.bf16 %v599
        %v917 = vunpack.c.h.bf16 %v599
        %v918 = vunpack.c.l.bf16 %v600
        %v919 = vunpack.c.h.bf16 %v600
        %v920 = vunpack.c.l.bf16 %v601
        %v921 = vunpack.c.h.bf16 %v601
        %v922 = vunpack.c.l.bf16 %v602
        %v923 = vunpack.c.h.bf16 %v602
        %v924 = vunpack.c.l.bf16 %v603
        %v925 = vunpack.c.h.bf16 %v603
        %v926 = vunpack.c.l.bf16 %v604
        %v927 = vunpack.c.h.bf16 %v604
        %v928 = vunpack.c.l.bf16 %v605
        %v929 = vunpack.c.h.bf16 %v605
        %v930 = vunpack.c.l.bf16 %v606
        %v931 = vunpack.c.h.bf16 %v606
        %v932 = vunpack.c.l.bf16 %v607
        %v933 = vunpack.c.h.bf16 %v607
        %v934 = vunpack.c.l.bf16 %v608
        %v935 = vunpack.c.h.bf16 %v608
        %v936 = vunpack.c.l.bf16 %v609
        %v937 = vunpack.c.h.bf16 %v609
        %v938 = vunpack.c.l.bf16 %v610
        %v939 = vunpack.c.h.bf16 %v610
        %v940 = vunpack.c.l.bf16 %v611
        %v941 = vunpack.c.h.bf16 %v611
        %v942 = vunpack.c.l.bf16 %v612
        %v943 = vunpack.c.h.bf16 %v612
        %v944 = vunpack.c.l.bf16 %v613
        %v945 = vunpack.c.h.bf16 %v613
        %v946 = vunpack.c.l.bf16 %v614
        %v947 = vunpack.c.h.bf16 %v614
        %v948 = vunpack.c.l.bf16 %v615
        %v949 = vunpack.c.h.bf16 %v615
        %v950 = vunpack.c.l.bf16 %v616
        %v951 = vunpack.c.h.bf16 %v616
        %v952 = vunpack.c.l.bf16 %v617
        %v953 = vunpack.c.h.bf16 %v617
        %v954 = vunpack.c.l.bf16 %v618
        %v955 = vunpack.c.h.bf16 %v618
        %v956 = vunpack.c.l.bf16 %v619
        %v957 = vunpack.c.h.bf16 %v619
        %v958 = vunpack.c.l.bf16 %v620
        %v959 = vunpack.c.h.bf16 %v620
        %v960 = vunpack.c.l.bf16 %v621
        %v961 = vunpack.c.h.bf16 %v621
        %v962 = vunpack.c.l.bf16 %v622
        %v963 = vunpack.c.h.bf16 %v622
        %v964 = vunpack.c.l.bf16 %v623
        %v965 = vunpack.c.h.bf16 %v623
        %v966 = vunpack.c.l.bf16 %v624
        %v967 = vunpack.c.h.bf16 %v624
        %v968 = vunpack.c.l.bf16 %v625
        %v969 = vunpack.c.h.bf16 %v625
        %v970 = vunpack.c.l.bf16 %v626
        %v971 = vunpack.c.h.bf16 %v626
        %v972 = vunpack.c.l.bf16 %v627
        %v973 = vunpack.c.h.bf16 %v627
        %v974 = vunpack.c.l.bf16 %v628
        %v975 = vunpack.c.h.bf16 %v628
        %v976 = vunpack.c.l.bf16 %v629
        %v977 = vunpack.c.h.bf16 %v629
        %v978 = vunpack.c.l.bf16 %v630
        %v979 = vunpack.c.h.bf16 %v630
        %v980 = vunpack.c.l.bf16 %v631
        %v981 = vunpack.c.h.bf16 %v631
        %v982 = vunpack.c.l.bf16 %v632
        %v983 = vunpack.c.h.bf16 %v632
        %v984 = vunpack.c.l.bf16 %v633
        %v985 = vunpack.c.h.bf16 %v633
        %v986 = vunpack.c.l.bf16 %v634
        %v987 = vunpack.c.h.bf16 %v634
        %v988 = vunpack.c.l.bf16 %v635
        %v989 = vunpack.c.h.bf16 %v635
        %v990 = vunpack.c.l.bf16 %v636
        %v991 = vunpack.c.h.bf16 %v636
        %v992 = vunpack.c.l.bf16 %v637
        %v993 = vunpack.c.h.bf16 %v637
        %v994 = vunpack.c.l.bf16 %v638
        %v995 = vunpack.c.h.bf16 %v638
        %v996 = vunpack.c.l.bf16 %v639
        %v997 = vunpack.c.h.bf16 %v639
        %v998 = vunpack.c.l.bf16 %v640
        %v999 = vunpack.c.h.bf16 %v640
        %v1000 = vunpack.c.l.bf16 %v641
        %v1001 = vunpack.c.h.bf16 %v641
        %v1002 = vunpack.c.l.bf16 %v642
        %v1003 = vunpack.c.h.bf16 %v642
        %v1004 = vunpack.c.l.bf16 %v643
        %v1005 = vunpack.c.h.bf16 %v643
        %v1006 = vunpack.c.l.bf16 %v644
        %v1007 = vunpack.c.h.bf16 %v644
        %v1008 = vunpack.c.l.bf16 %v645
        %v1009 = vunpack.c.h.bf16 %v645
        %v1010 = vunpack.c.l.bf16 %v646
        %v1011 = vunpack.c.h.bf16 %v646
        %v1012 = vunpack.c.l.bf16 %v647
        %v1013 = vunpack.c.h.bf16 %v647
        %v1014 = vunpack.c.l.bf16 %v648
        %v1015 = vunpack.c.h.bf16 %v648
        %v1016 = vunpack.c.l.bf16 %v649
        %v1017 = vunpack.c.h.bf16 %v649
        %v1018 = vunpack.c.l.bf16 %v650
        %v1019 = vunpack.c.h.bf16 %v650
        %v1020 = vunpack.c.l.bf16 %v651
        %v1021 = vunpack.c.h.bf16 %v651
        %v1022 = vunpack.c.l.bf16 %v652
        %v1023 = vunpack.c.h.bf16 %v652
        %v1024 = vunpack.c.l.bf16 %v653
        %v1025 = vunpack.c.h.bf16 %v653
        %v1026 = vunpack.c.l.bf16 %v654
        %v1027 = vunpack.c.h.bf16 %v654
        %v1028 = vunpack.c.l.bf16 %v655
        %v1029 = vunpack.c.h.bf16 %v655
        %v1030 = vunpack.c.l.bf16 %v656
        %v1031 = vunpack.c.h.bf16 %v656
        %v1032 = vunpack.c.l.bf16 %v657
        %v1033 = vunpack.c.h.bf16 %v657
        %v1034 = vunpack.c.l.bf16 %v658
        %v1035 = vunpack.c.h.bf16 %v658
        %v1036 = vunpack.c.l.bf16 %v659
        %v1037 = vunpack.c.h.bf16 %v659
        %v1038 = vunpack.c.l.bf16 %v660
        %v1039 = vunpack.c.h.bf16 %v660
        %v1040 = vunpack.c.l.bf16 %v661
        %v1041 = vunpack.c.h.bf16 %v661
        %v1042 = vunpack.c.l.bf16 %v662
        %v1043 = vunpack.c.h.bf16 %v662
        %v1044 = vunpack.c.l.bf16 %v663
        %v1045 = vunpack.c.h.bf16 %v663
        %v1046 = vunpack.c.l.bf16 %v664
        %v1047 = vunpack.c.h.bf16 %v664
        %v1048 = vunpack.c.l.bf16 %v665
        %v1049 = vunpack.c.h.bf16 %v665
        %v1050 = vunpack.c.l.bf16 %v666
        %v1051 = vunpack.c.h.bf16 %v666
        %v1052 = vunpack.c.l.bf16 %v667
        %v1053 = vunpack.c.h.bf16 %v667
        %v1054 = vunpack.c.l.bf16 %v668
        %v1055 = vunpack.c.h.bf16 %v668
        %v1056 = vunpack.c.l.bf16 %v669
        %v1057 = vunpack.c.h.bf16 %v669
        %v1058 = vunpack.c.l.bf16 %v670
        %v1059 = vunpack.c.h.bf16 %v670
        %v1060 = vunpack.c.l.bf16 %v671
        %v1061 = vunpack.c.h.bf16 %v671
        %v1062 = vunpack.c.l.bf16 %v672
        %v1063 = vunpack.c.h.bf16 %v672
        %v1064 = vunpack.c.l.bf16 %v673
        %v1065 = vunpack.c.h.bf16 %v673
        %v1066 = vunpack.c.l.bf16 %v674
        %v1067 = vunpack.c.h.bf16 %v674
        %v1068 = vunpack.c.l.bf16 %v675
        %v1069 = vunpack.c.h.bf16 %v675
        %v1070 = vunpack.c.l.bf16 %v676
        %v1071 = vunpack.c.h.bf16 %v676
        %v1072 = vunpack.c.l.bf16 %v677
        %v1073 = vunpack.c.h.bf16 %v677
        %v1074 = vunpack.c.l.bf16 %v678
        %v1075 = vunpack.c.h.bf16 %v678
        %v1076 = vunpack.c.l.bf16 %v679
        %v1077 = vunpack.c.h.bf16 %v679
        %v1078 = vunpack.c.l.bf16 %v680
        %v1079 = vunpack.c.h.bf16 %v680
        %v1080 = vunpack.c.l.bf16 %v681
        %v1081 = vunpack.c.h.bf16 %v681
        %v1082 = vunpack.c.l.bf16 %v682
        %v1083 = vunpack.c.h.bf16 %v682
        %v1084 = vunpack.c.l.bf16 %v683
        %v1085 = vunpack.c.h.bf16 %v683
        %v1086 = vunpack.c.l.bf16 %v684
        %v1087 = vunpack.c.h.bf16 %v684
        %v1088 = vunpack.c.l.bf16 %v685
        %v1089 = vunpack.c.h.bf16 %v685
        %v1090 = vunpack.c.l.bf16 %v686
        %v1091 = vunpack.c.h.bf16 %v686
        %v1092 = vunpack.c.l.bf16 %v687
        %v1093 = vunpack.c.h.bf16 %v687
        %v1094 = vunpack.c.l.bf16 %v688
        %v1095 = vunpack.c.h.bf16 %v688
        %v1096 = vunpack.c.l.bf16 %v689
        %v1097 = vunpack.c.h.bf16 %v689
        %v1098 = vunpack.c.l.bf16 %v690
        %v1099 = vunpack.c.h.bf16 %v690
        %v1100 = vunpack.c.l.bf16 %v691
        %v1101 = vunpack.c.h.bf16 %v691
        %v1102 = vunpack.c.l.bf16 %v692
        %v1103 = vunpack.c.h.bf16 %v692
        %v1104 = vunpack.c.l.bf16 %v693
        %v1105 = vunpack.c.h.bf16 %v693
        %v1106 = vunpack.c.l.bf16 %v694
        %v1107 = vunpack.c.h.bf16 %v694
        %v1108 = vunpack.c.l.bf16 %v695
        %v1109 = vunpack.c.h.bf16 %v695
        %v1110 = vunpack.c.l.bf16 %v696
        %v1111 = vunpack.c.h.bf16 %v696
        %v1112 = vunpack.c.l.bf16 %v697
        %v1113 = vunpack.c.h.bf16 %v697
        %v1114 = vunpack.c.l.bf16 %v698
        %v1115 = vunpack.c.h.bf16 %v698
        %v1116 = vunpack.c.l.bf16 %v699
        %v1117 = vunpack.c.h.bf16 %v699
        %v1118 = vunpack.c.l.bf16 %v700
        %v1119 = vunpack.c.h.bf16 %v700
        %v1120 = vunpack.c.l.bf16 %v701
        %v1121 = vunpack.c.h.bf16 %v701
        %v1122 = vunpack.c.l.bf16 %v702
        %v1123 = vunpack.c.h.bf16 %v702
        %v1124 = vunpack.c.l.bf16 %v703
        %v1125 = vunpack.c.h.bf16 %v703
        %v1126 = vunpack.c.l.bf16 %v704
        %v1127 = vunpack.c.h.bf16 %v704
        %v1128 = vunpack.c.l.bf16 %v705
        %v1129 = vunpack.c.h.bf16 %v705
        %v1130 = vunpack.c.l.bf16 %v706
        %v1131 = vunpack.c.h.bf16 %v706
        %v1132 = vunpack.c.l.bf16 %v707
        %v1133 = vunpack.c.h.bf16 %v707
        %v1134 = vunpack.c.l.bf16 %v708
        %v1135 = vunpack.c.h.bf16 %v708
        %v1136 = vunpack.c.l.bf16 %v709
        %v1137 = vunpack.c.h.bf16 %v709
        %v1138 = vunpack.c.l.bf16 %v710
        %v1139 = vunpack.c.h.bf16 %v710
        %v1140 = vunpack.c.l.bf16 %v711
        %v1141 = vunpack.c.h.bf16 %v711
        %v1142 = vunpack.c.l.bf16 %v712
        %v1143 = vunpack.c.h.bf16 %v712
        %v1144 = vunpack.c.l.bf16 %v713
        %v1145 = vunpack.c.h.bf16 %v713
        %v1146 = vunpack.c.l.bf16 %v714
        %v1147 = vunpack.c.h.bf16 %v714
        %v1148 = vunpack.c.l.bf16 %v715
        %v1149 = vunpack.c.h.bf16 %v715
        %v1150 = vunpack.c.l.bf16 %v716
        %v1151 = vunpack.c.h.bf16 %v716
        %v1152 = vunpack.c.l.bf16 %v717
        %v1153 = vunpack.c.h.bf16 %v717
        %v1154 = vunpack.c.l.bf16 %v718
        %v1155 = vunpack.c.h.bf16 %v718
        %v1156 = vunpack.c.l.bf16 %v719
        %v1157 = vunpack.c.h.bf16 %v719
        %v1158 = vunpack.c.l.bf16 %v720
        %v1159 = vunpack.c.h.bf16 %v720
        %v1160 = vunpack.c.l.bf16 %v721
        %v1161 = vunpack.c.h.bf16 %v721
        %v1162 = vunpack.c.l.bf16 %v722
        %v1163 = vunpack.c.h.bf16 %v722
        %v1164 = vunpack.c.l.bf16 %v723
        %v1165 = vunpack.c.h.bf16 %v723
        %v1166 = vunpack.c.l.bf16 %v724
        %v1167 = vunpack.c.h.bf16 %v724
        %v1168 = vunpack.c.l.bf16 %v725
        %v1169 = vunpack.c.h.bf16 %v725
        %v1170 = vunpack.c.l.bf16 %v726
        %v1171 = vunpack.c.h.bf16 %v726
        %v1172 = vunpack.c.l.bf16 %v727
        %v1173 = vunpack.c.h.bf16 %v727
        %v1174 = vunpack.c.l.bf16 %v728
        %v1175 = vunpack.c.h.bf16 %v728
        %v1176 = vunpack.c.l.bf16 %v729
        %v1177 = vunpack.c.h.bf16 %v729
        %v1178 = vunpack.c.l.bf16 %v730
        %v1179 = vunpack.c.h.bf16 %v730
        %v1180 = vunpack.c.l.bf16 %v731
        %v1181 = vunpack.c.h.bf16 %v731
        %v1182 = vunpack.c.l.bf16 %v732
        %v1183 = vunpack.c.h.bf16 %v732
        %v1184 = vunpack.c.l.bf16 %v733
        %v1185 = vunpack.c.h.bf16 %v733
        %v1186 = vunpack.c.l.bf16 %v734
        %v1187 = vunpack.c.h.bf16 %v734
        %v1188 = vunpack.c.l.bf16 %v735
        %v1189 = vunpack.c.h.bf16 %v735
        %v1190 = vunpack.c.l.bf16 %v736
        %v1191 = vunpack.c.h.bf16 %v736
        %v1192 = vunpack.c.l.bf16 %v737
        %v1193 = vunpack.c.h.bf16 %v737
        %v1194 = vunpack.c.l.bf16 %v738
        %v1195 = vunpack.c.h.bf16 %v738
        %v1196 = vunpack.c.l.bf16 %v739
        %v1197 = vunpack.c.h.bf16 %v739
        %v1198 = vunpack.c.l.bf16 %v740
        %v1199 = vunpack.c.h.bf16 %v740
        %v1200 = vunpack.c.l.bf16 %v741
        %v1201 = vunpack.c.h.bf16 %v741
        %v1202 = vunpack.c.l.bf16 %v742
        %v1203 = vunpack.c.h.bf16 %v742
        %v1204 = vunpack.c.l.bf16 %v743
        %v1205 = vunpack.c.h.bf16 %v743
        %v1206 = vunpack.c.l.bf16 %v744
        %v1207 = vunpack.c.h.bf16 %v744
        %v1208 = vunpack.c.l.bf16 %v745
        %v1209 = vunpack.c.h.bf16 %v745
        %v1210 = vunpack.c.l.bf16 %v746
        %v1211 = vunpack.c.h.bf16 %v746
        %v1212 = vunpack.c.l.bf16 %v747
        %v1213 = vunpack.c.h.bf16 %v747
        %v1214 = vunpack.c.l.bf16 %v748
        %v1215 = vunpack.c.h.bf16 %v748
        %v1216 = vunpack.c.l.bf16 %v749
        %v1217 = vunpack.c.h.bf16 %v749
        %v1218 = vunpack.c.l.bf16 %v750
        %v1219 = vunpack.c.h.bf16 %v750
        %v1220 = vunpack.c.l.bf16 %v751
        %v1221 = vunpack.c.h.bf16 %v751
        %v1222 = vunpack.c.l.bf16 %v752
        %v1223 = vunpack.c.h.bf16 %v752
        %v1224 = vunpack.c.l.bf16 %v753
        %v1225 = vunpack.c.h.bf16 %v753
        %v1226 = vunpack.c.l.bf16 %v754
        %v1227 = vunpack.c.h.bf16 %v754
        %v1228 = vunpack.c.l.bf16 %v755
        %v1229 = vunpack.c.h.bf16 %v755
        %v1230 = vunpack.c.l.bf16 %v756
        %v1231 = vunpack.c.h.bf16 %v756
        %v1232 = vunpack.c.l.bf16 %v757
        %v1233 = vunpack.c.h.bf16 %v757
        %v1234 = vunpack.c.l.bf16 %v758
        %v1235 = vunpack.c.h.bf16 %v758
        %v1236 = vunpack.c.l.bf16 %v759
        %v1237 = vunpack.c.h.bf16 %v759
        %v1238 = vunpack.c.l.bf16 %v760
        %v1239 = vunpack.c.h.bf16 %v760
        %v1240 = vunpack.c.l.bf16 %v761
        %v1241 = vunpack.c.h.bf16 %v761
        %v1242 = vunpack.c.l.bf16 %v762
        %v1243 = vunpack.c.h.bf16 %v762
        %v1244 = vunpack.c.l.bf16 %v763
        %v1245 = vunpack.c.h.bf16 %v763
        %v1246 = vunpack.c.l.bf16 %v764
        %v1247 = vunpack.c.h.bf16 %v764
        %v1248 = vunpack.c.l.bf16 %v765
        %v1249 = vunpack.c.h.bf16 %v765
        %v1250 = vunpack.c.l.bf16 %v766
        %v1251 = vunpack.c.h.bf16 %v766
        %v1252 = vunpack.c.l.bf16 %v767
        %v1253 = vunpack.c.h.bf16 %v767
        %v1254 = vunpack.c.l.bf16 %v768
        %v1255 = vunpack.c.h.bf16 %v768
        %v1256 = vunpack.c.l.bf16 %v769
        %v1257 = vunpack.c.h.bf16 %v769
        %v1258 = vunpack.c.l.bf16 %v770
        %v1259 = vunpack.c.h.bf16 %v770
        %v1260 = vunpack.c.l.bf16 %v771
        %v1261 = vunpack.c.h.bf16 %v771
        %v1262 = vunpack.c.l.bf16 %v772
        %v1263 = vunpack.c.h.bf16 %v772
        %v1264 = vunpack.c.l.bf16 %v773
        %v1265 = vunpack.c.h.bf16 %v773
        %v1266 = vunpack.c.l.bf16 %v774
        %v1267 = vunpack.c.h.bf16 %v774
        %v1268 = vunpack.c.l.bf16 %v775
        %v1269 = vunpack.c.h.bf16 %v775
        %v1270 = vunpack.c.l.bf16 %v776
        %v1271 = vunpack.c.h.bf16 %v776
        %v1272 = vunpack.c.l.bf16 %v777
        %v1273 = vunpack.c.h.bf16 %v777
        %v1274 = vunpack.c.l.bf16 %v778
        %v1275 = vunpack.c.h.bf16 %v778
        %v1276 = vunpack.c.l.bf16 %v779
        %v1277 = vunpack.c.h.bf16 %v779
        %v1278 = vunpack.c.l.bf16 %v780
        %v1279 = vunpack.c.h.bf16 %v780
        %v1280 = vunpack.c.l.bf16 %v781
        %v1281 = vunpack.c.h.bf16 %v781
        %v1282 = vunpack.c.l.bf16 %v782
        %v1283 = vunpack.c.h.bf16 %v782
        %v1284 = vunpack.c.l.bf16 %v783
        %v1285 = vunpack.c.h.bf16 %v783
        %v1286 = vunpack.c.l.bf16 %v784
        %v1287 = vunpack.c.h.bf16 %v784
        %v1288 = vunpack.c.l.bf16 %v785
        %v1289 = vunpack.c.h.bf16 %v785
        %v1290 = vunpack.c.l.bf16 %v786
        %v1291 = vunpack.c.h.bf16 %v786
        %v1292 = vunpack.c.l.bf16 %v787
        %v1293 = vunpack.c.h.bf16 %v787
        %v1294 = vunpack.c.l.bf16 %v788
        %v1295 = vunpack.c.h.bf16 %v788
        %v1296 = vunpack.c.l.bf16 %v789
        %v1297 = vunpack.c.h.bf16 %v789
        %v1298 = vunpack.c.l.bf16 %v790
        %v1299 = vunpack.c.h.bf16 %v790
        %v1300 = vunpack.c.l.bf16 %v791
        %v1301 = vunpack.c.h.bf16 %v791
        %v1302 = vunpack.c.l.bf16 %v792
        %v1303 = vunpack.c.h.bf16 %v792
        %v1304 = vunpack.c.l.bf16 %v793
        %v1305 = vunpack.c.h.bf16 %v793
        %v1306 = vunpack.c.l.bf16 %v794
        %v1307 = vunpack.c.h.bf16 %v794
        %v1308 = vunpack.c.l.bf16 %v795
        %v1309 = vunpack.c.h.bf16 %v795
        %v1310 = vunpack.c.l.bf16 %v796
        %v1311 = vunpack.c.h.bf16 %v796
        %v1312 = vunpack.c.l.bf16 %v797
        %v1313 = vunpack.c.h.bf16 %v797
        %v1314 = vunpack.c.l.bf16 %v798
        %v1315 = vunpack.c.h.bf16 %v798
        %v1316 = vunpack.c.l.bf16 %v799
        %v1317 = vunpack.c.h.bf16 %v799
        %v1318 = vunpack.c.l.bf16 %v800
        %v1319 = vunpack.c.h.bf16 %v800
        %v1320 = vunpack.c.l.bf16 %v801
        %v1321 = vunpack.c.h.bf16 %v801
        %v1322 = vunpack.c.l.bf16 %v802
        %v1323 = vunpack.c.h.bf16 %v802
        %v1324 = vunpack.c.l.bf16 %v803
        %v1325 = vunpack.c.h.bf16 %v803
        %v1326 = vunpack.c.l.bf16 %v804
        %v1327 = vunpack.c.h.bf16 %v804
        %v1328 = vunpack.c.l.bf16 %v805
        %v1329 = vunpack.c.h.bf16 %v805
        %v1330 = vunpack.c.l.bf16 %v806
        %v1331 = vunpack.c.h.bf16 %v806
        %v1332 = vunpack.c.l.bf16 %v807
        %v1333 = vunpack.c.h.bf16 %v807
        %v1334 = vunpack.c.l.bf16 %v808
        %v1335 = vunpack.c.h.bf16 %v808
        %v1336 = vunpack.c.l.bf16 %v809
        %v1337 = vunpack.c.h.bf16 %v809
        %v1338 = vunpack.c.l.bf16 %v810
        %v1339 = vunpack.c.h.bf16 %v810
        %v1340 = vunpack.c.l.bf16 %v811
        %v1341 = vunpack.c.h.bf16 %v811
        %v1342 = vunpack.c.l.bf16 %v812
        %v1343 = vunpack.c.h.bf16 %v812
        %v1344 = vunpack.c.l.bf16 %v813
        %v1345 = vunpack.c.h.bf16 %v813
        %v1346 = vunpack.c.l.bf16 %v814
        %v1347 = vunpack.c.h.bf16 %v814
        %v1348 = vunpack.c.l.bf16 %v815
        %v1349 = vunpack.c.h.bf16 %v815
        %v1350 = vunpack.c.l.bf16 %v816
        %v1351 = vunpack.c.h.bf16 %v816
        %v1352 = vunpack.c.l.bf16 %v817
        %v1353 = vunpack.c.h.bf16 %v817
        %v1354 = vunpack.c.l.bf16 %v818
        %v1355 = vunpack.c.h.bf16 %v818
        %v1356 = vunpack.c.l.bf16 %v819
        %v1357 = vunpack.c.h.bf16 %v819
        %v1358 = vunpack.c.l.bf16 %v820
        %v1359 = vunpack.c.h.bf16 %v820
        %v1360 = vunpack.c.l.bf16 %v821
        %v1361 = vunpack.c.h.bf16 %v821
        %v1362 = vunpack.c.l.bf16 %v822
        %v1363 = vunpack.c.h.bf16 %v822
        %v1364 = vunpack.c.l.bf16 %v823
        %v1365 = vunpack.c.h.bf16 %v823
        %v1366 = vunpack.c.l.bf16 %v824
        %v1367 = vunpack.c.h.bf16 %v824
        %v1368 = vunpack.c.l.bf16 %v825
        %v1369 = vunpack.c.h.bf16 %v825
        %v1370 = vunpack.c.l.bf16 %v826
        %v1371 = vunpack.c.h.bf16 %v826
        %v1372 = vunpack.c.l.bf16 %v827
        %v1373 = vunpack.c.h.bf16 %v827
        %v1374 = vunpack.c.l.bf16 %v828
        %v1375 = vunpack.c.h.bf16 %v828
        %v1376 = vunpack.c.l.bf16 %v829
        %v1377 = vunpack.c.h.bf16 %v829
        %v1378 = vunpack.c.l.bf16 %v830
        %v1379 = vunpack.c.h.bf16 %v830
        %v1380 = vunpack.c.l.bf16 %v831
        %v1381 = vunpack.c.h.bf16 %v831
        %v1382 = vunpack.c.l.bf16 %v832
        %v1383 = vunpack.c.h.bf16 %v832
        %v1384 = vunpack.c.l.bf16 %v833
        %v1385 = vunpack.c.h.bf16 %v833
        %v1386 = vunpack.c.l.bf16 %v834
        %v1387 = vunpack.c.h.bf16 %v834
        %v1388 = vunpack.c.l.bf16 %v835
        %v1389 = vunpack.c.h.bf16 %v835
        %v1390 = vunpack.c.l.bf16 %v836
        %v1391 = vunpack.c.h.bf16 %v836
        %v1392 = vunpack.c.l.bf16 %v837
        %v1393 = vunpack.c.h.bf16 %v837
        %v1394 = vunpack.c.l.bf16 %v838
        %v1395 = vunpack.c.h.bf16 %v838
        %v1396 = vunpack.c.l.bf16 %v839
        %v1397 = vunpack.c.h.bf16 %v839
        %v1398 = vunpack.c.l.bf16 %v840
        %v1399 = vunpack.c.h.bf16 %v840
        %v1400 = vunpack.c.l.bf16 %v841
        %v1401 = vunpack.c.h.bf16 %v841
        %v1402 = vunpack.c.l.bf16 %v842
        %v1403 = vunpack.c.h.bf16 %v842
        %v1404 = vunpack.c.l.bf16 %v843
        %v1405 = vunpack.c.h.bf16 %v843
        %v1406 = vunpack.c.l.bf16 %v844
        %v1407 = vunpack.c.h.bf16 %v844
        %v1408 = vunpack.c.l.bf16 %v845
        %v1409 = vunpack.c.h.bf16 %v845
        %v1410 = vunpack.c.l.bf16 %v846
        %v1411 = vunpack.c.h.bf16 %v846
        %v1412 = vunpack.c.l.bf16 %v847
        %v1413 = vunpack.c.h.bf16 %v847
        %v1414 = vunpack.c.l.bf16 %v848
        %v1415 = vunpack.c.h.bf16 %v848
        %v1416 = vunpack.c.l.bf16 %v849
        %v1417 = vunpack.c.h.bf16 %v849
        %v1418 = vunpack.c.l.bf16 %v850
        %v1419 = vunpack.c.h.bf16 %v850
        %v1420 = vunpack.c.l.bf16 %v851
        %v1421 = vunpack.c.h.bf16 %v851
        %v1422 = vunpack.c.l.bf16 %v852
        %v1423 = vunpack.c.h.bf16 %v852
        %v1424 = vunpack.c.l.bf16 %v853
        %v1425 = vunpack.c.h.bf16 %v853
        %v1426 = vunpack.c.l.bf16 %v854
        %v1427 = vunpack.c.h.bf16 %v854
        %v1428 = vunpack.c.l.bf16 %v855
        %v1429 = vunpack.c.h.bf16 %v855
        %v1430 = vunpack.c.l.bf16 %v856
        %v1431 = vunpack.c.h.bf16 %v856
        %v1432 = vunpack.c.l.bf16 %v857
        %v1433 = vunpack.c.h.bf16 %v857
        %v1434 = vld [vmem:[#allocation8] sm:$0x3f]
        %v1436 = vperm.slane %v1434, 0
        %v1437 = vperm.slane %v1434, 1
        %v1438 = vperm.slane %v1434, 2
        %v1439 = vperm.slane %v1434, 3
        %v1440 = vperm.slane %v1434, 4
        %v1441 = vperm.slane %v1434, 5
        %1448 = vmatpush.msra.mxu0 %v948
        %1449 = vmatpush.msra.mxu0 %v942
        %1450 = vmatpush.msra.mxu0 %v936
        %1451 = vmatpush.msra.mxu0 %v930
        %1452 = vmatpush.msra.mxu0 %v924
        %1453 = vmatpush.msra.mxu0 %v918
        %1454 = vmatpush.msra.mxu0 %v912
        %1455 = vmatpush.msra.mxu0 %v906
        %1456 = vmatpush.msra.mxu0 %v900
        %1457 = vmatpush.msra.mxu0 %v894
        %1458 = vmatpush.msra.mxu0 %v888
        %1459 = vmatpush.msra.mxu0 %v882
        %1460 = vmatpush.msra.mxu0 %v876
        %1461 = vmatpush.msra.mxu0 %v870
        %1462 = vmatpush.msra.mxu0 %v864
        %1463 = vmatpush.msra.mxu0 %v858
        %1464 = vmatmul.f32.gmra.mxu0 %v546
        %v1465 = vpop.f32.mrf.mxu0
        %v1466 = vadd.f32 %v1436, %v1465
        %1467 = vmatmul.f32.gmra.mxu0 %v552
        %v1468 = vpop.f32.mrf.mxu0
        %v1469 = vadd.f32 %v1436, %v1468
        %1470 = vdwg.mxu0
        %1471 = vmatpush.msra.mxu0 %v1044
        %1472 = vmatpush.msra.mxu0 %v1038
        %1473 = vmatpush.msra.mxu0 %v1032
        %1474 = vmatpush.msra.mxu0 %v1026
        %1475 = vmatpush.msra.mxu0 %v1020
        %1476 = vmatpush.msra.mxu0 %v1014
        %1477 = vmatpush.msra.mxu0 %v1008
        %1478 = vmatpush.msra.mxu0 %v1002
        %1479 = vmatpush.msra.mxu0 %v996
        %1480 = vmatpush.msra.mxu0 %v990
        %1481 = vmatpush.msra.mxu0 %v984
        %1482 = vmatpush.msra.mxu0 %v978
        %1483 = vmatpush.msra.mxu0 %v972
        %1484 = vmatpush.msra.mxu0 %v966
        %1485 = vmatpush.msra.mxu0 %v960
        %1486 = vmatpush.msra.mxu0 %v954
        %1487 = vmatmul.f32.gmra.mxu0 %v547
        %v1488 = vpop.f32.mrf.mxu0
        %v1489 = vadd.f32 %v1466, %v1488
        %1490 = vmatmul.f32.gmra.mxu0 %v553
        %v1491 = vpop.f32.mrf.mxu0
        %v1492 = vadd.f32 %v1469, %v1491
        %1493 = vdwg.mxu0
        %1494 = vmatpush.msra.mxu0 %v1140
        %1495 = vmatpush.msra.mxu0 %v1134
        %1496 = vmatpush.msra.mxu0 %v1128
        %1497 = vmatpush.msra.mxu0 %v1122
        %1498 = vmatpush.msra.mxu0 %v1116
        %1499 = vmatpush.msra.mxu0 %v1110
        %1500 = vmatpush.msra.mxu0 %v1104
        %1501 = vmatpush.msra.mxu0 %v1098
        %1502 = vmatpush.msra.mxu0 %v1092
        %1503 = vmatpush.msra.mxu0 %v1086
        %1504 = vmatpush.msra.mxu0 %v1080
        %1505 = vmatpush.msra.mxu0 %v1074
        %1506 = vmatpush.msra.mxu0 %v1068
        %1507 = vmatpush.msra.mxu0 %v1062
        %1508 = vmatpush.msra.mxu0 %v1056
        %1509 = vmatpush.msra.mxu0 %v1050
        %1510 = vmatmul.f32.gmra.mxu0 %v548
        %v1511 = vpop.f32.mrf.mxu0
        %v1512 = vadd.f32 %v1489, %v1511
        %1513 = vmatmul.f32.gmra.mxu0 %v554
        %v1514 = vpop.f32.mrf.mxu0
        %v1515 = vadd.f32 %v1492, %v1514
        %1516 = vdwg.mxu0
        %1517 = vmatpush.msra.mxu0 %v1236
        %1518 = vmatpush.msra.mxu0 %v1230
        %1519 = vmatpush.msra.mxu0 %v1224
        %1520 = vmatpush.msra.mxu0 %v1218
        %1521 = vmatpush.msra.mxu0 %v1212
        %1522 = vmatpush.msra.mxu0 %v1206
        %1523 = vmatpush.msra.mxu0 %v1200
        %1524 = vmatpush.msra.mxu0 %v1194
        %1525 = vmatpush.msra.mxu0 %v1188
        %1526 = vmatpush.msra.mxu0 %v1182
        %1527 = vmatpush.msra.mxu0 %v1176
        %1528 = vmatpush.msra.mxu0 %v1170
        %1529 = vmatpush.msra.mxu0 %v1164
        %1530 = vmatpush.msra.mxu0 %v1158
        %1531 = vmatpush.msra.mxu0 %v1152
        %1532 = vmatpush.msra.mxu0 %v1146
        %1533 = vmatmul.f32.gmra.mxu0 %v549
        %v1534 = vpop.f32.mrf.mxu0
        %v1535 = vadd.f32 %v1512, %v1534
        %1536 = vmatmul.f32.gmra.mxu0 %v555
        %v1537 = vpop.f32.mrf.mxu0
        %v1538 = vadd.f32 %v1515, %v1537
        %1539 = vdwg.mxu0
        %1540 = vmatpush.msra.mxu0 %v1332
        %1541 = vmatpush.msra.mxu0 %v1326
        %1542 = vmatpush.msra.mxu0 %v1320
        %1543 = vmatpush.msra.mxu0 %v1314
        %1544 = vmatpush.msra.mxu0 %v1308
        %1545 = vmatpush.msra.mxu0 %v1302
        %1546 = vmatpush.msra.mxu0 %v1296
        %1547 = vmatpush.msra.mxu0 %v1290
        %1548 = vmatpush.msra.mxu0 %v1284
        %1549 = vmatpush.msra.mxu0 %v1278
        %1550 = vmatpush.msra.mxu0 %v1272
        %1551 = vmatpush.msra.mxu0 %v1266
        %1552 = vmatpush.msra.mxu0 %v1260
        %1553 = vmatpush.msra.mxu0 %v1254
        %1554 = vmatpush.msra.mxu0 %v1248
        %1555 = vmatpush.msra.mxu0 %v1242
        %1556 = vmatmul.f32.gmra.mxu0 %v550
        %v1557 = vpop.f32.mrf.mxu0
        %v1558 = vadd.f32 %v1535, %v1557
        %1559 = vmatmul.f32.gmra.mxu0 %v556
        %v1560 = vpop.f32.mrf.mxu0
        %v1561 = vadd.f32 %v1538, %v1560
        %1562 = vdwg.mxu0
        %1563 = vmatpush.msra.mxu0 %v1428
        %1564 = vmatpush.msra.mxu0 %v1422
        %1565 = vmatpush.msra.mxu0 %v1416
        %1566 = vmatpush.msra.mxu0 %v1410
        %1567 = vmatpush.msra.mxu0 %v1404
        %1568 = vmatpush.msra.mxu0 %v1398
        %1569 = vmatpush.msra.mxu0 %v1392
        %1570 = vmatpush.msra.mxu0 %v1386
        %1571 = vmatpush.msra.mxu0 %v1380
        %1572 = vmatpush.msra.mxu0 %v1374
        %1573 = vmatpush.msra.mxu0 %v1368
        %1574 = vmatpush.msra.mxu0 %v1362
        %1575 = vmatpush.msra.mxu0 %v1356
        %1576 = vmatpush.msra.mxu0 %v1350
        %1577 = vmatpush.msra.mxu0 %v1344
        %1578 = vmatpush.msra.mxu0 %v1338
        %1579 = vmatmul.f32.gmra.mxu0 %v551
        %v1580 = vpop.f32.mrf.mxu0
        %v1581 = vadd.f32 %v1558, %v1580
        %1582 = vmatmul.f32.gmra.mxu0 %v557
        %v1583 = vpop.f32.mrf.mxu0
        %v1584 = vadd.f32 %v1561, %v1583
        %1585 = vdwg.mxu0
        %1586 = vmatpush.msra.mxu0 %v949
        %1587 = vmatpush.msra.mxu0 %v943
        %1588 = vmatpush.msra.mxu0 %v937
        %1589 = vmatpush.msra.mxu0 %v931
        %1590 = vmatpush.msra.mxu0 %v925
        %1591 = vmatpush.msra.mxu0 %v919
        %1592 = vmatpush.msra.mxu0 %v913
        %1593 = vmatpush.msra.mxu0 %v907
        %1594 = vmatpush.msra.mxu0 %v901
        %1595 = vmatpush.msra.mxu0 %v895
        %1596 = vmatpush.msra.mxu0 %v889
        %1597 = vmatpush.msra.mxu0 %v883
        %1598 = vmatpush.msra.mxu0 %v877
        %1599 = vmatpush.msra.mxu0 %v871
        %1600 = vmatpush.msra.mxu0 %v865
        %1601 = vmatpush.msra.mxu0 %v859
        %1602 = vmatmul.f32.gmra.mxu0 %v546
        %v1603 = vpop.f32.mrf.mxu0
        %v1604 = vadd.f32 %v1437, %v1603
        %1605 = vmatmul.f32.gmra.mxu0 %v552
        %v1606 = vpop.f32.mrf.mxu0
        %v1607 = vadd.f32 %v1437, %v1606
        %1608 = vdwg.mxu0
        %1609 = vmatpush.msra.mxu0 %v1045
        %1610 = vmatpush.msra.mxu0 %v1039
        %1611 = vmatpush.msra.mxu0 %v1033
        %1612 = vmatpush.msra.mxu0 %v1027
        %1613 = vmatpush.msra.mxu0 %v1021
        %1614 = vmatpush.msra.mxu0 %v1015
        %1615 = vmatpush.msra.mxu0 %v1009
        %1616 = vmatpush.msra.mxu0 %v1003
        %1617 = vmatpush.msra.mxu0 %v997
        %1618 = vmatpush.msra.mxu0 %v991
        %1619 = vmatpush.msra.mxu0 %v985
        %1620 = vmatpush.msra.mxu0 %v979
        %1621 = vmatpush.msra.mxu0 %v973
        %1622 = vmatpush.msra.mxu0 %v967
        %1623 = vmatpush.msra.mxu0 %v961
        %1624 = vmatpush.msra.mxu0 %v955
        %1625 = vmatmul.f32.gmra.mxu0 %v547
        %v1626 = vpop.f32.mrf.mxu0
        %v1627 = vadd.f32 %v1604, %v1626
        %1628 = vmatmul.f32.gmra.mxu0 %v553
        %v1629 = vpop.f32.mrf.mxu0
        %v1630 = vadd.f32 %v1607, %v1629
        %1631 = vdwg.mxu0
        %1632 = vmatpush.msra.mxu0 %v1141
        %1633 = vmatpush.msra.mxu0 %v1135
        %1634 = vmatpush.msra.mxu0 %v1129
        %1635 = vmatpush.msra.mxu0 %v1123
        %1636 = vmatpush.msra.mxu0 %v1117
        %1637 = vmatpush.msra.mxu0 %v1111
        %1638 = vmatpush.msra.mxu0 %v1105
        %1639 = vmatpush.msra.mxu0 %v1099
        %1640 = vmatpush.msra.mxu0 %v1093
        %1641 = vmatpush.msra.mxu0 %v1087
        %1642 = vmatpush.msra.mxu0 %v1081
        %1643 = vmatpush.msra.mxu0 %v1075
        %1644 = vmatpush.msra.mxu0 %v1069
        %1645 = vmatpush.msra.mxu0 %v1063
        %1646 = vmatpush.msra.mxu0 %v1057
        %1647 = vmatpush.msra.mxu0 %v1051
        %1648 = vmatmul.f32.gmra.mxu0 %v548
        %v1649 = vpop.f32.mrf.mxu0
        %v1650 = vadd.f32 %v1627, %v1649
        %1651 = vmatmul.f32.gmra.mxu0 %v554
        %v1652 = vpop.f32.mrf.mxu0
        %v1653 = vadd.f32 %v1630, %v1652
        %1654 = vdwg.mxu0
        %1655 = vmatpush.msra.mxu0 %v1237
        %1656 = vmatpush.msra.mxu0 %v1231
        %1657 = vmatpush.msra.mxu0 %v1225
        %1658 = vmatpush.msra.mxu0 %v1219
        %1659 = vmatpush.msra.mxu0 %v1213
        %1660 = vmatpush.msra.mxu0 %v1207
        %1661 = vmatpush.msra.mxu0 %v1201
        %1662 = vmatpush.msra.mxu0 %v1195
        %1663 = vmatpush.msra.mxu0 %v1189
        %1664 = vmatpush.msra.mxu0 %v1183
        %1665 = vmatpush.msra.mxu0 %v1177
        %1666 = vmatpush.msra.mxu0 %v1171
        %1667 = vmatpush.msra.mxu0 %v1165
        %1668 = vmatpush.msra.mxu0 %v1159
        %1669 = vmatpush.msra.mxu0 %v1153
        %1670 = vmatpush.msra.mxu0 %v1147
        %1671 = vmatmul.f32.gmra.mxu0 %v549
        %v1672 = vpop.f32.mrf.mxu0
        %v1673 = vadd.f32 %v1650, %v1672
        %1674 = vmatmul.f32.gmra.mxu0 %v555
        %v1675 = vpop.f32.mrf.mxu0
        %v1676 = vadd.f32 %v1653, %v1675
        %1677 = vdwg.mxu0
        %1678 = vmatpush.msra.mxu0 %v1333
        %1679 = vmatpush.msra.mxu0 %v1327
        %1680 = vmatpush.msra.mxu0 %v1321
        %1681 = vmatpush.msra.mxu0 %v1315
        %1682 = vmatpush.msra.mxu0 %v1309
        %1683 = vmatpush.msra.mxu0 %v1303
        %1684 = vmatpush.msra.mxu0 %v1297
        %1685 = vmatpush.msra.mxu0 %v1291
        %1686 = vmatpush.msra.mxu0 %v1285
        %1687 = vmatpush.msra.mxu0 %v1279
        %1688 = vmatpush.msra.mxu0 %v1273
        %1689 = vmatpush.msra.mxu0 %v1267
        %1690 = vmatpush.msra.mxu0 %v1261
        %1691 = vmatpush.msra.mxu0 %v1255
        %1692 = vmatpush.msra.mxu0 %v1249
        %1693 = vmatpush.msra.mxu0 %v1243
        %1694 = vmatmul.f32.gmra.mxu0 %v550
        %v1695 = vpop.f32.mrf.mxu0
        %v1696 = vadd.f32 %v1673, %v1695
        %1697 = vmatmul.f32.gmra.mxu0 %v556
        %v1698 = vpop.f32.mrf.mxu0
        %v1699 = vadd.f32 %v1676, %v1698
        %1700 = vdwg.mxu0
        %1701 = vmatpush.msra.mxu0 %v1429
        %1702 = vmatpush.msra.mxu0 %v1423
        %1703 = vmatpush.msra.mxu0 %v1417
        %1704 = vmatpush.msra.mxu0 %v1411
        %1705 = vmatpush.msra.mxu0 %v1405
        %1706 = vmatpush.msra.mxu0 %v1399
        %1707 = vmatpush.msra.mxu0 %v1393
        %1708 = vmatpush.msra.mxu0 %v1387
        %1709 = vmatpush.msra.mxu0 %v1381
        %1710 = vmatpush.msra.mxu0 %v1375
        %1711 = vmatpush.msra.mxu0 %v1369
        %1712 = vmatpush.msra.mxu0 %v1363
        %1713 = vmatpush.msra.mxu0 %v1357
        %1714 = vmatpush.msra.mxu0 %v1351
        %1715 = vmatpush.msra.mxu0 %v1345
        %1716 = vmatpush.msra.mxu0 %v1339
        %1717 = vmatmul.f32.gmra.mxu0 %v551
        %v1718 = vpop.f32.mrf.mxu0
        %v1719 = vadd.f32 %v1696, %v1718
        %1720 = vmatmul.f32.gmra.mxu0 %v557
        %v1721 = vpop.f32.mrf.mxu0
        %v1722 = vadd.f32 %v1699, %v1721
        %1723 = vdwg.mxu0
        %1724 = vmatpush.msra.mxu0 %v950
        %1725 = vmatpush.msra.mxu0 %v944
        %1726 = vmatpush.msra.mxu0 %v938
        %1727 = vmatpush.msra.mxu0 %v932
        %1728 = vmatpush.msra.mxu0 %v926
        %1729 = vmatpush.msra.mxu0 %v920
        %1730 = vmatpush.msra.mxu0 %v914
        %1731 = vmatpush.msra.mxu0 %v908
        %1732 = vmatpush.msra.mxu0 %v902
        %1733 = vmatpush.msra.mxu0 %v896
        %1734 = vmatpush.msra.mxu0 %v890
        %1735 = vmatpush.msra.mxu0 %v884
        %1736 = vmatpush.msra.mxu0 %v878
        %1737 = vmatpush.msra.mxu0 %v872
        %1738 = vmatpush.msra.mxu0 %v866
        %1739 = vmatpush.msra.mxu0 %v860
        %1740 = vmatmul.f32.gmra.mxu0 %v546
        %v1741 = vpop.f32.mrf.mxu0
        %v1742 = vadd.f32 %v1438, %v1741
        %1743 = vmatmul.f32.gmra.mxu0 %v552
        %v1744 = vpop.f32.mrf.mxu0
        %v1745 = vadd.f32 %v1438, %v1744
        %1746 = vdwg.mxu0
        %1747 = vmatpush.msra.mxu0 %v1046
        %1748 = vmatpush.msra.mxu0 %v1040
        %1749 = vmatpush.msra.mxu0 %v1034
        %1750 = vmatpush.msra.mxu0 %v1028
        %1751 = vmatpush.msra.mxu0 %v1022
        %1752 = vmatpush.msra.mxu0 %v1016
        %1753 = vmatpush.msra.mxu0 %v1010
        %1754 = vmatpush.msra.mxu0 %v1004
        %1755 = vmatpush.msra.mxu0 %v998
        %1756 = vmatpush.msra.mxu0 %v992
        %1757 = vmatpush.msra.mxu0 %v986
        %1758 = vmatpush.msra.mxu0 %v980
        %1759 = vmatpush.msra.mxu0 %v974
        %1760 = vmatpush.msra.mxu0 %v968
        %1761 = vmatpush.msra.mxu0 %v962
        %1762 = vmatpush.msra.mxu0 %v956
        %1763 = vmatmul.f32.gmra.mxu0 %v547
        %v1764 = vpop.f32.mrf.mxu0
        %v1765 = vadd.f32 %v1742, %v1764
        %1766 = vmatmul.f32.gmra.mxu0 %v553
        %v1767 = vpop.f32.mrf.mxu0
        %v1768 = vadd.f32 %v1745, %v1767
        %1769 = vdwg.mxu0
        %1770 = vmatpush.msra.mxu0 %v1142
        %1771 = vmatpush.msra.mxu0 %v1136
        %1772 = vmatpush.msra.mxu0 %v1130
        %1773 = vmatpush.msra.mxu0 %v1124
        %1774 = vmatpush.msra.mxu0 %v1118
        %1775 = vmatpush.msra.mxu0 %v1112
        %1776 = vmatpush.msra.mxu0 %v1106
        %1777 = vmatpush.msra.mxu0 %v1100
        %1778 = vmatpush.msra.mxu0 %v1094
        %1779 = vmatpush.msra.mxu0 %v1088
        %1780 = vmatpush.msra.mxu0 %v1082
        %1781 = vmatpush.msra.mxu0 %v1076
        %1782 = vmatpush.msra.mxu0 %v1070
        %1783 = vmatpush.msra.mxu0 %v1064
        %1784 = vmatpush.msra.mxu0 %v1058
        %1785 = vmatpush.msra.mxu0 %v1052
        %1786 = vmatmul.f32.gmra.mxu0 %v548
        %v1787 = vpop.f32.mrf.mxu0
        %v1788 = vadd.f32 %v1765, %v1787
        %1789 = vmatmul.f32.gmra.mxu0 %v554
        %v1790 = vpop.f32.mrf.mxu0
        %v1791 = vadd.f32 %v1768, %v1790
        %1792 = vdwg.mxu0
        %1793 = vmatpush.msra.mxu0 %v1238
        %1794 = vmatpush.msra.mxu0 %v1232
        %1795 = vmatpush.msra.mxu0 %v1226
        %1796 = vmatpush.msra.mxu0 %v1220
        %1797 = vmatpush.msra.mxu0 %v1214
        %1798 = vmatpush.msra.mxu0 %v1208
        %1799 = vmatpush.msra.mxu0 %v1202
        %1800 = vmatpush.msra.mxu0 %v1196
        %1801 = vmatpush.msra.mxu0 %v1190
        %1802 = vmatpush.msra.mxu0 %v1184
        %1803 = vmatpush.msra.mxu0 %v1178
        %1804 = vmatpush.msra.mxu0 %v1172
        %1805 = vmatpush.msra.mxu0 %v1166
        %1806 = vmatpush.msra.mxu0 %v1160
        %1807 = vmatpush.msra.mxu0 %v1154
        %1808 = vmatpush.msra.mxu0 %v1148
        %1809 = vmatmul.f32.gmra.mxu0 %v549
        %v1810 = vpop.f32.mrf.mxu0
        %v1811 = vadd.f32 %v1788, %v1810
        %1812 = vmatmul.f32.gmra.mxu0 %v555
        %v1813 = vpop.f32.mrf.mxu0
        %v1814 = vadd.f32 %v1791, %v1813
        %1815 = vdwg.mxu0
        %1816 = vmatpush.msra.mxu0 %v1334
        %1817 = vmatpush.msra.mxu0 %v1328
        %1818 = vmatpush.msra.mxu0 %v1322
        %1819 = vmatpush.msra.mxu0 %v1316
        %1820 = vmatpush.msra.mxu0 %v1310
        %1821 = vmatpush.msra.mxu0 %v1304
        %1822 = vmatpush.msra.mxu0 %v1298
        %1823 = vmatpush.msra.mxu0 %v1292
        %1824 = vmatpush.msra.mxu0 %v1286
        %1825 = vmatpush.msra.mxu0 %v1280
        %1826 = vmatpush.msra.mxu0 %v1274
        %1827 = vmatpush.msra.mxu0 %v1268
        %1828 = vmatpush.msra.mxu0 %v1262
        %1829 = vmatpush.msra.mxu0 %v1256
        %1830 = vmatpush.msra.mxu0 %v1250
        %1831 = vmatpush.msra.mxu0 %v1244
        %1832 = vmatmul.f32.gmra.mxu0 %v550
        %v1833 = vpop.f32.mrf.mxu0
        %v1834 = vadd.f32 %v1811, %v1833
        %1835 = vmatmul.f32.gmra.mxu0 %v556
        %v1836 = vpop.f32.mrf.mxu0
        %v1837 = vadd.f32 %v1814, %v1836
        %1838 = vdwg.mxu0
        %1839 = vmatpush.msra.mxu0 %v1430
        %1840 = vmatpush.msra.mxu0 %v1424
        %1841 = vmatpush.msra.mxu0 %v1418
        %1842 = vmatpush.msra.mxu0 %v1412
        %1843 = vmatpush.msra.mxu0 %v1406
        %1844 = vmatpush.msra.mxu0 %v1400
        %1845 = vmatpush.msra.mxu0 %v1394
        %1846 = vmatpush.msra.mxu0 %v1388
        %1847 = vmatpush.msra.mxu0 %v1382
        %1848 = vmatpush.msra.mxu0 %v1376
        %1849 = vmatpush.msra.mxu0 %v1370
        %1850 = vmatpush.msra.mxu0 %v1364
        %1851 = vmatpush.msra.mxu0 %v1358
        %1852 = vmatpush.msra.mxu0 %v1352
        %1853 = vmatpush.msra.mxu0 %v1346
        %1854 = vmatpush.msra.mxu0 %v1340
        %1855 = vmatmul.f32.gmra.mxu0 %v551
        %v1856 = vpop.f32.mrf.mxu0
        %v1857 = vadd.f32 %v1834, %v1856
        %1858 = vmatmul.f32.gmra.mxu0 %v557
        %v1859 = vpop.f32.mrf.mxu0
        %v1860 = vadd.f32 %v1837, %v1859
        %1861 = vdwg.mxu0
        %1862 = vmatpush.msra.mxu0 %v951
        %1863 = vmatpush.msra.mxu0 %v945
        %1864 = vmatpush.msra.mxu0 %v939
        %1865 = vmatpush.msra.mxu0 %v933
        %1866 = vmatpush.msra.mxu0 %v927
        %1867 = vmatpush.msra.mxu0 %v921
        %1868 = vmatpush.msra.mxu0 %v915
        %1869 = vmatpush.msra.mxu0 %v909
        %1870 = vmatpush.msra.mxu0 %v903
        %1871 = vmatpush.msra.mxu0 %v897
        %1872 = vmatpush.msra.mxu0 %v891
        %1873 = vmatpush.msra.mxu0 %v885
        %1874 = vmatpush.msra.mxu0 %v879
        %1875 = vmatpush.msra.mxu0 %v873
        %1876 = vmatpush.msra.mxu0 %v867
        %1877 = vmatpush.msra.mxu0 %v861
        %1878 = vmatmul.f32.gmra.mxu0 %v546
        %v1879 = vpop.f32.mrf.mxu0
        %v1880 = vadd.f32 %v1439, %v1879
        %1881 = vmatmul.f32.gmra.mxu0 %v552
        %v1882 = vpop.f32.mrf.mxu0
        %v1883 = vadd.f32 %v1439, %v1882
        %1884 = vdwg.mxu0
        %1885 = vmatpush.msra.mxu0 %v1047
        %1886 = vmatpush.msra.mxu0 %v1041
        %1887 = vmatpush.msra.mxu0 %v1035
        %1888 = vmatpush.msra.mxu0 %v1029
        %1889 = vmatpush.msra.mxu0 %v1023
        %1890 = vmatpush.msra.mxu0 %v1017
        %1891 = vmatpush.msra.mxu0 %v1011
        %1892 = vmatpush.msra.mxu0 %v1005
        %1893 = vmatpush.msra.mxu0 %v999
        %1894 = vmatpush.msra.mxu0 %v993
        %1895 = vmatpush.msra.mxu0 %v987
        %1896 = vmatpush.msra.mxu0 %v981
        %1897 = vmatpush.msra.mxu0 %v975
        %1898 = vmatpush.msra.mxu0 %v969
        %1899 = vmatpush.msra.mxu0 %v963
        %1900 = vmatpush.msra.mxu0 %v957
        %1901 = vmatmul.f32.gmra.mxu0 %v547
        %v1902 = vpop.f32.mrf.mxu0
        %v1903 = vadd.f32 %v1880, %v1902
        %1904 = vmatmul.f32.gmra.mxu0 %v553
        %v1905 = vpop.f32.mrf.mxu0
        %v1906 = vadd.f32 %v1883, %v1905
        %1907 = vdwg.mxu0
        %1908 = vmatpush.msra.mxu0 %v1143
        %1909 = vmatpush.msra.mxu0 %v1137
        %1910 = vmatpush.msra.mxu0 %v1131
        %1911 = vmatpush.msra.mxu0 %v1125
        %1912 = vmatpush.msra.mxu0 %v1119
        %1913 = vmatpush.msra.mxu0 %v1113
        %1914 = vmatpush.msra.mxu0 %v1107
        %1915 = vmatpush.msra.mxu0 %v1101
        %1916 = vmatpush.msra.mxu0 %v1095
        %1917 = vmatpush.msra.mxu0 %v1089
        %1918 = vmatpush.msra.mxu0 %v1083
        %1919 = vmatpush.msra.mxu0 %v1077
        %1920 = vmatpush.msra.mxu0 %v1071
        %1921 = vmatpush.msra.mxu0 %v1065
        %1922 = vmatpush.msra.mxu0 %v1059
        %1923 = vmatpush.msra.mxu0 %v1053
        %1924 = vmatmul.f32.gmra.mxu0 %v548
        %v1925 = vpop.f32.mrf.mxu0
        %v1926 = vadd.f32 %v1903, %v1925
        %1927 = vmatmul.f32.gmra.mxu0 %v554
        %v1928 = vpop.f32.mrf.mxu0
        %v1929 = vadd.f32 %v1906, %v1928
        %1930 = vdwg.mxu0
        %1931 = vmatpush.msra.mxu0 %v1239
        %1932 = vmatpush.msra.mxu0 %v1233
        %1933 = vmatpush.msra.mxu0 %v1227
        %1934 = vmatpush.msra.mxu0 %v1221
        %1935 = vmatpush.msra.mxu0 %v1215
        %1936 = vmatpush.msra.mxu0 %v1209
        %1937 = vmatpush.msra.mxu0 %v1203
        %1938 = vmatpush.msra.mxu0 %v1197
        %1939 = vmatpush.msra.mxu0 %v1191
        %1940 = vmatpush.msra.mxu0 %v1185
        %1941 = vmatpush.msra.mxu0 %v1179
        %1942 = vmatpush.msra.mxu0 %v1173
        %1943 = vmatpush.msra.mxu0 %v1167
        %1944 = vmatpush.msra.mxu0 %v1161
        %1945 = vmatpush.msra.mxu0 %v1155
        %1946 = vmatpush.msra.mxu0 %v1149
        %1947 = vmatmul.f32.gmra.mxu0 %v549
        %v1948 = vpop.f32.mrf.mxu0
        %v1949 = vadd.f32 %v1926, %v1948
        %1950 = vmatmul.f32.gmra.mxu0 %v555
        %v1951 = vpop.f32.mrf.mxu0
        %v1952 = vadd.f32 %v1929, %v1951
        %1953 = vdwg.mxu0
        %1954 = vmatpush.msra.mxu0 %v1335
        %1955 = vmatpush.msra.mxu0 %v1329
        %1956 = vmatpush.msra.mxu0 %v1323
        %1957 = vmatpush.msra.mxu0 %v1317
        %1958 = vmatpush.msra.mxu0 %v1311
        %1959 = vmatpush.msra.mxu0 %v1305
        %1960 = vmatpush.msra.mxu0 %v1299
        %1961 = vmatpush.msra.mxu0 %v1293
        %1962 = vmatpush.msra.mxu0 %v1287
        %1963 = vmatpush.msra.mxu0 %v1281
        %1964 = vmatpush.msra.mxu0 %v1275
        %1965 = vmatpush.msra.mxu0 %v1269
        %1966 = vmatpush.msra.mxu0 %v1263
        %1967 = vmatpush.msra.mxu0 %v1257
        %1968 = vmatpush.msra.mxu0 %v1251
        %1969 = vmatpush.msra.mxu0 %v1245
        %1970 = vmatmul.f32.gmra.mxu0 %v550
        %v1971 = vpop.f32.mrf.mxu0
        %v1972 = vadd.f32 %v1949, %v1971
        %1973 = vmatmul.f32.gmra.mxu0 %v556
        %v1974 = vpop.f32.mrf.mxu0
        %v1975 = vadd.f32 %v1952, %v1974
        %1976 = vdwg.mxu0
        %1977 = vmatpush.msra.mxu0 %v1431
        %1978 = vmatpush.msra.mxu0 %v1425
        %1979 = vmatpush.msra.mxu0 %v1419
        %1980 = vmatpush.msra.mxu0 %v1413
        %1981 = vmatpush.msra.mxu0 %v1407
        %1982 = vmatpush.msra.mxu0 %v1401
        %1983 = vmatpush.msra.mxu0 %v1395
        %1984 = vmatpush.msra.mxu0 %v1389
        %1985 = vmatpush.msra.mxu0 %v1383
        %1986 = vmatpush.msra.mxu0 %v1377
        %1987 = vmatpush.msra.mxu0 %v1371
        %1988 = vmatpush.msra.mxu0 %v1365
        %1989 = vmatpush.msra.mxu0 %v1359
        %1990 = vmatpush.msra.mxu0 %v1353
        %1991 = vmatpush.msra.mxu0 %v1347
        %1992 = vmatpush.msra.mxu0 %v1341
        %1993 = vmatmul.f32.gmra.mxu0 %v551
        %v1994 = vpop.f32.mrf.mxu0
        %v1995 = vadd.f32 %v1972, %v1994
        %1996 = vmatmul.f32.gmra.mxu0 %v557
        %v1997 = vpop.f32.mrf.mxu0
        %v1998 = vadd.f32 %v1975, %v1997
        %1999 = vdwg.mxu0
        %2000 = vmatpush.msra.mxu0 %v952
        %2001 = vmatpush.msra.mxu0 %v946
        %2002 = vmatpush.msra.mxu0 %v940
        %2003 = vmatpush.msra.mxu0 %v934
        %2004 = vmatpush.msra.mxu0 %v928
        %2005 = vmatpush.msra.mxu0 %v922
        %2006 = vmatpush.msra.mxu0 %v916
        %2007 = vmatpush.msra.mxu0 %v910
        %2008 = vmatpush.msra.mxu0 %v904
        %2009 = vmatpush.msra.mxu0 %v898
        %2010 = vmatpush.msra.mxu0 %v892
        %2011 = vmatpush.msra.mxu0 %v886
        %2012 = vmatpush.msra.mxu0 %v880
        %2013 = vmatpush.msra.mxu0 %v874
        %2014 = vmatpush.msra.mxu0 %v868
        %2015 = vmatpush.msra.mxu0 %v862
        %2016 = vmatmul.f32.gmra.mxu0 %v546
        %v2017 = vpop.f32.mrf.mxu0
        %v2018 = vadd.f32 %v1440, %v2017
        %2019 = vmatmul.f32.gmra.mxu0 %v552
        %v2020 = vpop.f32.mrf.mxu0
        %v2021 = vadd.f32 %v1440, %v2020
        %2022 = vdwg.mxu0
        %2023 = vmatpush.msra.mxu0 %v1048
        %2024 = vmatpush.msra.mxu0 %v1042
        %2025 = vmatpush.msra.mxu0 %v1036
        %2026 = vmatpush.msra.mxu0 %v1030
        %2027 = vmatpush.msra.mxu0 %v1024
        %2028 = vmatpush.msra.mxu0 %v1018
        %2029 = vmatpush.msra.mxu0 %v1012
        %2030 = vmatpush.msra.mxu0 %v1006
        %2031 = vmatpush.msra.mxu0 %v1000
        %2032 = vmatpush.msra.mxu0 %v994
        %2033 = vmatpush.msra.mxu0 %v988
        %2034 = vmatpush.msra.mxu0 %v982
        %2035 = vmatpush.msra.mxu0 %v976
        %2036 = vmatpush.msra.mxu0 %v970
        %2037 = vmatpush.msra.mxu0 %v964
        %2038 = vmatpush.msra.mxu0 %v958
        %2039 = vmatmul.f32.gmra.mxu0 %v547
        %v2040 = vpop.f32.mrf.mxu0
        %v2041 = vadd.f32 %v2018, %v2040
        %2042 = vmatmul.f32.gmra.mxu0 %v553
        %v2043 = vpop.f32.mrf.mxu0
        %v2044 = vadd.f32 %v2021, %v2043
        %2045 = vdwg.mxu0
        %2046 = vmatpush.msra.mxu0 %v1144
        %2047 = vmatpush.msra.mxu0 %v1138
        %2048 = vmatpush.msra.mxu0 %v1132
        %2049 = vmatpush.msra.mxu0 %v1126
        %2050 = vmatpush.msra.mxu0 %v1120
        %2051 = vmatpush.msra.mxu0 %v1114
        %2052 = vmatpush.msra.mxu0 %v1108
        %2053 = vmatpush.msra.mxu0 %v1102
        %2054 = vmatpush.msra.mxu0 %v1096
        %2055 = vmatpush.msra.mxu0 %v1090
        %2056 = vmatpush.msra.mxu0 %v1084
        %2057 = vmatpush.msra.mxu0 %v1078
        %2058 = vmatpush.msra.mxu0 %v1072
        %2059 = vmatpush.msra.mxu0 %v1066
        %2060 = vmatpush.msra.mxu0 %v1060
        %2061 = vmatpush.msra.mxu0 %v1054
        %2062 = vmatmul.f32.gmra.mxu0 %v548
        %v2063 = vpop.f32.mrf.mxu0
        %v2064 = vadd.f32 %v2041, %v2063
        %2065 = vmatmul.f32.gmra.mxu0 %v554
        %v2066 = vpop.f32.mrf.mxu0
        %v2067 = vadd.f32 %v2044, %v2066
        %2068 = vdwg.mxu0
        %2069 = vmatpush.msra.mxu0 %v1240
        %2070 = vmatpush.msra.mxu0 %v1234
        %2071 = vmatpush.msra.mxu0 %v1228
        %2072 = vmatpush.msra.mxu0 %v1222
        %2073 = vmatpush.msra.mxu0 %v1216
        %2074 = vmatpush.msra.mxu0 %v1210
        %2075 = vmatpush.msra.mxu0 %v1204
        %2076 = vmatpush.msra.mxu0 %v1198
        %2077 = vmatpush.msra.mxu0 %v1192
        %2078 = vmatpush.msra.mxu0 %v1186
        %2079 = vmatpush.msra.mxu0 %v1180
        %2080 = vmatpush.msra.mxu0 %v1174
        %2081 = vmatpush.msra.mxu0 %v1168
        %2082 = vmatpush.msra.mxu0 %v1162
        %2083 = vmatpush.msra.mxu0 %v1156
        %2084 = vmatpush.msra.mxu0 %v1150
        %2085 = vmatmul.f32.gmra.mxu0 %v549
        %v2086 = vpop.f32.mrf.mxu0
        %v2087 = vadd.f32 %v2064, %v2086
        %2088 = vmatmul.f32.gmra.mxu0 %v555
        %v2089 = vpop.f32.mrf.mxu0
        %v2090 = vadd.f32 %v2067, %v2089
        %2091 = vdwg.mxu0
        %2092 = vmatpush.msra.mxu0 %v1336
        %2093 = vmatpush.msra.mxu0 %v1330
        %2094 = vmatpush.msra.mxu0 %v1324
        %2095 = vmatpush.msra.mxu0 %v1318
        %2096 = vmatpush.msra.mxu0 %v1312
        %2097 = vmatpush.msra.mxu0 %v1306
        %2098 = vmatpush.msra.mxu0 %v1300
        %2099 = vmatpush.msra.mxu0 %v1294
        %2100 = vmatpush.msra.mxu0 %v1288
        %2101 = vmatpush.msra.mxu0 %v1282
        %2102 = vmatpush.msra.mxu0 %v1276
        %2103 = vmatpush.msra.mxu0 %v1270
        %2104 = vmatpush.msra.mxu0 %v1264
        %2105 = vmatpush.msra.mxu0 %v1258
        %2106 = vmatpush.msra.mxu0 %v1252
        %2107 = vmatpush.msra.mxu0 %v1246
        %2108 = vmatmul.f32.gmra.mxu0 %v550
        %v2109 = vpop.f32.mrf.mxu0
        %v2110 = vadd.f32 %v2087, %v2109
        %2111 = vmatmul.f32.gmra.mxu0 %v556
        %v2112 = vpop.f32.mrf.mxu0
        %v2113 = vadd.f32 %v2090, %v2112
        %2114 = vdwg.mxu0
        %2115 = vmatpush.msra.mxu0 %v1432
        %2116 = vmatpush.msra.mxu0 %v1426
        %2117 = vmatpush.msra.mxu0 %v1420
        %2118 = vmatpush.msra.mxu0 %v1414
        %2119 = vmatpush.msra.mxu0 %v1408
        %2120 = vmatpush.msra.mxu0 %v1402
        %2121 = vmatpush.msra.mxu0 %v1396
        %2122 = vmatpush.msra.mxu0 %v1390
        %2123 = vmatpush.msra.mxu0 %v1384
        %2124 = vmatpush.msra.mxu0 %v1378
        %2125 = vmatpush.msra.mxu0 %v1372
        %2126 = vmatpush.msra.mxu0 %v1366
        %2127 = vmatpush.msra.mxu0 %v1360
        %2128 = vmatpush.msra.mxu0 %v1354
        %2129 = vmatpush.msra.mxu0 %v1348
        %2130 = vmatpush.msra.mxu0 %v1342
        %2131 = vmatmul.f32.gmra.mxu0 %v551
        %v2132 = vpop.f32.mrf.mxu0
        %v2133 = vadd.f32 %v2110, %v2132
        %2134 = vmatmul.f32.gmra.mxu0 %v557
        %v2135 = vpop.f32.mrf.mxu0
        %v2136 = vadd.f32 %v2113, %v2135
        %2137 = vdwg.mxu0
        %2138 = vmatpush.msra.mxu0 %v953
        %2139 = vmatpush.msra.mxu0 %v947
        %2140 = vmatpush.msra.mxu0 %v941
        %2141 = vmatpush.msra.mxu0 %v935
        %2142 = vmatpush.msra.mxu0 %v929
        %2143 = vmatpush.msra.mxu0 %v923
        %2144 = vmatpush.msra.mxu0 %v917
        %2145 = vmatpush.msra.mxu0 %v911
        %2146 = vmatpush.msra.mxu0 %v905
        %2147 = vmatpush.msra.mxu0 %v899
        %2148 = vmatpush.msra.mxu0 %v893
        %2149 = vmatpush.msra.mxu0 %v887
        %2150 = vmatpush.msra.mxu0 %v881
        %2151 = vmatpush.msra.mxu0 %v875
        %2152 = vmatpush.msra.mxu0 %v869
        %2153 = vmatpush.msra.mxu0 %v863
        %2154 = vmatmul.f32.gmra.mxu0 %v546
        %v2155 = vpop.f32.mrf.mxu0
        %v2156 = vadd.f32 %v1441, %v2155
        %2157 = vmatmul.f32.gmra.mxu0 %v552
        %v2158 = vpop.f32.mrf.mxu0
        %v2159 = vadd.f32 %v1441, %v2158
        %2160 = vdwg.mxu0
        %2161 = vmatpush.msra.mxu0 %v1049
        %2162 = vmatpush.msra.mxu0 %v1043
        %2163 = vmatpush.msra.mxu0 %v1037
        %2164 = vmatpush.msra.mxu0 %v1031
        %2165 = vmatpush.msra.mxu0 %v1025
        %2166 = vmatpush.msra.mxu0 %v1019
        %2167 = vmatpush.msra.mxu0 %v1013
        %2168 = vmatpush.msra.mxu0 %v1007
        %2169 = vmatpush.msra.mxu0 %v1001
        %2170 = vmatpush.msra.mxu0 %v995
        %2171 = vmatpush.msra.mxu0 %v989
        %2172 = vmatpush.msra.mxu0 %v983
        %2173 = vmatpush.msra.mxu0 %v977
        %2174 = vmatpush.msra.mxu0 %v971
        %2175 = vmatpush.msra.mxu0 %v965
        %2176 = vmatpush.msra.mxu0 %v959
        %2177 = vmatmul.f32.gmra.mxu0 %v547
        %v2178 = vpop.f32.mrf.mxu0
        %v2179 = vadd.f32 %v2156, %v2178
        %2180 = vmatmul.f32.gmra.mxu0 %v553
        %v2181 = vpop.f32.mrf.mxu0
        %v2182 = vadd.f32 %v2159, %v2181
        %2183 = vdwg.mxu0
        %2184 = vmatpush.msra.mxu0 %v1145
        %2185 = vmatpush.msra.mxu0 %v1139
        %2186 = vmatpush.msra.mxu0 %v1133
        %2187 = vmatpush.msra.mxu0 %v1127
        %2188 = vmatpush.msra.mxu0 %v1121
        %2189 = vmatpush.msra.mxu0 %v1115
        %2190 = vmatpush.msra.mxu0 %v1109
        %2191 = vmatpush.msra.mxu0 %v1103
        %2192 = vmatpush.msra.mxu0 %v1097
        %2193 = vmatpush.msra.mxu0 %v1091
        %2194 = vmatpush.msra.mxu0 %v1085
        %2195 = vmatpush.msra.mxu0 %v1079
        %2196 = vmatpush.msra.mxu0 %v1073
        %2197 = vmatpush.msra.mxu0 %v1067
        %2198 = vmatpush.msra.mxu0 %v1061
        %2199 = vmatpush.msra.mxu0 %v1055
        %2200 = vmatmul.f32.gmra.mxu0 %v548
        %v2201 = vpop.f32.mrf.mxu0
        %v2202 = vadd.f32 %v2179, %v2201
        %2203 = vmatmul.f32.gmra.mxu0 %v554
        %v2204 = vpop.f32.mrf.mxu0
        %v2205 = vadd.f32 %v2182, %v2204
        %2206 = vdwg.mxu0
        %2207 = vmatpush.msra.mxu0 %v1241
        %2208 = vmatpush.msra.mxu0 %v1235
        %2209 = vmatpush.msra.mxu0 %v1229
        %2210 = vmatpush.msra.mxu0 %v1223
        %2211 = vmatpush.msra.mxu0 %v1217
        %2212 = vmatpush.msra.mxu0 %v1211
        %2213 = vmatpush.msra.mxu0 %v1205
        %2214 = vmatpush.msra.mxu0 %v1199
        %2215 = vmatpush.msra.mxu0 %v1193
        %2216 = vmatpush.msra.mxu0 %v1187
        %2217 = vmatpush.msra.mxu0 %v1181
        %2218 = vmatpush.msra.mxu0 %v1175
        %2219 = vmatpush.msra.mxu0 %v1169
        %2220 = vmatpush.msra.mxu0 %v1163
        %2221 = vmatpush.msra.mxu0 %v1157
        %2222 = vmatpush.msra.mxu0 %v1151
        %2223 = vmatmul.f32.gmra.mxu0 %v549
        %v2224 = vpop.f32.mrf.mxu0
        %v2225 = vadd.f32 %v2202, %v2224
        %2226 = vmatmul.f32.gmra.mxu0 %v555
        %v2227 = vpop.f32.mrf.mxu0
        %v2228 = vadd.f32 %v2205, %v2227
        %2229 = vdwg.mxu0
        %2230 = vmatpush.msra.mxu0 %v1337
        %2231 = vmatpush.msra.mxu0 %v1331
        %2232 = vmatpush.msra.mxu0 %v1325
        %2233 = vmatpush.msra.mxu0 %v1319
        %2234 = vmatpush.msra.mxu0 %v1313
        %2235 = vmatpush.msra.mxu0 %v1307
        %2236 = vmatpush.msra.mxu0 %v1301
        %2237 = vmatpush.msra.mxu0 %v1295
        %2238 = vmatpush.msra.mxu0 %v1289
        %2239 = vmatpush.msra.mxu0 %v1283
        %2240 = vmatpush.msra.mxu0 %v1277
        %2241 = vmatpush.msra.mxu0 %v1271
        %2242 = vmatpush.msra.mxu0 %v1265
        %2243 = vmatpush.msra.mxu0 %v1259
        %2244 = vmatpush.msra.mxu0 %v1253
        %2245 = vmatpush.msra.mxu0 %v1247
        %2246 = vmatmul.f32.gmra.mxu0 %v550
        %v2247 = vpop.f32.mrf.mxu0
        %v2248 = vadd.f32 %v2225, %v2247
        %2249 = vmatmul.f32.gmra.mxu0 %v556
        %v2250 = vpop.f32.mrf.mxu0
        %v2251 = vadd.f32 %v2228, %v2250
        %2252 = vdwg.mxu0
        %2253 = vmatpush.msra.mxu0 %v1433
        %2254 = vmatpush.msra.mxu0 %v1427
        %2255 = vmatpush.msra.mxu0 %v1421
        %2256 = vmatpush.msra.mxu0 %v1415
        %2257 = vmatpush.msra.mxu0 %v1409
        %2258 = vmatpush.msra.mxu0 %v1403
        %2259 = vmatpush.msra.mxu0 %v1397
        %2260 = vmatpush.msra.mxu0 %v1391
        %2261 = vmatpush.msra.mxu0 %v1385
        %2262 = vmatpush.msra.mxu0 %v1379
        %2263 = vmatpush.msra.mxu0 %v1373
        %2264 = vmatpush.msra.mxu0 %v1367
        %2265 = vmatpush.msra.mxu0 %v1361
        %2266 = vmatpush.msra.mxu0 %v1355
        %2267 = vmatpush.msra.mxu0 %v1349
        %2268 = vmatpush.msra.mxu0 %v1343
        %2269 = vmatmul.f32.gmra.mxu0 %v551
        %v2270 = vpop.f32.mrf.mxu0
        %v2271 = vadd.f32 %v2248, %v2270
        %2272 = vmatmul.f32.gmra.mxu0 %v557
        %v2273 = vpop.f32.mrf.mxu0
        %v2274 = vadd.f32 %v2251, %v2273
        %2275 = vdwg.mxu0
        %v2276 = vld [vmem:[#allocation10] sm:$0xff]
        %v2277 = vld [vmem:[#allocation10 + $0x8] sm:$0xff]
        %v2278 = vld [vmem:[#allocation10 + $0x10] sm:$0xff]
        %v2279 = vld [vmem:[#allocation10 + $0x18] sm:$0xff]
        %v2280 = vld [vmem:[#allocation10 + $0x20] sm:$0xff]
        %v2281 = vld [vmem:[#allocation10 + $0x28] sm:$0xff]
        %v2282 = vld [vmem:[#allocation10 + $0x30] sm:$0xff]
        %v2283 = vld [vmem:[#allocation10 + $0x38] sm:$0xff]
        %v2284 = vld [vmem:[#allocation10 + $0x40] sm:$0xff]
        %v2285 = vld [vmem:[#allocation10 + $0x48] sm:$0xff]
        %v2286 = vld [vmem:[#allocation10 + $0x50] sm:$0xff]
        %v2287 = vld [vmem:[#allocation10 + $0x58] sm:$0xff]
        %v2288 = vld [vmem:[#allocation10 + $0x60] sm:$0xff]
        %v2289 = vld [vmem:[#allocation10 + $0x68] sm:$0xff]
        %v2290 = vld [vmem:[#allocation10 + $0x70] sm:$0xff]
        %v2291 = vld [vmem:[#allocation10 + $0x78] sm:$0xff]
        %v2292 = vld [vmem:[#allocation10 + $0x80] sm:$0xff]
        %v2293 = vld [vmem:[#allocation10 + $0x88] sm:$0xff]
        %v2294 = vld [vmem:[#allocation10 + $0x90] sm:$0xff]
        %v2295 = vld [vmem:[#allocation10 + $0x98] sm:$0xff]
        %v2296 = vld [vmem:[#allocation10 + $0xa0] sm:$0xff]
        %v2297 = vld [vmem:[#allocation10 + $0xa8] sm:$0xff]
        %v2298 = vld [vmem:[#allocation10 + $0xb0] sm:$0xff]
        %v2299 = vld [vmem:[#allocation10 + $0xb8] sm:$0xff]
        %v2300 = vld [vmem:[#allocation10 + $0xc0] sm:$0xff]
        %v2301 = vld [vmem:[#allocation10 + $0xc8] sm:$0xff]
        %v2302 = vld [vmem:[#allocation10 + $0xd0] sm:$0xff]
        %v2303 = vld [vmem:[#allocation10 + $0xd8] sm:$0xff]
        %v2304 = vld [vmem:[#allocation10 + $0xe0] sm:$0xff]
        %v2305 = vld [vmem:[#allocation10 + $0xe8] sm:$0xff]
        %v2306 = vld [vmem:[#allocation10 + $0xf0] sm:$0xff]
        %v2307 = vld [vmem:[#allocation10 + $0xf8] sm:$0xff]
        %v2308 = vld [vmem:[#allocation10 + $0x100] sm:$0xff]
        %v2309 = vld [vmem:[#allocation10 + $0x108] sm:$0xff]
        %v2310 = vld [vmem:[#allocation10 + $0x110] sm:$0xff]
        %v2311 = vld [vmem:[#allocation10 + $0x118] sm:$0xff]
        %v2312 = vld [vmem:[#allocation10 + $0x120] sm:$0xff]
        %v2313 = vld [vmem:[#allocation10 + $0x128] sm:$0xff]
        %v2314 = vld [vmem:[#allocation10 + $0x130] sm:$0xff]
        %v2315 = vld [vmem:[#allocation10 + $0x138] sm:$0xff]
        %v2316 = vld [vmem:[#allocation10 + $0x140] sm:$0xff]
        %v2317 = vld [vmem:[#allocation10 + $0x148] sm:$0xff]
        %v2318 = vld [vmem:[#allocation10 + $0x150] sm:$0xff]
        %v2319 = vld [vmem:[#allocation10 + $0x158] sm:$0xff]
        %v2320 = vld [vmem:[#allocation10 + $0x160] sm:$0xff]
        %v2321 = vld [vmem:[#allocation10 + $0x168] sm:$0xff]
        %v2322 = vld [vmem:[#allocation10 + $0x170] sm:$0xff]
        %v2323 = vld [vmem:[#allocation10 + $0x178] sm:$0xff]
        %v2324 = vld [vmem:[#allocation10 + $0x180] sm:$0xff]
        %v2325 = vld [vmem:[#allocation10 + $0x188] sm:$0xff]
        %v2326 = vld [vmem:[#allocation10 + $0x190] sm:$0xff]
        %v2327 = vld [vmem:[#allocation10 + $0x198] sm:$0xff]
        %v2328 = vld [vmem:[#allocation10 + $0x1a0] sm:$0xff]
        %v2329 = vld [vmem:[#allocation10 + $0x1a8] sm:$0xff]
        %v2330 = vld [vmem:[#allocation10 + $0x1b0] sm:$0xff]
        %v2331 = vld [vmem:[#allocation10 + $0x1b8] sm:$0xff]
        %v2332 = vld [vmem:[#allocation10 + $0x1c0] sm:$0xff]
        %v2333 = vld [vmem:[#allocation10 + $0x1c8] sm:$0xff]
        %v2334 = vld [vmem:[#allocation10 + $0x1d0] sm:$0xff]
        %v2335 = vld [vmem:[#allocation10 + $0x1d8] sm:$0xff]
        %v2336 = vld [vmem:[#allocation10 + $0x1e0] sm:$0xff]
        %v2337 = vld [vmem:[#allocation10 + $0x1e8] sm:$0xff]
        %v2338 = vld [vmem:[#allocation10 + $0x1f0] sm:$0xff]
        %v2339 = vld [vmem:[#allocation10 + $0x1f8] sm:$0xff]
        %v2340 = vld [vmem:[#allocation10 + $0x200] sm:$0xff]
        %v2341 = vld [vmem:[#allocation10 + $0x208] sm:$0xff]
        %v2342 = vld [vmem:[#allocation10 + $0x210] sm:$0xff]
        %v2343 = vld [vmem:[#allocation10 + $0x218] sm:$0xff]
        %v2344 = vld [vmem:[#allocation10 + $0x220] sm:$0xff]
        %v2345 = vld [vmem:[#allocation10 + $0x228] sm:$0xff]
        %v2346 = vld [vmem:[#allocation10 + $0x230] sm:$0xff]
        %v2347 = vld [vmem:[#allocation10 + $0x238] sm:$0xff]
        %v2348 = vld [vmem:[#allocation10 + $0x240] sm:$0xff]
        %v2349 = vld [vmem:[#allocation10 + $0x248] sm:$0xff]
        %v2350 = vld [vmem:[#allocation10 + $0x250] sm:$0xff]
        %v2351 = vld [vmem:[#allocation10 + $0x258] sm:$0xff]
        %v2352 = vld [vmem:[#allocation10 + $0x260] sm:$0xff]
        %v2353 = vld [vmem:[#allocation10 + $0x268] sm:$0xff]
        %v2354 = vld [vmem:[#allocation10 + $0x270] sm:$0xff]
        %v2355 = vld [vmem:[#allocation10 + $0x278] sm:$0xff]
        %v2356 = vld [vmem:[#allocation10 + $0x280] sm:$0xff]
        %v2357 = vld [vmem:[#allocation10 + $0x288] sm:$0xff]
        %v2358 = vld [vmem:[#allocation10 + $0x290] sm:$0xff]
        %v2359 = vld [vmem:[#allocation10 + $0x298] sm:$0xff]
        %v2360 = vld [vmem:[#allocation10 + $0x2a0] sm:$0xff]
        %v2361 = vld [vmem:[#allocation10 + $0x2a8] sm:$0xff]
        %v2362 = vld [vmem:[#allocation10 + $0x2b0] sm:$0xff]
        %v2363 = vld [vmem:[#allocation10 + $0x2b8] sm:$0xff]
        %v2364 = vld [vmem:[#allocation10 + $0x2c0] sm:$0xff]
        %v2365 = vld [vmem:[#allocation10 + $0x2c8] sm:$0xff]
        %v2366 = vld [vmem:[#allocation10 + $0x2d0] sm:$0xff]
        %v2367 = vld [vmem:[#allocation10 + $0x2d8] sm:$0xff]
        %v2368 = vld [vmem:[#allocation10 + $0x2e0] sm:$0xff]
        %v2369 = vld [vmem:[#allocation10 + $0x2e8] sm:$0xff]
        %v2370 = vld [vmem:[#allocation10 + $0x2f0] sm:$0xff]
        %v2371 = vld [vmem:[#allocation10 + $0x2f8] sm:$0xff]
        %v2372 = vld [vmem:[#allocation10 + $0x300] sm:$0xff]
        %v2373 = vld [vmem:[#allocation10 + $0x308] sm:$0xff]
        %v2374 = vld [vmem:[#allocation10 + $0x310] sm:$0xff]
        %v2375 = vld [vmem:[#allocation10 + $0x318] sm:$0xff]
        %v2376 = vld [vmem:[#allocation10 + $0x320] sm:$0xff]
        %v2377 = vld [vmem:[#allocation10 + $0x328] sm:$0xff]
        %v2378 = vld [vmem:[#allocation10 + $0x330] sm:$0xff]
        %v2379 = vld [vmem:[#allocation10 + $0x338] sm:$0xff]
        %v2380 = vld [vmem:[#allocation10 + $0x340] sm:$0xff]
        %v2381 = vld [vmem:[#allocation10 + $0x348] sm:$0xff]
        %v2382 = vld [vmem:[#allocation10 + $0x350] sm:$0xff]
        %v2383 = vld [vmem:[#allocation10 + $0x358] sm:$0xff]
        %v2384 = vld [vmem:[#allocation10 + $0x360] sm:$0xff]
        %v2385 = vld [vmem:[#allocation10 + $0x368] sm:$0xff]
        %v2386 = vld [vmem:[#allocation10 + $0x370] sm:$0xff]
        %v2387 = vld [vmem:[#allocation10 + $0x378] sm:$0xff]
        %v2388 = vld [vmem:[#allocation10 + $0x380] sm:$0xff]
        %v2389 = vld [vmem:[#allocation10 + $0x388] sm:$0xff]
        %v2390 = vld [vmem:[#allocation10 + $0x390] sm:$0xff]
        %v2391 = vld [vmem:[#allocation10 + $0x398] sm:$0xff]
        %v2392 = vld [vmem:[#allocation10 + $0x3a0] sm:$0xff]
        %v2393 = vld [vmem:[#allocation10 + $0x3a8] sm:$0xff]
        %v2394 = vld [vmem:[#allocation10 + $0x3b0] sm:$0xff]
        %v2395 = vld [vmem:[#allocation10 + $0x3b8] sm:$0xff]
        %v2396 = vld [vmem:[#allocation10 + $0x3c0] sm:$0xff]
        %v2397 = vld [vmem:[#allocation10 + $0x3c8] sm:$0xff]
        %v2398 = vld [vmem:[#allocation10 + $0x3d0] sm:$0xff]
        %v2399 = vld [vmem:[#allocation10 + $0x3d8] sm:$0xff]
        %v2400 = vld [vmem:[#allocation10 + $0x3e0] sm:$0xff]
        %v2401 = vld [vmem:[#allocation10 + $0x3e8] sm:$0xff]
        %v2402 = vld [vmem:[#allocation10 + $0x3f0] sm:$0xff]
        %v2403 = vld [vmem:[#allocation10 + $0x3f8] sm:$0xff]
        %v2404 = vld [vmem:[#allocation10 + $0x400] sm:$0xff]
        %v2405 = vld [vmem:[#allocation10 + $0x408] sm:$0xff]
        %v2406 = vld [vmem:[#allocation10 + $0x410] sm:$0xff]
        %v2407 = vld [vmem:[#allocation10 + $0x418] sm:$0xff]
        %v2408 = vld [vmem:[#allocation10 + $0x420] sm:$0xff]
        %v2409 = vld [vmem:[#allocation10 + $0x428] sm:$0xff]
        %v2410 = vld [vmem:[#allocation10 + $0x430] sm:$0xff]
        %v2411 = vld [vmem:[#allocation10 + $0x438] sm:$0xff]
        %v2412 = vld [vmem:[#allocation10 + $0x440] sm:$0xff]
        %v2413 = vld [vmem:[#allocation10 + $0x448] sm:$0xff]
        %v2414 = vld [vmem:[#allocation10 + $0x450] sm:$0xff]
        %v2415 = vld [vmem:[#allocation10 + $0x458] sm:$0xff]
        %v2416 = vld [vmem:[#allocation10 + $0x460] sm:$0xff]
        %v2417 = vld [vmem:[#allocation10 + $0x468] sm:$0xff]
        %v2418 = vld [vmem:[#allocation10 + $0x470] sm:$0xff]
        %v2419 = vld [vmem:[#allocation10 + $0x478] sm:$0xff]
        %v2420 = vld [vmem:[#allocation10 + $0x480] sm:$0xff]
        %v2421 = vld [vmem:[#allocation10 + $0x488] sm:$0xff]
        %v2422 = vld [vmem:[#allocation10 + $0x490] sm:$0xff]
        %v2423 = vld [vmem:[#allocation10 + $0x498] sm:$0xff]
        %v2424 = vld [vmem:[#allocation10 + $0x4a0] sm:$0xff]
        %v2425 = vld [vmem:[#allocation10 + $0x4a8] sm:$0xff]
        %v2426 = vld [vmem:[#allocation10 + $0x4b0] sm:$0xff]
        %v2427 = vld [vmem:[#allocation10 + $0x4b8] sm:$0xff]
        %v2428 = vld [vmem:[#allocation10 + $0x4c0] sm:$0xff]
        %v2429 = vld [vmem:[#allocation10 + $0x4c8] sm:$0xff]
        %v2430 = vld [vmem:[#allocation10 + $0x4d0] sm:$0xff]
        %v2431 = vld [vmem:[#allocation10 + $0x4d8] sm:$0xff]
        %v2432 = vld [vmem:[#allocation10 + $0x4e0] sm:$0xff]
        %v2433 = vld [vmem:[#allocation10 + $0x4e8] sm:$0xff]
        %v2434 = vld [vmem:[#allocation10 + $0x4f0] sm:$0xff]
        %v2435 = vld [vmem:[#allocation10 + $0x4f8] sm:$0xff]
        %v2436 = vld [vmem:[#allocation10 + $0x500] sm:$0xff]
        %v2437 = vld [vmem:[#allocation10 + $0x508] sm:$0xff]
        %v2438 = vld [vmem:[#allocation10 + $0x510] sm:$0xff]
        %v2439 = vld [vmem:[#allocation10 + $0x518] sm:$0xff]
        %v2440 = vld [vmem:[#allocation10 + $0x520] sm:$0xff]
        %v2441 = vld [vmem:[#allocation10 + $0x528] sm:$0xff]
        %v2442 = vld [vmem:[#allocation10 + $0x530] sm:$0xff]
        %v2443 = vld [vmem:[#allocation10 + $0x538] sm:$0xff]
        %v2444 = vld [vmem:[#allocation10 + $0x540] sm:$0xff]
        %v2445 = vld [vmem:[#allocation10 + $0x548] sm:$0xff]
        %v2446 = vld [vmem:[#allocation10 + $0x550] sm:$0xff]
        %v2447 = vld [vmem:[#allocation10 + $0x558] sm:$0xff]
        %v2448 = vld [vmem:[#allocation10 + $0x560] sm:$0xff]
        %v2449 = vld [vmem:[#allocation10 + $0x568] sm:$0xff]
        %v2450 = vld [vmem:[#allocation10 + $0x570] sm:$0xff]
        %v2451 = vld [vmem:[#allocation10 + $0x578] sm:$0xff]
        %v2452 = vld [vmem:[#allocation10 + $0x580] sm:$0xff]
        %v2453 = vld [vmem:[#allocation10 + $0x588] sm:$0xff]
        %v2454 = vld [vmem:[#allocation10 + $0x590] sm:$0xff]
        %v2455 = vld [vmem:[#allocation10 + $0x598] sm:$0xff]
        %v2456 = vld [vmem:[#allocation10 + $0x5a0] sm:$0xff]
        %v2457 = vld [vmem:[#allocation10 + $0x5a8] sm:$0xff]
        %v2458 = vld [vmem:[#allocation10 + $0x5b0] sm:$0xff]
        %v2459 = vld [vmem:[#allocation10 + $0x5b8] sm:$0xff]
        %v2460 = vld [vmem:[#allocation10 + $0x5c0] sm:$0xff]
        %v2461 = vld [vmem:[#allocation10 + $0x5c8] sm:$0xff]
        %v2462 = vld [vmem:[#allocation10 + $0x5d0] sm:$0xff]
        %v2463 = vld [vmem:[#allocation10 + $0x5d8] sm:$0xff]
        %v2464 = vld [vmem:[#allocation10 + $0x5e0] sm:$0xff]
        %v2465 = vld [vmem:[#allocation10 + $0x5e8] sm:$0xff]
        %v2466 = vld [vmem:[#allocation10 + $0x5f0] sm:$0xff]
        %v2467 = vld [vmem:[#allocation10 + $0x5f8] sm:$0xff]
        %v2468 = vld [vmem:[#allocation10 + $0x600] sm:$0xff]
        %v2469 = vld [vmem:[#allocation10 + $0x608] sm:$0xff]
        %v2470 = vld [vmem:[#allocation10 + $0x610] sm:$0xff]
        %v2471 = vld [vmem:[#allocation10 + $0x618] sm:$0xff]
        %v2472 = vld [vmem:[#allocation10 + $0x620] sm:$0xff]
        %v2473 = vld [vmem:[#allocation10 + $0x628] sm:$0xff]
        %v2474 = vld [vmem:[#allocation10 + $0x630] sm:$0xff]
        %v2475 = vld [vmem:[#allocation10 + $0x638] sm:$0xff]
        %v2476 = vld [vmem:[#allocation10 + $0x640] sm:$0xff]
        %v2477 = vld [vmem:[#allocation10 + $0x648] sm:$0xff]
        %v2478 = vld [vmem:[#allocation10 + $0x650] sm:$0xff]
        %v2479 = vld [vmem:[#allocation10 + $0x658] sm:$0xff]
        %v2480 = vld [vmem:[#allocation10 + $0x660] sm:$0xff]
        %v2481 = vld [vmem:[#allocation10 + $0x668] sm:$0xff]
        %v2482 = vld [vmem:[#allocation10 + $0x670] sm:$0xff]
        %v2483 = vld [vmem:[#allocation10 + $0x678] sm:$0xff]
        %v2484 = vld [vmem:[#allocation10 + $0x680] sm:$0xff]
        %v2485 = vld [vmem:[#allocation10 + $0x688] sm:$0xff]
        %v2486 = vld [vmem:[#allocation10 + $0x690] sm:$0xff]
        %v2487 = vld [vmem:[#allocation10 + $0x698] sm:$0xff]
        %v2488 = vld [vmem:[#allocation10 + $0x6a0] sm:$0xff]
        %v2489 = vld [vmem:[#allocation10 + $0x6a8] sm:$0xff]
        %v2490 = vld [vmem:[#allocation10 + $0x6b0] sm:$0xff]
        %v2491 = vld [vmem:[#allocation10 + $0x6b8] sm:$0xff]
        %v2492 = vld [vmem:[#allocation10 + $0x6c0] sm:$0xff]
        %v2493 = vld [vmem:[#allocation10 + $0x6c8] sm:$0xff]
        %v2494 = vld [vmem:[#allocation10 + $0x6d0] sm:$0xff]
        %v2495 = vld [vmem:[#allocation10 + $0x6d8] sm:$0xff]
        %v2496 = vld [vmem:[#allocation10 + $0x6e0] sm:$0xff]
        %v2497 = vld [vmem:[#allocation10 + $0x6e8] sm:$0xff]
        %v2498 = vld [vmem:[#allocation10 + $0x6f0] sm:$0xff]
        %v2499 = vld [vmem:[#allocation10 + $0x6f8] sm:$0xff]
        %v2500 = vld [vmem:[#allocation10 + $0x700] sm:$0xff]
        %v2501 = vld [vmem:[#allocation10 + $0x708] sm:$0xff]
        %v2502 = vld [vmem:[#allocation10 + $0x710] sm:$0xff]
        %v2503 = vld [vmem:[#allocation10 + $0x718] sm:$0xff]
        %v2504 = vld [vmem:[#allocation10 + $0x720] sm:$0xff]
        %v2505 = vld [vmem:[#allocation10 + $0x728] sm:$0xff]
        %v2506 = vld [vmem:[#allocation10 + $0x730] sm:$0xff]
        %v2507 = vld [vmem:[#allocation10 + $0x738] sm:$0xff]
        %v2508 = vld [vmem:[#allocation10 + $0x740] sm:$0xff]
        %v2509 = vld [vmem:[#allocation10 + $0x748] sm:$0xff]
        %v2510 = vld [vmem:[#allocation10 + $0x750] sm:$0xff]
        %v2511 = vld [vmem:[#allocation10 + $0x758] sm:$0xff]
        %v2512 = vld [vmem:[#allocation10 + $0x760] sm:$0xff]
        %v2513 = vld [vmem:[#allocation10 + $0x768] sm:$0xff]
        %v2514 = vld [vmem:[#allocation10 + $0x770] sm:$0xff]
        %v2515 = vld [vmem:[#allocation10 + $0x778] sm:$0xff]
        %v2516 = vld [vmem:[#allocation10 + $0x780] sm:$0xff]
        %v2517 = vld [vmem:[#allocation10 + $0x788] sm:$0xff]
        %v2518 = vld [vmem:[#allocation10 + $0x790] sm:$0xff]
        %v2519 = vld [vmem:[#allocation10 + $0x798] sm:$0xff]
        %v2520 = vld [vmem:[#allocation10 + $0x7a0] sm:$0xff]
        %v2521 = vld [vmem:[#allocation10 + $0x7a8] sm:$0xff]
        %v2522 = vld [vmem:[#allocation10 + $0x7b0] sm:$0xff]
        %v2523 = vld [vmem:[#allocation10 + $0x7b8] sm:$0xff]
        %v2524 = vld [vmem:[#allocation10 + $0x7c0] sm:$0xff]
        %v2525 = vld [vmem:[#allocation10 + $0x7c8] sm:$0xff]
        %v2526 = vld [vmem:[#allocation10 + $0x7d0] sm:$0xff]
        %v2527 = vld [vmem:[#allocation10 + $0x7d8] sm:$0xff]
        %v2528 = vld [vmem:[#allocation10 + $0x7e0] sm:$0xff]
        %v2529 = vld [vmem:[#allocation10 + $0x7e8] sm:$0xff]
        %v2530 = vld [vmem:[#allocation10 + $0x7f0] sm:$0xff]
        %v2531 = vld [vmem:[#allocation10 + $0x7f8] sm:$0xff]
        %v2532 = vld [vmem:[#allocation10 + $0x800] sm:$0xff]
        %v2533 = vld [vmem:[#allocation10 + $0x808] sm:$0xff]
        %v2534 = vld [vmem:[#allocation10 + $0x810] sm:$0xff]
        %v2535 = vld [vmem:[#allocation10 + $0x818] sm:$0xff]
        %v2536 = vld [vmem:[#allocation10 + $0x820] sm:$0xff]
        %v2537 = vld [vmem:[#allocation10 + $0x828] sm:$0xff]
        %v2538 = vld [vmem:[#allocation10 + $0x830] sm:$0xff]
        %v2539 = vld [vmem:[#allocation10 + $0x838] sm:$0xff]
        %v2540 = vld [vmem:[#allocation10 + $0x840] sm:$0xff]
        %v2541 = vld [vmem:[#allocation10 + $0x848] sm:$0xff]
        %v2542 = vld [vmem:[#allocation10 + $0x850] sm:$0xff]
        %v2543 = vld [vmem:[#allocation10 + $0x858] sm:$0xff]
        %v2544 = vld [vmem:[#allocation10 + $0x860] sm:$0xff]
        %v2545 = vld [vmem:[#allocation10 + $0x868] sm:$0xff]
        %v2546 = vld [vmem:[#allocation10 + $0x870] sm:$0xff]
        %v2547 = vld [vmem:[#allocation10 + $0x878] sm:$0xff]
        %v2548 = vld [vmem:[#allocation10 + $0x880] sm:$0xff]
        %v2549 = vld [vmem:[#allocation10 + $0x888] sm:$0xff]
        %v2550 = vld [vmem:[#allocation10 + $0x890] sm:$0xff]
        %v2551 = vld [vmem:[#allocation10 + $0x898] sm:$0xff]
        %v2552 = vld [vmem:[#allocation10 + $0x8a0] sm:$0xff]
        %v2553 = vld [vmem:[#allocation10 + $0x8a8] sm:$0xff]
        %v2554 = vld [vmem:[#allocation10 + $0x8b0] sm:$0xff]
        %v2555 = vld [vmem:[#allocation10 + $0x8b8] sm:$0xff]
        %v2556 = vld [vmem:[#allocation10 + $0x8c0] sm:$0xff]
        %v2557 = vld [vmem:[#allocation10 + $0x8c8] sm:$0xff]
        %v2558 = vld [vmem:[#allocation10 + $0x8d0] sm:$0xff]
        %v2559 = vld [vmem:[#allocation10 + $0x8d8] sm:$0xff]
        %v2560 = vld [vmem:[#allocation10 + $0x8e0] sm:$0xff]
        %v2561 = vld [vmem:[#allocation10 + $0x8e8] sm:$0xff]
        %v2562 = vld [vmem:[#allocation10 + $0x8f0] sm:$0xff]
        %v2563 = vld [vmem:[#allocation10 + $0x8f8] sm:$0xff]
        %v2564 = vunpack.c.l.bf16 %v2276
        %v2565 = vunpack.c.h.bf16 %v2276
        %v2566 = vunpack.c.l.bf16 %v2277
        %v2567 = vunpack.c.h.bf16 %v2277
        %v2568 = vunpack.c.l.bf16 %v2278
        %v2569 = vunpack.c.h.bf16 %v2278
        %v2570 = vunpack.c.l.bf16 %v2279
        %v2571 = vunpack.c.h.bf16 %v2279
        %v2572 = vunpack.c.l.bf16 %v2280
        %v2573 = vunpack.c.h.bf16 %v2280
        %v2574 = vunpack.c.l.bf16 %v2281
        %v2575 = vunpack.c.h.bf16 %v2281
        %v2576 = vunpack.c.l.bf16 %v2282
        %v2577 = vunpack.c.h.bf16 %v2282
        %v2578 = vunpack.c.l.bf16 %v2283
        %v2579 = vunpack.c.h.bf16 %v2283
        %v2580 = vunpack.c.l.bf16 %v2284
        %v2581 = vunpack.c.h.bf16 %v2284
        %v2582 = vunpack.c.l.bf16 %v2285
        %v2583 = vunpack.c.h.bf16 %v2285
        %v2584 = vunpack.c.l.bf16 %v2286
        %v2585 = vunpack.c.h.bf16 %v2286
        %v2586 = vunpack.c.l.bf16 %v2287
        %v2587 = vunpack.c.h.bf16 %v2287
        %v2588 = vunpack.c.l.bf16 %v2288
        %v2589 = vunpack.c.h.bf16 %v2288
        %v2590 = vunpack.c.l.bf16 %v2289
        %v2591 = vunpack.c.h.bf16 %v2289
        %v2592 = vunpack.c.l.bf16 %v2290
        %v2593 = vunpack.c.h.bf16 %v2290
        %v2594 = vunpack.c.l.bf16 %v2291
        %v2595 = vunpack.c.h.bf16 %v2291
        %v2596 = vunpack.c.l.bf16 %v2292
        %v2597 = vunpack.c.h.bf16 %v2292
        %v2598 = vunpack.c.l.bf16 %v2293
        %v2599 = vunpack.c.h.bf16 %v2293
        %v2600 = vunpack.c.l.bf16 %v2294
        %v2601 = vunpack.c.h.bf16 %v2294
        %v2602 = vunpack.c.l.bf16 %v2295
        %v2603 = vunpack.c.h.bf16 %v2295
        %v2604 = vunpack.c.l.bf16 %v2296
        %v2605 = vunpack.c.h.bf16 %v2296
        %v2606 = vunpack.c.l.bf16 %v2297
        %v2607 = vunpack.c.h.bf16 %v2297
        %v2608 = vunpack.c.l.bf16 %v2298
        %v2609 = vunpack.c.h.bf16 %v2298
        %v2610 = vunpack.c.l.bf16 %v2299
        %v2611 = vunpack.c.h.bf16 %v2299
        %v2612 = vunpack.c.l.bf16 %v2300
        %v2613 = vunpack.c.h.bf16 %v2300
        %v2614 = vunpack.c.l.bf16 %v2301
        %v2615 = vunpack.c.h.bf16 %v2301
        %v2616 = vunpack.c.l.bf16 %v2302
        %v2617 = vunpack.c.h.bf16 %v2302
        %v2618 = vunpack.c.l.bf16 %v2303
        %v2619 = vunpack.c.h.bf16 %v2303
        %v2620 = vunpack.c.l.bf16 %v2304
        %v2621 = vunpack.c.h.bf16 %v2304
        %v2622 = vunpack.c.l.bf16 %v2305
        %v2623 = vunpack.c.h.bf16 %v2305
        %v2624 = vunpack.c.l.bf16 %v2306
        %v2625 = vunpack.c.h.bf16 %v2306
        %v2626 = vunpack.c.l.bf16 %v2307
        %v2627 = vunpack.c.h.bf16 %v2307
        %v2628 = vunpack.c.l.bf16 %v2308
        %v2629 = vunpack.c.h.bf16 %v2308
        %v2630 = vunpack.c.l.bf16 %v2309
        %v2631 = vunpack.c.h.bf16 %v2309
        %v2632 = vunpack.c.l.bf16 %v2310
        %v2633 = vunpack.c.h.bf16 %v2310
        %v2634 = vunpack.c.l.bf16 %v2311
        %v2635 = vunpack.c.h.bf16 %v2311
        %v2636 = vunpack.c.l.bf16 %v2312
        %v2637 = vunpack.c.h.bf16 %v2312
        %v2638 = vunpack.c.l.bf16 %v2313
        %v2639 = vunpack.c.h.bf16 %v2313
        %v2640 = vunpack.c.l.bf16 %v2314
        %v2641 = vunpack.c.h.bf16 %v2314
        %v2642 = vunpack.c.l.bf16 %v2315
        %v2643 = vunpack.c.h.bf16 %v2315
        %v2644 = vunpack.c.l.bf16 %v2316
        %v2645 = vunpack.c.h.bf16 %v2316
        %v2646 = vunpack.c.l.bf16 %v2317
        %v2647 = vunpack.c.h.bf16 %v2317
        %v2648 = vunpack.c.l.bf16 %v2318
        %v2649 = vunpack.c.h.bf16 %v2318
        %v2650 = vunpack.c.l.bf16 %v2319
        %v2651 = vunpack.c.h.bf16 %v2319
        %v2652 = vunpack.c.l.bf16 %v2320
        %v2653 = vunpack.c.h.bf16 %v2320
        %v2654 = vunpack.c.l.bf16 %v2321
        %v2655 = vunpack.c.h.bf16 %v2321
        %v2656 = vunpack.c.l.bf16 %v2322
        %v2657 = vunpack.c.h.bf16 %v2322
        %v2658 = vunpack.c.l.bf16 %v2323
        %v2659 = vunpack.c.h.bf16 %v2323
        %v2660 = vunpack.c.l.bf16 %v2324
        %v2661 = vunpack.c.h.bf16 %v2324
        %v2662 = vunpack.c.l.bf16 %v2325
        %v2663 = vunpack.c.h.bf16 %v2325
        %v2664 = vunpack.c.l.bf16 %v2326
        %v2665 = vunpack.c.h.bf16 %v2326
        %v2666 = vunpack.c.l.bf16 %v2327
        %v2667 = vunpack.c.h.bf16 %v2327
        %v2668 = vunpack.c.l.bf16 %v2328
        %v2669 = vunpack.c.h.bf16 %v2328
        %v2670 = vunpack.c.l.bf16 %v2329
        %v2671 = vunpack.c.h.bf16 %v2329
        %v2672 = vunpack.c.l.bf16 %v2330
        %v2673 = vunpack.c.h.bf16 %v2330
        %v2674 = vunpack.c.l.bf16 %v2331
        %v2675 = vunpack.c.h.bf16 %v2331
        %v2676 = vunpack.c.l.bf16 %v2332
        %v2677 = vunpack.c.h.bf16 %v2332
        %v2678 = vunpack.c.l.bf16 %v2333
        %v2679 = vunpack.c.h.bf16 %v2333
        %v2680 = vunpack.c.l.bf16 %v2334
        %v2681 = vunpack.c.h.bf16 %v2334
        %v2682 = vunpack.c.l.bf16 %v2335
        %v2683 = vunpack.c.h.bf16 %v2335
        %v2684 = vunpack.c.l.bf16 %v2336
        %v2685 = vunpack.c.h.bf16 %v2336
        %v2686 = vunpack.c.l.bf16 %v2337
        %v2687 = vunpack.c.h.bf16 %v2337
        %v2688 = vunpack.c.l.bf16 %v2338
        %v2689 = vunpack.c.h.bf16 %v2338
        %v2690 = vunpack.c.l.bf16 %v2339
        %v2691 = vunpack.c.h.bf16 %v2339
        %v2692 = vunpack.c.l.bf16 %v2340
        %v2693 = vunpack.c.h.bf16 %v2340
        %v2694 = vunpack.c.l.bf16 %v2341
        %v2695 = vunpack.c.h.bf16 %v2341
        %v2696 = vunpack.c.l.bf16 %v2342
        %v2697 = vunpack.c.h.bf16 %v2342
        %v2698 = vunpack.c.l.bf16 %v2343
        %v2699 = vunpack.c.h.bf16 %v2343
        %v2700 = vunpack.c.l.bf16 %v2344
        %v2701 = vunpack.c.h.bf16 %v2344
        %v2702 = vunpack.c.l.bf16 %v2345
        %v2703 = vunpack.c.h.bf16 %v2345
        %v2704 = vunpack.c.l.bf16 %v2346
        %v2705 = vunpack.c.h.bf16 %v2346
        %v2706 = vunpack.c.l.bf16 %v2347
        %v2707 = vunpack.c.h.bf16 %v2347
        %v2708 = vunpack.c.l.bf16 %v2348
        %v2709 = vunpack.c.h.bf16 %v2348
        %v2710 = vunpack.c.l.bf16 %v2349
        %v2711 = vunpack.c.h.bf16 %v2349
        %v2712 = vunpack.c.l.bf16 %v2350
        %v2713 = vunpack.c.h.bf16 %v2350
        %v2714 = vunpack.c.l.bf16 %v2351
        %v2715 = vunpack.c.h.bf16 %v2351
        %v2716 = vunpack.c.l.bf16 %v2352
        %v2717 = vunpack.c.h.bf16 %v2352
        %v2718 = vunpack.c.l.bf16 %v2353
        %v2719 = vunpack.c.h.bf16 %v2353
        %v2720 = vunpack.c.l.bf16 %v2354
        %v2721 = vunpack.c.h.bf16 %v2354
        %v2722 = vunpack.c.l.bf16 %v2355
        %v2723 = vunpack.c.h.bf16 %v2355
        %v2724 = vunpack.c.l.bf16 %v2356
        %v2725 = vunpack.c.h.bf16 %v2356
        %v2726 = vunpack.c.l.bf16 %v2357
        %v2727 = vunpack.c.h.bf16 %v2357
        %v2728 = vunpack.c.l.bf16 %v2358
        %v2729 = vunpack.c.h.bf16 %v2358
        %v2730 = vunpack.c.l.bf16 %v2359
        %v2731 = vunpack.c.h.bf16 %v2359
        %v2732 = vunpack.c.l.bf16 %v2360
        %v2733 = vunpack.c.h.bf16 %v2360
        %v2734 = vunpack.c.l.bf16 %v2361
        %v2735 = vunpack.c.h.bf16 %v2361
        %v2736 = vunpack.c.l.bf16 %v2362
        %v2737 = vunpack.c.h.bf16 %v2362
        %v2738 = vunpack.c.l.bf16 %v2363
        %v2739 = vunpack.c.h.bf16 %v2363
        %v2740 = vunpack.c.l.bf16 %v2364
        %v2741 = vunpack.c.h.bf16 %v2364
        %v2742 = vunpack.c.l.bf16 %v2365
        %v2743 = vunpack.c.h.bf16 %v2365
        %v2744 = vunpack.c.l.bf16 %v2366
        %v2745 = vunpack.c.h.bf16 %v2366
        %v2746 = vunpack.c.l.bf16 %v2367
        %v2747 = vunpack.c.h.bf16 %v2367
        %v2748 = vunpack.c.l.bf16 %v2368
        %v2749 = vunpack.c.h.bf16 %v2368
        %v2750 = vunpack.c.l.bf16 %v2369
        %v2751 = vunpack.c.h.bf16 %v2369
        %v2752 = vunpack.c.l.bf16 %v2370
        %v2753 = vunpack.c.h.bf16 %v2370
        %v2754 = vunpack.c.l.bf16 %v2371
        %v2755 = vunpack.c.h.bf16 %v2371
        %v2756 = vunpack.c.l.bf16 %v2372
        %v2757 = vunpack.c.h.bf16 %v2372
        %v2758 = vunpack.c.l.bf16 %v2373
        %v2759 = vunpack.c.h.bf16 %v2373
        %v2760 = vunpack.c.l.bf16 %v2374
        %v2761 = vunpack.c.h.bf16 %v2374
        %v2762 = vunpack.c.l.bf16 %v2375
        %v2763 = vunpack.c.h.bf16 %v2375
        %v2764 = vunpack.c.l.bf16 %v2376
        %v2765 = vunpack.c.h.bf16 %v2376
        %v2766 = vunpack.c.l.bf16 %v2377
        %v2767 = vunpack.c.h.bf16 %v2377
        %v2768 = vunpack.c.l.bf16 %v2378
        %v2769 = vunpack.c.h.bf16 %v2378
        %v2770 = vunpack.c.l.bf16 %v2379
        %v2771 = vunpack.c.h.bf16 %v2379
        %v2772 = vunpack.c.l.bf16 %v2380
        %v2773 = vunpack.c.h.bf16 %v2380
        %v2774 = vunpack.c.l.bf16 %v2381
        %v2775 = vunpack.c.h.bf16 %v2381
        %v2776 = vunpack.c.l.bf16 %v2382
        %v2777 = vunpack.c.h.bf16 %v2382
        %v2778 = vunpack.c.l.bf16 %v2383
        %v2779 = vunpack.c.h.bf16 %v2383
        %v2780 = vunpack.c.l.bf16 %v2384
        %v2781 = vunpack.c.h.bf16 %v2384
        %v2782 = vunpack.c.l.bf16 %v2385
        %v2783 = vunpack.c.h.bf16 %v2385
        %v2784 = vunpack.c.l.bf16 %v2386
        %v2785 = vunpack.c.h.bf16 %v2386
        %v2786 = vunpack.c.l.bf16 %v2387
        %v2787 = vunpack.c.h.bf16 %v2387
        %v2788 = vunpack.c.l.bf16 %v2388
        %v2789 = vunpack.c.h.bf16 %v2388
        %v2790 = vunpack.c.l.bf16 %v2389
        %v2791 = vunpack.c.h.bf16 %v2389
        %v2792 = vunpack.c.l.bf16 %v2390
        %v2793 = vunpack.c.h.bf16 %v2390
        %v2794 = vunpack.c.l.bf16 %v2391
        %v2795 = vunpack.c.h.bf16 %v2391
        %v2796 = vunpack.c.l.bf16 %v2392
        %v2797 = vunpack.c.h.bf16 %v2392
        %v2798 = vunpack.c.l.bf16 %v2393
        %v2799 = vunpack.c.h.bf16 %v2393
        %v2800 = vunpack.c.l.bf16 %v2394
        %v2801 = vunpack.c.h.bf16 %v2394
        %v2802 = vunpack.c.l.bf16 %v2395
        %v2803 = vunpack.c.h.bf16 %v2395
        %v2804 = vunpack.c.l.bf16 %v2396
        %v2805 = vunpack.c.h.bf16 %v2396
        %v2806 = vunpack.c.l.bf16 %v2397
        %v2807 = vunpack.c.h.bf16 %v2397
        %v2808 = vunpack.c.l.bf16 %v2398
        %v2809 = vunpack.c.h.bf16 %v2398
        %v2810 = vunpack.c.l.bf16 %v2399
        %v2811 = vunpack.c.h.bf16 %v2399
        %v2812 = vunpack.c.l.bf16 %v2400
        %v2813 = vunpack.c.h.bf16 %v2400
        %v2814 = vunpack.c.l.bf16 %v2401
        %v2815 = vunpack.c.h.bf16 %v2401
        %v2816 = vunpack.c.l.bf16 %v2402
        %v2817 = vunpack.c.h.bf16 %v2402
        %v2818 = vunpack.c.l.bf16 %v2403
        %v2819 = vunpack.c.h.bf16 %v2403
        %v2820 = vunpack.c.l.bf16 %v2404
        %v2821 = vunpack.c.h.bf16 %v2404
        %v2822 = vunpack.c.l.bf16 %v2405
        %v2823 = vunpack.c.h.bf16 %v2405
        %v2824 = vunpack.c.l.bf16 %v2406
        %v2825 = vunpack.c.h.bf16 %v2406
        %v2826 = vunpack.c.l.bf16 %v2407
        %v2827 = vunpack.c.h.bf16 %v2407
        %v2828 = vunpack.c.l.bf16 %v2408
        %v2829 = vunpack.c.h.bf16 %v2408
        %v2830 = vunpack.c.l.bf16 %v2409
        %v2831 = vunpack.c.h.bf16 %v2409
        %v2832 = vunpack.c.l.bf16 %v2410
        %v2833 = vunpack.c.h.bf16 %v2410
        %v2834 = vunpack.c.l.bf16 %v2411
        %v2835 = vunpack.c.h.bf16 %v2411
        %v2836 = vunpack.c.l.bf16 %v2412
        %v2837 = vunpack.c.h.bf16 %v2412
        %v2838 = vunpack.c.l.bf16 %v2413
        %v2839 = vunpack.c.h.bf16 %v2413
        %v2840 = vunpack.c.l.bf16 %v2414
        %v2841 = vunpack.c.h.bf16 %v2414
        %v2842 = vunpack.c.l.bf16 %v2415
        %v2843 = vunpack.c.h.bf16 %v2415
        %v2844 = vunpack.c.l.bf16 %v2416
        %v2845 = vunpack.c.h.bf16 %v2416
        %v2846 = vunpack.c.l.bf16 %v2417
        %v2847 = vunpack.c.h.bf16 %v2417
        %v2848 = vunpack.c.l.bf16 %v2418
        %v2849 = vunpack.c.h.bf16 %v2418
        %v2850 = vunpack.c.l.bf16 %v2419
        %v2851 = vunpack.c.h.bf16 %v2419
        %v2852 = vunpack.c.l.bf16 %v2420
        %v2853 = vunpack.c.h.bf16 %v2420
        %v2854 = vunpack.c.l.bf16 %v2421
        %v2855 = vunpack.c.h.bf16 %v2421
        %v2856 = vunpack.c.l.bf16 %v2422
        %v2857 = vunpack.c.h.bf16 %v2422
        %v2858 = vunpack.c.l.bf16 %v2423
        %v2859 = vunpack.c.h.bf16 %v2423
        %v2860 = vunpack.c.l.bf16 %v2424
        %v2861 = vunpack.c.h.bf16 %v2424
        %v2862 = vunpack.c.l.bf16 %v2425
        %v2863 = vunpack.c.h.bf16 %v2425
        %v2864 = vunpack.c.l.bf16 %v2426
        %v2865 = vunpack.c.h.bf16 %v2426
        %v2866 = vunpack.c.l.bf16 %v2427
        %v2867 = vunpack.c.h.bf16 %v2427
        %v2868 = vunpack.c.l.bf16 %v2428
        %v2869 = vunpack.c.h.bf16 %v2428
        %v2870 = vunpack.c.l.bf16 %v2429
        %v2871 = vunpack.c.h.bf16 %v2429
        %v2872 = vunpack.c.l.bf16 %v2430
        %v2873 = vunpack.c.h.bf16 %v2430
        %v2874 = vunpack.c.l.bf16 %v2431
        %v2875 = vunpack.c.h.bf16 %v2431
        %v2876 = vunpack.c.l.bf16 %v2432
        %v2877 = vunpack.c.h.bf16 %v2432
        %v2878 = vunpack.c.l.bf16 %v2433
        %v2879 = vunpack.c.h.bf16 %v2433
        %v2880 = vunpack.c.l.bf16 %v2434
        %v2881 = vunpack.c.h.bf16 %v2434
        %v2882 = vunpack.c.l.bf16 %v2435
        %v2883 = vunpack.c.h.bf16 %v2435
        %v2884 = vunpack.c.l.bf16 %v2436
        %v2885 = vunpack.c.h.bf16 %v2436
        %v2886 = vunpack.c.l.bf16 %v2437
        %v2887 = vunpack.c.h.bf16 %v2437
        %v2888 = vunpack.c.l.bf16 %v2438
        %v2889 = vunpack.c.h.bf16 %v2438
        %v2890 = vunpack.c.l.bf16 %v2439
        %v2891 = vunpack.c.h.bf16 %v2439
        %v2892 = vunpack.c.l.bf16 %v2440
        %v2893 = vunpack.c.h.bf16 %v2440
        %v2894 = vunpack.c.l.bf16 %v2441
        %v2895 = vunpack.c.h.bf16 %v2441
        %v2896 = vunpack.c.l.bf16 %v2442
        %v2897 = vunpack.c.h.bf16 %v2442
        %v2898 = vunpack.c.l.bf16 %v2443
        %v2899 = vunpack.c.h.bf16 %v2443
        %v2900 = vunpack.c.l.bf16 %v2444
        %v2901 = vunpack.c.h.bf16 %v2444
        %v2902 = vunpack.c.l.bf16 %v2445
        %v2903 = vunpack.c.h.bf16 %v2445
        %v2904 = vunpack.c.l.bf16 %v2446
        %v2905 = vunpack.c.h.bf16 %v2446
        %v2906 = vunpack.c.l.bf16 %v2447
        %v2907 = vunpack.c.h.bf16 %v2447
        %v2908 = vunpack.c.l.bf16 %v2448
        %v2909 = vunpack.c.h.bf16 %v2448
        %v2910 = vunpack.c.l.bf16 %v2449
        %v2911 = vunpack.c.h.bf16 %v2449
        %v2912 = vunpack.c.l.bf16 %v2450
        %v2913 = vunpack.c.h.bf16 %v2450
        %v2914 = vunpack.c.l.bf16 %v2451
        %v2915 = vunpack.c.h.bf16 %v2451
        %v2916 = vunpack.c.l.bf16 %v2452
        %v2917 = vunpack.c.h.bf16 %v2452
        %v2918 = vunpack.c.l.bf16 %v2453
        %v2919 = vunpack.c.h.bf16 %v2453
        %v2920 = vunpack.c.l.bf16 %v2454
        %v2921 = vunpack.c.h.bf16 %v2454
        %v2922 = vunpack.c.l.bf16 %v2455
        %v2923 = vunpack.c.h.bf16 %v2455
        %v2924 = vunpack.c.l.bf16 %v2456
        %v2925 = vunpack.c.h.bf16 %v2456
        %v2926 = vunpack.c.l.bf16 %v2457
        %v2927 = vunpack.c.h.bf16 %v2457
        %v2928 = vunpack.c.l.bf16 %v2458
        %v2929 = vunpack.c.h.bf16 %v2458
        %v2930 = vunpack.c.l.bf16 %v2459
        %v2931 = vunpack.c.h.bf16 %v2459
        %v2932 = vunpack.c.l.bf16 %v2460
        %v2933 = vunpack.c.h.bf16 %v2460
        %v2934 = vunpack.c.l.bf16 %v2461
        %v2935 = vunpack.c.h.bf16 %v2461
        %v2936 = vunpack.c.l.bf16 %v2462
        %v2937 = vunpack.c.h.bf16 %v2462
        %v2938 = vunpack.c.l.bf16 %v2463
        %v2939 = vunpack.c.h.bf16 %v2463
        %v2940 = vunpack.c.l.bf16 %v2464
        %v2941 = vunpack.c.h.bf16 %v2464
        %v2942 = vunpack.c.l.bf16 %v2465
        %v2943 = vunpack.c.h.bf16 %v2465
        %v2944 = vunpack.c.l.bf16 %v2466
        %v2945 = vunpack.c.h.bf16 %v2466
        %v2946 = vunpack.c.l.bf16 %v2467
        %v2947 = vunpack.c.h.bf16 %v2467
        %v2948 = vunpack.c.l.bf16 %v2468
        %v2949 = vunpack.c.h.bf16 %v2468
        %v2950 = vunpack.c.l.bf16 %v2469
        %v2951 = vunpack.c.h.bf16 %v2469
        %v2952 = vunpack.c.l.bf16 %v2470
        %v2953 = vunpack.c.h.bf16 %v2470
        %v2954 = vunpack.c.l.bf16 %v2471
        %v2955 = vunpack.c.h.bf16 %v2471
        %v2956 = vunpack.c.l.bf16 %v2472
        %v2957 = vunpack.c.h.bf16 %v2472
        %v2958 = vunpack.c.l.bf16 %v2473
        %v2959 = vunpack.c.h.bf16 %v2473
        %v2960 = vunpack.c.l.bf16 %v2474
        %v2961 = vunpack.c.h.bf16 %v2474
        %v2962 = vunpack.c.l.bf16 %v2475
        %v2963 = vunpack.c.h.bf16 %v2475
        %v2964 = vunpack.c.l.bf16 %v2476
        %v2965 = vunpack.c.h.bf16 %v2476
        %v2966 = vunpack.c.l.bf16 %v2477
        %v2967 = vunpack.c.h.bf16 %v2477
        %v2968 = vunpack.c.l.bf16 %v2478
        %v2969 = vunpack.c.h.bf16 %v2478
        %v2970 = vunpack.c.l.bf16 %v2479
        %v2971 = vunpack.c.h.bf16 %v2479
        %v2972 = vunpack.c.l.bf16 %v2480
        %v2973 = vunpack.c.h.bf16 %v2480
        %v2974 = vunpack.c.l.bf16 %v2481
        %v2975 = vunpack.c.h.bf16 %v2481
        %v2976 = vunpack.c.l.bf16 %v2482
        %v2977 = vunpack.c.h.bf16 %v2482
        %v2978 = vunpack.c.l.bf16 %v2483
        %v2979 = vunpack.c.h.bf16 %v2483
        %v2980 = vunpack.c.l.bf16 %v2484
        %v2981 = vunpack.c.h.bf16 %v2484
        %v2982 = vunpack.c.l.bf16 %v2485
        %v2983 = vunpack.c.h.bf16 %v2485
        %v2984 = vunpack.c.l.bf16 %v2486
        %v2985 = vunpack.c.h.bf16 %v2486
        %v2986 = vunpack.c.l.bf16 %v2487
        %v2987 = vunpack.c.h.bf16 %v2487
        %v2988 = vunpack.c.l.bf16 %v2488
        %v2989 = vunpack.c.h.bf16 %v2488
        %v2990 = vunpack.c.l.bf16 %v2489
        %v2991 = vunpack.c.h.bf16 %v2489
        %v2992 = vunpack.c.l.bf16 %v2490
        %v2993 = vunpack.c.h.bf16 %v2490
        %v2994 = vunpack.c.l.bf16 %v2491
        %v2995 = vunpack.c.h.bf16 %v2491
        %v2996 = vunpack.c.l.bf16 %v2492
        %v2997 = vunpack.c.h.bf16 %v2492
        %v2998 = vunpack.c.l.bf16 %v2493
        %v2999 = vunpack.c.h.bf16 %v2493
        %v3000 = vunpack.c.l.bf16 %v2494
        %v3001 = vunpack.c.h.bf16 %v2494
        %v3002 = vunpack.c.l.bf16 %v2495
        %v3003 = vunpack.c.h.bf16 %v2495
        %v3004 = vunpack.c.l.bf16 %v2496
        %v3005 = vunpack.c.h.bf16 %v2496
        %v3006 = vunpack.c.l.bf16 %v2497
        %v3007 = vunpack.c.h.bf16 %v2497
        %v3008 = vunpack.c.l.bf16 %v2498
        %v3009 = vunpack.c.h.bf16 %v2498
        %v3010 = vunpack.c.l.bf16 %v2499
        %v3011 = vunpack.c.h.bf16 %v2499
        %v3012 = vunpack.c.l.bf16 %v2500
        %v3013 = vunpack.c.h.bf16 %v2500
        %v3014 = vunpack.c.l.bf16 %v2501
        %v3015 = vunpack.c.h.bf16 %v2501
        %v3016 = vunpack.c.l.bf16 %v2502
        %v3017 = vunpack.c.h.bf16 %v2502
        %v3018 = vunpack.c.l.bf16 %v2503
        %v3019 = vunpack.c.h.bf16 %v2503
        %v3020 = vunpack.c.l.bf16 %v2504
        %v3021 = vunpack.c.h.bf16 %v2504
        %v3022 = vunpack.c.l.bf16 %v2505
        %v3023 = vunpack.c.h.bf16 %v2505
        %v3024 = vunpack.c.l.bf16 %v2506
        %v3025 = vunpack.c.h.bf16 %v2506
        %v3026 = vunpack.c.l.bf16 %v2507
        %v3027 = vunpack.c.h.bf16 %v2507
        %v3028 = vunpack.c.l.bf16 %v2508
        %v3029 = vunpack.c.h.bf16 %v2508
        %v3030 = vunpack.c.l.bf16 %v2509
        %v3031 = vunpack.c.h.bf16 %v2509
        %v3032 = vunpack.c.l.bf16 %v2510
        %v3033 = vunpack.c.h.bf16 %v2510
        %v3034 = vunpack.c.l.bf16 %v2511
        %v3035 = vunpack.c.h.bf16 %v2511
        %v3036 = vunpack.c.l.bf16 %v2512
        %v3037 = vunpack.c.h.bf16 %v2512
        %v3038 = vunpack.c.l.bf16 %v2513
        %v3039 = vunpack.c.h.bf16 %v2513
        %v3040 = vunpack.c.l.bf16 %v2514
        %v3041 = vunpack.c.h.bf16 %v2514
        %v3042 = vunpack.c.l.bf16 %v2515
        %v3043 = vunpack.c.h.bf16 %v2515
        %v3044 = vunpack.c.l.bf16 %v2516
        %v3045 = vunpack.c.h.bf16 %v2516
        %v3046 = vunpack.c.l.bf16 %v2517
        %v3047 = vunpack.c.h.bf16 %v2517
        %v3048 = vunpack.c.l.bf16 %v2518
        %v3049 = vunpack.c.h.bf16 %v2518
        %v3050 = vunpack.c.l.bf16 %v2519
        %v3051 = vunpack.c.h.bf16 %v2519
        %v3052 = vunpack.c.l.bf16 %v2520
        %v3053 = vunpack.c.h.bf16 %v2520
        %v3054 = vunpack.c.l.bf16 %v2521
        %v3055 = vunpack.c.h.bf16 %v2521
        %v3056 = vunpack.c.l.bf16 %v2522
        %v3057 = vunpack.c.h.bf16 %v2522
        %v3058 = vunpack.c.l.bf16 %v2523
        %v3059 = vunpack.c.h.bf16 %v2523
        %v3060 = vunpack.c.l.bf16 %v2524
        %v3061 = vunpack.c.h.bf16 %v2524
        %v3062 = vunpack.c.l.bf16 %v2525
        %v3063 = vunpack.c.h.bf16 %v2525
        %v3064 = vunpack.c.l.bf16 %v2526
        %v3065 = vunpack.c.h.bf16 %v2526
        %v3066 = vunpack.c.l.bf16 %v2527
        %v3067 = vunpack.c.h.bf16 %v2527
        %v3068 = vunpack.c.l.bf16 %v2528
        %v3069 = vunpack.c.h.bf16 %v2528
        %v3070 = vunpack.c.l.bf16 %v2529
        %v3071 = vunpack.c.h.bf16 %v2529
        %v3072 = vunpack.c.l.bf16 %v2530
        %v3073 = vunpack.c.h.bf16 %v2530
        %v3074 = vunpack.c.l.bf16 %v2531
        %v3075 = vunpack.c.h.bf16 %v2531
        %v3076 = vunpack.c.l.bf16 %v2532
        %v3077 = vunpack.c.h.bf16 %v2532
        %v3078 = vunpack.c.l.bf16 %v2533
        %v3079 = vunpack.c.h.bf16 %v2533
        %v3080 = vunpack.c.l.bf16 %v2534
        %v3081 = vunpack.c.h.bf16 %v2534
        %v3082 = vunpack.c.l.bf16 %v2535
        %v3083 = vunpack.c.h.bf16 %v2535
        %v3084 = vunpack.c.l.bf16 %v2536
        %v3085 = vunpack.c.h.bf16 %v2536
        %v3086 = vunpack.c.l.bf16 %v2537
        %v3087 = vunpack.c.h.bf16 %v2537
        %v3088 = vunpack.c.l.bf16 %v2538
        %v3089 = vunpack.c.h.bf16 %v2538
        %v3090 = vunpack.c.l.bf16 %v2539
        %v3091 = vunpack.c.h.bf16 %v2539
        %v3092 = vunpack.c.l.bf16 %v2540
        %v3093 = vunpack.c.h.bf16 %v2540
        %v3094 = vunpack.c.l.bf16 %v2541
        %v3095 = vunpack.c.h.bf16 %v2541
        %v3096 = vunpack.c.l.bf16 %v2542
        %v3097 = vunpack.c.h.bf16 %v2542
        %v3098 = vunpack.c.l.bf16 %v2543
        %v3099 = vunpack.c.h.bf16 %v2543
        %v3100 = vunpack.c.l.bf16 %v2544
        %v3101 = vunpack.c.h.bf16 %v2544
        %v3102 = vunpack.c.l.bf16 %v2545
        %v3103 = vunpack.c.h.bf16 %v2545
        %v3104 = vunpack.c.l.bf16 %v2546
        %v3105 = vunpack.c.h.bf16 %v2546
        %v3106 = vunpack.c.l.bf16 %v2547
        %v3107 = vunpack.c.h.bf16 %v2547
        %v3108 = vunpack.c.l.bf16 %v2548
        %v3109 = vunpack.c.h.bf16 %v2548
        %v3110 = vunpack.c.l.bf16 %v2549
        %v3111 = vunpack.c.h.bf16 %v2549
        %v3112 = vunpack.c.l.bf16 %v2550
        %v3113 = vunpack.c.h.bf16 %v2550
        %v3114 = vunpack.c.l.bf16 %v2551
        %v3115 = vunpack.c.h.bf16 %v2551
        %v3116 = vunpack.c.l.bf16 %v2552
        %v3117 = vunpack.c.h.bf16 %v2552
        %v3118 = vunpack.c.l.bf16 %v2553
        %v3119 = vunpack.c.h.bf16 %v2553
        %v3120 = vunpack.c.l.bf16 %v2554
        %v3121 = vunpack.c.h.bf16 %v2554
        %v3122 = vunpack.c.l.bf16 %v2555
        %v3123 = vunpack.c.h.bf16 %v2555
        %v3124 = vunpack.c.l.bf16 %v2556
        %v3125 = vunpack.c.h.bf16 %v2556
        %v3126 = vunpack.c.l.bf16 %v2557
        %v3127 = vunpack.c.h.bf16 %v2557
        %v3128 = vunpack.c.l.bf16 %v2558
        %v3129 = vunpack.c.h.bf16 %v2558
        %v3130 = vunpack.c.l.bf16 %v2559
        %v3131 = vunpack.c.h.bf16 %v2559
        %v3132 = vunpack.c.l.bf16 %v2560
        %v3133 = vunpack.c.h.bf16 %v2560
        %v3134 = vunpack.c.l.bf16 %v2561
        %v3135 = vunpack.c.h.bf16 %v2561
        %v3136 = vunpack.c.l.bf16 %v2562
        %v3137 = vunpack.c.h.bf16 %v2562
        %v3138 = vunpack.c.l.bf16 %v2563
        %v3139 = vunpack.c.h.bf16 %v2563
        %v3140 = vld [vmem:[#allocation11] sm:$0x3f]
        %v3142 = vperm.slane %v3140, 0
        %v3143 = vperm.slane %v3140, 1
        %v3144 = vperm.slane %v3140, 2
        %v3145 = vperm.slane %v3140, 3
        %v3146 = vperm.slane %v3140, 4
        %v3147 = vperm.slane %v3140, 5
        %3154 = vmatpush.msra.mxu0 %v2654
        %3155 = vmatpush.msra.mxu0 %v2648
        %3156 = vmatpush.msra.mxu0 %v2642
        %3157 = vmatpush.msra.mxu0 %v2636
        %3158 = vmatpush.msra.mxu0 %v2630
        %3159 = vmatpush.msra.mxu0 %v2624
        %3160 = vmatpush.msra.mxu0 %v2618
        %3161 = vmatpush.msra.mxu0 %v2612
        %3162 = vmatpush.msra.mxu0 %v2606
        %3163 = vmatpush.msra.mxu0 %v2600
        %3164 = vmatpush.msra.mxu0 %v2594
        %3165 = vmatpush.msra.mxu0 %v2588
        %3166 = vmatpush.msra.mxu0 %v2582
        %3167 = vmatpush.msra.mxu0 %v2576
        %3168 = vmatpush.msra.mxu0 %v2570
        %3169 = vmatpush.msra.mxu0 %v2564
        %3170 = vmatmul.f32.gmra.mxu0 %v558
        %v3171 = vpop.f32.mrf.mxu0
        %v3172 = vadd.f32 %v3142, %v3171
        %3173 = vmatmul.f32.gmra.mxu0 %v564
        %v3174 = vpop.f32.mrf.mxu0
        %v3175 = vadd.f32 %v3142, %v3174
        %3176 = vdwg.mxu0
        %3177 = vmatpush.msra.mxu0 %v2750
        %3178 = vmatpush.msra.mxu0 %v2744
        %3179 = vmatpush.msra.mxu0 %v2738
        %3180 = vmatpush.msra.mxu0 %v2732
        %3181 = vmatpush.msra.mxu0 %v2726
        %3182 = vmatpush.msra.mxu0 %v2720
        %3183 = vmatpush.msra.mxu0 %v2714
        %3184 = vmatpush.msra.mxu0 %v2708
        %3185 = vmatpush.msra.mxu0 %v2702
        %3186 = vmatpush.msra.mxu0 %v2696
        %3187 = vmatpush.msra.mxu0 %v2690
        %3188 = vmatpush.msra.mxu0 %v2684
        %3189 = vmatpush.msra.mxu0 %v2678
        %3190 = vmatpush.msra.mxu0 %v2672
        %3191 = vmatpush.msra.mxu0 %v2666
        %3192 = vmatpush.msra.mxu0 %v2660
        %3193 = vmatmul.f32.gmra.mxu0 %v559
        %v3194 = vpop.f32.mrf.mxu0
        %v3195 = vadd.f32 %v3172, %v3194
        %3196 = vmatmul.f32.gmra.mxu0 %v565
        %v3197 = vpop.f32.mrf.mxu0
        %v3198 = vadd.f32 %v3175, %v3197
        %3199 = vdwg.mxu0
        %3200 = vmatpush.msra.mxu0 %v2846
        %3201 = vmatpush.msra.mxu0 %v2840
        %3202 = vmatpush.msra.mxu0 %v2834
        %3203 = vmatpush.msra.mxu0 %v2828
        %3204 = vmatpush.msra.mxu0 %v2822
        %3205 = vmatpush.msra.mxu0 %v2816
        %3206 = vmatpush.msra.mxu0 %v2810
        %3207 = vmatpush.msra.mxu0 %v2804
        %3208 = vmatpush.msra.mxu0 %v2798
        %3209 = vmatpush.msra.mxu0 %v2792
        %3210 = vmatpush.msra.mxu0 %v2786
        %3211 = vmatpush.msra.mxu0 %v2780
        %3212 = vmatpush.msra.mxu0 %v2774
        %3213 = vmatpush.msra.mxu0 %v2768
        %3214 = vmatpush.msra.mxu0 %v2762
        %3215 = vmatpush.msra.mxu0 %v2756
        %3216 = vmatmul.f32.gmra.mxu0 %v560
        %v3217 = vpop.f32.mrf.mxu0
        %v3218 = vadd.f32 %v3195, %v3217
        %3219 = vmatmul.f32.gmra.mxu0 %v566
        %v3220 = vpop.f32.mrf.mxu0
        %v3221 = vadd.f32 %v3198, %v3220
        %3222 = vdwg.mxu0
        %3223 = vmatpush.msra.mxu0 %v2942
        %3224 = vmatpush.msra.mxu0 %v2936
        %3225 = vmatpush.msra.mxu0 %v2930
        %3226 = vmatpush.msra.mxu0 %v2924
        %3227 = vmatpush.msra.mxu0 %v2918
        %3228 = vmatpush.msra.mxu0 %v2912
        %3229 = vmatpush.msra.mxu0 %v2906
        %3230 = vmatpush.msra.mxu0 %v2900
        %3231 = vmatpush.msra.mxu0 %v2894
        %3232 = vmatpush.msra.mxu0 %v2888
        %3233 = vmatpush.msra.mxu0 %v2882
        %3234 = vmatpush.msra.mxu0 %v2876
        %3235 = vmatpush.msra.mxu0 %v2870
        %3236 = vmatpush.msra.mxu0 %v2864
        %3237 = vmatpush.msra.mxu0 %v2858
        %3238 = vmatpush.msra.mxu0 %v2852
        %3239 = vmatmul.f32.gmra.mxu0 %v561
        %v3240 = vpop.f32.mrf.mxu0
        %v3241 = vadd.f32 %v3218, %v3240
        %3242 = vmatmul.f32.gmra.mxu0 %v567
        %v3243 = vpop.f32.mrf.mxu0
        %v3244 = vadd.f32 %v3221, %v3243
        %3245 = vdwg.mxu0
        %3246 = vmatpush.msra.mxu0 %v3038
        %3247 = vmatpush.msra.mxu0 %v3032
        %3248 = vmatpush.msra.mxu0 %v3026
        %3249 = vmatpush.msra.mxu0 %v3020
        %3250 = vmatpush.msra.mxu0 %v3014
        %3251 = vmatpush.msra.mxu0 %v3008
        %3252 = vmatpush.msra.mxu0 %v3002
        %3253 = vmatpush.msra.mxu0 %v2996
        %3254 = vmatpush.msra.mxu0 %v2990
        %3255 = vmatpush.msra.mxu0 %v2984
        %3256 = vmatpush.msra.mxu0 %v2978
        %3257 = vmatpush.msra.mxu0 %v2972
        %3258 = vmatpush.msra.mxu0 %v2966
        %3259 = vmatpush.msra.mxu0 %v2960
        %3260 = vmatpush.msra.mxu0 %v2954
        %3261 = vmatpush.msra.mxu0 %v2948
        %3262 = vmatmul.f32.gmra.mxu0 %v562
        %v3263 = vpop.f32.mrf.mxu0
        %v3264 = vadd.f32 %v3241, %v3263
        %3265 = vmatmul.f32.gmra.mxu0 %v568
        %v3266 = vpop.f32.mrf.mxu0
        %v3267 = vadd.f32 %v3244, %v3266
        %3268 = vdwg.mxu0
        %3269 = vmatpush.msra.mxu0 %v3134
        %3270 = vmatpush.msra.mxu0 %v3128
        %3271 = vmatpush.msra.mxu0 %v3122
        %3272 = vmatpush.msra.mxu0 %v3116
        %3273 = vmatpush.msra.mxu0 %v3110
        %3274 = vmatpush.msra.mxu0 %v3104
        %3275 = vmatpush.msra.mxu0 %v3098
        %3276 = vmatpush.msra.mxu0 %v3092
        %3277 = vmatpush.msra.mxu0 %v3086
        %3278 = vmatpush.msra.mxu0 %v3080
        %3279 = vmatpush.msra.mxu0 %v3074
        %3280 = vmatpush.msra.mxu0 %v3068
        %3281 = vmatpush.msra.mxu0 %v3062
        %3282 = vmatpush.msra.mxu0 %v3056
        %3283 = vmatpush.msra.mxu0 %v3050
        %3284 = vmatpush.msra.mxu0 %v3044
        %3285 = vmatmul.f32.gmra.mxu0 %v563
        %v3286 = vpop.f32.mrf.mxu0
        %v3287 = vadd.f32 %v3264, %v3286
        %3288 = vmatmul.f32.gmra.mxu0 %v569
        %v3289 = vpop.f32.mrf.mxu0
        %v3290 = vadd.f32 %v3267, %v3289
        %3291 = vdwg.mxu0
        %3292 = vmatpush.msra.mxu0 %v2655
        %3293 = vmatpush.msra.mxu0 %v2649
        %3294 = vmatpush.msra.mxu0 %v2643
        %3295 = vmatpush.msra.mxu0 %v2637
        %3296 = vmatpush.msra.mxu0 %v2631
        %3297 = vmatpush.msra.mxu0 %v2625
        %3298 = vmatpush.msra.mxu0 %v2619
        %3299 = vmatpush.msra.mxu0 %v2613
        %3300 = vmatpush.msra.mxu0 %v2607
        %3301 = vmatpush.msra.mxu0 %v2601
        %3302 = vmatpush.msra.mxu0 %v2595
        %3303 = vmatpush.msra.mxu0 %v2589
        %3304 = vmatpush.msra.mxu0 %v2583
        %3305 = vmatpush.msra.mxu0 %v2577
        %3306 = vmatpush.msra.mxu0 %v2571
        %3307 = vmatpush.msra.mxu0 %v2565
        %3308 = vmatmul.f32.gmra.mxu0 %v558
        %v3309 = vpop.f32.mrf.mxu0
        %v3310 = vadd.f32 %v3143, %v3309
        %3311 = vmatmul.f32.gmra.mxu0 %v564
        %v3312 = vpop.f32.mrf.mxu0
        %v3313 = vadd.f32 %v3143, %v3312
        %3314 = vdwg.mxu0
        %3315 = vmatpush.msra.mxu0 %v2751
        %3316 = vmatpush.msra.mxu0 %v2745
        %3317 = vmatpush.msra.mxu0 %v2739
        %3318 = vmatpush.msra.mxu0 %v2733
        %3319 = vmatpush.msra.mxu0 %v2727
        %3320 = vmatpush.msra.mxu0 %v2721
        %3321 = vmatpush.msra.mxu0 %v2715
        %3322 = vmatpush.msra.mxu0 %v2709
        %3323 = vmatpush.msra.mxu0 %v2703
        %3324 = vmatpush.msra.mxu0 %v2697
        %3325 = vmatpush.msra.mxu0 %v2691
        %3326 = vmatpush.msra.mxu0 %v2685
        %3327 = vmatpush.msra.mxu0 %v2679
        %3328 = vmatpush.msra.mxu0 %v2673
        %3329 = vmatpush.msra.mxu0 %v2667
        %3330 = vmatpush.msra.mxu0 %v2661
        %3331 = vmatmul.f32.gmra.mxu0 %v559
        %v3332 = vpop.f32.mrf.mxu0
        %v3333 = vadd.f32 %v3310, %v3332
        %3334 = vmatmul.f32.gmra.mxu0 %v565
        %v3335 = vpop.f32.mrf.mxu0
        %v3336 = vadd.f32 %v3313, %v3335
        %3337 = vdwg.mxu0
        %3338 = vmatpush.msra.mxu0 %v2847
        %3339 = vmatpush.msra.mxu0 %v2841
        %3340 = vmatpush.msra.mxu0 %v2835
        %3341 = vmatpush.msra.mxu0 %v2829
        %3342 = vmatpush.msra.mxu0 %v2823
        %3343 = vmatpush.msra.mxu0 %v2817
        %3344 = vmatpush.msra.mxu0 %v2811
        %3345 = vmatpush.msra.mxu0 %v2805
        %3346 = vmatpush.msra.mxu0 %v2799
        %3347 = vmatpush.msra.mxu0 %v2793
        %3348 = vmatpush.msra.mxu0 %v2787
        %3349 = vmatpush.msra.mxu0 %v2781
        %3350 = vmatpush.msra.mxu0 %v2775
        %3351 = vmatpush.msra.mxu0 %v2769
        %3352 = vmatpush.msra.mxu0 %v2763
        %3353 = vmatpush.msra.mxu0 %v2757
        %3354 = vmatmul.f32.gmra.mxu0 %v560
        %v3355 = vpop.f32.mrf.mxu0
        %v3356 = vadd.f32 %v3333, %v3355
        %3357 = vmatmul.f32.gmra.mxu0 %v566
        %v3358 = vpop.f32.mrf.mxu0
        %v3359 = vadd.f32 %v3336, %v3358
        %3360 = vdwg.mxu0
        %3361 = vmatpush.msra.mxu0 %v2943
        %3362 = vmatpush.msra.mxu0 %v2937
        %3363 = vmatpush.msra.mxu0 %v2931
        %3364 = vmatpush.msra.mxu0 %v2925
        %3365 = vmatpush.msra.mxu0 %v2919
        %3366 = vmatpush.msra.mxu0 %v2913
        %3367 = vmatpush.msra.mxu0 %v2907
        %3368 = vmatpush.msra.mxu0 %v2901
        %3369 = vmatpush.msra.mxu0 %v2895
        %3370 = vmatpush.msra.mxu0 %v2889
        %3371 = vmatpush.msra.mxu0 %v2883
        %3372 = vmatpush.msra.mxu0 %v2877
        %3373 = vmatpush.msra.mxu0 %v2871
        %3374 = vmatpush.msra.mxu0 %v2865
        %3375 = vmatpush.msra.mxu0 %v2859
        %3376 = vmatpush.msra.mxu0 %v2853
        %3377 = vmatmul.f32.gmra.mxu0 %v561
        %v3378 = vpop.f32.mrf.mxu0
        %v3379 = vadd.f32 %v3356, %v3378
        %3380 = vmatmul.f32.gmra.mxu0 %v567
        %v3381 = vpop.f32.mrf.mxu0
        %v3382 = vadd.f32 %v3359, %v3381
        %3383 = vdwg.mxu0
        %3384 = vmatpush.msra.mxu0 %v3039
        %3385 = vmatpush.msra.mxu0 %v3033
        %3386 = vmatpush.msra.mxu0 %v3027
        %3387 = vmatpush.msra.mxu0 %v3021
        %3388 = vmatpush.msra.mxu0 %v3015
        %3389 = vmatpush.msra.mxu0 %v3009
        %3390 = vmatpush.msra.mxu0 %v3003
        %3391 = vmatpush.msra.mxu0 %v2997
        %3392 = vmatpush.msra.mxu0 %v2991
        %3393 = vmatpush.msra.mxu0 %v2985
        %3394 = vmatpush.msra.mxu0 %v2979
        %3395 = vmatpush.msra.mxu0 %v2973
        %3396 = vmatpush.msra.mxu0 %v2967
        %3397 = vmatpush.msra.mxu0 %v2961
        %3398 = vmatpush.msra.mxu0 %v2955
        %3399 = vmatpush.msra.mxu0 %v2949
        %3400 = vmatmul.f32.gmra.mxu0 %v562
        %v3401 = vpop.f32.mrf.mxu0
        %v3402 = vadd.f32 %v3379, %v3401
        %3403 = vmatmul.f32.gmra.mxu0 %v568
        %v3404 = vpop.f32.mrf.mxu0
        %v3405 = vadd.f32 %v3382, %v3404
        %3406 = vdwg.mxu0
        %3407 = vmatpush.msra.mxu0 %v3135
        %3408 = vmatpush.msra.mxu0 %v3129
        %3409 = vmatpush.msra.mxu0 %v3123
        %3410 = vmatpush.msra.mxu0 %v3117
        %3411 = vmatpush.msra.mxu0 %v3111
        %3412 = vmatpush.msra.mxu0 %v3105
        %3413 = vmatpush.msra.mxu0 %v3099
        %3414 = vmatpush.msra.mxu0 %v3093
        %3415 = vmatpush.msra.mxu0 %v3087
        %3416 = vmatpush.msra.mxu0 %v3081
        %3417 = vmatpush.msra.mxu0 %v3075
        %3418 = vmatpush.msra.mxu0 %v3069
        %3419 = vmatpush.msra.mxu0 %v3063
        %3420 = vmatpush.msra.mxu0 %v3057
        %3421 = vmatpush.msra.mxu0 %v3051
        %3422 = vmatpush.msra.mxu0 %v3045
        %3423 = vmatmul.f32.gmra.mxu0 %v563
        %v3424 = vpop.f32.mrf.mxu0
        %v3425 = vadd.f32 %v3402, %v3424
        %3426 = vmatmul.f32.gmra.mxu0 %v569
        %v3427 = vpop.f32.mrf.mxu0
        %v3428 = vadd.f32 %v3405, %v3427
        %3429 = vdwg.mxu0
        %3430 = vmatpush.msra.mxu0 %v2656
        %3431 = vmatpush.msra.mxu0 %v2650
        %3432 = vmatpush.msra.mxu0 %v2644
        %3433 = vmatpush.msra.mxu0 %v2638
        %3434 = vmatpush.msra.mxu0 %v2632
        %3435 = vmatpush.msra.mxu0 %v2626
        %3436 = vmatpush.msra.mxu0 %v2620
        %3437 = vmatpush.msra.mxu0 %v2614
        %3438 = vmatpush.msra.mxu0 %v2608
        %3439 = vmatpush.msra.mxu0 %v2602
        %3440 = vmatpush.msra.mxu0 %v2596
        %3441 = vmatpush.msra.mxu0 %v2590
        %3442 = vmatpush.msra.mxu0 %v2584
        %3443 = vmatpush.msra.mxu0 %v2578
        %3444 = vmatpush.msra.mxu0 %v2572
        %3445 = vmatpush.msra.mxu0 %v2566
        %3446 = vmatmul.f32.gmra.mxu0 %v558
        %v3447 = vpop.f32.mrf.mxu0
        %v3448 = vadd.f32 %v3144, %v3447
        %3449 = vmatmul.f32.gmra.mxu0 %v564
        %v3450 = vpop.f32.mrf.mxu0
        %v3451 = vadd.f32 %v3144, %v3450
        %3452 = vdwg.mxu0
        %3453 = vmatpush.msra.mxu0 %v2752
        %3454 = vmatpush.msra.mxu0 %v2746
        %3455 = vmatpush.msra.mxu0 %v2740
        %3456 = vmatpush.msra.mxu0 %v2734
        %3457 = vmatpush.msra.mxu0 %v2728
        %3458 = vmatpush.msra.mxu0 %v2722
        %3459 = vmatpush.msra.mxu0 %v2716
        %3460 = vmatpush.msra.mxu0 %v2710
        %3461 = vmatpush.msra.mxu0 %v2704
        %3462 = vmatpush.msra.mxu0 %v2698
        %3463 = vmatpush.msra.mxu0 %v2692
        %3464 = vmatpush.msra.mxu0 %v2686
        %3465 = vmatpush.msra.mxu0 %v2680
        %3466 = vmatpush.msra.mxu0 %v2674
        %3467 = vmatpush.msra.mxu0 %v2668
        %3468 = vmatpush.msra.mxu0 %v2662
        %3469 = vmatmul.f32.gmra.mxu0 %v559
        %v3470 = vpop.f32.mrf.mxu0
        %v3471 = vadd.f32 %v3448, %v3470
        %3472 = vmatmul.f32.gmra.mxu0 %v565
        %v3473 = vpop.f32.mrf.mxu0
        %v3474 = vadd.f32 %v3451, %v3473
        %3475 = vdwg.mxu0
        %3476 = vmatpush.msra.mxu0 %v2848
        %3477 = vmatpush.msra.mxu0 %v2842
        %3478 = vmatpush.msra.mxu0 %v2836
        %3479 = vmatpush.msra.mxu0 %v2830
        %3480 = vmatpush.msra.mxu0 %v2824
        %3481 = vmatpush.msra.mxu0 %v2818
        %3482 = vmatpush.msra.mxu0 %v2812
        %3483 = vmatpush.msra.mxu0 %v2806
        %3484 = vmatpush.msra.mxu0 %v2800
        %3485 = vmatpush.msra.mxu0 %v2794
        %3486 = vmatpush.msra.mxu0 %v2788
        %3487 = vmatpush.msra.mxu0 %v2782
        %3488 = vmatpush.msra.mxu0 %v2776
        %3489 = vmatpush.msra.mxu0 %v2770
        %3490 = vmatpush.msra.mxu0 %v2764
        %3491 = vmatpush.msra.mxu0 %v2758
        %3492 = vmatmul.f32.gmra.mxu0 %v560
        %v3493 = vpop.f32.mrf.mxu0
        %v3494 = vadd.f32 %v3471, %v3493
        %3495 = vmatmul.f32.gmra.mxu0 %v566
        %v3496 = vpop.f32.mrf.mxu0
        %v3497 = vadd.f32 %v3474, %v3496
        %3498 = vdwg.mxu0
        %3499 = vmatpush.msra.mxu0 %v2944
        %3500 = vmatpush.msra.mxu0 %v2938
        %3501 = vmatpush.msra.mxu0 %v2932
        %3502 = vmatpush.msra.mxu0 %v2926
        %3503 = vmatpush.msra.mxu0 %v2920
        %3504 = vmatpush.msra.mxu0 %v2914
        %3505 = vmatpush.msra.mxu0 %v2908
        %3506 = vmatpush.msra.mxu0 %v2902
        %3507 = vmatpush.msra.mxu0 %v2896
        %3508 = vmatpush.msra.mxu0 %v2890
        %3509 = vmatpush.msra.mxu0 %v2884
        %3510 = vmatpush.msra.mxu0 %v2878
        %3511 = vmatpush.msra.mxu0 %v2872
        %3512 = vmatpush.msra.mxu0 %v2866
        %3513 = vmatpush.msra.mxu0 %v2860
        %3514 = vmatpush.msra.mxu0 %v2854
        %3515 = vmatmul.f32.gmra.mxu0 %v561
        %v3516 = vpop.f32.mrf.mxu0
        %v3517 = vadd.f32 %v3494, %v3516
        %3518 = vmatmul.f32.gmra.mxu0 %v567
        %v3519 = vpop.f32.mrf.mxu0
        %v3520 = vadd.f32 %v3497, %v3519
        %3521 = vdwg.mxu0
        %3522 = vmatpush.msra.mxu0 %v3040
        %3523 = vmatpush.msra.mxu0 %v3034
        %3524 = vmatpush.msra.mxu0 %v3028
        %3525 = vmatpush.msra.mxu0 %v3022
        %3526 = vmatpush.msra.mxu0 %v3016
        %3527 = vmatpush.msra.mxu0 %v3010
        %3528 = vmatpush.msra.mxu0 %v3004
        %3529 = vmatpush.msra.mxu0 %v2998
        %3530 = vmatpush.msra.mxu0 %v2992
        %3531 = vmatpush.msra.mxu0 %v2986
        %3532 = vmatpush.msra.mxu0 %v2980
        %3533 = vmatpush.msra.mxu0 %v2974
        %3534 = vmatpush.msra.mxu0 %v2968
        %3535 = vmatpush.msra.mxu0 %v2962
        %3536 = vmatpush.msra.mxu0 %v2956
        %3537 = vmatpush.msra.mxu0 %v2950
        %3538 = vmatmul.f32.gmra.mxu0 %v562
        %v3539 = vpop.f32.mrf.mxu0
        %v3540 = vadd.f32 %v3517, %v3539
        %3541 = vmatmul.f32.gmra.mxu0 %v568
        %v3542 = vpop.f32.mrf.mxu0
        %v3543 = vadd.f32 %v3520, %v3542
        %3544 = vdwg.mxu0
        %3545 = vmatpush.msra.mxu0 %v3136
        %3546 = vmatpush.msra.mxu0 %v3130
        %3547 = vmatpush.msra.mxu0 %v3124
        %3548 = vmatpush.msra.mxu0 %v3118
        %3549 = vmatpush.msra.mxu0 %v3112
        %3550 = vmatpush.msra.mxu0 %v3106
        %3551 = vmatpush.msra.mxu0 %v3100
        %3552 = vmatpush.msra.mxu0 %v3094
        %3553 = vmatpush.msra.mxu0 %v3088
        %3554 = vmatpush.msra.mxu0 %v3082
        %3555 = vmatpush.msra.mxu0 %v3076
        %3556 = vmatpush.msra.mxu0 %v3070
        %3557 = vmatpush.msra.mxu0 %v3064
        %3558 = vmatpush.msra.mxu0 %v3058
        %3559 = vmatpush.msra.mxu0 %v3052
        %3560 = vmatpush.msra.mxu0 %v3046
        %3561 = vmatmul.f32.gmra.mxu0 %v563
        %v3562 = vpop.f32.mrf.mxu0
        %v3563 = vadd.f32 %v3540, %v3562
        %3564 = vmatmul.f32.gmra.mxu0 %v569
        %v3565 = vpop.f32.mrf.mxu0
        %v3566 = vadd.f32 %v3543, %v3565
        %3567 = vdwg.mxu0
        %3568 = vmatpush.msra.mxu0 %v2657
        %3569 = vmatpush.msra.mxu0 %v2651
        %3570 = vmatpush.msra.mxu0 %v2645
        %3571 = vmatpush.msra.mxu0 %v2639
        %3572 = vmatpush.msra.mxu0 %v2633
        %3573 = vmatpush.msra.mxu0 %v2627
        %3574 = vmatpush.msra.mxu0 %v2621
        %3575 = vmatpush.msra.mxu0 %v2615
        %3576 = vmatpush.msra.mxu0 %v2609
        %3577 = vmatpush.msra.mxu0 %v2603
        %3578 = vmatpush.msra.mxu0 %v2597
        %3579 = vmatpush.msra.mxu0 %v2591
        %3580 = vmatpush.msra.mxu0 %v2585
        %3581 = vmatpush.msra.mxu0 %v2579
        %3582 = vmatpush.msra.mxu0 %v2573
        %3583 = vmatpush.msra.mxu0 %v2567
        %3584 = vmatmul.f32.gmra.mxu0 %v558
        %v3585 = vpop.f32.mrf.mxu0
        %v3586 = vadd.f32 %v3145, %v3585
        %3587 = vmatmul.f32.gmra.mxu0 %v564
        %v3588 = vpop.f32.mrf.mxu0
        %v3589 = vadd.f32 %v3145, %v3588
        %3590 = vdwg.mxu0
        %3591 = vmatpush.msra.mxu0 %v2753
        %3592 = vmatpush.msra.mxu0 %v2747
        %3593 = vmatpush.msra.mxu0 %v2741
        %3594 = vmatpush.msra.mxu0 %v2735
        %3595 = vmatpush.msra.mxu0 %v2729
        %3596 = vmatpush.msra.mxu0 %v2723
        %3597 = vmatpush.msra.mxu0 %v2717
        %3598 = vmatpush.msra.mxu0 %v2711
        %3599 = vmatpush.msra.mxu0 %v2705
        %3600 = vmatpush.msra.mxu0 %v2699
        %3601 = vmatpush.msra.mxu0 %v2693
        %3602 = vmatpush.msra.mxu0 %v2687
        %3603 = vmatpush.msra.mxu0 %v2681
        %3604 = vmatpush.msra.mxu0 %v2675
        %3605 = vmatpush.msra.mxu0 %v2669
        %3606 = vmatpush.msra.mxu0 %v2663
        %3607 = vmatmul.f32.gmra.mxu0 %v559
        %v3608 = vpop.f32.mrf.mxu0
        %v3609 = vadd.f32 %v3586, %v3608
        %3610 = vmatmul.f32.gmra.mxu0 %v565
        %v3611 = vpop.f32.mrf.mxu0
        %v3612 = vadd.f32 %v3589, %v3611
        %3613 = vdwg.mxu0
        %3614 = vmatpush.msra.mxu0 %v2849
        %3615 = vmatpush.msra.mxu0 %v2843
        %3616 = vmatpush.msra.mxu0 %v2837
        %3617 = vmatpush.msra.mxu0 %v2831
        %3618 = vmatpush.msra.mxu0 %v2825
        %3619 = vmatpush.msra.mxu0 %v2819
        %3620 = vmatpush.msra.mxu0 %v2813
        %3621 = vmatpush.msra.mxu0 %v2807
        %3622 = vmatpush.msra.mxu0 %v2801
        %3623 = vmatpush.msra.mxu0 %v2795
        %3624 = vmatpush.msra.mxu0 %v2789
        %3625 = vmatpush.msra.mxu0 %v2783
        %3626 = vmatpush.msra.mxu0 %v2777
        %3627 = vmatpush.msra.mxu0 %v2771
        %3628 = vmatpush.msra.mxu0 %v2765
        %3629 = vmatpush.msra.mxu0 %v2759
        %3630 = vmatmul.f32.gmra.mxu0 %v560
        %v3631 = vpop.f32.mrf.mxu0
        %v3632 = vadd.f32 %v3609, %v3631
        %3633 = vmatmul.f32.gmra.mxu0 %v566
        %v3634 = vpop.f32.mrf.mxu0
        %v3635 = vadd.f32 %v3612, %v3634
        %3636 = vdwg.mxu0
        %3637 = vmatpush.msra.mxu0 %v2945
        %3638 = vmatpush.msra.mxu0 %v2939
        %3639 = vmatpush.msra.mxu0 %v2933
        %3640 = vmatpush.msra.mxu0 %v2927
        %3641 = vmatpush.msra.mxu0 %v2921
        %3642 = vmatpush.msra.mxu0 %v2915
        %3643 = vmatpush.msra.mxu0 %v2909
        %3644 = vmatpush.msra.mxu0 %v2903
        %3645 = vmatpush.msra.mxu0 %v2897
        %3646 = vmatpush.msra.mxu0 %v2891
        %3647 = vmatpush.msra.mxu0 %v2885
        %3648 = vmatpush.msra.mxu0 %v2879
        %3649 = vmatpush.msra.mxu0 %v2873
        %3650 = vmatpush.msra.mxu0 %v2867
        %3651 = vmatpush.msra.mxu0 %v2861
        %3652 = vmatpush.msra.mxu0 %v2855
        %3653 = vmatmul.f32.gmra.mxu0 %v561
        %v3654 = vpop.f32.mrf.mxu0
        %v3655 = vadd.f32 %v3632, %v3654
        %3656 = vmatmul.f32.gmra.mxu0 %v567
        %v3657 = vpop.f32.mrf.mxu0
        %v3658 = vadd.f32 %v3635, %v3657
        %3659 = vdwg.mxu0
        %3660 = vmatpush.msra.mxu0 %v3041
        %3661 = vmatpush.msra.mxu0 %v3035
        %3662 = vmatpush.msra.mxu0 %v3029
        %3663 = vmatpush.msra.mxu0 %v3023
        %3664 = vmatpush.msra.mxu0 %v3017
        %3665 = vmatpush.msra.mxu0 %v3011
        %3666 = vmatpush.msra.mxu0 %v3005
        %3667 = vmatpush.msra.mxu0 %v2999
        %3668 = vmatpush.msra.mxu0 %v2993
        %3669 = vmatpush.msra.mxu0 %v2987
        %3670 = vmatpush.msra.mxu0 %v2981
        %3671 = vmatpush.msra.mxu0 %v2975
        %3672 = vmatpush.msra.mxu0 %v2969
        %3673 = vmatpush.msra.mxu0 %v2963
        %3674 = vmatpush.msra.mxu0 %v2957
        %3675 = vmatpush.msra.mxu0 %v2951
        %3676 = vmatmul.f32.gmra.mxu0 %v562
        %v3677 = vpop.f32.mrf.mxu0
        %v3678 = vadd.f32 %v3655, %v3677
        %3679 = vmatmul.f32.gmra.mxu0 %v568
        %v3680 = vpop.f32.mrf.mxu0
        %v3681 = vadd.f32 %v3658, %v3680
        %3682 = vdwg.mxu0
        %3683 = vmatpush.msra.mxu0 %v3137
        %3684 = vmatpush.msra.mxu0 %v3131
        %3685 = vmatpush.msra.mxu0 %v3125
        %3686 = vmatpush.msra.mxu0 %v3119
        %3687 = vmatpush.msra.mxu0 %v3113
        %3688 = vmatpush.msra.mxu0 %v3107
        %3689 = vmatpush.msra.mxu0 %v3101
        %3690 = vmatpush.msra.mxu0 %v3095
        %3691 = vmatpush.msra.mxu0 %v3089
        %3692 = vmatpush.msra.mxu0 %v3083
        %3693 = vmatpush.msra.mxu0 %v3077
        %3694 = vmatpush.msra.mxu0 %v3071
        %3695 = vmatpush.msra.mxu0 %v3065
        %3696 = vmatpush.msra.mxu0 %v3059
        %3697 = vmatpush.msra.mxu0 %v3053
        %3698 = vmatpush.msra.mxu0 %v3047
        %3699 = vmatmul.f32.gmra.mxu0 %v563
        %v3700 = vpop.f32.mrf.mxu0
        %v3701 = vadd.f32 %v3678, %v3700
        %3702 = vmatmul.f32.gmra.mxu0 %v569
        %v3703 = vpop.f32.mrf.mxu0
        %v3704 = vadd.f32 %v3681, %v3703
        %3705 = vdwg.mxu0
        %3706 = vmatpush.msra.mxu0 %v2658
        %3707 = vmatpush.msra.mxu0 %v2652
        %3708 = vmatpush.msra.mxu0 %v2646
        %3709 = vmatpush.msra.mxu0 %v2640
        %3710 = vmatpush.msra.mxu0 %v2634
        %3711 = vmatpush.msra.mxu0 %v2628
        %3712 = vmatpush.msra.mxu0 %v2622
        %3713 = vmatpush.msra.mxu0 %v2616
        %3714 = vmatpush.msra.mxu0 %v2610
        %3715 = vmatpush.msra.mxu0 %v2604
        %3716 = vmatpush.msra.mxu0 %v2598
        %3717 = vmatpush.msra.mxu0 %v2592
        %3718 = vmatpush.msra.mxu0 %v2586
        %3719 = vmatpush.msra.mxu0 %v2580
        %3720 = vmatpush.msra.mxu0 %v2574
        %3721 = vmatpush.msra.mxu0 %v2568
        %3722 = vmatmul.f32.gmra.mxu0 %v558
        %v3723 = vpop.f32.mrf.mxu0
        %v3724 = vadd.f32 %v3146, %v3723
        %3725 = vmatmul.f32.gmra.mxu0 %v564
        %v3726 = vpop.f32.mrf.mxu0
        %v3727 = vadd.f32 %v3146, %v3726
        %3728 = vdwg.mxu0
        %3729 = vmatpush.msra.mxu0 %v2754
        %3730 = vmatpush.msra.mxu0 %v2748
        %3731 = vmatpush.msra.mxu0 %v2742
        %3732 = vmatpush.msra.mxu0 %v2736
        %3733 = vmatpush.msra.mxu0 %v2730
        %3734 = vmatpush.msra.mxu0 %v2724
        %3735 = vmatpush.msra.mxu0 %v2718
        %3736 = vmatpush.msra.mxu0 %v2712
        %3737 = vmatpush.msra.mxu0 %v2706
        %3738 = vmatpush.msra.mxu0 %v2700
        %3739 = vmatpush.msra.mxu0 %v2694
        %3740 = vmatpush.msra.mxu0 %v2688
        %3741 = vmatpush.msra.mxu0 %v2682
        %3742 = vmatpush.msra.mxu0 %v2676
        %3743 = vmatpush.msra.mxu0 %v2670
        %3744 = vmatpush.msra.mxu0 %v2664
        %3745 = vmatmul.f32.gmra.mxu0 %v559
        %v3746 = vpop.f32.mrf.mxu0
        %v3747 = vadd.f32 %v3724, %v3746
        %3748 = vmatmul.f32.gmra.mxu0 %v565
        %v3749 = vpop.f32.mrf.mxu0
        %v3750 = vadd.f32 %v3727, %v3749
        %3751 = vdwg.mxu0
        %3752 = vmatpush.msra.mxu0 %v2850
        %3753 = vmatpush.msra.mxu0 %v2844
        %3754 = vmatpush.msra.mxu0 %v2838
        %3755 = vmatpush.msra.mxu0 %v2832
        %3756 = vmatpush.msra.mxu0 %v2826
        %3757 = vmatpush.msra.mxu0 %v2820
        %3758 = vmatpush.msra.mxu0 %v2814
        %3759 = vmatpush.msra.mxu0 %v2808
        %3760 = vmatpush.msra.mxu0 %v2802
        %3761 = vmatpush.msra.mxu0 %v2796
        %3762 = vmatpush.msra.mxu0 %v2790
        %3763 = vmatpush.msra.mxu0 %v2784
        %3764 = vmatpush.msra.mxu0 %v2778
        %3765 = vmatpush.msra.mxu0 %v2772
        %3766 = vmatpush.msra.mxu0 %v2766
        %3767 = vmatpush.msra.mxu0 %v2760
        %3768 = vmatmul.f32.gmra.mxu0 %v560
        %v3769 = vpop.f32.mrf.mxu0
        %v3770 = vadd.f32 %v3747, %v3769
        %3771 = vmatmul.f32.gmra.mxu0 %v566
        %v3772 = vpop.f32.mrf.mxu0
        %v3773 = vadd.f32 %v3750, %v3772
        %3774 = vdwg.mxu0
        %3775 = vmatpush.msra.mxu0 %v2946
        %3776 = vmatpush.msra.mxu0 %v2940
        %3777 = vmatpush.msra.mxu0 %v2934
        %3778 = vmatpush.msra.mxu0 %v2928
        %3779 = vmatpush.msra.mxu0 %v2922
        %3780 = vmatpush.msra.mxu0 %v2916
        %3781 = vmatpush.msra.mxu0 %v2910
        %3782 = vmatpush.msra.mxu0 %v2904
        %3783 = vmatpush.msra.mxu0 %v2898
        %3784 = vmatpush.msra.mxu0 %v2892
        %3785 = vmatpush.msra.mxu0 %v2886
        %3786 = vmatpush.msra.mxu0 %v2880
        %3787 = vmatpush.msra.mxu0 %v2874
        %3788 = vmatpush.msra.mxu0 %v2868
        %3789 = vmatpush.msra.mxu0 %v2862
        %3790 = vmatpush.msra.mxu0 %v2856
        %3791 = vmatmul.f32.gmra.mxu0 %v561
        %v3792 = vpop.f32.mrf.mxu0
        %v3793 = vadd.f32 %v3770, %v3792
        %3794 = vmatmul.f32.gmra.mxu0 %v567
        %v3795 = vpop.f32.mrf.mxu0
        %v3796 = vadd.f32 %v3773, %v3795
        %3797 = vdwg.mxu0
        %3798 = vmatpush.msra.mxu0 %v3042
        %3799 = vmatpush.msra.mxu0 %v3036
        %3800 = vmatpush.msra.mxu0 %v3030
        %3801 = vmatpush.msra.mxu0 %v3024
        %3802 = vmatpush.msra.mxu0 %v3018
        %3803 = vmatpush.msra.mxu0 %v3012
        %3804 = vmatpush.msra.mxu0 %v3006
        %3805 = vmatpush.msra.mxu0 %v3000
        %3806 = vmatpush.msra.mxu0 %v2994
        %3807 = vmatpush.msra.mxu0 %v2988
        %3808 = vmatpush.msra.mxu0 %v2982
        %3809 = vmatpush.msra.mxu0 %v2976
        %3810 = vmatpush.msra.mxu0 %v2970
        %3811 = vmatpush.msra.mxu0 %v2964
        %3812 = vmatpush.msra.mxu0 %v2958
        %3813 = vmatpush.msra.mxu0 %v2952
        %3814 = vmatmul.f32.gmra.mxu0 %v562
        %v3815 = vpop.f32.mrf.mxu0
        %v3816 = vadd.f32 %v3793, %v3815
        %3817 = vmatmul.f32.gmra.mxu0 %v568
        %v3818 = vpop.f32.mrf.mxu0
        %v3819 = vadd.f32 %v3796, %v3818
        %3820 = vdwg.mxu0
        %3821 = vmatpush.msra.mxu0 %v3138
        %3822 = vmatpush.msra.mxu0 %v3132
        %3823 = vmatpush.msra.mxu0 %v3126
        %3824 = vmatpush.msra.mxu0 %v3120
        %3825 = vmatpush.msra.mxu0 %v3114
        %3826 = vmatpush.msra.mxu0 %v3108
        %3827 = vmatpush.msra.mxu0 %v3102
        %3828 = vmatpush.msra.mxu0 %v3096
        %3829 = vmatpush.msra.mxu0 %v3090
        %3830 = vmatpush.msra.mxu0 %v3084
        %3831 = vmatpush.msra.mxu0 %v3078
        %3832 = vmatpush.msra.mxu0 %v3072
        %3833 = vmatpush.msra.mxu0 %v3066
        %3834 = vmatpush.msra.mxu0 %v3060
        %3835 = vmatpush.msra.mxu0 %v3054
        %3836 = vmatpush.msra.mxu0 %v3048
        %3837 = vmatmul.f32.gmra.mxu0 %v563
        %v3838 = vpop.f32.mrf.mxu0
        %v3839 = vadd.f32 %v3816, %v3838
        %3840 = vmatmul.f32.gmra.mxu0 %v569
        %v3841 = vpop.f32.mrf.mxu0
        %v3842 = vadd.f32 %v3819, %v3841
        %3843 = vdwg.mxu0
        %3844 = vmatpush.msra.mxu0 %v2659
        %3845 = vmatpush.msra.mxu0 %v2653
        %3846 = vmatpush.msra.mxu0 %v2647
        %3847 = vmatpush.msra.mxu0 %v2641
        %3848 = vmatpush.msra.mxu0 %v2635
        %3849 = vmatpush.msra.mxu0 %v2629
        %3850 = vmatpush.msra.mxu0 %v2623
        %3851 = vmatpush.msra.mxu0 %v2617
        %3852 = vmatpush.msra.mxu0 %v2611
        %3853 = vmatpush.msra.mxu0 %v2605
        %3854 = vmatpush.msra.mxu0 %v2599
        %3855 = vmatpush.msra.mxu0 %v2593
        %3856 = vmatpush.msra.mxu0 %v2587
        %3857 = vmatpush.msra.mxu0 %v2581
        %3858 = vmatpush.msra.mxu0 %v2575
        %3859 = vmatpush.msra.mxu0 %v2569
        %3860 = vmatmul.f32.gmra.mxu0 %v558
        %v3861 = vpop.f32.mrf.mxu0
        %v3862 = vadd.f32 %v3147, %v3861
        %3863 = vmatmul.f32.gmra.mxu0 %v564
        %v3864 = vpop.f32.mrf.mxu0
        %v3865 = vadd.f32 %v3147, %v3864
        %3866 = vdwg.mxu0
        %3867 = vmatpush.msra.mxu0 %v2755
        %3868 = vmatpush.msra.mxu0 %v2749
        %3869 = vmatpush.msra.mxu0 %v2743
        %3870 = vmatpush.msra.mxu0 %v2737
        %3871 = vmatpush.msra.mxu0 %v2731
        %3872 = vmatpush.msra.mxu0 %v2725
        %3873 = vmatpush.msra.mxu0 %v2719
        %3874 = vmatpush.msra.mxu0 %v2713
        %3875 = vmatpush.msra.mxu0 %v2707
        %3876 = vmatpush.msra.mxu0 %v2701
        %3877 = vmatpush.msra.mxu0 %v2695
        %3878 = vmatpush.msra.mxu0 %v2689
        %3879 = vmatpush.msra.mxu0 %v2683
        %3880 = vmatpush.msra.mxu0 %v2677
        %3881 = vmatpush.msra.mxu0 %v2671
        %3882 = vmatpush.msra.mxu0 %v2665
        %3883 = vmatmul.f32.gmra.mxu0 %v559
        %v3884 = vpop.f32.mrf.mxu0
        %v3885 = vadd.f32 %v3862, %v3884
        %3886 = vmatmul.f32.gmra.mxu0 %v565
        %v3887 = vpop.f32.mrf.mxu0
        %v3888 = vadd.f32 %v3865, %v3887
        %3889 = vdwg.mxu0
        %3890 = vmatpush.msra.mxu0 %v2851
        %3891 = vmatpush.msra.mxu0 %v2845
        %3892 = vmatpush.msra.mxu0 %v2839
        %3893 = vmatpush.msra.mxu0 %v2833
        %3894 = vmatpush.msra.mxu0 %v2827
        %3895 = vmatpush.msra.mxu0 %v2821
        %3896 = vmatpush.msra.mxu0 %v2815
        %3897 = vmatpush.msra.mxu0 %v2809
        %3898 = vmatpush.msra.mxu0 %v2803
        %3899 = vmatpush.msra.mxu0 %v2797
        %3900 = vmatpush.msra.mxu0 %v2791
        %3901 = vmatpush.msra.mxu0 %v2785
        %3902 = vmatpush.msra.mxu0 %v2779
        %3903 = vmatpush.msra.mxu0 %v2773
        %3904 = vmatpush.msra.mxu0 %v2767
        %3905 = vmatpush.msra.mxu0 %v2761
        %3906 = vmatmul.f32.gmra.mxu0 %v560
        %v3907 = vpop.f32.mrf.mxu0
        %v3908 = vadd.f32 %v3885, %v3907
        %3909 = vmatmul.f32.gmra.mxu0 %v566
        %v3910 = vpop.f32.mrf.mxu0
        %v3911 = vadd.f32 %v3888, %v3910
        %3912 = vdwg.mxu0
        %3913 = vmatpush.msra.mxu0 %v2947
        %3914 = vmatpush.msra.mxu0 %v2941
        %3915 = vmatpush.msra.mxu0 %v2935
        %3916 = vmatpush.msra.mxu0 %v2929
        %3917 = vmatpush.msra.mxu0 %v2923
        %3918 = vmatpush.msra.mxu0 %v2917
        %3919 = vmatpush.msra.mxu0 %v2911
        %3920 = vmatpush.msra.mxu0 %v2905
        %3921 = vmatpush.msra.mxu0 %v2899
        %3922 = vmatpush.msra.mxu0 %v2893
        %3923 = vmatpush.msra.mxu0 %v2887
        %3924 = vmatpush.msra.mxu0 %v2881
        %3925 = vmatpush.msra.mxu0 %v2875
        %3926 = vmatpush.msra.mxu0 %v2869
        %3927 = vmatpush.msra.mxu0 %v2863
        %3928 = vmatpush.msra.mxu0 %v2857
        %3929 = vmatmul.f32.gmra.mxu0 %v561
        %v3930 = vpop.f32.mrf.mxu0
        %v3931 = vadd.f32 %v3908, %v3930
        %3932 = vmatmul.f32.gmra.mxu0 %v567
        %v3933 = vpop.f32.mrf.mxu0
        %v3934 = vadd.f32 %v3911, %v3933
        %3935 = vdwg.mxu0
        %3936 = vmatpush.msra.mxu0 %v3043
        %3937 = vmatpush.msra.mxu0 %v3037
        %3938 = vmatpush.msra.mxu0 %v3031
        %3939 = vmatpush.msra.mxu0 %v3025
        %3940 = vmatpush.msra.mxu0 %v3019
        %3941 = vmatpush.msra.mxu0 %v3013
        %3942 = vmatpush.msra.mxu0 %v3007
        %3943 = vmatpush.msra.mxu0 %v3001
        %3944 = vmatpush.msra.mxu0 %v2995
        %3945 = vmatpush.msra.mxu0 %v2989
        %3946 = vmatpush.msra.mxu0 %v2983
        %3947 = vmatpush.msra.mxu0 %v2977
        %3948 = vmatpush.msra.mxu0 %v2971
        %3949 = vmatpush.msra.mxu0 %v2965
        %3950 = vmatpush.msra.mxu0 %v2959
        %3951 = vmatpush.msra.mxu0 %v2953
        %3952 = vmatmul.f32.gmra.mxu0 %v562
        %v3953 = vpop.f32.mrf.mxu0
        %v3954 = vadd.f32 %v3931, %v3953
        %3955 = vmatmul.f32.gmra.mxu0 %v568
        %v3956 = vpop.f32.mrf.mxu0
        %v3957 = vadd.f32 %v3934, %v3956
        %3958 = vdwg.mxu0
        %3959 = vmatpush.msra.mxu0 %v3139
        %3960 = vmatpush.msra.mxu0 %v3133
        %3961 = vmatpush.msra.mxu0 %v3127
        %3962 = vmatpush.msra.mxu0 %v3121
        %3963 = vmatpush.msra.mxu0 %v3115
        %3964 = vmatpush.msra.mxu0 %v3109
        %3965 = vmatpush.msra.mxu0 %v3103
        %3966 = vmatpush.msra.mxu0 %v3097
        %3967 = vmatpush.msra.mxu0 %v3091
        %3968 = vmatpush.msra.mxu0 %v3085
        %3969 = vmatpush.msra.mxu0 %v3079
        %3970 = vmatpush.msra.mxu0 %v3073
        %3971 = vmatpush.msra.mxu0 %v3067
        %3972 = vmatpush.msra.mxu0 %v3061
        %3973 = vmatpush.msra.mxu0 %v3055
        %3974 = vmatpush.msra.mxu0 %v3049
        %3975 = vmatmul.f32.gmra.mxu0 %v563
        %v3976 = vpop.f32.mrf.mxu0
        %v3977 = vadd.f32 %v3954, %v3976
        %3978 = vmatmul.f32.gmra.mxu0 %v569
        %v3979 = vpop.f32.mrf.mxu0
        %v3980 = vadd.f32 %v3957, %v3979
        %3981 = vdwg.mxu0
        %v3982 = vld [vmem:[#allocation13] sm:$0xff]
        %v3983 = vld [vmem:[#allocation13 + $0x8] sm:$0xff]
        %v3984 = vld [vmem:[#allocation13 + $0x10] sm:$0xff]
        %v3985 = vld [vmem:[#allocation13 + $0x18] sm:$0xff]
        %v3986 = vld [vmem:[#allocation13 + $0x20] sm:$0xff]
        %v3987 = vld [vmem:[#allocation13 + $0x28] sm:$0xff]
        %v3988 = vld [vmem:[#allocation13 + $0x30] sm:$0xff]
        %v3989 = vld [vmem:[#allocation13 + $0x38] sm:$0xff]
        %v3990 = vld [vmem:[#allocation13 + $0x40] sm:$0xff]
        %v3991 = vld [vmem:[#allocation13 + $0x48] sm:$0xff]
        %v3992 = vld [vmem:[#allocation13 + $0x50] sm:$0xff]
        %v3993 = vld [vmem:[#allocation13 + $0x58] sm:$0xff]
        %v3994 = vld [vmem:[#allocation13 + $0x60] sm:$0xff]
        %v3995 = vld [vmem:[#allocation13 + $0x68] sm:$0xff]
        %v3996 = vld [vmem:[#allocation13 + $0x70] sm:$0xff]
        %v3997 = vld [vmem:[#allocation13 + $0x78] sm:$0xff]
        %v3998 = vld [vmem:[#allocation13 + $0x80] sm:$0xff]
        %v3999 = vld [vmem:[#allocation13 + $0x88] sm:$0xff]
        %v4000 = vld [vmem:[#allocation13 + $0x90] sm:$0xff]
        %v4001 = vld [vmem:[#allocation13 + $0x98] sm:$0xff]
        %v4002 = vld [vmem:[#allocation13 + $0xa0] sm:$0xff]
        %v4003 = vld [vmem:[#allocation13 + $0xa8] sm:$0xff]
        %v4004 = vld [vmem:[#allocation13 + $0xb0] sm:$0xff]
        %v4005 = vld [vmem:[#allocation13 + $0xb8] sm:$0xff]
        %v4006 = vld [vmem:[#allocation13 + $0xc0] sm:$0xff]
        %v4007 = vld [vmem:[#allocation13 + $0xc8] sm:$0xff]
        %v4008 = vld [vmem:[#allocation13 + $0xd0] sm:$0xff]
        %v4009 = vld [vmem:[#allocation13 + $0xd8] sm:$0xff]
        %v4010 = vld [vmem:[#allocation13 + $0xe0] sm:$0xff]
        %v4011 = vld [vmem:[#allocation13 + $0xe8] sm:$0xff]
        %v4012 = vld [vmem:[#allocation13 + $0xf0] sm:$0xff]
        %v4013 = vld [vmem:[#allocation13 + $0xf8] sm:$0xff]
        %v4014 = vld [vmem:[#allocation13 + $0x100] sm:$0xff]
        %v4015 = vld [vmem:[#allocation13 + $0x108] sm:$0xff]
        %v4016 = vld [vmem:[#allocation13 + $0x110] sm:$0xff]
        %v4017 = vld [vmem:[#allocation13 + $0x118] sm:$0xff]
        %v4018 = vld [vmem:[#allocation13 + $0x120] sm:$0xff]
        %v4019 = vld [vmem:[#allocation13 + $0x128] sm:$0xff]
        %v4020 = vld [vmem:[#allocation13 + $0x130] sm:$0xff]
        %v4021 = vld [vmem:[#allocation13 + $0x138] sm:$0xff]
        %v4022 = vld [vmem:[#allocation13 + $0x140] sm:$0xff]
        %v4023 = vld [vmem:[#allocation13 + $0x148] sm:$0xff]
        %v4024 = vld [vmem:[#allocation13 + $0x150] sm:$0xff]
        %v4025 = vld [vmem:[#allocation13 + $0x158] sm:$0xff]
        %v4026 = vld [vmem:[#allocation13 + $0x160] sm:$0xff]
        %v4027 = vld [vmem:[#allocation13 + $0x168] sm:$0xff]
        %v4028 = vld [vmem:[#allocation13 + $0x170] sm:$0xff]
        %v4029 = vld [vmem:[#allocation13 + $0x178] sm:$0xff]
        %v4030 = vld [vmem:[#allocation13 + $0x180] sm:$0xff]
        %v4031 = vld [vmem:[#allocation13 + $0x188] sm:$0xff]
        %v4032 = vld [vmem:[#allocation13 + $0x190] sm:$0xff]
        %v4033 = vld [vmem:[#allocation13 + $0x198] sm:$0xff]
        %v4034 = vld [vmem:[#allocation13 + $0x1a0] sm:$0xff]
        %v4035 = vld [vmem:[#allocation13 + $0x1a8] sm:$0xff]
        %v4036 = vld [vmem:[#allocation13 + $0x1b0] sm:$0xff]
        %v4037 = vld [vmem:[#allocation13 + $0x1b8] sm:$0xff]
        %v4038 = vld [vmem:[#allocation13 + $0x1c0] sm:$0xff]
        %v4039 = vld [vmem:[#allocation13 + $0x1c8] sm:$0xff]
        %v4040 = vld [vmem:[#allocation13 + $0x1d0] sm:$0xff]
        %v4041 = vld [vmem:[#allocation13 + $0x1d8] sm:$0xff]
        %v4042 = vld [vmem:[#allocation13 + $0x1e0] sm:$0xff]
        %v4043 = vld [vmem:[#allocation13 + $0x1e8] sm:$0xff]
        %v4044 = vld [vmem:[#allocation13 + $0x1f0] sm:$0xff]
        %v4045 = vld [vmem:[#allocation13 + $0x1f8] sm:$0xff]
        %v4046 = vld [vmem:[#allocation13 + $0x200] sm:$0xff]
        %v4047 = vld [vmem:[#allocation13 + $0x208] sm:$0xff]
        %v4048 = vld [vmem:[#allocation13 + $0x210] sm:$0xff]
        %v4049 = vld [vmem:[#allocation13 + $0x218] sm:$0xff]
        %v4050 = vld [vmem:[#allocation13 + $0x220] sm:$0xff]
        %v4051 = vld [vmem:[#allocation13 + $0x228] sm:$0xff]
        %v4052 = vld [vmem:[#allocation13 + $0x230] sm:$0xff]
        %v4053 = vld [vmem:[#allocation13 + $0x238] sm:$0xff]
        %v4054 = vld [vmem:[#allocation13 + $0x240] sm:$0xff]
        %v4055 = vld [vmem:[#allocation13 + $0x248] sm:$0xff]
        %v4056 = vld [vmem:[#allocation13 + $0x250] sm:$0xff]
        %v4057 = vld [vmem:[#allocation13 + $0x258] sm:$0xff]
        %v4058 = vld [vmem:[#allocation13 + $0x260] sm:$0xff]
        %v4059 = vld [vmem:[#allocation13 + $0x268] sm:$0xff]
        %v4060 = vld [vmem:[#allocation13 + $0x270] sm:$0xff]
        %v4061 = vld [vmem:[#allocation13 + $0x278] sm:$0xff]
        %v4062 = vld [vmem:[#allocation13 + $0x280] sm:$0xff]
        %v4063 = vld [vmem:[#allocation13 + $0x288] sm:$0xff]
        %v4064 = vld [vmem:[#allocation13 + $0x290] sm:$0xff]
        %v4065 = vld [vmem:[#allocation13 + $0x298] sm:$0xff]
        %v4066 = vld [vmem:[#allocation13 + $0x2a0] sm:$0xff]
        %v4067 = vld [vmem:[#allocation13 + $0x2a8] sm:$0xff]
        %v4068 = vld [vmem:[#allocation13 + $0x2b0] sm:$0xff]
        %v4069 = vld [vmem:[#allocation13 + $0x2b8] sm:$0xff]
        %v4070 = vld [vmem:[#allocation13 + $0x2c0] sm:$0xff]
        %v4071 = vld [vmem:[#allocation13 + $0x2c8] sm:$0xff]
        %v4072 = vld [vmem:[#allocation13 + $0x2d0] sm:$0xff]
        %v4073 = vld [vmem:[#allocation13 + $0x2d8] sm:$0xff]
        %v4074 = vld [vmem:[#allocation13 + $0x2e0] sm:$0xff]
        %v4075 = vld [vmem:[#allocation13 + $0x2e8] sm:$0xff]
        %v4076 = vld [vmem:[#allocation13 + $0x2f0] sm:$0xff]
        %v4077 = vld [vmem:[#allocation13 + $0x2f8] sm:$0xff]
        %v4078 = vld [vmem:[#allocation13 + $0x300] sm:$0xff]
        %v4079 = vld [vmem:[#allocation13 + $0x308] sm:$0xff]
        %v4080 = vld [vmem:[#allocation13 + $0x310] sm:$0xff]
        %v4081 = vld [vmem:[#allocation13 + $0x318] sm:$0xff]
        %v4082 = vld [vmem:[#allocation13 + $0x320] sm:$0xff]
        %v4083 = vld [vmem:[#allocation13 + $0x328] sm:$0xff]
        %v4084 = vld [vmem:[#allocation13 + $0x330] sm:$0xff]
        %v4085 = vld [vmem:[#allocation13 + $0x338] sm:$0xff]
        %v4086 = vld [vmem:[#allocation13 + $0x340] sm:$0xff]
        %v4087 = vld [vmem:[#allocation13 + $0x348] sm:$0xff]
        %v4088 = vld [vmem:[#allocation13 + $0x350] sm:$0xff]
        %v4089 = vld [vmem:[#allocation13 + $0x358] sm:$0xff]
        %v4090 = vld [vmem:[#allocation13 + $0x360] sm:$0xff]
        %v4091 = vld [vmem:[#allocation13 + $0x368] sm:$0xff]
        %v4092 = vld [vmem:[#allocation13 + $0x370] sm:$0xff]
        %v4093 = vld [vmem:[#allocation13 + $0x378] sm:$0xff]
        %v4094 = vld [vmem:[#allocation13 + $0x380] sm:$0xff]
        %v4095 = vld [vmem:[#allocation13 + $0x388] sm:$0xff]
        %v4096 = vld [vmem:[#allocation13 + $0x390] sm:$0xff]
        %v4097 = vld [vmem:[#allocation13 + $0x398] sm:$0xff]
        %v4098 = vld [vmem:[#allocation13 + $0x3a0] sm:$0xff]
        %v4099 = vld [vmem:[#allocation13 + $0x3a8] sm:$0xff]
        %v4100 = vld [vmem:[#allocation13 + $0x3b0] sm:$0xff]
        %v4101 = vld [vmem:[#allocation13 + $0x3b8] sm:$0xff]
        %v4102 = vld [vmem:[#allocation13 + $0x3c0] sm:$0xff]
        %v4103 = vld [vmem:[#allocation13 + $0x3c8] sm:$0xff]
        %v4104 = vld [vmem:[#allocation13 + $0x3d0] sm:$0xff]
        %v4105 = vld [vmem:[#allocation13 + $0x3d8] sm:$0xff]
        %v4106 = vld [vmem:[#allocation13 + $0x3e0] sm:$0xff]
        %v4107 = vld [vmem:[#allocation13 + $0x3e8] sm:$0xff]
        %v4108 = vld [vmem:[#allocation13 + $0x3f0] sm:$0xff]
        %v4109 = vld [vmem:[#allocation13 + $0x3f8] sm:$0xff]
        %v4110 = vld [vmem:[#allocation13 + $0x400] sm:$0xff]
        %v4111 = vld [vmem:[#allocation13 + $0x408] sm:$0xff]
        %v4112 = vld [vmem:[#allocation13 + $0x410] sm:$0xff]
        %v4113 = vld [vmem:[#allocation13 + $0x418] sm:$0xff]
        %v4114 = vld [vmem:[#allocation13 + $0x420] sm:$0xff]
        %v4115 = vld [vmem:[#allocation13 + $0x428] sm:$0xff]
        %v4116 = vld [vmem:[#allocation13 + $0x430] sm:$0xff]
        %v4117 = vld [vmem:[#allocation13 + $0x438] sm:$0xff]
        %v4118 = vld [vmem:[#allocation13 + $0x440] sm:$0xff]
        %v4119 = vld [vmem:[#allocation13 + $0x448] sm:$0xff]
        %v4120 = vld [vmem:[#allocation13 + $0x450] sm:$0xff]
        %v4121 = vld [vmem:[#allocation13 + $0x458] sm:$0xff]
        %v4122 = vld [vmem:[#allocation13 + $0x460] sm:$0xff]
        %v4123 = vld [vmem:[#allocation13 + $0x468] sm:$0xff]
        %v4124 = vld [vmem:[#allocation13 + $0x470] sm:$0xff]
        %v4125 = vld [vmem:[#allocation13 + $0x478] sm:$0xff]
        %v4126 = vld [vmem:[#allocation13 + $0x480] sm:$0xff]
        %v4127 = vld [vmem:[#allocation13 + $0x488] sm:$0xff]
        %v4128 = vld [vmem:[#allocation13 + $0x490] sm:$0xff]
        %v4129 = vld [vmem:[#allocation13 + $0x498] sm:$0xff]
        %v4130 = vld [vmem:[#allocation13 + $0x4a0] sm:$0xff]
        %v4131 = vld [vmem:[#allocation13 + $0x4a8] sm:$0xff]
        %v4132 = vld [vmem:[#allocation13 + $0x4b0] sm:$0xff]
        %v4133 = vld [vmem:[#allocation13 + $0x4b8] sm:$0xff]
        %v4134 = vld [vmem:[#allocation13 + $0x4c0] sm:$0xff]
        %v4135 = vld [vmem:[#allocation13 + $0x4c8] sm:$0xff]
        %v4136 = vld [vmem:[#allocation13 + $0x4d0] sm:$0xff]
        %v4137 = vld [vmem:[#allocation13 + $0x4d8] sm:$0xff]
        %v4138 = vld [vmem:[#allocation13 + $0x4e0] sm:$0xff]
        %v4139 = vld [vmem:[#allocation13 + $0x4e8] sm:$0xff]
        %v4140 = vld [vmem:[#allocation13 + $0x4f0] sm:$0xff]
        %v4141 = vld [vmem:[#allocation13 + $0x4f8] sm:$0xff]
        %v4142 = vld [vmem:[#allocation13 + $0x500] sm:$0xff]
        %v4143 = vld [vmem:[#allocation13 + $0x508] sm:$0xff]
        %v4144 = vld [vmem:[#allocation13 + $0x510] sm:$0xff]
        %v4145 = vld [vmem:[#allocation13 + $0x518] sm:$0xff]
        %v4146 = vld [vmem:[#allocation13 + $0x520] sm:$0xff]
        %v4147 = vld [vmem:[#allocation13 + $0x528] sm:$0xff]
        %v4148 = vld [vmem:[#allocation13 + $0x530] sm:$0xff]
        %v4149 = vld [vmem:[#allocation13 + $0x538] sm:$0xff]
        %v4150 = vld [vmem:[#allocation13 + $0x540] sm:$0xff]
        %v4151 = vld [vmem:[#allocation13 + $0x548] sm:$0xff]
        %v4152 = vld [vmem:[#allocation13 + $0x550] sm:$0xff]
        %v4153 = vld [vmem:[#allocation13 + $0x558] sm:$0xff]
        %v4154 = vld [vmem:[#allocation13 + $0x560] sm:$0xff]
        %v4155 = vld [vmem:[#allocation13 + $0x568] sm:$0xff]
        %v4156 = vld [vmem:[#allocation13 + $0x570] sm:$0xff]
        %v4157 = vld [vmem:[#allocation13 + $0x578] sm:$0xff]
        %v4158 = vld [vmem:[#allocation13 + $0x580] sm:$0xff]
        %v4159 = vld [vmem:[#allocation13 + $0x588] sm:$0xff]
        %v4160 = vld [vmem:[#allocation13 + $0x590] sm:$0xff]
        %v4161 = vld [vmem:[#allocation13 + $0x598] sm:$0xff]
        %v4162 = vld [vmem:[#allocation13 + $0x5a0] sm:$0xff]
        %v4163 = vld [vmem:[#allocation13 + $0x5a8] sm:$0xff]
        %v4164 = vld [vmem:[#allocation13 + $0x5b0] sm:$0xff]
        %v4165 = vld [vmem:[#allocation13 + $0x5b8] sm:$0xff]
        %v4166 = vld [vmem:[#allocation13 + $0x5c0] sm:$0xff]
        %v4167 = vld [vmem:[#allocation13 + $0x5c8] sm:$0xff]
        %v4168 = vld [vmem:[#allocation13 + $0x5d0] sm:$0xff]
        %v4169 = vld [vmem:[#allocation13 + $0x5d8] sm:$0xff]
        %v4170 = vld [vmem:[#allocation13 + $0x5e0] sm:$0xff]
        %v4171 = vld [vmem:[#allocation13 + $0x5e8] sm:$0xff]
        %v4172 = vld [vmem:[#allocation13 + $0x5f0] sm:$0xff]
        %v4173 = vld [vmem:[#allocation13 + $0x5f8] sm:$0xff]
        %v4174 = vld [vmem:[#allocation13 + $0x600] sm:$0xff]
        %v4175 = vld [vmem:[#allocation13 + $0x608] sm:$0xff]
        %v4176 = vld [vmem:[#allocation13 + $0x610] sm:$0xff]
        %v4177 = vld [vmem:[#allocation13 + $0x618] sm:$0xff]
        %v4178 = vld [vmem:[#allocation13 + $0x620] sm:$0xff]
        %v4179 = vld [vmem:[#allocation13 + $0x628] sm:$0xff]
        %v4180 = vld [vmem:[#allocation13 + $0x630] sm:$0xff]
        %v4181 = vld [vmem:[#allocation13 + $0x638] sm:$0xff]
        %v4182 = vld [vmem:[#allocation13 + $0x640] sm:$0xff]
        %v4183 = vld [vmem:[#allocation13 + $0x648] sm:$0xff]
        %v4184 = vld [vmem:[#allocation13 + $0x650] sm:$0xff]
        %v4185 = vld [vmem:[#allocation13 + $0x658] sm:$0xff]
        %v4186 = vld [vmem:[#allocation13 + $0x660] sm:$0xff]
        %v4187 = vld [vmem:[#allocation13 + $0x668] sm:$0xff]
        %v4188 = vld [vmem:[#allocation13 + $0x670] sm:$0xff]
        %v4189 = vld [vmem:[#allocation13 + $0x678] sm:$0xff]
        %v4190 = vld [vmem:[#allocation13 + $0x680] sm:$0xff]
        %v4191 = vld [vmem:[#allocation13 + $0x688] sm:$0xff]
        %v4192 = vld [vmem:[#allocation13 + $0x690] sm:$0xff]
        %v4193 = vld [vmem:[#allocation13 + $0x698] sm:$0xff]
        %v4194 = vld [vmem:[#allocation13 + $0x6a0] sm:$0xff]
        %v4195 = vld [vmem:[#allocation13 + $0x6a8] sm:$0xff]
        %v4196 = vld [vmem:[#allocation13 + $0x6b0] sm:$0xff]
        %v4197 = vld [vmem:[#allocation13 + $0x6b8] sm:$0xff]
        %v4198 = vld [vmem:[#allocation13 + $0x6c0] sm:$0xff]
        %v4199 = vld [vmem:[#allocation13 + $0x6c8] sm:$0xff]
        %v4200 = vld [vmem:[#allocation13 + $0x6d0] sm:$0xff]
        %v4201 = vld [vmem:[#allocation13 + $0x6d8] sm:$0xff]
        %v4202 = vld [vmem:[#allocation13 + $0x6e0] sm:$0xff]
        %v4203 = vld [vmem:[#allocation13 + $0x6e8] sm:$0xff]
        %v4204 = vld [vmem:[#allocation13 + $0x6f0] sm:$0xff]
        %v4205 = vld [vmem:[#allocation13 + $0x6f8] sm:$0xff]
        %v4206 = vld [vmem:[#allocation13 + $0x700] sm:$0xff]
        %v4207 = vld [vmem:[#allocation13 + $0x708] sm:$0xff]
        %v4208 = vld [vmem:[#allocation13 + $0x710] sm:$0xff]
        %v4209 = vld [vmem:[#allocation13 + $0x718] sm:$0xff]
        %v4210 = vld [vmem:[#allocation13 + $0x720] sm:$0xff]
        %v4211 = vld [vmem:[#allocation13 + $0x728] sm:$0xff]
        %v4212 = vld [vmem:[#allocation13 + $0x730] sm:$0xff]
        %v4213 = vld [vmem:[#allocation13 + $0x738] sm:$0xff]
        %v4214 = vld [vmem:[#allocation13 + $0x740] sm:$0xff]
        %v4215 = vld [vmem:[#allocation13 + $0x748] sm:$0xff]
        %v4216 = vld [vmem:[#allocation13 + $0x750] sm:$0xff]
        %v4217 = vld [vmem:[#allocation13 + $0x758] sm:$0xff]
        %v4218 = vld [vmem:[#allocation13 + $0x760] sm:$0xff]
        %v4219 = vld [vmem:[#allocation13 + $0x768] sm:$0xff]
        %v4220 = vld [vmem:[#allocation13 + $0x770] sm:$0xff]
        %v4221 = vld [vmem:[#allocation13 + $0x778] sm:$0xff]
        %v4222 = vld [vmem:[#allocation13 + $0x780] sm:$0xff]
        %v4223 = vld [vmem:[#allocation13 + $0x788] sm:$0xff]
        %v4224 = vld [vmem:[#allocation13 + $0x790] sm:$0xff]
        %v4225 = vld [vmem:[#allocation13 + $0x798] sm:$0xff]
        %v4226 = vld [vmem:[#allocation13 + $0x7a0] sm:$0xff]
        %v4227 = vld [vmem:[#allocation13 + $0x7a8] sm:$0xff]
        %v4228 = vld [vmem:[#allocation13 + $0x7b0] sm:$0xff]
        %v4229 = vld [vmem:[#allocation13 + $0x7b8] sm:$0xff]
        %v4230 = vld [vmem:[#allocation13 + $0x7c0] sm:$0xff]
        %v4231 = vld [vmem:[#allocation13 + $0x7c8] sm:$0xff]
        %v4232 = vld [vmem:[#allocation13 + $0x7d0] sm:$0xff]
        %v4233 = vld [vmem:[#allocation13 + $0x7d8] sm:$0xff]
        %v4234 = vld [vmem:[#allocation13 + $0x7e0] sm:$0xff]
        %v4235 = vld [vmem:[#allocation13 + $0x7e8] sm:$0xff]
        %v4236 = vld [vmem:[#allocation13 + $0x7f0] sm:$0xff]
        %v4237 = vld [vmem:[#allocation13 + $0x7f8] sm:$0xff]
        %v4238 = vld [vmem:[#allocation13 + $0x800] sm:$0xff]
        %v4239 = vld [vmem:[#allocation13 + $0x808] sm:$0xff]
        %v4240 = vld [vmem:[#allocation13 + $0x810] sm:$0xff]
        %v4241 = vld [vmem:[#allocation13 + $0x818] sm:$0xff]
        %v4242 = vld [vmem:[#allocation13 + $0x820] sm:$0xff]
        %v4243 = vld [vmem:[#allocation13 + $0x828] sm:$0xff]
        %v4244 = vld [vmem:[#allocation13 + $0x830] sm:$0xff]
        %v4245 = vld [vmem:[#allocation13 + $0x838] sm:$0xff]
        %v4246 = vld [vmem:[#allocation13 + $0x840] sm:$0xff]
        %v4247 = vld [vmem:[#allocation13 + $0x848] sm:$0xff]
        %v4248 = vld [vmem:[#allocation13 + $0x850] sm:$0xff]
        %v4249 = vld [vmem:[#allocation13 + $0x858] sm:$0xff]
        %v4250 = vld [vmem:[#allocation13 + $0x860] sm:$0xff]
        %v4251 = vld [vmem:[#allocation13 + $0x868] sm:$0xff]
        %v4252 = vld [vmem:[#allocation13 + $0x870] sm:$0xff]
        %v4253 = vld [vmem:[#allocation13 + $0x878] sm:$0xff]
        %v4254 = vld [vmem:[#allocation13 + $0x880] sm:$0xff]
        %v4255 = vld [vmem:[#allocation13 + $0x888] sm:$0xff]
        %v4256 = vld [vmem:[#allocation13 + $0x890] sm:$0xff]
        %v4257 = vld [vmem:[#allocation13 + $0x898] sm:$0xff]
        %v4258 = vld [vmem:[#allocation13 + $0x8a0] sm:$0xff]
        %v4259 = vld [vmem:[#allocation13 + $0x8a8] sm:$0xff]
        %v4260 = vld [vmem:[#allocation13 + $0x8b0] sm:$0xff]
        %v4261 = vld [vmem:[#allocation13 + $0x8b8] sm:$0xff]
        %v4262 = vld [vmem:[#allocation13 + $0x8c0] sm:$0xff]
        %v4263 = vld [vmem:[#allocation13 + $0x8c8] sm:$0xff]
        %v4264 = vld [vmem:[#allocation13 + $0x8d0] sm:$0xff]
        %v4265 = vld [vmem:[#allocation13 + $0x8d8] sm:$0xff]
        %v4266 = vld [vmem:[#allocation13 + $0x8e0] sm:$0xff]
        %v4267 = vld [vmem:[#allocation13 + $0x8e8] sm:$0xff]
        %v4268 = vld [vmem:[#allocation13 + $0x8f0] sm:$0xff]
        %v4269 = vld [vmem:[#allocation13 + $0x8f8] sm:$0xff]
        %v4270 = vunpack.c.l.bf16 %v3982
        %v4271 = vunpack.c.h.bf16 %v3982
        %v4272 = vunpack.c.l.bf16 %v3983
        %v4273 = vunpack.c.h.bf16 %v3983
        %v4274 = vunpack.c.l.bf16 %v3984
        %v4275 = vunpack.c.h.bf16 %v3984
        %v4276 = vunpack.c.l.bf16 %v3985
        %v4277 = vunpack.c.h.bf16 %v3985
        %v4278 = vunpack.c.l.bf16 %v3986
        %v4279 = vunpack.c.h.bf16 %v3986
        %v4280 = vunpack.c.l.bf16 %v3987
        %v4281 = vunpack.c.h.bf16 %v3987
        %v4282 = vunpack.c.l.bf16 %v3988
        %v4283 = vunpack.c.h.bf16 %v3988
        %v4284 = vunpack.c.l.bf16 %v3989
        %v4285 = vunpack.c.h.bf16 %v3989
        %v4286 = vunpack.c.l.bf16 %v3990
        %v4287 = vunpack.c.h.bf16 %v3990
        %v4288 = vunpack.c.l.bf16 %v3991
        %v4289 = vunpack.c.h.bf16 %v3991
        %v4290 = vunpack.c.l.bf16 %v3992
        %v4291 = vunpack.c.h.bf16 %v3992
        %v4292 = vunpack.c.l.bf16 %v3993
        %v4293 = vunpack.c.h.bf16 %v3993
        %v4294 = vunpack.c.l.bf16 %v3994
        %v4295 = vunpack.c.h.bf16 %v3994
        %v4296 = vunpack.c.l.bf16 %v3995
        %v4297 = vunpack.c.h.bf16 %v3995
        %v4298 = vunpack.c.l.bf16 %v3996
        %v4299 = vunpack.c.h.bf16 %v3996
        %v4300 = vunpack.c.l.bf16 %v3997
        %v4301 = vunpack.c.h.bf16 %v3997
        %v4302 = vunpack.c.l.bf16 %v3998
        %v4303 = vunpack.c.h.bf16 %v3998
        %v4304 = vunpack.c.l.bf16 %v3999
        %v4305 = vunpack.c.h.bf16 %v3999
        %v4306 = vunpack.c.l.bf16 %v4000
        %v4307 = vunpack.c.h.bf16 %v4000
        %v4308 = vunpack.c.l.bf16 %v4001
        %v4309 = vunpack.c.h.bf16 %v4001
        %v4310 = vunpack.c.l.bf16 %v4002
        %v4311 = vunpack.c.h.bf16 %v4002
        %v4312 = vunpack.c.l.bf16 %v4003
        %v4313 = vunpack.c.h.bf16 %v4003
        %v4314 = vunpack.c.l.bf16 %v4004
        %v4315 = vunpack.c.h.bf16 %v4004
        %v4316 = vunpack.c.l.bf16 %v4005
        %v4317 = vunpack.c.h.bf16 %v4005
        %v4318 = vunpack.c.l.bf16 %v4006
        %v4319 = vunpack.c.h.bf16 %v4006
        %v4320 = vunpack.c.l.bf16 %v4007
        %v4321 = vunpack.c.h.bf16 %v4007
        %v4322 = vunpack.c.l.bf16 %v4008
        %v4323 = vunpack.c.h.bf16 %v4008
        %v4324 = vunpack.c.l.bf16 %v4009
        %v4325 = vunpack.c.h.bf16 %v4009
        %v4326 = vunpack.c.l.bf16 %v4010
        %v4327 = vunpack.c.h.bf16 %v4010
        %v4328 = vunpack.c.l.bf16 %v4011
        %v4329 = vunpack.c.h.bf16 %v4011
        %v4330 = vunpack.c.l.bf16 %v4012
        %v4331 = vunpack.c.h.bf16 %v4012
        %v4332 = vunpack.c.l.bf16 %v4013
        %v4333 = vunpack.c.h.bf16 %v4013
        %v4334 = vunpack.c.l.bf16 %v4014
        %v4335 = vunpack.c.h.bf16 %v4014
        %v4336 = vunpack.c.l.bf16 %v4015
        %v4337 = vunpack.c.h.bf16 %v4015
        %v4338 = vunpack.c.l.bf16 %v4016
        %v4339 = vunpack.c.h.bf16 %v4016
        %v4340 = vunpack.c.l.bf16 %v4017
        %v4341 = vunpack.c.h.bf16 %v4017
        %v4342 = vunpack.c.l.bf16 %v4018
        %v4343 = vunpack.c.h.bf16 %v4018
        %v4344 = vunpack.c.l.bf16 %v4019
        %v4345 = vunpack.c.h.bf16 %v4019
        %v4346 = vunpack.c.l.bf16 %v4020
        %v4347 = vunpack.c.h.bf16 %v4020
        %v4348 = vunpack.c.l.bf16 %v4021
        %v4349 = vunpack.c.h.bf16 %v4021
        %v4350 = vunpack.c.l.bf16 %v4022
        %v4351 = vunpack.c.h.bf16 %v4022
        %v4352 = vunpack.c.l.bf16 %v4023
        %v4353 = vunpack.c.h.bf16 %v4023
        %v4354 = vunpack.c.l.bf16 %v4024
        %v4355 = vunpack.c.h.bf16 %v4024
        %v4356 = vunpack.c.l.bf16 %v4025
        %v4357 = vunpack.c.h.bf16 %v4025
        %v4358 = vunpack.c.l.bf16 %v4026
        %v4359 = vunpack.c.h.bf16 %v4026
        %v4360 = vunpack.c.l.bf16 %v4027
        %v4361 = vunpack.c.h.bf16 %v4027
        %v4362 = vunpack.c.l.bf16 %v4028
        %v4363 = vunpack.c.h.bf16 %v4028
        %v4364 = vunpack.c.l.bf16 %v4029
        %v4365 = vunpack.c.h.bf16 %v4029
        %v4366 = vunpack.c.l.bf16 %v4030
        %v4367 = vunpack.c.h.bf16 %v4030
        %v4368 = vunpack.c.l.bf16 %v4031
        %v4369 = vunpack.c.h.bf16 %v4031
        %v4370 = vunpack.c.l.bf16 %v4032
        %v4371 = vunpack.c.h.bf16 %v4032
        %v4372 = vunpack.c.l.bf16 %v4033
        %v4373 = vunpack.c.h.bf16 %v4033
        %v4374 = vunpack.c.l.bf16 %v4034
        %v4375 = vunpack.c.h.bf16 %v4034
        %v4376 = vunpack.c.l.bf16 %v4035
        %v4377 = vunpack.c.h.bf16 %v4035
        %v4378 = vunpack.c.l.bf16 %v4036
        %v4379 = vunpack.c.h.bf16 %v4036
        %v4380 = vunpack.c.l.bf16 %v4037
        %v4381 = vunpack.c.h.bf16 %v4037
        %v4382 = vunpack.c.l.bf16 %v4038
        %v4383 = vunpack.c.h.bf16 %v4038
        %v4384 = vunpack.c.l.bf16 %v4039
        %v4385 = vunpack.c.h.bf16 %v4039
        %v4386 = vunpack.c.l.bf16 %v4040
        %v4387 = vunpack.c.h.bf16 %v4040
        %v4388 = vunpack.c.l.bf16 %v4041
        %v4389 = vunpack.c.h.bf16 %v4041
        %v4390 = vunpack.c.l.bf16 %v4042
        %v4391 = vunpack.c.h.bf16 %v4042
        %v4392 = vunpack.c.l.bf16 %v4043
        %v4393 = vunpack.c.h.bf16 %v4043
        %v4394 = vunpack.c.l.bf16 %v4044
        %v4395 = vunpack.c.h.bf16 %v4044
        %v4396 = vunpack.c.l.bf16 %v4045
        %v4397 = vunpack.c.h.bf16 %v4045
        %v4398 = vunpack.c.l.bf16 %v4046
        %v4399 = vunpack.c.h.bf16 %v4046
        %v4400 = vunpack.c.l.bf16 %v4047
        %v4401 = vunpack.c.h.bf16 %v4047
        %v4402 = vunpack.c.l.bf16 %v4048
        %v4403 = vunpack.c.h.bf16 %v4048
        %v4404 = vunpack.c.l.bf16 %v4049
        %v4405 = vunpack.c.h.bf16 %v4049
        %v4406 = vunpack.c.l.bf16 %v4050
        %v4407 = vunpack.c.h.bf16 %v4050
        %v4408 = vunpack.c.l.bf16 %v4051
        %v4409 = vunpack.c.h.bf16 %v4051
        %v4410 = vunpack.c.l.bf16 %v4052
        %v4411 = vunpack.c.h.bf16 %v4052
        %v4412 = vunpack.c.l.bf16 %v4053
        %v4413 = vunpack.c.h.bf16 %v4053
        %v4414 = vunpack.c.l.bf16 %v4054
        %v4415 = vunpack.c.h.bf16 %v4054
        %v4416 = vunpack.c.l.bf16 %v4055
        %v4417 = vunpack.c.h.bf16 %v4055
        %v4418 = vunpack.c.l.bf16 %v4056
        %v4419 = vunpack.c.h.bf16 %v4056
        %v4420 = vunpack.c.l.bf16 %v4057
        %v4421 = vunpack.c.h.bf16 %v4057
        %v4422 = vunpack.c.l.bf16 %v4058
        %v4423 = vunpack.c.h.bf16 %v4058
        %v4424 = vunpack.c.l.bf16 %v4059
        %v4425 = vunpack.c.h.bf16 %v4059
        %v4426 = vunpack.c.l.bf16 %v4060
        %v4427 = vunpack.c.h.bf16 %v4060
        %v4428 = vunpack.c.l.bf16 %v4061
        %v4429 = vunpack.c.h.bf16 %v4061
        %v4430 = vunpack.c.l.bf16 %v4062
        %v4431 = vunpack.c.h.bf16 %v4062
        %v4432 = vunpack.c.l.bf16 %v4063
        %v4433 = vunpack.c.h.bf16 %v4063
        %v4434 = vunpack.c.l.bf16 %v4064
        %v4435 = vunpack.c.h.bf16 %v4064
        %v4436 = vunpack.c.l.bf16 %v4065
        %v4437 = vunpack.c.h.bf16 %v4065
        %v4438 = vunpack.c.l.bf16 %v4066
        %v4439 = vunpack.c.h.bf16 %v4066
        %v4440 = vunpack.c.l.bf16 %v4067
        %v4441 = vunpack.c.h.bf16 %v4067
        %v4442 = vunpack.c.l.bf16 %v4068
        %v4443 = vunpack.c.h.bf16 %v4068
        %v4444 = vunpack.c.l.bf16 %v4069
        %v4445 = vunpack.c.h.bf16 %v4069
        %v4446 = vunpack.c.l.bf16 %v4070
        %v4447 = vunpack.c.h.bf16 %v4070
        %v4448 = vunpack.c.l.bf16 %v4071
        %v4449 = vunpack.c.h.bf16 %v4071
        %v4450 = vunpack.c.l.bf16 %v4072
        %v4451 = vunpack.c.h.bf16 %v4072
        %v4452 = vunpack.c.l.bf16 %v4073
        %v4453 = vunpack.c.h.bf16 %v4073
        %v4454 = vunpack.c.l.bf16 %v4074
        %v4455 = vunpack.c.h.bf16 %v4074
        %v4456 = vunpack.c.l.bf16 %v4075
        %v4457 = vunpack.c.h.bf16 %v4075
        %v4458 = vunpack.c.l.bf16 %v4076
        %v4459 = vunpack.c.h.bf16 %v4076
        %v4460 = vunpack.c.l.bf16 %v4077
        %v4461 = vunpack.c.h.bf16 %v4077
        %v4462 = vunpack.c.l.bf16 %v4078
        %v4463 = vunpack.c.h.bf16 %v4078
        %v4464 = vunpack.c.l.bf16 %v4079
        %v4465 = vunpack.c.h.bf16 %v4079
        %v4466 = vunpack.c.l.bf16 %v4080
        %v4467 = vunpack.c.h.bf16 %v4080
        %v4468 = vunpack.c.l.bf16 %v4081
        %v4469 = vunpack.c.h.bf16 %v4081
        %v4470 = vunpack.c.l.bf16 %v4082
        %v4471 = vunpack.c.h.bf16 %v4082
        %v4472 = vunpack.c.l.bf16 %v4083
        %v4473 = vunpack.c.h.bf16 %v4083
        %v4474 = vunpack.c.l.bf16 %v4084
        %v4475 = vunpack.c.h.bf16 %v4084
        %v4476 = vunpack.c.l.bf16 %v4085
        %v4477 = vunpack.c.h.bf16 %v4085
        %v4478 = vunpack.c.l.bf16 %v4086
        %v4479 = vunpack.c.h.bf16 %v4086
        %v4480 = vunpack.c.l.bf16 %v4087
        %v4481 = vunpack.c.h.bf16 %v4087
        %v4482 = vunpack.c.l.bf16 %v4088
        %v4483 = vunpack.c.h.bf16 %v4088
        %v4484 = vunpack.c.l.bf16 %v4089
        %v4485 = vunpack.c.h.bf16 %v4089
        %v4486 = vunpack.c.l.bf16 %v4090
        %v4487 = vunpack.c.h.bf16 %v4090
        %v4488 = vunpack.c.l.bf16 %v4091
        %v4489 = vunpack.c.h.bf16 %v4091
        %v4490 = vunpack.c.l.bf16 %v4092
        %v4491 = vunpack.c.h.bf16 %v4092
        %v4492 = vunpack.c.l.bf16 %v4093
        %v4493 = vunpack.c.h.bf16 %v4093
        %v4494 = vunpack.c.l.bf16 %v4094
        %v4495 = vunpack.c.h.bf16 %v4094
        %v4496 = vunpack.c.l.bf16 %v4095
        %v4497 = vunpack.c.h.bf16 %v4095
        %v4498 = vunpack.c.l.bf16 %v4096
        %v4499 = vunpack.c.h.bf16 %v4096
        %v4500 = vunpack.c.l.bf16 %v4097
        %v4501 = vunpack.c.h.bf16 %v4097
        %v4502 = vunpack.c.l.bf16 %v4098
        %v4503 = vunpack.c.h.bf16 %v4098
        %v4504 = vunpack.c.l.bf16 %v4099
        %v4505 = vunpack.c.h.bf16 %v4099
        %v4506 = vunpack.c.l.bf16 %v4100
        %v4507 = vunpack.c.h.bf16 %v4100
        %v4508 = vunpack.c.l.bf16 %v4101
        %v4509 = vunpack.c.h.bf16 %v4101
        %v4510 = vunpack.c.l.bf16 %v4102
        %v4511 = vunpack.c.h.bf16 %v4102
        %v4512 = vunpack.c.l.bf16 %v4103
        %v4513 = vunpack.c.h.bf16 %v4103
        %v4514 = vunpack.c.l.bf16 %v4104
        %v4515 = vunpack.c.h.bf16 %v4104
        %v4516 = vunpack.c.l.bf16 %v4105
        %v4517 = vunpack.c.h.bf16 %v4105
        %v4518 = vunpack.c.l.bf16 %v4106
        %v4519 = vunpack.c.h.bf16 %v4106
        %v4520 = vunpack.c.l.bf16 %v4107
        %v4521 = vunpack.c.h.bf16 %v4107
        %v4522 = vunpack.c.l.bf16 %v4108
        %v4523 = vunpack.c.h.bf16 %v4108
        %v4524 = vunpack.c.l.bf16 %v4109
        %v4525 = vunpack.c.h.bf16 %v4109
        %v4526 = vunpack.c.l.bf16 %v4110
        %v4527 = vunpack.c.h.bf16 %v4110
        %v4528 = vunpack.c.l.bf16 %v4111
        %v4529 = vunpack.c.h.bf16 %v4111
        %v4530 = vunpack.c.l.bf16 %v4112
        %v4531 = vunpack.c.h.bf16 %v4112
        %v4532 = vunpack.c.l.bf16 %v4113
        %v4533 = vunpack.c.h.bf16 %v4113
        %v4534 = vunpack.c.l.bf16 %v4114
        %v4535 = vunpack.c.h.bf16 %v4114
        %v4536 = vunpack.c.l.bf16 %v4115
        %v4537 = vunpack.c.h.bf16 %v4115
        %v4538 = vunpack.c.l.bf16 %v4116
        %v4539 = vunpack.c.h.bf16 %v4116
        %v4540 = vunpack.c.l.bf16 %v4117
        %v4541 = vunpack.c.h.bf16 %v4117
        %v4542 = vunpack.c.l.bf16 %v4118
        %v4543 = vunpack.c.h.bf16 %v4118
        %v4544 = vunpack.c.l.bf16 %v4119
        %v4545 = vunpack.c.h.bf16 %v4119
        %v4546 = vunpack.c.l.bf16 %v4120
        %v4547 = vunpack.c.h.bf16 %v4120
        %v4548 = vunpack.c.l.bf16 %v4121
        %v4549 = vunpack.c.h.bf16 %v4121
        %v4550 = vunpack.c.l.bf16 %v4122
        %v4551 = vunpack.c.h.bf16 %v4122
        %v4552 = vunpack.c.l.bf16 %v4123
        %v4553 = vunpack.c.h.bf16 %v4123
        %v4554 = vunpack.c.l.bf16 %v4124
        %v4555 = vunpack.c.h.bf16 %v4124
        %v4556 = vunpack.c.l.bf16 %v4125
        %v4557 = vunpack.c.h.bf16 %v4125
        %v4558 = vunpack.c.l.bf16 %v4126
        %v4559 = vunpack.c.h.bf16 %v4126
        %v4560 = vunpack.c.l.bf16 %v4127
        %v4561 = vunpack.c.h.bf16 %v4127
        %v4562 = vunpack.c.l.bf16 %v4128
        %v4563 = vunpack.c.h.bf16 %v4128
        %v4564 = vunpack.c.l.bf16 %v4129
        %v4565 = vunpack.c.h.bf16 %v4129
        %v4566 = vunpack.c.l.bf16 %v4130
        %v4567 = vunpack.c.h.bf16 %v4130
        %v4568 = vunpack.c.l.bf16 %v4131
        %v4569 = vunpack.c.h.bf16 %v4131
        %v4570 = vunpack.c.l.bf16 %v4132
        %v4571 = vunpack.c.h.bf16 %v4132
        %v4572 = vunpack.c.l.bf16 %v4133
        %v4573 = vunpack.c.h.bf16 %v4133
        %v4574 = vunpack.c.l.bf16 %v4134
        %v4575 = vunpack.c.h.bf16 %v4134
        %v4576 = vunpack.c.l.bf16 %v4135
        %v4577 = vunpack.c.h.bf16 %v4135
        %v4578 = vunpack.c.l.bf16 %v4136
        %v4579 = vunpack.c.h.bf16 %v4136
        %v4580 = vunpack.c.l.bf16 %v4137
        %v4581 = vunpack.c.h.bf16 %v4137
        %v4582 = vunpack.c.l.bf16 %v4138
        %v4583 = vunpack.c.h.bf16 %v4138
        %v4584 = vunpack.c.l.bf16 %v4139
        %v4585 = vunpack.c.h.bf16 %v4139
        %v4586 = vunpack.c.l.bf16 %v4140
        %v4587 = vunpack.c.h.bf16 %v4140
        %v4588 = vunpack.c.l.bf16 %v4141
        %v4589 = vunpack.c.h.bf16 %v4141
        %v4590 = vunpack.c.l.bf16 %v4142
        %v4591 = vunpack.c.h.bf16 %v4142
        %v4592 = vunpack.c.l.bf16 %v4143
        %v4593 = vunpack.c.h.bf16 %v4143
        %v4594 = vunpack.c.l.bf16 %v4144
        %v4595 = vunpack.c.h.bf16 %v4144
        %v4596 = vunpack.c.l.bf16 %v4145
        %v4597 = vunpack.c.h.bf16 %v4145
        %v4598 = vunpack.c.l.bf16 %v4146
        %v4599 = vunpack.c.h.bf16 %v4146
        %v4600 = vunpack.c.l.bf16 %v4147
        %v4601 = vunpack.c.h.bf16 %v4147
        %v4602 = vunpack.c.l.bf16 %v4148
        %v4603 = vunpack.c.h.bf16 %v4148
        %v4604 = vunpack.c.l.bf16 %v4149
        %v4605 = vunpack.c.h.bf16 %v4149
        %v4606 = vunpack.c.l.bf16 %v4150
        %v4607 = vunpack.c.h.bf16 %v4150
        %v4608 = vunpack.c.l.bf16 %v4151
        %v4609 = vunpack.c.h.bf16 %v4151
        %v4610 = vunpack.c.l.bf16 %v4152
        %v4611 = vunpack.c.h.bf16 %v4152
        %v4612 = vunpack.c.l.bf16 %v4153
        %v4613 = vunpack.c.h.bf16 %v4153
        %v4614 = vunpack.c.l.bf16 %v4154
        %v4615 = vunpack.c.h.bf16 %v4154
        %v4616 = vunpack.c.l.bf16 %v4155
        %v4617 = vunpack.c.h.bf16 %v4155
        %v4618 = vunpack.c.l.bf16 %v4156
        %v4619 = vunpack.c.h.bf16 %v4156
        %v4620 = vunpack.c.l.bf16 %v4157
        %v4621 = vunpack.c.h.bf16 %v4157
        %v4622 = vunpack.c.l.bf16 %v4158
        %v4623 = vunpack.c.h.bf16 %v4158
        %v4624 = vunpack.c.l.bf16 %v4159
        %v4625 = vunpack.c.h.bf16 %v4159
        %v4626 = vunpack.c.l.bf16 %v4160
        %v4627 = vunpack.c.h.bf16 %v4160
        %v4628 = vunpack.c.l.bf16 %v4161
        %v4629 = vunpack.c.h.bf16 %v4161
        %v4630 = vunpack.c.l.bf16 %v4162
        %v4631 = vunpack.c.h.bf16 %v4162
        %v4632 = vunpack.c.l.bf16 %v4163
        %v4633 = vunpack.c.h.bf16 %v4163
        %v4634 = vunpack.c.l.bf16 %v4164
        %v4635 = vunpack.c.h.bf16 %v4164
        %v4636 = vunpack.c.l.bf16 %v4165
        %v4637 = vunpack.c.h.bf16 %v4165
        %v4638 = vunpack.c.l.bf16 %v4166
        %v4639 = vunpack.c.h.bf16 %v4166
        %v4640 = vunpack.c.l.bf16 %v4167
        %v4641 = vunpack.c.h.bf16 %v4167
        %v4642 = vunpack.c.l.bf16 %v4168
        %v4643 = vunpack.c.h.bf16 %v4168
        %v4644 = vunpack.c.l.bf16 %v4169
        %v4645 = vunpack.c.h.bf16 %v4169
        %v4646 = vunpack.c.l.bf16 %v4170
        %v4647 = vunpack.c.h.bf16 %v4170
        %v4648 = vunpack.c.l.bf16 %v4171
        %v4649 = vunpack.c.h.bf16 %v4171
        %v4650 = vunpack.c.l.bf16 %v4172
        %v4651 = vunpack.c.h.bf16 %v4172
        %v4652 = vunpack.c.l.bf16 %v4173
        %v4653 = vunpack.c.h.bf16 %v4173
        %v4654 = vunpack.c.l.bf16 %v4174
        %v4655 = vunpack.c.h.bf16 %v4174
        %v4656 = vunpack.c.l.bf16 %v4175
        %v4657 = vunpack.c.h.bf16 %v4175
        %v4658 = vunpack.c.l.bf16 %v4176
        %v4659 = vunpack.c.h.bf16 %v4176
        %v4660 = vunpack.c.l.bf16 %v4177
        %v4661 = vunpack.c.h.bf16 %v4177
        %v4662 = vunpack.c.l.bf16 %v4178
        %v4663 = vunpack.c.h.bf16 %v4178
        %v4664 = vunpack.c.l.bf16 %v4179
        %v4665 = vunpack.c.h.bf16 %v4179
        %v4666 = vunpack.c.l.bf16 %v4180
        %v4667 = vunpack.c.h.bf16 %v4180
        %v4668 = vunpack.c.l.bf16 %v4181
        %v4669 = vunpack.c.h.bf16 %v4181
        %v4670 = vunpack.c.l.bf16 %v4182
        %v4671 = vunpack.c.h.bf16 %v4182
        %v4672 = vunpack.c.l.bf16 %v4183
        %v4673 = vunpack.c.h.bf16 %v4183
        %v4674 = vunpack.c.l.bf16 %v4184
        %v4675 = vunpack.c.h.bf16 %v4184
        %v4676 = vunpack.c.l.bf16 %v4185
        %v4677 = vunpack.c.h.bf16 %v4185
        %v4678 = vunpack.c.l.bf16 %v4186
        %v4679 = vunpack.c.h.bf16 %v4186
        %v4680 = vunpack.c.l.bf16 %v4187
        %v4681 = vunpack.c.h.bf16 %v4187
        %v4682 = vunpack.c.l.bf16 %v4188
        %v4683 = vunpack.c.h.bf16 %v4188
        %v4684 = vunpack.c.l.bf16 %v4189
        %v4685 = vunpack.c.h.bf16 %v4189
        %v4686 = vunpack.c.l.bf16 %v4190
        %v4687 = vunpack.c.h.bf16 %v4190
        %v4688 = vunpack.c.l.bf16 %v4191
        %v4689 = vunpack.c.h.bf16 %v4191
        %v4690 = vunpack.c.l.bf16 %v4192
        %v4691 = vunpack.c.h.bf16 %v4192
        %v4692 = vunpack.c.l.bf16 %v4193
        %v4693 = vunpack.c.h.bf16 %v4193
        %v4694 = vunpack.c.l.bf16 %v4194
        %v4695 = vunpack.c.h.bf16 %v4194
        %v4696 = vunpack.c.l.bf16 %v4195
        %v4697 = vunpack.c.h.bf16 %v4195
        %v4698 = vunpack.c.l.bf16 %v4196
        %v4699 = vunpack.c.h.bf16 %v4196
        %v4700 = vunpack.c.l.bf16 %v4197
        %v4701 = vunpack.c.h.bf16 %v4197
        %v4702 = vunpack.c.l.bf16 %v4198
        %v4703 = vunpack.c.h.bf16 %v4198
        %v4704 = vunpack.c.l.bf16 %v4199
        %v4705 = vunpack.c.h.bf16 %v4199
        %v4706 = vunpack.c.l.bf16 %v4200
        %v4707 = vunpack.c.h.bf16 %v4200
        %v4708 = vunpack.c.l.bf16 %v4201
        %v4709 = vunpack.c.h.bf16 %v4201
        %v4710 = vunpack.c.l.bf16 %v4202
        %v4711 = vunpack.c.h.bf16 %v4202
        %v4712 = vunpack.c.l.bf16 %v4203
        %v4713 = vunpack.c.h.bf16 %v4203
        %v4714 = vunpack.c.l.bf16 %v4204
        %v4715 = vunpack.c.h.bf16 %v4204
        %v4716 = vunpack.c.l.bf16 %v4205
        %v4717 = vunpack.c.h.bf16 %v4205
        %v4718 = vunpack.c.l.bf16 %v4206
        %v4719 = vunpack.c.h.bf16 %v4206
        %v4720 = vunpack.c.l.bf16 %v4207
        %v4721 = vunpack.c.h.bf16 %v4207
        %v4722 = vunpack.c.l.bf16 %v4208
        %v4723 = vunpack.c.h.bf16 %v4208
        %v4724 = vunpack.c.l.bf16 %v4209
        %v4725 = vunpack.c.h.bf16 %v4209
        %v4726 = vunpack.c.l.bf16 %v4210
        %v4727 = vunpack.c.h.bf16 %v4210
        %v4728 = vunpack.c.l.bf16 %v4211
        %v4729 = vunpack.c.h.bf16 %v4211
        %v4730 = vunpack.c.l.bf16 %v4212
        %v4731 = vunpack.c.h.bf16 %v4212
        %v4732 = vunpack.c.l.bf16 %v4213
        %v4733 = vunpack.c.h.bf16 %v4213
        %v4734 = vunpack.c.l.bf16 %v4214
        %v4735 = vunpack.c.h.bf16 %v4214
        %v4736 = vunpack.c.l.bf16 %v4215
        %v4737 = vunpack.c.h.bf16 %v4215
        %v4738 = vunpack.c.l.bf16 %v4216
        %v4739 = vunpack.c.h.bf16 %v4216
        %v4740 = vunpack.c.l.bf16 %v4217
        %v4741 = vunpack.c.h.bf16 %v4217
        %v4742 = vunpack.c.l.bf16 %v4218
        %v4743 = vunpack.c.h.bf16 %v4218
        %v4744 = vunpack.c.l.bf16 %v4219
        %v4745 = vunpack.c.h.bf16 %v4219
        %v4746 = vunpack.c.l.bf16 %v4220
        %v4747 = vunpack.c.h.bf16 %v4220
        %v4748 = vunpack.c.l.bf16 %v4221
        %v4749 = vunpack.c.h.bf16 %v4221
        %v4750 = vunpack.c.l.bf16 %v4222
        %v4751 = vunpack.c.h.bf16 %v4222
        %v4752 = vunpack.c.l.bf16 %v4223
        %v4753 = vunpack.c.h.bf16 %v4223
        %v4754 = vunpack.c.l.bf16 %v4224
        %v4755 = vunpack.c.h.bf16 %v4224
        %v4756 = vunpack.c.l.bf16 %v4225
        %v4757 = vunpack.c.h.bf16 %v4225
        %v4758 = vunpack.c.l.bf16 %v4226
        %v4759 = vunpack.c.h.bf16 %v4226
        %v4760 = vunpack.c.l.bf16 %v4227
        %v4761 = vunpack.c.h.bf16 %v4227
        %v4762 = vunpack.c.l.bf16 %v4228
        %v4763 = vunpack.c.h.bf16 %v4228
        %v4764 = vunpack.c.l.bf16 %v4229
        %v4765 = vunpack.c.h.bf16 %v4229
        %v4766 = vunpack.c.l.bf16 %v4230
        %v4767 = vunpack.c.h.bf16 %v4230
        %v4768 = vunpack.c.l.bf16 %v4231
        %v4769 = vunpack.c.h.bf16 %v4231
        %v4770 = vunpack.c.l.bf16 %v4232
        %v4771 = vunpack.c.h.bf16 %v4232
        %v4772 = vunpack.c.l.bf16 %v4233
        %v4773 = vunpack.c.h.bf16 %v4233
        %v4774 = vunpack.c.l.bf16 %v4234
        %v4775 = vunpack.c.h.bf16 %v4234
        %v4776 = vunpack.c.l.bf16 %v4235
        %v4777 = vunpack.c.h.bf16 %v4235
        %v4778 = vunpack.c.l.bf16 %v4236
        %v4779 = vunpack.c.h.bf16 %v4236
        %v4780 = vunpack.c.l.bf16 %v4237
        %v4781 = vunpack.c.h.bf16 %v4237
        %v4782 = vunpack.c.l.bf16 %v4238
        %v4783 = vunpack.c.h.bf16 %v4238
        %v4784 = vunpack.c.l.bf16 %v4239
        %v4785 = vunpack.c.h.bf16 %v4239
        %v4786 = vunpack.c.l.bf16 %v4240
        %v4787 = vunpack.c.h.bf16 %v4240
        %v4788 = vunpack.c.l.bf16 %v4241
        %v4789 = vunpack.c.h.bf16 %v4241
        %v4790 = vunpack.c.l.bf16 %v4242
        %v4791 = vunpack.c.h.bf16 %v4242
        %v4792 = vunpack.c.l.bf16 %v4243
        %v4793 = vunpack.c.h.bf16 %v4243
        %v4794 = vunpack.c.l.bf16 %v4244
        %v4795 = vunpack.c.h.bf16 %v4244
        %v4796 = vunpack.c.l.bf16 %v4245
        %v4797 = vunpack.c.h.bf16 %v4245
        %v4798 = vunpack.c.l.bf16 %v4246
        %v4799 = vunpack.c.h.bf16 %v4246
        %v4800 = vunpack.c.l.bf16 %v4247
        %v4801 = vunpack.c.h.bf16 %v4247
        %v4802 = vunpack.c.l.bf16 %v4248
        %v4803 = vunpack.c.h.bf16 %v4248
        %v4804 = vunpack.c.l.bf16 %v4249
        %v4805 = vunpack.c.h.bf16 %v4249
        %v4806 = vunpack.c.l.bf16 %v4250
        %v4807 = vunpack.c.h.bf16 %v4250
        %v4808 = vunpack.c.l.bf16 %v4251
        %v4809 = vunpack.c.h.bf16 %v4251
        %v4810 = vunpack.c.l.bf16 %v4252
        %v4811 = vunpack.c.h.bf16 %v4252
        %v4812 = vunpack.c.l.bf16 %v4253
        %v4813 = vunpack.c.h.bf16 %v4253
        %v4814 = vunpack.c.l.bf16 %v4254
        %v4815 = vunpack.c.h.bf16 %v4254
        %v4816 = vunpack.c.l.bf16 %v4255
        %v4817 = vunpack.c.h.bf16 %v4255
        %v4818 = vunpack.c.l.bf16 %v4256
        %v4819 = vunpack.c.h.bf16 %v4256
        %v4820 = vunpack.c.l.bf16 %v4257
        %v4821 = vunpack.c.h.bf16 %v4257
        %v4822 = vunpack.c.l.bf16 %v4258
        %v4823 = vunpack.c.h.bf16 %v4258
        %v4824 = vunpack.c.l.bf16 %v4259
        %v4825 = vunpack.c.h.bf16 %v4259
        %v4826 = vunpack.c.l.bf16 %v4260
        %v4827 = vunpack.c.h.bf16 %v4260
        %v4828 = vunpack.c.l.bf16 %v4261
        %v4829 = vunpack.c.h.bf16 %v4261
        %v4830 = vunpack.c.l.bf16 %v4262
        %v4831 = vunpack.c.h.bf16 %v4262
        %v4832 = vunpack.c.l.bf16 %v4263
        %v4833 = vunpack.c.h.bf16 %v4263
        %v4834 = vunpack.c.l.bf16 %v4264
        %v4835 = vunpack.c.h.bf16 %v4264
        %v4836 = vunpack.c.l.bf16 %v4265
        %v4837 = vunpack.c.h.bf16 %v4265
        %v4838 = vunpack.c.l.bf16 %v4266
        %v4839 = vunpack.c.h.bf16 %v4266
        %v4840 = vunpack.c.l.bf16 %v4267
        %v4841 = vunpack.c.h.bf16 %v4267
        %v4842 = vunpack.c.l.bf16 %v4268
        %v4843 = vunpack.c.h.bf16 %v4268
        %v4844 = vunpack.c.l.bf16 %v4269
        %v4845 = vunpack.c.h.bf16 %v4269
        %v4846 = vld [vmem:[#allocation14] sm:$0x3f]
        %v4848 = vperm.slane %v4846, 0
        %v4849 = vperm.slane %v4846, 1
        %v4850 = vperm.slane %v4846, 2
        %v4851 = vperm.slane %v4846, 3
        %v4852 = vperm.slane %v4846, 4
        %v4853 = vperm.slane %v4846, 5
        %4860 = vmatpush.msra.mxu0 %v4360
        %4861 = vmatpush.msra.mxu0 %v4354
        %4862 = vmatpush.msra.mxu0 %v4348
        %4863 = vmatpush.msra.mxu0 %v4342
        %4864 = vmatpush.msra.mxu0 %v4336
        %4865 = vmatpush.msra.mxu0 %v4330
        %4866 = vmatpush.msra.mxu0 %v4324
        %4867 = vmatpush.msra.mxu0 %v4318
        %4868 = vmatpush.msra.mxu0 %v4312
        %4869 = vmatpush.msra.mxu0 %v4306
        %4870 = vmatpush.msra.mxu0 %v4300
        %4871 = vmatpush.msra.mxu0 %v4294
        %4872 = vmatpush.msra.mxu0 %v4288
        %4873 = vmatpush.msra.mxu0 %v4282
        %4874 = vmatpush.msra.mxu0 %v4276
        %4875 = vmatpush.msra.mxu0 %v4270
        %4876 = vmatmul.f32.gmra.mxu0 %v558
        %v4877 = vpop.f32.mrf.mxu0
        %v4878 = vadd.f32 %v4848, %v4877
        %4879 = vmatmul.f32.gmra.mxu0 %v564
        %v4880 = vpop.f32.mrf.mxu0
        %v4881 = vadd.f32 %v4848, %v4880
        %4882 = vdwg.mxu0
        %4883 = vmatpush.msra.mxu0 %v4456
        %4884 = vmatpush.msra.mxu0 %v4450
        %4885 = vmatpush.msra.mxu0 %v4444
        %4886 = vmatpush.msra.mxu0 %v4438
        %4887 = vmatpush.msra.mxu0 %v4432
        %4888 = vmatpush.msra.mxu0 %v4426
        %4889 = vmatpush.msra.mxu0 %v4420
        %4890 = vmatpush.msra.mxu0 %v4414
        %4891 = vmatpush.msra.mxu0 %v4408
        %4892 = vmatpush.msra.mxu0 %v4402
        %4893 = vmatpush.msra.mxu0 %v4396
        %4894 = vmatpush.msra.mxu0 %v4390
        %4895 = vmatpush.msra.mxu0 %v4384
        %4896 = vmatpush.msra.mxu0 %v4378
        %4897 = vmatpush.msra.mxu0 %v4372
        %4898 = vmatpush.msra.mxu0 %v4366
        %4899 = vmatmul.f32.gmra.mxu0 %v559
        %v4900 = vpop.f32.mrf.mxu0
        %v4901 = vadd.f32 %v4878, %v4900
        %4902 = vmatmul.f32.gmra.mxu0 %v565
        %v4903 = vpop.f32.mrf.mxu0
        %v4904 = vadd.f32 %v4881, %v4903
        %4905 = vdwg.mxu0
        %4906 = vmatpush.msra.mxu0 %v4552
        %4907 = vmatpush.msra.mxu0 %v4546
        %4908 = vmatpush.msra.mxu0 %v4540
        %4909 = vmatpush.msra.mxu0 %v4534
        %4910 = vmatpush.msra.mxu0 %v4528
        %4911 = vmatpush.msra.mxu0 %v4522
        %4912 = vmatpush.msra.mxu0 %v4516
        %4913 = vmatpush.msra.mxu0 %v4510
        %4914 = vmatpush.msra.mxu0 %v4504
        %4915 = vmatpush.msra.mxu0 %v4498
        %4916 = vmatpush.msra.mxu0 %v4492
        %4917 = vmatpush.msra.mxu0 %v4486
        %4918 = vmatpush.msra.mxu0 %v4480
        %4919 = vmatpush.msra.mxu0 %v4474
        %4920 = vmatpush.msra.mxu0 %v4468
        %4921 = vmatpush.msra.mxu0 %v4462
        %4922 = vmatmul.f32.gmra.mxu0 %v560
        %v4923 = vpop.f32.mrf.mxu0
        %v4924 = vadd.f32 %v4901, %v4923
        %4925 = vmatmul.f32.gmra.mxu0 %v566
        %v4926 = vpop.f32.mrf.mxu0
        %v4927 = vadd.f32 %v4904, %v4926
        %4928 = vdwg.mxu0
        %4929 = vmatpush.msra.mxu0 %v4648
        %4930 = vmatpush.msra.mxu0 %v4642
        %4931 = vmatpush.msra.mxu0 %v4636
        %4932 = vmatpush.msra.mxu0 %v4630
        %4933 = vmatpush.msra.mxu0 %v4624
        %4934 = vmatpush.msra.mxu0 %v4618
        %4935 = vmatpush.msra.mxu0 %v4612
        %4936 = vmatpush.msra.mxu0 %v4606
        %4937 = vmatpush.msra.mxu0 %v4600
        %4938 = vmatpush.msra.mxu0 %v4594
        %4939 = vmatpush.msra.mxu0 %v4588
        %4940 = vmatpush.msra.mxu0 %v4582
        %4941 = vmatpush.msra.mxu0 %v4576
        %4942 = vmatpush.msra.mxu0 %v4570
        %4943 = vmatpush.msra.mxu0 %v4564
        %4944 = vmatpush.msra.mxu0 %v4558
        %4945 = vmatmul.f32.gmra.mxu0 %v561
        %v4946 = vpop.f32.mrf.mxu0
        %v4947 = vadd.f32 %v4924, %v4946
        %4948 = vmatmul.f32.gmra.mxu0 %v567
        %v4949 = vpop.f32.mrf.mxu0
        %v4950 = vadd.f32 %v4927, %v4949
        %4951 = vdwg.mxu0
        %4952 = vmatpush.msra.mxu0 %v4744
        %4953 = vmatpush.msra.mxu0 %v4738
        %4954 = vmatpush.msra.mxu0 %v4732
        %4955 = vmatpush.msra.mxu0 %v4726
        %4956 = vmatpush.msra.mxu0 %v4720
        %4957 = vmatpush.msra.mxu0 %v4714
        %4958 = vmatpush.msra.mxu0 %v4708
        %4959 = vmatpush.msra.mxu0 %v4702
        %4960 = vmatpush.msra.mxu0 %v4696
        %4961 = vmatpush.msra.mxu0 %v4690
        %4962 = vmatpush.msra.mxu0 %v4684
        %4963 = vmatpush.msra.mxu0 %v4678
        %4964 = vmatpush.msra.mxu0 %v4672
        %4965 = vmatpush.msra.mxu0 %v4666
        %4966 = vmatpush.msra.mxu0 %v4660
        %4967 = vmatpush.msra.mxu0 %v4654
        %4968 = vmatmul.f32.gmra.mxu0 %v562
        %v4969 = vpop.f32.mrf.mxu0
        %v4970 = vadd.f32 %v4947, %v4969
        %4971 = vmatmul.f32.gmra.mxu0 %v568
        %v4972 = vpop.f32.mrf.mxu0
        %v4973 = vadd.f32 %v4950, %v4972
        %4974 = vdwg.mxu0
        %4975 = vmatpush.msra.mxu0 %v4840
        %4976 = vmatpush.msra.mxu0 %v4834
        %4977 = vmatpush.msra.mxu0 %v4828
        %4978 = vmatpush.msra.mxu0 %v4822
        %4979 = vmatpush.msra.mxu0 %v4816
        %4980 = vmatpush.msra.mxu0 %v4810
        %4981 = vmatpush.msra.mxu0 %v4804
        %4982 = vmatpush.msra.mxu0 %v4798
        %4983 = vmatpush.msra.mxu0 %v4792
        %4984 = vmatpush.msra.mxu0 %v4786
        %4985 = vmatpush.msra.mxu0 %v4780
        %4986 = vmatpush.msra.mxu0 %v4774
        %4987 = vmatpush.msra.mxu0 %v4768
        %4988 = vmatpush.msra.mxu0 %v4762
        %4989 = vmatpush.msra.mxu0 %v4756
        %4990 = vmatpush.msra.mxu0 %v4750
        %4991 = vmatmul.f32.gmra.mxu0 %v563
        %v4992 = vpop.f32.mrf.mxu0
        %v4993 = vadd.f32 %v4970, %v4992
        %4994 = vmatmul.f32.gmra.mxu0 %v569
        %v4995 = vpop.f32.mrf.mxu0
        %v4996 = vadd.f32 %v4973, %v4995
        %4997 = vdwg.mxu0
        %4998 = vmatpush.msra.mxu0 %v4361
        %4999 = vmatpush.msra.mxu0 %v4355
        %5000 = vmatpush.msra.mxu0 %v4349
        %5001 = vmatpush.msra.mxu0 %v4343
        %5002 = vmatpush.msra.mxu0 %v4337
        %5003 = vmatpush.msra.mxu0 %v4331
        %5004 = vmatpush.msra.mxu0 %v4325
        %5005 = vmatpush.msra.mxu0 %v4319
        %5006 = vmatpush.msra.mxu0 %v4313
        %5007 = vmatpush.msra.mxu0 %v4307
        %5008 = vmatpush.msra.mxu0 %v4301
        %5009 = vmatpush.msra.mxu0 %v4295
        %5010 = vmatpush.msra.mxu0 %v4289
        %5011 = vmatpush.msra.mxu0 %v4283
        %5012 = vmatpush.msra.mxu0 %v4277
        %5013 = vmatpush.msra.mxu0 %v4271
        %5014 = vmatmul.f32.gmra.mxu0 %v558
        %v5015 = vpop.f32.mrf.mxu0
        %v5016 = vadd.f32 %v4849, %v5015
        %5017 = vmatmul.f32.gmra.mxu0 %v564
        %v5018 = vpop.f32.mrf.mxu0
        %v5019 = vadd.f32 %v4849, %v5018
        %5020 = vdwg.mxu0
        %5021 = vmatpush.msra.mxu0 %v4457
        %5022 = vmatpush.msra.mxu0 %v4451
        %5023 = vmatpush.msra.mxu0 %v4445
        %5024 = vmatpush.msra.mxu0 %v4439
        %5025 = vmatpush.msra.mxu0 %v4433
        %5026 = vmatpush.msra.mxu0 %v4427
        %5027 = vmatpush.msra.mxu0 %v4421
        %5028 = vmatpush.msra.mxu0 %v4415
        %5029 = vmatpush.msra.mxu0 %v4409
        %5030 = vmatpush.msra.mxu0 %v4403
        %5031 = vmatpush.msra.mxu0 %v4397
        %5032 = vmatpush.msra.mxu0 %v4391
        %5033 = vmatpush.msra.mxu0 %v4385
        %5034 = vmatpush.msra.mxu0 %v4379
        %5035 = vmatpush.msra.mxu0 %v4373
        %5036 = vmatpush.msra.mxu0 %v4367
        %5037 = vmatmul.f32.gmra.mxu0 %v559
        %v5038 = vpop.f32.mrf.mxu0
        %v5039 = vadd.f32 %v5016, %v5038
        %5040 = vmatmul.f32.gmra.mxu0 %v565
        %v5041 = vpop.f32.mrf.mxu0
        %v5042 = vadd.f32 %v5019, %v5041
        %5043 = vdwg.mxu0
        %5044 = vmatpush.msra.mxu0 %v4553
        %5045 = vmatpush.msra.mxu0 %v4547
        %5046 = vmatpush.msra.mxu0 %v4541
        %5047 = vmatpush.msra.mxu0 %v4535
        %5048 = vmatpush.msra.mxu0 %v4529
        %5049 = vmatpush.msra.mxu0 %v4523
        %5050 = vmatpush.msra.mxu0 %v4517
        %5051 = vmatpush.msra.mxu0 %v4511
        %5052 = vmatpush.msra.mxu0 %v4505
        %5053 = vmatpush.msra.mxu0 %v4499
        %5054 = vmatpush.msra.mxu0 %v4493
        %5055 = vmatpush.msra.mxu0 %v4487
        %5056 = vmatpush.msra.mxu0 %v4481
        %5057 = vmatpush.msra.mxu0 %v4475
        %5058 = vmatpush.msra.mxu0 %v4469
        %5059 = vmatpush.msra.mxu0 %v4463
        %5060 = vmatmul.f32.gmra.mxu0 %v560
        %v5061 = vpop.f32.mrf.mxu0
        %v5062 = vadd.f32 %v5039, %v5061
        %5063 = vmatmul.f32.gmra.mxu0 %v566
        %v5064 = vpop.f32.mrf.mxu0
        %v5065 = vadd.f32 %v5042, %v5064
        %5066 = vdwg.mxu0
        %5067 = vmatpush.msra.mxu0 %v4649
        %5068 = vmatpush.msra.mxu0 %v4643
        %5069 = vmatpush.msra.mxu0 %v4637
        %5070 = vmatpush.msra.mxu0 %v4631
        %5071 = vmatpush.msra.mxu0 %v4625
        %5072 = vmatpush.msra.mxu0 %v4619
        %5073 = vmatpush.msra.mxu0 %v4613
        %5074 = vmatpush.msra.mxu0 %v4607
        %5075 = vmatpush.msra.mxu0 %v4601
        %5076 = vmatpush.msra.mxu0 %v4595
        %5077 = vmatpush.msra.mxu0 %v4589
        %5078 = vmatpush.msra.mxu0 %v4583
        %5079 = vmatpush.msra.mxu0 %v4577
        %5080 = vmatpush.msra.mxu0 %v4571
        %5081 = vmatpush.msra.mxu0 %v4565
        %5082 = vmatpush.msra.mxu0 %v4559
        %5083 = vmatmul.f32.gmra.mxu0 %v561
        %v5084 = vpop.f32.mrf.mxu0
        %v5085 = vadd.f32 %v5062, %v5084
        %5086 = vmatmul.f32.gmra.mxu0 %v567
        %v5087 = vpop.f32.mrf.mxu0
        %v5088 = vadd.f32 %v5065, %v5087
        %5089 = vdwg.mxu0
        %5090 = vmatpush.msra.mxu0 %v4745
        %5091 = vmatpush.msra.mxu0 %v4739
        %5092 = vmatpush.msra.mxu0 %v4733
        %5093 = vmatpush.msra.mxu0 %v4727
        %5094 = vmatpush.msra.mxu0 %v4721
        %5095 = vmatpush.msra.mxu0 %v4715
        %5096 = vmatpush.msra.mxu0 %v4709
        %5097 = vmatpush.msra.mxu0 %v4703
        %5098 = vmatpush.msra.mxu0 %v4697
        %5099 = vmatpush.msra.mxu0 %v4691
        %5100 = vmatpush.msra.mxu0 %v4685
        %5101 = vmatpush.msra.mxu0 %v4679
        %5102 = vmatpush.msra.mxu0 %v4673
        %5103 = vmatpush.msra.mxu0 %v4667
        %5104 = vmatpush.msra.mxu0 %v4661
        %5105 = vmatpush.msra.mxu0 %v4655
        %5106 = vmatmul.f32.gmra.mxu0 %v562
        %v5107 = vpop.f32.mrf.mxu0
        %v5108 = vadd.f32 %v5085, %v5107
        %5109 = vmatmul.f32.gmra.mxu0 %v568
        %v5110 = vpop.f32.mrf.mxu0
        %v5111 = vadd.f32 %v5088, %v5110
        %5112 = vdwg.mxu0
        %5113 = vmatpush.msra.mxu0 %v4841
        %5114 = vmatpush.msra.mxu0 %v4835
        %5115 = vmatpush.msra.mxu0 %v4829
        %5116 = vmatpush.msra.mxu0 %v4823
        %5117 = vmatpush.msra.mxu0 %v4817
        %5118 = vmatpush.msra.mxu0 %v4811
        %5119 = vmatpush.msra.mxu0 %v4805
        %5120 = vmatpush.msra.mxu0 %v4799
        %5121 = vmatpush.msra.mxu0 %v4793
        %5122 = vmatpush.msra.mxu0 %v4787
        %5123 = vmatpush.msra.mxu0 %v4781
        %5124 = vmatpush.msra.mxu0 %v4775
        %5125 = vmatpush.msra.mxu0 %v4769
        %5126 = vmatpush.msra.mxu0 %v4763
        %5127 = vmatpush.msra.mxu0 %v4757
        %5128 = vmatpush.msra.mxu0 %v4751
        %5129 = vmatmul.f32.gmra.mxu0 %v563
        %v5130 = vpop.f32.mrf.mxu0
        %v5131 = vadd.f32 %v5108, %v5130
        %5132 = vmatmul.f32.gmra.mxu0 %v569
        %v5133 = vpop.f32.mrf.mxu0
        %v5134 = vadd.f32 %v5111, %v5133
        %5135 = vdwg.mxu0
        %5136 = vmatpush.msra.mxu0 %v4362
        %5137 = vmatpush.msra.mxu0 %v4356
        %5138 = vmatpush.msra.mxu0 %v4350
        %5139 = vmatpush.msra.mxu0 %v4344
        %5140 = vmatpush.msra.mxu0 %v4338
        %5141 = vmatpush.msra.mxu0 %v4332
        %5142 = vmatpush.msra.mxu0 %v4326
        %5143 = vmatpush.msra.mxu0 %v4320
        %5144 = vmatpush.msra.mxu0 %v4314
        %5145 = vmatpush.msra.mxu0 %v4308
        %5146 = vmatpush.msra.mxu0 %v4302
        %5147 = vmatpush.msra.mxu0 %v4296
        %5148 = vmatpush.msra.mxu0 %v4290
        %5149 = vmatpush.msra.mxu0 %v4284
        %5150 = vmatpush.msra.mxu0 %v4278
        %5151 = vmatpush.msra.mxu0 %v4272
        %5152 = vmatmul.f32.gmra.mxu0 %v558
        %v5153 = vpop.f32.mrf.mxu0
        %v5154 = vadd.f32 %v4850, %v5153
        %5155 = vmatmul.f32.gmra.mxu0 %v564
        %v5156 = vpop.f32.mrf.mxu0
        %v5157 = vadd.f32 %v4850, %v5156
        %5158 = vdwg.mxu0
        %5159 = vmatpush.msra.mxu0 %v4458
        %5160 = vmatpush.msra.mxu0 %v4452
        %5161 = vmatpush.msra.mxu0 %v4446
        %5162 = vmatpush.msra.mxu0 %v4440
        %5163 = vmatpush.msra.mxu0 %v4434
        %5164 = vmatpush.msra.mxu0 %v4428
        %5165 = vmatpush.msra.mxu0 %v4422
        %5166 = vmatpush.msra.mxu0 %v4416
        %5167 = vmatpush.msra.mxu0 %v4410
        %5168 = vmatpush.msra.mxu0 %v4404
        %5169 = vmatpush.msra.mxu0 %v4398
        %5170 = vmatpush.msra.mxu0 %v4392
        %5171 = vmatpush.msra.mxu0 %v4386
        %5172 = vmatpush.msra.mxu0 %v4380
        %5173 = vmatpush.msra.mxu0 %v4374
        %5174 = vmatpush.msra.mxu0 %v4368
        %5175 = vmatmul.f32.gmra.mxu0 %v559
        %v5176 = vpop.f32.mrf.mxu0
        %v5177 = vadd.f32 %v5154, %v5176
        %5178 = vmatmul.f32.gmra.mxu0 %v565
        %v5179 = vpop.f32.mrf.mxu0
        %v5180 = vadd.f32 %v5157, %v5179
        %5181 = vdwg.mxu0
        %5182 = vmatpush.msra.mxu0 %v4554
        %5183 = vmatpush.msra.mxu0 %v4548
        %5184 = vmatpush.msra.mxu0 %v4542
        %5185 = vmatpush.msra.mxu0 %v4536
        %5186 = vmatpush.msra.mxu0 %v4530
        %5187 = vmatpush.msra.mxu0 %v4524
        %5188 = vmatpush.msra.mxu0 %v4518
        %5189 = vmatpush.msra.mxu0 %v4512
        %5190 = vmatpush.msra.mxu0 %v4506
        %5191 = vmatpush.msra.mxu0 %v4500
        %5192 = vmatpush.msra.mxu0 %v4494
        %5193 = vmatpush.msra.mxu0 %v4488
        %5194 = vmatpush.msra.mxu0 %v4482
        %5195 = vmatpush.msra.mxu0 %v4476
        %5196 = vmatpush.msra.mxu0 %v4470
        %5197 = vmatpush.msra.mxu0 %v4464
        %5198 = vmatmul.f32.gmra.mxu0 %v560
        %v5199 = vpop.f32.mrf.mxu0
        %v5200 = vadd.f32 %v5177, %v5199
        %5201 = vmatmul.f32.gmra.mxu0 %v566
        %v5202 = vpop.f32.mrf.mxu0
        %v5203 = vadd.f32 %v5180, %v5202
        %5204 = vdwg.mxu0
        %5205 = vmatpush.msra.mxu0 %v4650
        %5206 = vmatpush.msra.mxu0 %v4644
        %5207 = vmatpush.msra.mxu0 %v4638
        %5208 = vmatpush.msra.mxu0 %v4632
        %5209 = vmatpush.msra.mxu0 %v4626
        %5210 = vmatpush.msra.mxu0 %v4620
        %5211 = vmatpush.msra.mxu0 %v4614
        %5212 = vmatpush.msra.mxu0 %v4608
        %5213 = vmatpush.msra.mxu0 %v4602
        %5214 = vmatpush.msra.mxu0 %v4596
        %5215 = vmatpush.msra.mxu0 %v4590
        %5216 = vmatpush.msra.mxu0 %v4584
        %5217 = vmatpush.msra.mxu0 %v4578
        %5218 = vmatpush.msra.mxu0 %v4572
        %5219 = vmatpush.msra.mxu0 %v4566
        %5220 = vmatpush.msra.mxu0 %v4560
        %5221 = vmatmul.f32.gmra.mxu0 %v561
        %v5222 = vpop.f32.mrf.mxu0
        %v5223 = vadd.f32 %v5200, %v5222
        %5224 = vmatmul.f32.gmra.mxu0 %v567
        %v5225 = vpop.f32.mrf.mxu0
        %v5226 = vadd.f32 %v5203, %v5225
        %5227 = vdwg.mxu0
        %5228 = vmatpush.msra.mxu0 %v4746
        %5229 = vmatpush.msra.mxu0 %v4740
        %5230 = vmatpush.msra.mxu0 %v4734
        %5231 = vmatpush.msra.mxu0 %v4728
        %5232 = vmatpush.msra.mxu0 %v4722
        %5233 = vmatpush.msra.mxu0 %v4716
        %5234 = vmatpush.msra.mxu0 %v4710
        %5235 = vmatpush.msra.mxu0 %v4704
        %5236 = vmatpush.msra.mxu0 %v4698
        %5237 = vmatpush.msra.mxu0 %v4692
        %5238 = vmatpush.msra.mxu0 %v4686
        %5239 = vmatpush.msra.mxu0 %v4680
        %5240 = vmatpush.msra.mxu0 %v4674
        %5241 = vmatpush.msra.mxu0 %v4668
        %5242 = vmatpush.msra.mxu0 %v4662
        %5243 = vmatpush.msra.mxu0 %v4656
        %5244 = vmatmul.f32.gmra.mxu0 %v562
        %v5245 = vpop.f32.mrf.mxu0
        %v5246 = vadd.f32 %v5223, %v5245
        %5247 = vmatmul.f32.gmra.mxu0 %v568
        %v5248 = vpop.f32.mrf.mxu0
        %v5249 = vadd.f32 %v5226, %v5248
        %5250 = vdwg.mxu0
        %5251 = vmatpush.msra.mxu0 %v4842
        %5252 = vmatpush.msra.mxu0 %v4836
        %5253 = vmatpush.msra.mxu0 %v4830
        %5254 = vmatpush.msra.mxu0 %v4824
        %5255 = vmatpush.msra.mxu0 %v4818
        %5256 = vmatpush.msra.mxu0 %v4812
        %5257 = vmatpush.msra.mxu0 %v4806
        %5258 = vmatpush.msra.mxu0 %v4800
        %5259 = vmatpush.msra.mxu0 %v4794
        %5260 = vmatpush.msra.mxu0 %v4788
        %5261 = vmatpush.msra.mxu0 %v4782
        %5262 = vmatpush.msra.mxu0 %v4776
        %5263 = vmatpush.msra.mxu0 %v4770
        %5264 = vmatpush.msra.mxu0 %v4764
        %5265 = vmatpush.msra.mxu0 %v4758
        %5266 = vmatpush.msra.mxu0 %v4752
        %5267 = vmatmul.f32.gmra.mxu0 %v563
        %v5268 = vpop.f32.mrf.mxu0
        %v5269 = vadd.f32 %v5246, %v5268
        %5270 = vmatmul.f32.gmra.mxu0 %v569
        %v5271 = vpop.f32.mrf.mxu0
        %v5272 = vadd.f32 %v5249, %v5271
        %5273 = vdwg.mxu0
        %5274 = vmatpush.msra.mxu0 %v4363
        %5275 = vmatpush.msra.mxu0 %v4357
        %5276 = vmatpush.msra.mxu0 %v4351
        %5277 = vmatpush.msra.mxu0 %v4345
        %5278 = vmatpush.msra.mxu0 %v4339
        %5279 = vmatpush.msra.mxu0 %v4333
        %5280 = vmatpush.msra.mxu0 %v4327
        %5281 = vmatpush.msra.mxu0 %v4321
        %5282 = vmatpush.msra.mxu0 %v4315
        %5283 = vmatpush.msra.mxu0 %v4309
        %5284 = vmatpush.msra.mxu0 %v4303
        %5285 = vmatpush.msra.mxu0 %v4297
        %5286 = vmatpush.msra.mxu0 %v4291
        %5287 = vmatpush.msra.mxu0 %v4285
        %5288 = vmatpush.msra.mxu0 %v4279
        %5289 = vmatpush.msra.mxu0 %v4273
        %5290 = vmatmul.f32.gmra.mxu0 %v558
        %v5291 = vpop.f32.mrf.mxu0
        %v5292 = vadd.f32 %v4851, %v5291
        %5293 = vmatmul.f32.gmra.mxu0 %v564
        %v5294 = vpop.f32.mrf.mxu0
        %v5295 = vadd.f32 %v4851, %v5294
        %5296 = vdwg.mxu0
        %5297 = vmatpush.msra.mxu0 %v4459
        %5298 = vmatpush.msra.mxu0 %v4453
        %5299 = vmatpush.msra.mxu0 %v4447
        %5300 = vmatpush.msra.mxu0 %v4441
        %5301 = vmatpush.msra.mxu0 %v4435
        %5302 = vmatpush.msra.mxu0 %v4429
        %5303 = vmatpush.msra.mxu0 %v4423
        %5304 = vmatpush.msra.mxu0 %v4417
        %5305 = vmatpush.msra.mxu0 %v4411
        %5306 = vmatpush.msra.mxu0 %v4405
        %5307 = vmatpush.msra.mxu0 %v4399
        %5308 = vmatpush.msra.mxu0 %v4393
        %5309 = vmatpush.msra.mxu0 %v4387
        %5310 = vmatpush.msra.mxu0 %v4381
        %5311 = vmatpush.msra.mxu0 %v4375
        %5312 = vmatpush.msra.mxu0 %v4369
        %5313 = vmatmul.f32.gmra.mxu0 %v559
        %v5314 = vpop.f32.mrf.mxu0
        %v5315 = vadd.f32 %v5292, %v5314
        %5316 = vmatmul.f32.gmra.mxu0 %v565
        %v5317 = vpop.f32.mrf.mxu0
        %v5318 = vadd.f32 %v5295, %v5317
        %5319 = vdwg.mxu0
        %5320 = vmatpush.msra.mxu0 %v4555
        %5321 = vmatpush.msra.mxu0 %v4549
        %5322 = vmatpush.msra.mxu0 %v4543
        %5323 = vmatpush.msra.mxu0 %v4537
        %5324 = vmatpush.msra.mxu0 %v4531
        %5325 = vmatpush.msra.mxu0 %v4525
        %5326 = vmatpush.msra.mxu0 %v4519
        %5327 = vmatpush.msra.mxu0 %v4513
        %5328 = vmatpush.msra.mxu0 %v4507
        %5329 = vmatpush.msra.mxu0 %v4501
        %5330 = vmatpush.msra.mxu0 %v4495
        %5331 = vmatpush.msra.mxu0 %v4489
        %5332 = vmatpush.msra.mxu0 %v4483
        %5333 = vmatpush.msra.mxu0 %v4477
        %5334 = vmatpush.msra.mxu0 %v4471
        %5335 = vmatpush.msra.mxu0 %v4465
        %5336 = vmatmul.f32.gmra.mxu0 %v560
        %v5337 = vpop.f32.mrf.mxu0
        %v5338 = vadd.f32 %v5315, %v5337
        %5339 = vmatmul.f32.gmra.mxu0 %v566
        %v5340 = vpop.f32.mrf.mxu0
        %v5341 = vadd.f32 %v5318, %v5340
        %5342 = vdwg.mxu0
        %5343 = vmatpush.msra.mxu0 %v4651
        %5344 = vmatpush.msra.mxu0 %v4645
        %5345 = vmatpush.msra.mxu0 %v4639
        %5346 = vmatpush.msra.mxu0 %v4633
        %5347 = vmatpush.msra.mxu0 %v4627
        %5348 = vmatpush.msra.mxu0 %v4621
        %5349 = vmatpush.msra.mxu0 %v4615
        %5350 = vmatpush.msra.mxu0 %v4609
        %5351 = vmatpush.msra.mxu0 %v4603
        %5352 = vmatpush.msra.mxu0 %v4597
        %5353 = vmatpush.msra.mxu0 %v4591
        %5354 = vmatpush.msra.mxu0 %v4585
        %5355 = vmatpush.msra.mxu0 %v4579
        %5356 = vmatpush.msra.mxu0 %v4573
        %5357 = vmatpush.msra.mxu0 %v4567
        %5358 = vmatpush.msra.mxu0 %v4561
        %5359 = vmatmul.f32.gmra.mxu0 %v561
        %v5360 = vpop.f32.mrf.mxu0
        %v5361 = vadd.f32 %v5338, %v5360
        %5362 = vmatmul.f32.gmra.mxu0 %v567
        %v5363 = vpop.f32.mrf.mxu0
        %v5364 = vadd.f32 %v5341, %v5363
        %5365 = vdwg.mxu0
        %5366 = vmatpush.msra.mxu0 %v4747
        %5367 = vmatpush.msra.mxu0 %v4741
        %5368 = vmatpush.msra.mxu0 %v4735
        %5369 = vmatpush.msra.mxu0 %v4729
        %5370 = vmatpush.msra.mxu0 %v4723
        %5371 = vmatpush.msra.mxu0 %v4717
        %5372 = vmatpush.msra.mxu0 %v4711
        %5373 = vmatpush.msra.mxu0 %v4705
        %5374 = vmatpush.msra.mxu0 %v4699
        %5375 = vmatpush.msra.mxu0 %v4693
        %5376 = vmatpush.msra.mxu0 %v4687
        %5377 = vmatpush.msra.mxu0 %v4681
        %5378 = vmatpush.msra.mxu0 %v4675
        %5379 = vmatpush.msra.mxu0 %v4669
        %5380 = vmatpush.msra.mxu0 %v4663
        %5381 = vmatpush.msra.mxu0 %v4657
        %5382 = vmatmul.f32.gmra.mxu0 %v562
        %v5383 = vpop.f32.mrf.mxu0
        %v5384 = vadd.f32 %v5361, %v5383
        %5385 = vmatmul.f32.gmra.mxu0 %v568
        %v5386 = vpop.f32.mrf.mxu0
        %v5387 = vadd.f32 %v5364, %v5386
        %5388 = vdwg.mxu0
        %5389 = vmatpush.msra.mxu0 %v4843
        %5390 = vmatpush.msra.mxu0 %v4837
        %5391 = vmatpush.msra.mxu0 %v4831
        %5392 = vmatpush.msra.mxu0 %v4825
        %5393 = vmatpush.msra.mxu0 %v4819
        %5394 = vmatpush.msra.mxu0 %v4813
        %5395 = vmatpush.msra.mxu0 %v4807
        %5396 = vmatpush.msra.mxu0 %v4801
        %5397 = vmatpush.msra.mxu0 %v4795
        %5398 = vmatpush.msra.mxu0 %v4789
        %5399 = vmatpush.msra.mxu0 %v4783
        %5400 = vmatpush.msra.mxu0 %v4777
        %5401 = vmatpush.msra.mxu0 %v4771
        %5402 = vmatpush.msra.mxu0 %v4765
        %5403 = vmatpush.msra.mxu0 %v4759
        %5404 = vmatpush.msra.mxu0 %v4753
        %5405 = vmatmul.f32.gmra.mxu0 %v563
        %v5406 = vpop.f32.mrf.mxu0
        %v5407 = vadd.f32 %v5384, %v5406
        %5408 = vmatmul.f32.gmra.mxu0 %v569
        %v5409 = vpop.f32.mrf.mxu0
        %v5410 = vadd.f32 %v5387, %v5409
        %5411 = vdwg.mxu0
        %5412 = vmatpush.msra.mxu0 %v4364
        %5413 = vmatpush.msra.mxu0 %v4358
        %5414 = vmatpush.msra.mxu0 %v4352
        %5415 = vmatpush.msra.mxu0 %v4346
        %5416 = vmatpush.msra.mxu0 %v4340
        %5417 = vmatpush.msra.mxu0 %v4334
        %5418 = vmatpush.msra.mxu0 %v4328
        %5419 = vmatpush.msra.mxu0 %v4322
        %5420 = vmatpush.msra.mxu0 %v4316
        %5421 = vmatpush.msra.mxu0 %v4310
        %5422 = vmatpush.msra.mxu0 %v4304
        %5423 = vmatpush.msra.mxu0 %v4298
        %5424 = vmatpush.msra.mxu0 %v4292
        %5425 = vmatpush.msra.mxu0 %v4286
        %5426 = vmatpush.msra.mxu0 %v4280
        %5427 = vmatpush.msra.mxu0 %v4274
        %5428 = vmatmul.f32.gmra.mxu0 %v558
        %v5429 = vpop.f32.mrf.mxu0
        %v5430 = vadd.f32 %v4852, %v5429
        %5431 = vmatmul.f32.gmra.mxu0 %v564
        %v5432 = vpop.f32.mrf.mxu0
        %v5433 = vadd.f32 %v4852, %v5432
        %5434 = vdwg.mxu0
        %5435 = vmatpush.msra.mxu0 %v4460
        %5436 = vmatpush.msra.mxu0 %v4454
        %5437 = vmatpush.msra.mxu0 %v4448
        %5438 = vmatpush.msra.mxu0 %v4442
        %5439 = vmatpush.msra.mxu0 %v4436
        %5440 = vmatpush.msra.mxu0 %v4430
        %5441 = vmatpush.msra.mxu0 %v4424
        %5442 = vmatpush.msra.mxu0 %v4418
        %5443 = vmatpush.msra.mxu0 %v4412
        %5444 = vmatpush.msra.mxu0 %v4406
        %5445 = vmatpush.msra.mxu0 %v4400
        %5446 = vmatpush.msra.mxu0 %v4394
        %5447 = vmatpush.msra.mxu0 %v4388
        %5448 = vmatpush.msra.mxu0 %v4382
        %5449 = vmatpush.msra.mxu0 %v4376
        %5450 = vmatpush.msra.mxu0 %v4370
        %5451 = vmatmul.f32.gmra.mxu0 %v559
        %v5452 = vpop.f32.mrf.mxu0
        %v5453 = vadd.f32 %v5430, %v5452
        %5454 = vmatmul.f32.gmra.mxu0 %v565
        %v5455 = vpop.f32.mrf.mxu0
        %v5456 = vadd.f32 %v5433, %v5455
        %5457 = vdwg.mxu0
        %5458 = vmatpush.msra.mxu0 %v4556
        %5459 = vmatpush.msra.mxu0 %v4550
        %5460 = vmatpush.msra.mxu0 %v4544
        %5461 = vmatpush.msra.mxu0 %v4538
        %5462 = vmatpush.msra.mxu0 %v4532
        %5463 = vmatpush.msra.mxu0 %v4526
        %5464 = vmatpush.msra.mxu0 %v4520
        %5465 = vmatpush.msra.mxu0 %v4514
        %5466 = vmatpush.msra.mxu0 %v4508
        %5467 = vmatpush.msra.mxu0 %v4502
        %5468 = vmatpush.msra.mxu0 %v4496
        %5469 = vmatpush.msra.mxu0 %v4490
        %5470 = vmatpush.msra.mxu0 %v4484
        %5471 = vmatpush.msra.mxu0 %v4478
        %5472 = vmatpush.msra.mxu0 %v4472
        %5473 = vmatpush.msra.mxu0 %v4466
        %5474 = vmatmul.f32.gmra.mxu0 %v560
        %v5475 = vpop.f32.mrf.mxu0
        %v5476 = vadd.f32 %v5453, %v5475
        %5477 = vmatmul.f32.gmra.mxu0 %v566
        %v5478 = vpop.f32.mrf.mxu0
        %v5479 = vadd.f32 %v5456, %v5478
        %5480 = vdwg.mxu0
        %5481 = vmatpush.msra.mxu0 %v4652
        %5482 = vmatpush.msra.mxu0 %v4646
        %5483 = vmatpush.msra.mxu0 %v4640
        %5484 = vmatpush.msra.mxu0 %v4634
        %5485 = vmatpush.msra.mxu0 %v4628
        %5486 = vmatpush.msra.mxu0 %v4622
        %5487 = vmatpush.msra.mxu0 %v4616
        %5488 = vmatpush.msra.mxu0 %v4610
        %5489 = vmatpush.msra.mxu0 %v4604
        %5490 = vmatpush.msra.mxu0 %v4598
        %5491 = vmatpush.msra.mxu0 %v4592
        %5492 = vmatpush.msra.mxu0 %v4586
        %5493 = vmatpush.msra.mxu0 %v4580
        %5494 = vmatpush.msra.mxu0 %v4574
        %5495 = vmatpush.msra.mxu0 %v4568
        %5496 = vmatpush.msra.mxu0 %v4562
        %5497 = vmatmul.f32.gmra.mxu0 %v561
        %v5498 = vpop.f32.mrf.mxu0
        %v5499 = vadd.f32 %v5476, %v5498
        %5500 = vmatmul.f32.gmra.mxu0 %v567
        %v5501 = vpop.f32.mrf.mxu0
        %v5502 = vadd.f32 %v5479, %v5501
        %5503 = vdwg.mxu0
        %5504 = vmatpush.msra.mxu0 %v4748
        %5505 = vmatpush.msra.mxu0 %v4742
        %5506 = vmatpush.msra.mxu0 %v4736
        %5507 = vmatpush.msra.mxu0 %v4730
        %5508 = vmatpush.msra.mxu0 %v4724
        %5509 = vmatpush.msra.mxu0 %v4718
        %5510 = vmatpush.msra.mxu0 %v4712
        %5511 = vmatpush.msra.mxu0 %v4706
        %5512 = vmatpush.msra.mxu0 %v4700
        %5513 = vmatpush.msra.mxu0 %v4694
        %5514 = vmatpush.msra.mxu0 %v4688
        %5515 = vmatpush.msra.mxu0 %v4682
        %5516 = vmatpush.msra.mxu0 %v4676
        %5517 = vmatpush.msra.mxu0 %v4670
        %5518 = vmatpush.msra.mxu0 %v4664
        %5519 = vmatpush.msra.mxu0 %v4658
        %5520 = vmatmul.f32.gmra.mxu0 %v562
        %v5521 = vpop.f32.mrf.mxu0
        %v5522 = vadd.f32 %v5499, %v5521
        %5523 = vmatmul.f32.gmra.mxu0 %v568
        %v5524 = vpop.f32.mrf.mxu0
        %v5525 = vadd.f32 %v5502, %v5524
        %5526 = vdwg.mxu0
        %5527 = vmatpush.msra.mxu0 %v4844
        %5528 = vmatpush.msra.mxu0 %v4838
        %5529 = vmatpush.msra.mxu0 %v4832
        %5530 = vmatpush.msra.mxu0 %v4826
        %5531 = vmatpush.msra.mxu0 %v4820
        %5532 = vmatpush.msra.mxu0 %v4814
        %5533 = vmatpush.msra.mxu0 %v4808
        %5534 = vmatpush.msra.mxu0 %v4802
        %5535 = vmatpush.msra.mxu0 %v4796
        %5536 = vmatpush.msra.mxu0 %v4790
        %5537 = vmatpush.msra.mxu0 %v4784
        %5538 = vmatpush.msra.mxu0 %v4778
        %5539 = vmatpush.msra.mxu0 %v4772
        %5540 = vmatpush.msra.mxu0 %v4766
        %5541 = vmatpush.msra.mxu0 %v4760
        %5542 = vmatpush.msra.mxu0 %v4754
        %5543 = vmatmul.f32.gmra.mxu0 %v563
        %v5544 = vpop.f32.mrf.mxu0
        %v5545 = vadd.f32 %v5522, %v5544
        %5546 = vmatmul.f32.gmra.mxu0 %v569
        %v5547 = vpop.f32.mrf.mxu0
        %v5548 = vadd.f32 %v5525, %v5547
        %5549 = vdwg.mxu0
        %5550 = vmatpush.msra.mxu0 %v4365
        %5551 = vmatpush.msra.mxu0 %v4359
        %5552 = vmatpush.msra.mxu0 %v4353
        %5553 = vmatpush.msra.mxu0 %v4347
        %5554 = vmatpush.msra.mxu0 %v4341
        %5555 = vmatpush.msra.mxu0 %v4335
        %5556 = vmatpush.msra.mxu0 %v4329
        %5557 = vmatpush.msra.mxu0 %v4323
        %5558 = vmatpush.msra.mxu0 %v4317
        %5559 = vmatpush.msra.mxu0 %v4311
        %5560 = vmatpush.msra.mxu0 %v4305
        %5561 = vmatpush.msra.mxu0 %v4299
        %5562 = vmatpush.msra.mxu0 %v4293
        %5563 = vmatpush.msra.mxu0 %v4287
        %5564 = vmatpush.msra.mxu0 %v4281
        %5565 = vmatpush.msra.mxu0 %v4275
        %5566 = vmatmul.f32.gmra.mxu0 %v558
        %v5567 = vpop.f32.mrf.mxu0
        %v5568 = vadd.f32 %v4853, %v5567
        %5569 = vmatmul.f32.gmra.mxu0 %v564
        %v5570 = vpop.f32.mrf.mxu0
        %v5571 = vadd.f32 %v4853, %v5570
        %5572 = vdwg.mxu0
        %5573 = vmatpush.msra.mxu0 %v4461
        %5574 = vmatpush.msra.mxu0 %v4455
        %5575 = vmatpush.msra.mxu0 %v4449
        %5576 = vmatpush.msra.mxu0 %v4443
        %5577 = vmatpush.msra.mxu0 %v4437
        %5578 = vmatpush.msra.mxu0 %v4431
        %5579 = vmatpush.msra.mxu0 %v4425
        %5580 = vmatpush.msra.mxu0 %v4419
        %5581 = vmatpush.msra.mxu0 %v4413
        %5582 = vmatpush.msra.mxu0 %v4407
        %5583 = vmatpush.msra.mxu0 %v4401
        %5584 = vmatpush.msra.mxu0 %v4395
        %5585 = vmatpush.msra.mxu0 %v4389
        %5586 = vmatpush.msra.mxu0 %v4383
        %5587 = vmatpush.msra.mxu0 %v4377
        %5588 = vmatpush.msra.mxu0 %v4371
        %5589 = vmatmul.f32.gmra.mxu0 %v559
        %v5590 = vpop.f32.mrf.mxu0
        %v5591 = vadd.f32 %v5568, %v5590
        %5592 = vmatmul.f32.gmra.mxu0 %v565
        %v5593 = vpop.f32.mrf.mxu0
        %v5594 = vadd.f32 %v5571, %v5593
        %5595 = vdwg.mxu0
        %5596 = vmatpush.msra.mxu0 %v4557
        %5597 = vmatpush.msra.mxu0 %v4551
        %5598 = vmatpush.msra.mxu0 %v4545
        %5599 = vmatpush.msra.mxu0 %v4539
        %5600 = vmatpush.msra.mxu0 %v4533
        %5601 = vmatpush.msra.mxu0 %v4527
        %5602 = vmatpush.msra.mxu0 %v4521
        %5603 = vmatpush.msra.mxu0 %v4515
        %5604 = vmatpush.msra.mxu0 %v4509
        %5605 = vmatpush.msra.mxu0 %v4503
        %5606 = vmatpush.msra.mxu0 %v4497
        %5607 = vmatpush.msra.mxu0 %v4491
        %5608 = vmatpush.msra.mxu0 %v4485
        %5609 = vmatpush.msra.mxu0 %v4479
        %5610 = vmatpush.msra.mxu0 %v4473
        %5611 = vmatpush.msra.mxu0 %v4467
        %5612 = vmatmul.f32.gmra.mxu0 %v560
        %v5613 = vpop.f32.mrf.mxu0
        %v5614 = vadd.f32 %v5591, %v5613
        %5615 = vmatmul.f32.gmra.mxu0 %v566
        %v5616 = vpop.f32.mrf.mxu0
        %v5617 = vadd.f32 %v5594, %v5616
        %5618 = vdwg.mxu0
        %5619 = vmatpush.msra.mxu0 %v4653
        %5620 = vmatpush.msra.mxu0 %v4647
        %5621 = vmatpush.msra.mxu0 %v4641
        %5622 = vmatpush.msra.mxu0 %v4635
        %5623 = vmatpush.msra.mxu0 %v4629
        %5624 = vmatpush.msra.mxu0 %v4623
        %5625 = vmatpush.msra.mxu0 %v4617
        %5626 = vmatpush.msra.mxu0 %v4611
        %5627 = vmatpush.msra.mxu0 %v4605
        %5628 = vmatpush.msra.mxu0 %v4599
        %5629 = vmatpush.msra.mxu0 %v4593
        %5630 = vmatpush.msra.mxu0 %v4587
        %5631 = vmatpush.msra.mxu0 %v4581
        %5632 = vmatpush.msra.mxu0 %v4575
        %5633 = vmatpush.msra.mxu0 %v4569
        %5634 = vmatpush.msra.mxu0 %v4563
        %5635 = vmatmul.f32.gmra.mxu0 %v561
        %v5636 = vpop.f32.mrf.mxu0
        %v5637 = vadd.f32 %v5614, %v5636
        %5638 = vmatmul.f32.gmra.mxu0 %v567
        %v5639 = vpop.f32.mrf.mxu0
        %v5640 = vadd.f32 %v5617, %v5639
        %5641 = vdwg.mxu0
        %5642 = vmatpush.msra.mxu0 %v4749
        %5643 = vmatpush.msra.mxu0 %v4743
        %5644 = vmatpush.msra.mxu0 %v4737
        %5645 = vmatpush.msra.mxu0 %v4731
        %5646 = vmatpush.msra.mxu0 %v4725
        %5647 = vmatpush.msra.mxu0 %v4719
        %5648 = vmatpush.msra.mxu0 %v4713
        %5649 = vmatpush.msra.mxu0 %v4707
        %5650 = vmatpush.msra.mxu0 %v4701
        %5651 = vmatpush.msra.mxu0 %v4695
        %5652 = vmatpush.msra.mxu0 %v4689
        %5653 = vmatpush.msra.mxu0 %v4683
        %5654 = vmatpush.msra.mxu0 %v4677
        %5655 = vmatpush.msra.mxu0 %v4671
        %5656 = vmatpush.msra.mxu0 %v4665
        %5657 = vmatpush.msra.mxu0 %v4659
        %5658 = vmatmul.f32.gmra.mxu0 %v562
        %v5659 = vpop.f32.mrf.mxu0
        %v5660 = vadd.f32 %v5637, %v5659
        %5661 = vmatmul.f32.gmra.mxu0 %v568
        %v5662 = vpop.f32.mrf.mxu0
        %v5663 = vadd.f32 %v5640, %v5662
        %5664 = vdwg.mxu0
        %5665 = vmatpush.msra.mxu0 %v4845
        %5666 = vmatpush.msra.mxu0 %v4839
        %5667 = vmatpush.msra.mxu0 %v4833
        %5668 = vmatpush.msra.mxu0 %v4827
        %5669 = vmatpush.msra.mxu0 %v4821
        %5670 = vmatpush.msra.mxu0 %v4815
        %5671 = vmatpush.msra.mxu0 %v4809
        %5672 = vmatpush.msra.mxu0 %v4803
        %5673 = vmatpush.msra.mxu0 %v4797
        %5674 = vmatpush.msra.mxu0 %v4791
        %5675 = vmatpush.msra.mxu0 %v4785
        %5676 = vmatpush.msra.mxu0 %v4779
        %5677 = vmatpush.msra.mxu0 %v4773
        %5678 = vmatpush.msra.mxu0 %v4767
        %5679 = vmatpush.msra.mxu0 %v4761
        %5680 = vmatpush.msra.mxu0 %v4755
        %5681 = vmatmul.f32.gmra.mxu0 %v563
        %v5682 = vpop.f32.mrf.mxu0
        %v5683 = vadd.f32 %v5660, %v5682
        %5684 = vmatmul.f32.gmra.mxu0 %v569
        %v5685 = vpop.f32.mrf.mxu0
        %v5686 = vadd.f32 %v5663, %v5685
        %5687 = vdwg.mxu0
        %vm5688 = vcmask 785408
        %v5690 = vsel %vm5688, %v1581, 0
        %v5693 = vsel %vm5688, %v1584, 0
        %v5696 = vsel %vm5688, %v3287, 0
        %v5699 = vsel %vm5688, %v3290, 0
        %5701 = vmatpush.xpose.msra.mxu0 0.0
        %5702 = vmatpush.xpose.msra.mxu0 0.0
        %5703 = vmatpush.xpose.msra.mxu0 0.0
        %5704 = vmatpush.xpose.msra.mxu0 0.0
        %5705 = vmatpush.xpose.msra.mxu0 0.0
        %5706 = vmatpush.xpose.msra.mxu0 0.0
        %5707 = vmatpush.xpose.msra.mxu0 0.0
        %5708 = vmatpush.xpose.msra.mxu0 0.0
        %5709 = vmatpush.xpose.msra.mxu0 0.0
        %5710 = vmatpush.xpose.msra.mxu0 0.0
        %5711 = vmatpush.xpose.msra.mxu0 0.0
        %5712 = vmatpush.xpose.msra.mxu0 0.0
        %5713 = vmatpush.xpose.msra.mxu0 0.0
        %5714 = vmatpush.xpose.msra.mxu0 0.0
        %5715 = vmatpush.xpose.msra.mxu0 %v5699
        %5716 = vmatpush.xpose.msra.mxu0 %v5696
        %5717 = vmatmul.f32.gmra.mxu0 %v5690
        %v5718 = vpop.f32.mrf.mxu0
        %v5719 = vadd.f32 0.0, %v5718
        %5720 = vmatmul.f32.gmra.mxu0 %v5693
        %v5721 = vpop.f32.mrf.mxu0
        %v5722 = vadd.f32 0.0, %v5721
        %5723 = vdwg.mxu0
        %v5724 = vmul.f32 %v5719, 0.10206208
        %v5725 = vmul.f32 %v5722, 0.10206208
        %vm5726 = vcmask 130048
        %v5727 = vsel %vm5726, %v5724, -inf
        %5728 = vmax.xlane.f32.xlu0 %v5727
        %v5729 = vpop.xlane.xlu0 %5728
        %v5730 = vsel %vm5726, %v5725, -inf
        %5731 = vmax.xlane.f32.xlu0 %v5730
        %v5732 = vpop.xlane.xlu0 %5731
        %v5733 = vsub.f32 %v5724, %v5729
        %v5734 = vsub.f32 %v5725, %v5732
        %v5735 = vmul.f32 %v5733, 1.442695
        %v5736 = vpow.pop %v5735
        %v5737 = vmul.f32 %v5734, 1.442695
        %v5738 = vpow.pop %v5737
        %v5739 = vsel %vm5726, %v5736, 0.0
        %5740 = vadd.xlane.f32.xlu0 %v5739
        %v5741 = vpop.xlane.xlu0 %5740
        %v5742 = vsel %vm5726, %v5738, 0.0
        %5743 = vadd.xlane.f32.xlu0 %v5742
        %v5744 = vpop.xlane.xlu0 %5743
        %v5745 = vrcp.pop %v5741
        %v5746 = vmul.f32 %v5741, %v5745
        %v5747 = vsub.f32 1.0, %v5746
        %v5748 = vmul.f32 %v5745, %v5747
        %v5749 = vadd.f32 %v5745, %v5748
        %vm5750 = vweird.f32 %v5741
        %vm5751 = vweird.f32 %v5745
        %vm5752 = vmor %vm5750, %vm5751
        %v5753 = vsel %vm5752, %v5745, %v5749
        %v5754 = vand.u32 2147483647, %v5741
        %vm5755 = vcmp.eq.f32.partialorder %v5754, 8.507059e+37
        %v5756 = vand.u32 %v5741, 2147483648
        %v5757 = vor.u32 1.1754944e-38, %v5756
        %v5758 = vsel %vm5755, %v5757, %v5753
        %v5759 = vmul.f32 %v5736, %v5758
        %v5760 = vrcp.pop %v5744
        %v5761 = vmul.f32 %v5744, %v5760
        %v5762 = vsub.f32 1.0, %v5761
        %v5763 = vmul.f32 %v5760, %v5762
        %v5764 = vadd.f32 %v5760, %v5763
        %vm5765 = vweird.f32 %v5744
        %vm5766 = vweird.f32 %v5760
        %vm5767 = vmor %vm5765, %vm5766
        %v5768 = vsel %vm5767, %v5760, %v5764
        %v5769 = vand.u32 2147483647, %v5744
        %vm5770 = vcmp.eq.f32.partialorder %v5769, 8.507059e+37
        %v5771 = vand.u32 %v5744, 2147483648
        %v5772 = vor.u32 1.1754944e-38, %v5771
        %v5773 = vsel %vm5770, %v5772, %v5768
        %v5774 = vmul.f32 %v5738, %v5773
        %v5776 = vsel %vm5726, %v5759, 0
        %v5779 = vsel %vm5726, %v5774, 0
        %5781 = vmatpush.msra.mxu0 0.0
        %5782 = vmatpush.msra.mxu0 0.0
        %5783 = vmatpush.msra.mxu0 0.0
        %5784 = vmatpush.msra.mxu0 0.0
        %5785 = vmatpush.msra.mxu0 0.0
        %5786 = vmatpush.msra.mxu0 0.0
        %5787 = vmatpush.msra.mxu0 0.0
        %5788 = vmatpush.msra.mxu0 0.0
        %5789 = vmatpush.msra.mxu0 0.0
        %5790 = vmatpush.msra.mxu0 0.0
        %5791 = vmatpush.msra.mxu0 0.0
        %5792 = vmatpush.msra.mxu0 0.0
        %5793 = vmatpush.msra.mxu0 0.0
        %5794 = vmatpush.msra.mxu0 0.0
        %5795 = vmatpush.msra.mxu0 %v4996
        %5796 = vmatpush.msra.mxu0 %v4993
        %5797 = vmatmul.f32.gmra.mxu0 %v5776
        %v5798 = vpop.f32.mrf.mxu0
        %v5799 = vadd.f32 0.0, %v5798
        %5800 = vmatmul.f32.gmra.mxu0 %v5779
        %v5801 = vpop.f32.mrf.mxu0
        %v5802 = vadd.f32 0.0, %v5801
        %5803 = vdwg.mxu0
        %v5804 = vld [vmem:[#allocation16] sm:$0xff]
        %v5805 = vld [vmem:[#allocation16 + $0x8] sm:$0xff]
        %v5806 = vld [vmem:[#allocation16 + $0x10] sm:$0xff]
        %v5807 = vld [vmem:[#allocation16 + $0x18] sm:$0xff]
        %v5808 = vld [vmem:[#allocation16 + $0x20] sm:$0xff]
        %v5809 = vld [vmem:[#allocation16 + $0x28] sm:$0xff]
        %v5810 = vld [vmem:[#allocation16 + $0x30] sm:$0xff]
        %v5811 = vld [vmem:[#allocation16 + $0x38] sm:$0xff]
        %v5812 = vld [vmem:[#allocation16 + $0x40] sm:$0xff]
        %v5813 = vld [vmem:[#allocation16 + $0x48] sm:$0xff]
        %v5814 = vld [vmem:[#allocation16 + $0x50] sm:$0xff]
        %v5815 = vld [vmem:[#allocation16 + $0x58] sm:$0xff]
        %v5816 = vld [vmem:[#allocation16 + $0x60] sm:$0xff]
        %v5817 = vld [vmem:[#allocation16 + $0x68] sm:$0xff]
        %v5818 = vld [vmem:[#allocation16 + $0x70] sm:$0xff]
        %v5819 = vld [vmem:[#allocation16 + $0x78] sm:$0xff]
        %v5820 = vld [vmem:[#allocation16 + $0x80] sm:$0xff]
        %v5821 = vld [vmem:[#allocation16 + $0x88] sm:$0xff]
        %v5822 = vld [vmem:[#allocation16 + $0x90] sm:$0xff]
        %v5823 = vld [vmem:[#allocation16 + $0x98] sm:$0xff]
        %v5824 = vld [vmem:[#allocation16 + $0xa0] sm:$0xff]
        %v5825 = vld [vmem:[#allocation16 + $0xa8] sm:$0xff]
        %v5826 = vld [vmem:[#allocation16 + $0xb0] sm:$0xff]
        %v5827 = vld [vmem:[#allocation16 + $0xb8] sm:$0xff]
        %v5828 = vld [vmem:[#allocation16 + $0xc0] sm:$0xff]
        %v5829 = vld [vmem:[#allocation16 + $0xc8] sm:$0xff]
        %v5830 = vld [vmem:[#allocation16 + $0xd0] sm:$0xff]
        %v5831 = vld [vmem:[#allocation16 + $0xd8] sm:$0xff]
        %v5832 = vld [vmem:[#allocation16 + $0xe0] sm:$0xff]
        %v5833 = vld [vmem:[#allocation16 + $0xe8] sm:$0xff]
        %v5834 = vld [vmem:[#allocation16 + $0xf0] sm:$0xff]
        %v5835 = vld [vmem:[#allocation16 + $0xf8] sm:$0xff]
        %v5836 = vld [vmem:[#allocation16 + $0x100] sm:$0xff]
        %v5837 = vld [vmem:[#allocation16 + $0x108] sm:$0xff]
        %v5838 = vld [vmem:[#allocation16 + $0x110] sm:$0xff]
        %v5839 = vld [vmem:[#allocation16 + $0x118] sm:$0xff]
        %v5840 = vunpack.c.l.bf16 %v5804
        %v5841 = vunpack.c.h.bf16 %v5804
        %v5842 = vunpack.c.l.bf16 %v5805
        %v5843 = vunpack.c.h.bf16 %v5805
        %v5844 = vunpack.c.l.bf16 %v5806
        %v5845 = vunpack.c.h.bf16 %v5806
        %v5846 = vunpack.c.l.bf16 %v5807
        %v5847 = vunpack.c.h.bf16 %v5807
        %v5848 = vunpack.c.l.bf16 %v5808
        %v5849 = vunpack.c.h.bf16 %v5808
        %v5850 = vunpack.c.l.bf16 %v5809
        %v5851 = vunpack.c.h.bf16 %v5809
        %v5852 = vunpack.c.l.bf16 %v5810
        %v5853 = vunpack.c.h.bf16 %v5810
        %v5854 = vunpack.c.l.bf16 %v5811
        %v5855 = vunpack.c.h.bf16 %v5811
        %v5856 = vunpack.c.l.bf16 %v5812
        %v5857 = vunpack.c.h.bf16 %v5812
        %v5858 = vunpack.c.l.bf16 %v5813
        %v5859 = vunpack.c.h.bf16 %v5813
        %v5860 = vunpack.c.l.bf16 %v5814
        %v5861 = vunpack.c.h.bf16 %v5814
        %v5862 = vunpack.c.l.bf16 %v5815
        %v5863 = vunpack.c.h.bf16 %v5815
        %v5864 = vunpack.c.l.bf16 %v5816
        %v5865 = vunpack.c.h.bf16 %v5816
        %v5866 = vunpack.c.l.bf16 %v5817
        %v5867 = vunpack.c.h.bf16 %v5817
        %v5868 = vunpack.c.l.bf16 %v5818
        %v5869 = vunpack.c.h.bf16 %v5818
        %v5870 = vunpack.c.l.bf16 %v5819
        %v5871 = vunpack.c.h.bf16 %v5819
        %v5872 = vunpack.c.l.bf16 %v5820
        %v5873 = vunpack.c.h.bf16 %v5820
        %v5874 = vunpack.c.l.bf16 %v5821
        %v5875 = vunpack.c.h.bf16 %v5821
        %v5876 = vunpack.c.l.bf16 %v5822
        %v5877 = vunpack.c.h.bf16 %v5822
        %v5878 = vunpack.c.l.bf16 %v5823
        %v5879 = vunpack.c.h.bf16 %v5823
        %v5880 = vunpack.c.l.bf16 %v5824
        %v5881 = vunpack.c.h.bf16 %v5824
        %v5882 = vunpack.c.l.bf16 %v5825
        %v5883 = vunpack.c.h.bf16 %v5825
        %v5884 = vunpack.c.l.bf16 %v5826
        %v5885 = vunpack.c.h.bf16 %v5826
        %v5886 = vunpack.c.l.bf16 %v5827
        %v5887 = vunpack.c.h.bf16 %v5827
        %v5888 = vunpack.c.l.bf16 %v5828
        %v5889 = vunpack.c.h.bf16 %v5828
        %v5890 = vunpack.c.l.bf16 %v5829
        %v5891 = vunpack.c.h.bf16 %v5829
        %v5892 = vunpack.c.l.bf16 %v5830
        %v5893 = vunpack.c.h.bf16 %v5830
        %v5894 = vunpack.c.l.bf16 %v5831
        %v5895 = vunpack.c.h.bf16 %v5831
        %v5896 = vunpack.c.l.bf16 %v5832
        %v5897 = vunpack.c.h.bf16 %v5832
        %v5898 = vunpack.c.l.bf16 %v5833
        %v5899 = vunpack.c.h.bf16 %v5833
        %v5900 = vunpack.c.l.bf16 %v5834
        %v5901 = vunpack.c.h.bf16 %v5834
        %v5902 = vunpack.c.l.bf16 %v5835
        %v5903 = vunpack.c.h.bf16 %v5835
        %v5904 = vunpack.c.l.bf16 %v5836
        %v5905 = vunpack.c.h.bf16 %v5836
        %v5906 = vunpack.c.l.bf16 %v5837
        %v5907 = vunpack.c.h.bf16 %v5837
        %v5908 = vunpack.c.l.bf16 %v5838
        %v5909 = vunpack.c.h.bf16 %v5838
        %v5910 = vunpack.c.l.bf16 %v5839
        %v5911 = vunpack.c.h.bf16 %v5839
        %5914 = vrot.lane.b32.xlu0 %v1581, 32
        %v5915 = vpop.permute.xlu0 %5914
        %5916 = vrot.lane.b32.xlu0 %v1719, 32
        %v5917 = vpop.permute.xlu0 %5916
        %5918 = vrot.lane.b32.xlu0 %v1584, 32
        %v5919 = vpop.permute.xlu0 %5918
        %5920 = vrot.lane.b32.xlu0 %v1722, 32
        %v5921 = vpop.permute.xlu0 %5920
        %vm5922 = vcmask 261120
        %v5923 = vsel %vm5922, %v5915, %v5917
        %v5924 = vsel %vm5922, %v5919, %v5921
        %5927 = vrot.lane.b32.xlu0 %v3287, 32
        %v5928 = vpop.permute.xlu0 %5927
        %5929 = vrot.lane.b32.xlu0 %v3425, 32
        %v5930 = vpop.permute.xlu0 %5929
        %5931 = vrot.lane.b32.xlu0 %v3290, 32
        %v5932 = vpop.permute.xlu0 %5931
        %5933 = vrot.lane.b32.xlu0 %v3428, 32
        %v5934 = vpop.permute.xlu0 %5933
        %v5935 = vsel %vm5922, %v5928, %v5930
        %v5936 = vsel %vm5922, %v5932, %v5934
        %v5937 = vsel %vm5688, %v5923, 0
        %v5939 = vsel %vm5688, %v5924, 0
        %v5941 = vsel %vm5688, %v5935, 0
        %v5943 = vsel %vm5688, %v5936, 0
        %5945 = vmatpush.xpose.msra.mxu0 0.0
        %5946 = vmatpush.xpose.msra.mxu0 0.0
        %5947 = vmatpush.xpose.msra.mxu0 0.0
        %5948 = vmatpush.xpose.msra.mxu0 0.0
        %5949 = vmatpush.xpose.msra.mxu0 0.0
        %5950 = vmatpush.xpose.msra.mxu0 0.0
        %5951 = vmatpush.xpose.msra.mxu0 0.0
        %5952 = vmatpush.xpose.msra.mxu0 0.0
        %5953 = vmatpush.xpose.msra.mxu0 0.0
        %5954 = vmatpush.xpose.msra.mxu0 0.0
        %5955 = vmatpush.xpose.msra.mxu0 0.0
        %5956 = vmatpush.xpose.msra.mxu0 0.0
        %5957 = vmatpush.xpose.msra.mxu0 0.0
        %5958 = vmatpush.xpose.msra.mxu0 0.0
        %5959 = vmatpush.xpose.msra.mxu0 %v5943
        %5960 = vmatpush.xpose.msra.mxu0 %v5941
        %5961 = vmatmul.f32.gmra.mxu0 %v5937
        %v5962 = vpop.f32.mrf.mxu0
        %v5963 = vadd.f32 0.0, %v5962
        %5964 = vmatmul.f32.gmra.mxu0 %v5939
        %v5965 = vpop.f32.mrf.mxu0
        %v5966 = vadd.f32 0.0, %v5965
        %5967 = vdwg.mxu0
        %v5968 = vmul.f32 %v5963, 0.10206208
        %v5969 = vmul.f32 %v5966, 0.10206208
        %v5970 = vsel %vm5726, %v5968, -inf
        %5971 = vmax.xlane.f32.xlu0 %v5970
        %v5972 = vpop.xlane.xlu0 %5971
        %v5973 = vsel %vm5726, %v5969, -inf
        %5974 = vmax.xlane.f32.xlu0 %v5973
        %v5975 = vpop.xlane.xlu0 %5974
        %v5976 = vsub.f32 %v5968, %v5972
        %v5977 = vsub.f32 %v5969, %v5975
        %v5978 = vmul.f32 %v5976, 1.442695
        %v5979 = vpow.pop %v5978
        %v5980 = vmul.f32 %v5977, 1.442695
        %v5981 = vpow.pop %v5980
        %v5982 = vsel %vm5726, %v5979, 0.0
        %5983 = vadd.xlane.f32.xlu0 %v5982
        %v5984 = vpop.xlane.xlu0 %5983
        %v5985 = vsel %vm5726, %v5981, 0.0
        %5986 = vadd.xlane.f32.xlu0 %v5985
        %v5987 = vpop.xlane.xlu0 %5986
        %v5988 = vrcp.pop %v5984
        %v5989 = vmul.f32 %v5984, %v5988
        %v5990 = vsub.f32 1.0, %v5989
        %v5991 = vmul.f32 %v5988, %v5990
        %v5992 = vadd.f32 %v5988, %v5991
        %vm5993 = vweird.f32 %v5984
        %vm5994 = vweird.f32 %v5988
        %vm5995 = vmor %vm5993, %vm5994
        %v5996 = vsel %vm5995, %v5988, %v5992
        %v5997 = vand.u32 2147483647, %v5984
        %vm5998 = vcmp.eq.f32.partialorder %v5997, 8.507059e+37
        %v5999 = vand.u32 %v5984, 2147483648
        %v6000 = vor.u32 1.1754944e-38, %v5999
        %v6001 = vsel %vm5998, %v6000, %v5996
        %v6002 = vmul.f32 %v5979, %v6001
        %v6003 = vrcp.pop %v5987
        %v6004 = vmul.f32 %v5987, %v6003
        %v6005 = vsub.f32 1.0, %v6004
        %v6006 = vmul.f32 %v6003, %v6005
        %v6007 = vadd.f32 %v6003, %v6006
        %vm6008 = vweird.f32 %v5987
        %vm6009 = vweird.f32 %v6003
        %vm6010 = vmor %vm6008, %vm6009
        %v6011 = vsel %vm6010, %v6003, %v6007
        %v6012 = vand.u32 2147483647, %v5987
        %vm6013 = vcmp.eq.f32.partialorder %v6012, 8.507059e+37
        %v6014 = vand.u32 %v5987, 2147483648
        %v6015 = vor.u32 1.1754944e-38, %v6014
        %v6016 = vsel %vm6013, %v6015, %v6011
        %v6017 = vmul.f32 %v5981, %v6016
        %6022 = vrot.lane.b32.xlu0 %v4993, 32
        %v6023 = vpop.permute.xlu0 %6022
        %6024 = vrot.lane.b32.xlu0 %v5131, 32
        %v6025 = vpop.permute.xlu0 %6024
        %6026 = vrot.lane.b32.xlu0 %v4996, 32
        %v6027 = vpop.permute.xlu0 %6026
        %6028 = vrot.lane.b32.xlu0 %v5134, 32
        %v6029 = vpop.permute.xlu0 %6028
        %v6030 = vsel %vm5922, %v6023, %v6025
        %v6031 = vsel %vm5922, %v6027, %v6029
        %v6035 = vsel %vm5726, %v6002, 0
        %v6038 = vsel %vm5726, %v6017, 0
        %6040 = vmatpush.msra.mxu0 0.0
        %6041 = vmatpush.msra.mxu0 0.0
        %6042 = vmatpush.msra.mxu0 0.0
        %6043 = vmatpush.msra.mxu0 0.0
        %6044 = vmatpush.msra.mxu0 0.0
        %6045 = vmatpush.msra.mxu0 0.0
        %6046 = vmatpush.msra.mxu0 0.0
        %6047 = vmatpush.msra.mxu0 0.0
        %6048 = vmatpush.msra.mxu0 0.0
        %6049 = vmatpush.msra.mxu0 0.0
        %6050 = vmatpush.msra.mxu0 0.0
        %6051 = vmatpush.msra.mxu0 0.0
        %6052 = vmatpush.msra.mxu0 0.0
        %6053 = vmatpush.msra.mxu0 0.0
        %6054 = vmatpush.msra.mxu0 %v6031
        %6055 = vmatpush.msra.mxu0 %v6030
        %6056 = vmatmul.f32.gmra.mxu0 %v6035
        %v6057 = vpop.f32.mrf.mxu0
        %v6058 = vadd.f32 0.0, %v6057
        %6059 = vmatmul.f32.gmra.mxu0 %v6038
        %v6060 = vpop.f32.mrf.mxu0
        %v6061 = vadd.f32 0.0, %v6060
        %6062 = vdwg.mxu0
        %v6063 = vld [vmem:[#allocation16 + $0x120] sm:$0xff]
        %v6064 = vld [vmem:[#allocation16 + $0x128] sm:$0xff]
        %v6065 = vld [vmem:[#allocation16 + $0x130] sm:$0xff]
        %v6066 = vld [vmem:[#allocation16 + $0x138] sm:$0xff]
        %v6067 = vld [vmem:[#allocation16 + $0x140] sm:$0xff]
        %v6068 = vld [vmem:[#allocation16 + $0x148] sm:$0xff]
        %v6069 = vld [vmem:[#allocation16 + $0x150] sm:$0xff]
        %v6070 = vld [vmem:[#allocation16 + $0x158] sm:$0xff]
        %v6071 = vld [vmem:[#allocation16 + $0x160] sm:$0xff]
        %v6072 = vld [vmem:[#allocation16 + $0x168] sm:$0xff]
        %v6073 = vld [vmem:[#allocation16 + $0x170] sm:$0xff]
        %v6074 = vld [vmem:[#allocation16 + $0x178] sm:$0xff]
        %v6075 = vld [vmem:[#allocation16 + $0x180] sm:$0xff]
        %v6076 = vld [vmem:[#allocation16 + $0x188] sm:$0xff]
        %v6077 = vld [vmem:[#allocation16 + $0x190] sm:$0xff]
        %v6078 = vld [vmem:[#allocation16 + $0x198] sm:$0xff]
        %v6079 = vld [vmem:[#allocation16 + $0x1a0] sm:$0xff]
        %v6080 = vld [vmem:[#allocation16 + $0x1a8] sm:$0xff]
        %v6081 = vld [vmem:[#allocation16 + $0x1b0] sm:$0xff]
        %v6082 = vld [vmem:[#allocation16 + $0x1b8] sm:$0xff]
        %v6083 = vld [vmem:[#allocation16 + $0x1c0] sm:$0xff]
        %v6084 = vld [vmem:[#allocation16 + $0x1c8] sm:$0xff]
        %v6085 = vld [vmem:[#allocation16 + $0x1d0] sm:$0xff]
        %v6086 = vld [vmem:[#allocation16 + $0x1d8] sm:$0xff]
        %v6087 = vld [vmem:[#allocation16 + $0x1e0] sm:$0xff]
        %v6088 = vld [vmem:[#allocation16 + $0x1e8] sm:$0xff]
        %v6089 = vld [vmem:[#allocation16 + $0x1f0] sm:$0xff]
        %v6090 = vld [vmem:[#allocation16 + $0x1f8] sm:$0xff]
        %v6091 = vld [vmem:[#allocation16 + $0x200] sm:$0xff]
        %v6092 = vld [vmem:[#allocation16 + $0x208] sm:$0xff]
        %v6093 = vld [vmem:[#allocation16 + $0x210] sm:$0xff]
        %v6094 = vld [vmem:[#allocation16 + $0x218] sm:$0xff]
        %v6095 = vld [vmem:[#allocation16 + $0x220] sm:$0xff]
        %v6096 = vld [vmem:[#allocation16 + $0x228] sm:$0xff]
        %v6097 = vld [vmem:[#allocation16 + $0x230] sm:$0xff]
        %v6098 = vld [vmem:[#allocation16 + $0x238] sm:$0xff]
        %v6099 = vunpack.c.l.bf16 %v6063
        %v6100 = vunpack.c.h.bf16 %v6063
        %v6101 = vunpack.c.l.bf16 %v6064
        %v6102 = vunpack.c.h.bf16 %v6064
        %v6103 = vunpack.c.l.bf16 %v6065
        %v6104 = vunpack.c.h.bf16 %v6065
        %v6105 = vunpack.c.l.bf16 %v6066
        %v6106 = vunpack.c.h.bf16 %v6066
        %v6107 = vunpack.c.l.bf16 %v6067
        %v6108 = vunpack.c.h.bf16 %v6067
        %v6109 = vunpack.c.l.bf16 %v6068
        %v6110 = vunpack.c.h.bf16 %v6068
        %v6111 = vunpack.c.l.bf16 %v6069
        %v6112 = vunpack.c.h.bf16 %v6069
        %v6113 = vunpack.c.l.bf16 %v6070
        %v6114 = vunpack.c.h.bf16 %v6070
        %v6115 = vunpack.c.l.bf16 %v6071
        %v6116 = vunpack.c.h.bf16 %v6071
        %v6117 = vunpack.c.l.bf16 %v6072
        %v6118 = vunpack.c.h.bf16 %v6072
        %v6119 = vunpack.c.l.bf16 %v6073
        %v6120 = vunpack.c.h.bf16 %v6073
        %v6121 = vunpack.c.l.bf16 %v6074
        %v6122 = vunpack.c.h.bf16 %v6074
        %v6123 = vunpack.c.l.bf16 %v6075
        %v6124 = vunpack.c.h.bf16 %v6075
        %v6125 = vunpack.c.l.bf16 %v6076
        %v6126 = vunpack.c.h.bf16 %v6076
        %v6127 = vunpack.c.l.bf16 %v6077
        %v6128 = vunpack.c.h.bf16 %v6077
        %v6129 = vunpack.c.l.bf16 %v6078
        %v6130 = vunpack.c.h.bf16 %v6078
        %v6131 = vunpack.c.l.bf16 %v6079
        %v6132 = vunpack.c.h.bf16 %v6079
        %v6133 = vunpack.c.l.bf16 %v6080
        %v6134 = vunpack.c.h.bf16 %v6080
        %v6135 = vunpack.c.l.bf16 %v6081
        %v6136 = vunpack.c.h.bf16 %v6081
        %v6137 = vunpack.c.l.bf16 %v6082
        %v6138 = vunpack.c.h.bf16 %v6082
        %v6139 = vunpack.c.l.bf16 %v6083
        %v6140 = vunpack.c.h.bf16 %v6083
        %v6141 = vunpack.c.l.bf16 %v6084
        %v6142 = vunpack.c.h.bf16 %v6084
        %v6143 = vunpack.c.l.bf16 %v6085
        %v6144 = vunpack.c.h.bf16 %v6085
        %v6145 = vunpack.c.l.bf16 %v6086
        %v6146 = vunpack.c.h.bf16 %v6086
        %v6147 = vunpack.c.l.bf16 %v6087
        %v6148 = vunpack.c.h.bf16 %v6087
        %v6149 = vunpack.c.l.bf16 %v6088
        %v6150 = vunpack.c.h.bf16 %v6088
        %v6151 = vunpack.c.l.bf16 %v6089
        %v6152 = vunpack.c.h.bf16 %v6089
        %v6153 = vunpack.c.l.bf16 %v6090
        %v6154 = vunpack.c.h.bf16 %v6090
        %v6155 = vunpack.c.l.bf16 %v6091
        %v6156 = vunpack.c.h.bf16 %v6091
        %v6157 = vunpack.c.l.bf16 %v6092
        %v6158 = vunpack.c.h.bf16 %v6092
        %v6159 = vunpack.c.l.bf16 %v6093
        %v6160 = vunpack.c.h.bf16 %v6093
        %v6161 = vunpack.c.l.bf16 %v6094
        %v6162 = vunpack.c.h.bf16 %v6094
        %v6163 = vunpack.c.l.bf16 %v6095
        %v6164 = vunpack.c.h.bf16 %v6095
        %v6165 = vunpack.c.l.bf16 %v6096
        %v6166 = vunpack.c.h.bf16 %v6096
        %v6167 = vunpack.c.l.bf16 %v6097
        %v6168 = vunpack.c.h.bf16 %v6097
        %v6169 = vunpack.c.l.bf16 %v6098
        %v6170 = vunpack.c.h.bf16 %v6098
        %v6172 = vsel %vm5688, %v6058, 0
        %v6175 = vsel %vm5688, %v6061, 0
        %6177 = vmatpush.msra.mxu0 0.0
        %6178 = vmatpush.msra.mxu0 0.0
        %6179 = vmatpush.msra.mxu0 0.0
        %6180 = vmatpush.msra.mxu0 0.0
        %6181 = vmatpush.msra.mxu0 %v6165
        %6182 = vmatpush.msra.mxu0 %v6159
        %6183 = vmatpush.msra.mxu0 %v6153
        %6184 = vmatpush.msra.mxu0 %v6147
        %6185 = vmatpush.msra.mxu0 %v6141
        %6186 = vmatpush.msra.mxu0 %v6135
        %6187 = vmatpush.msra.mxu0 %v6129
        %6188 = vmatpush.msra.mxu0 %v6123
        %6189 = vmatpush.msra.mxu0 %v6117
        %6190 = vmatpush.msra.mxu0 %v6111
        %6191 = vmatpush.msra.mxu0 %v6105
        %6192 = vmatpush.msra.mxu0 %v6099
        %6193 = vmatmul.f32.gmra.mxu0 %v6172
        %v6194 = vpop.f32.mrf.mxu0
        %v6195 = vadd.f32 0.0, %v6194
        %6196 = vmatmul.f32.gmra.mxu0 %v6175
        %v6197 = vpop.f32.mrf.mxu0
        %v6198 = vadd.f32 0.0, %v6197
        %6199 = vdwg.mxu0
        %6200 = vmatpush.msra.mxu0 0.0
        %6201 = vmatpush.msra.mxu0 0.0
        %6202 = vmatpush.msra.mxu0 0.0
        %6203 = vmatpush.msra.mxu0 0.0
        %6204 = vmatpush.msra.mxu0 %v6166
        %6205 = vmatpush.msra.mxu0 %v6160
        %6206 = vmatpush.msra.mxu0 %v6154
        %6207 = vmatpush.msra.mxu0 %v6148
        %6208 = vmatpush.msra.mxu0 %v6142
        %6209 = vmatpush.msra.mxu0 %v6136
        %6210 = vmatpush.msra.mxu0 %v6130
        %6211 = vmatpush.msra.mxu0 %v6124
        %6212 = vmatpush.msra.mxu0 %v6118
        %6213 = vmatpush.msra.mxu0 %v6112
        %6214 = vmatpush.msra.mxu0 %v6106
        %6215 = vmatpush.msra.mxu0 %v6100
        %6216 = vmatmul.f32.gmra.mxu0 %v6172
        %v6217 = vpop.f32.mrf.mxu0
        %v6218 = vadd.f32 0.0, %v6217
        %6219 = vmatmul.f32.gmra.mxu0 %v6175
        %v6220 = vpop.f32.mrf.mxu0
        %v6221 = vadd.f32 0.0, %v6220
        %6222 = vdwg.mxu0
        %6223 = vmatpush.msra.mxu0 0.0
        %6224 = vmatpush.msra.mxu0 0.0
        %6225 = vmatpush.msra.mxu0 0.0
        %6226 = vmatpush.msra.mxu0 0.0
        %6227 = vmatpush.msra.mxu0 %v6167
        %6228 = vmatpush.msra.mxu0 %v6161
        %6229 = vmatpush.msra.mxu0 %v6155
        %6230 = vmatpush.msra.mxu0 %v6149
        %6231 = vmatpush.msra.mxu0 %v6143
        %6232 = vmatpush.msra.mxu0 %v6137
        %6233 = vmatpush.msra.mxu0 %v6131
        %6234 = vmatpush.msra.mxu0 %v6125
        %6235 = vmatpush.msra.mxu0 %v6119
        %6236 = vmatpush.msra.mxu0 %v6113
        %6237 = vmatpush.msra.mxu0 %v6107
        %6238 = vmatpush.msra.mxu0 %v6101
        %6239 = vmatmul.f32.gmra.mxu0 %v6172
        %v6240 = vpop.f32.mrf.mxu0
        %v6241 = vadd.f32 0.0, %v6240
        %6242 = vmatmul.f32.gmra.mxu0 %v6175
        %v6243 = vpop.f32.mrf.mxu0
        %v6244 = vadd.f32 0.0, %v6243
        %6245 = vdwg.mxu0
        %6246 = vmatpush.msra.mxu0 0.0
        %6247 = vmatpush.msra.mxu0 0.0
        %6248 = vmatpush.msra.mxu0 0.0
        %6249 = vmatpush.msra.mxu0 0.0
        %6250 = vmatpush.msra.mxu0 %v6168
        %6251 = vmatpush.msra.mxu0 %v6162
        %6252 = vmatpush.msra.mxu0 %v6156
        %6253 = vmatpush.msra.mxu0 %v6150
        %6254 = vmatpush.msra.mxu0 %v6144
        %6255 = vmatpush.msra.mxu0 %v6138
        %6256 = vmatpush.msra.mxu0 %v6132
        %6257 = vmatpush.msra.mxu0 %v6126
        %6258 = vmatpush.msra.mxu0 %v6120
        %6259 = vmatpush.msra.mxu0 %v6114
        %6260 = vmatpush.msra.mxu0 %v6108
        %6261 = vmatpush.msra.mxu0 %v6102
        %6262 = vmatmul.f32.gmra.mxu0 %v6172
        %v6263 = vpop.f32.mrf.mxu0
        %v6264 = vadd.f32 0.0, %v6263
        %6265 = vmatmul.f32.gmra.mxu0 %v6175
        %v6266 = vpop.f32.mrf.mxu0
        %v6267 = vadd.f32 0.0, %v6266
        %6268 = vdwg.mxu0
        %6269 = vmatpush.msra.mxu0 0.0
        %6270 = vmatpush.msra.mxu0 0.0
        %6271 = vmatpush.msra.mxu0 0.0
        %6272 = vmatpush.msra.mxu0 0.0
        %6273 = vmatpush.msra.mxu0 %v6169
        %6274 = vmatpush.msra.mxu0 %v6163
        %6275 = vmatpush.msra.mxu0 %v6157
        %6276 = vmatpush.msra.mxu0 %v6151
        %6277 = vmatpush.msra.mxu0 %v6145
        %6278 = vmatpush.msra.mxu0 %v6139
        %6279 = vmatpush.msra.mxu0 %v6133
        %6280 = vmatpush.msra.mxu0 %v6127
        %6281 = vmatpush.msra.mxu0 %v6121
        %6282 = vmatpush.msra.mxu0 %v6115
        %6283 = vmatpush.msra.mxu0 %v6109
        %6284 = vmatpush.msra.mxu0 %v6103
        %6285 = vmatmul.f32.gmra.mxu0 %v6172
        %v6286 = vpop.f32.mrf.mxu0
        %v6287 = vadd.f32 0.0, %v6286
        %6288 = vmatmul.f32.gmra.mxu0 %v6175
        %v6289 = vpop.f32.mrf.mxu0
        %v6290 = vadd.f32 0.0, %v6289
        %6291 = vdwg.mxu0
        %6292 = vmatpush.msra.mxu0 0.0
        %6293 = vmatpush.msra.mxu0 0.0
        %6294 = vmatpush.msra.mxu0 0.0
        %6295 = vmatpush.msra.mxu0 0.0
        %6296 = vmatpush.msra.mxu0 %v6170
        %6297 = vmatpush.msra.mxu0 %v6164
        %6298 = vmatpush.msra.mxu0 %v6158
        %6299 = vmatpush.msra.mxu0 %v6152
        %6300 = vmatpush.msra.mxu0 %v6146
        %6301 = vmatpush.msra.mxu0 %v6140
        %6302 = vmatpush.msra.mxu0 %v6134
        %6303 = vmatpush.msra.mxu0 %v6128
        %6304 = vmatpush.msra.mxu0 %v6122
        %6305 = vmatpush.msra.mxu0 %v6116
        %6306 = vmatpush.msra.mxu0 %v6110
        %6307 = vmatpush.msra.mxu0 %v6104
        %6308 = vmatmul.f32.gmra.mxu0 %v6172
        %v6309 = vpop.f32.mrf.mxu0
        %v6310 = vadd.f32 0.0, %v6309
        %6311 = vmatmul.f32.gmra.mxu0 %v6175
        %v6312 = vpop.f32.mrf.mxu0
        %v6313 = vadd.f32 0.0, %v6312
        %6314 = vdwg.mxu0
        %v6316 = vsel %vm5688, %v5799, 0
        %v6319 = vsel %vm5688, %v5802, 0
        %6321 = vmatpush.msra.mxu0 0.0
        %6322 = vmatpush.msra.mxu0 0.0
        %6323 = vmatpush.msra.mxu0 0.0
        %6324 = vmatpush.msra.mxu0 0.0
        %6325 = vmatpush.msra.mxu0 %v5906
        %6326 = vmatpush.msra.mxu0 %v5900
        %6327 = vmatpush.msra.mxu0 %v5894
        %6328 = vmatpush.msra.mxu0 %v5888
        %6329 = vmatpush.msra.mxu0 %v5882
        %6330 = vmatpush.msra.mxu0 %v5876
        %6331 = vmatpush.msra.mxu0 %v5870
        %6332 = vmatpush.msra.mxu0 %v5864
        %6333 = vmatpush.msra.mxu0 %v5858
        %6334 = vmatpush.msra.mxu0 %v5852
        %6335 = vmatpush.msra.mxu0 %v5846
        %6336 = vmatpush.msra.mxu0 %v5840
        %6337 = vmatmul.f32.gmra.mxu0 %v6316
        %v6338 = vpop.f32.mrf.mxu0
        %v6339 = vadd.f32 %v6195, %v6338
        %6340 = vmatmul.f32.gmra.mxu0 %v6319
        %v6341 = vpop.f32.mrf.mxu0
        %v6342 = vadd.f32 %v6198, %v6341
        %6343 = vdwg.mxu0
        %6344 = vmatpush.msra.mxu0 0.0
        %6345 = vmatpush.msra.mxu0 0.0
        %6346 = vmatpush.msra.mxu0 0.0
        %6347 = vmatpush.msra.mxu0 0.0
        %6348 = vmatpush.msra.mxu0 %v5907
        %6349 = vmatpush.msra.mxu0 %v5901
        %6350 = vmatpush.msra.mxu0 %v5895
        %6351 = vmatpush.msra.mxu0 %v5889
        %6352 = vmatpush.msra.mxu0 %v5883
        %6353 = vmatpush.msra.mxu0 %v5877
        %6354 = vmatpush.msra.mxu0 %v5871
        %6355 = vmatpush.msra.mxu0 %v5865
        %6356 = vmatpush.msra.mxu0 %v5859
        %6357 = vmatpush.msra.mxu0 %v5853
        %6358 = vmatpush.msra.mxu0 %v5847
        %6359 = vmatpush.msra.mxu0 %v5841
        %6360 = vmatmul.f32.gmra.mxu0 %v6316
        %v6361 = vpop.f32.mrf.mxu0
        %v6362 = vadd.f32 %v6218, %v6361
        %6363 = vmatmul.f32.gmra.mxu0 %v6319
        %v6364 = vpop.f32.mrf.mxu0
        %v6365 = vadd.f32 %v6221, %v6364
        %6366 = vdwg.mxu0
        %6367 = vmatpush.msra.mxu0 0.0
        %6368 = vmatpush.msra.mxu0 0.0
        %6369 = vmatpush.msra.mxu0 0.0
        %6370 = vmatpush.msra.mxu0 0.0
        %6371 = vmatpush.msra.mxu0 %v5908
        %6372 = vmatpush.msra.mxu0 %v5902
        %6373 = vmatpush.msra.mxu0 %v5896
        %6374 = vmatpush.msra.mxu0 %v5890
        %6375 = vmatpush.msra.mxu0 %v5884
        %6376 = vmatpush.msra.mxu0 %v5878
        %6377 = vmatpush.msra.mxu0 %v5872
        %6378 = vmatpush.msra.mxu0 %v5866
        %6379 = vmatpush.msra.mxu0 %v5860
        %6380 = vmatpush.msra.mxu0 %v5854
        %6381 = vmatpush.msra.mxu0 %v5848
        %6382 = vmatpush.msra.mxu0 %v5842
        %6383 = vmatmul.f32.gmra.mxu0 %v6316
        %v6384 = vpop.f32.mrf.mxu0
        %v6385 = vadd.f32 %v6241, %v6384
        %6386 = vmatmul.f32.gmra.mxu0 %v6319
        %v6387 = vpop.f32.mrf.mxu0
        %v6388 = vadd.f32 %v6244, %v6387
        %6389 = vdwg.mxu0
        %6390 = vmatpush.msra.mxu0 0.0
        %6391 = vmatpush.msra.mxu0 0.0
        %6392 = vmatpush.msra.mxu0 0.0
        %6393 = vmatpush.msra.mxu0 0.0
        %6394 = vmatpush.msra.mxu0 %v5909
        %6395 = vmatpush.msra.mxu0 %v5903
        %6396 = vmatpush.msra.mxu0 %v5897
        %6397 = vmatpush.msra.mxu0 %v5891
        %6398 = vmatpush.msra.mxu0 %v5885
        %6399 = vmatpush.msra.mxu0 %v5879
        %6400 = vmatpush.msra.mxu0 %v5873
        %6401 = vmatpush.msra.mxu0 %v5867
        %6402 = vmatpush.msra.mxu0 %v5861
        %6403 = vmatpush.msra.mxu0 %v5855
        %6404 = vmatpush.msra.mxu0 %v5849
        %6405 = vmatpush.msra.mxu0 %v5843
        %6406 = vmatmul.f32.gmra.mxu0 %v6316
        %v6407 = vpop.f32.mrf.mxu0
        %v6408 = vadd.f32 %v6264, %v6407
        %6409 = vmatmul.f32.gmra.mxu0 %v6319
        %v6410 = vpop.f32.mrf.mxu0
        %v6411 = vadd.f32 %v6267, %v6410
        %6412 = vdwg.mxu0
        %6413 = vmatpush.msra.mxu0 0.0
        %6414 = vmatpush.msra.mxu0 0.0
        %6415 = vmatpush.msra.mxu0 0.0
        %6416 = vmatpush.msra.mxu0 0.0
        %6417 = vmatpush.msra.mxu0 %v5910
        %6418 = vmatpush.msra.mxu0 %v5904
        %6419 = vmatpush.msra.mxu0 %v5898
        %6420 = vmatpush.msra.mxu0 %v5892
        %6421 = vmatpush.msra.mxu0 %v5886
        %6422 = vmatpush.msra.mxu0 %v5880
        %6423 = vmatpush.msra.mxu0 %v5874
        %6424 = vmatpush.msra.mxu0 %v5868
        %6425 = vmatpush.msra.mxu0 %v5862
        %6426 = vmatpush.msra.mxu0 %v5856
        %6427 = vmatpush.msra.mxu0 %v5850
        %6428 = vmatpush.msra.mxu0 %v5844
        %6429 = vmatmul.f32.gmra.mxu0 %v6316
        %v6430 = vpop.f32.mrf.mxu0
        %v6431 = vadd.f32 %v6287, %v6430
        %6432 = vmatmul.f32.gmra.mxu0 %v6319
        %v6433 = vpop.f32.mrf.mxu0
        %v6434 = vadd.f32 %v6290, %v6433
        %6435 = vdwg.mxu0
        %6436 = vmatpush.msra.mxu0 0.0
        %6437 = vmatpush.msra.mxu0 0.0
        %6438 = vmatpush.msra.mxu0 0.0
        %6439 = vmatpush.msra.mxu0 0.0
        %6440 = vmatpush.msra.mxu0 %v5911
        %6441 = vmatpush.msra.mxu0 %v5905
        %6442 = vmatpush.msra.mxu0 %v5899
        %6443 = vmatpush.msra.mxu0 %v5893
        %6444 = vmatpush.msra.mxu0 %v5887
        %6445 = vmatpush.msra.mxu0 %v5881
        %6446 = vmatpush.msra.mxu0 %v5875
        %6447 = vmatpush.msra.mxu0 %v5869
        %6448 = vmatpush.msra.mxu0 %v5863
        %6449 = vmatpush.msra.mxu0 %v5857
        %6450 = vmatpush.msra.mxu0 %v5851
        %6451 = vmatpush.msra.mxu0 %v5845
        %6452 = vmatmul.f32.gmra.mxu0 %v6316
        %v6453 = vpop.f32.mrf.mxu0
        %v6454 = vadd.f32 %v6310, %v6453
        %6455 = vmatmul.f32.gmra.mxu0 %v6319
        %v6456 = vpop.f32.mrf.mxu0
        %v6457 = vadd.f32 %v6313, %v6456
        %6458 = vdwg.mxu0
        %6461 = vrot.lane.b32.xlu0 %v1719, 64
        %v6462 = vpop.permute.xlu0 %6461
        %6463 = vrot.lane.b32.xlu0 %v1857, 64
        %v6464 = vpop.permute.xlu0 %6463
        %6465 = vrot.lane.b32.xlu0 %v1722, 64
        %v6466 = vpop.permute.xlu0 %6465
        %6467 = vrot.lane.b32.xlu0 %v1860, 64
        %v6468 = vpop.permute.xlu0 %6467
        %vm6469 = vcmask 523264
        %v6470 = vsel %vm6469, %v6462, %v6464
        %v6471 = vsel %vm6469, %v6466, %v6468
        %6474 = vrot.lane.b32.xlu0 %v3425, 64
        %v6475 = vpop.permute.xlu0 %6474
        %6476 = vrot.lane.b32.xlu0 %v3563, 64
        %v6477 = vpop.permute.xlu0 %6476
        %6478 = vrot.lane.b32.xlu0 %v3428, 64
        %v6479 = vpop.permute.xlu0 %6478
        %6480 = vrot.lane.b32.xlu0 %v3566, 64
        %v6481 = vpop.permute.xlu0 %6480
        %v6482 = vsel %vm6469, %v6475, %v6477
        %v6483 = vsel %vm6469, %v6479, %v6481
        %v6484 = vsel %vm5688, %v6470, 0
        %v6486 = vsel %vm5688, %v6471, 0
        %v6488 = vsel %vm5688, %v6482, 0
        %v6490 = vsel %vm5688, %v6483, 0
        %6492 = vmatpush.xpose.msra.mxu0 0.0
        %6493 = vmatpush.xpose.msra.mxu0 0.0
        %6494 = vmatpush.xpose.msra.mxu0 0.0
        %6495 = vmatpush.xpose.msra.mxu0 0.0
        %6496 = vmatpush.xpose.msra.mxu0 0.0
        %6497 = vmatpush.xpose.msra.mxu0 0.0
        %6498 = vmatpush.xpose.msra.mxu0 0.0
        %6499 = vmatpush.xpose.msra.mxu0 0.0
        %6500 = vmatpush.xpose.msra.mxu0 0.0
        %6501 = vmatpush.xpose.msra.mxu0 0.0
        %6502 = vmatpush.xpose.msra.mxu0 0.0
        %6503 = vmatpush.xpose.msra.mxu0 0.0
        %6504 = vmatpush.xpose.msra.mxu0 0.0
        %6505 = vmatpush.xpose.msra.mxu0 0.0
        %6506 = vmatpush.xpose.msra.mxu0 %v6490
        %6507 = vmatpush.xpose.msra.mxu0 %v6488
        %6508 = vmatmul.f32.gmra.mxu0 %v6484
        %v6509 = vpop.f32.mrf.mxu0
        %v6510 = vadd.f32 0.0, %v6509
        %6511 = vmatmul.f32.gmra.mxu0 %v6486
        %v6512 = vpop.f32.mrf.mxu0
        %v6513 = vadd.f32 0.0, %v6512
        %6514 = vdwg.mxu0
        %v6515 = vmul.f32 %v6510, 0.10206208
        %v6516 = vmul.f32 %v6513, 0.10206208
        %v6517 = vsel %vm5726, %v6515, -inf
        %6518 = vmax.xlane.f32.xlu0 %v6517
        %v6519 = vpop.xlane.xlu0 %6518
        %v6520 = vsel %vm5726, %v6516, -inf
        %6521 = vmax.xlane.f32.xlu0 %v6520
        %v6522 = vpop.xlane.xlu0 %6521
        %v6523 = vsub.f32 %v6515, %v6519
        %v6524 = vsub.f32 %v6516, %v6522
        %v6525 = vmul.f32 %v6523, 1.442695
        %v6526 = vpow.pop %v6525
        %v6527 = vmul.f32 %v6524, 1.442695
        %v6528 = vpow.pop %v6527
        %v6529 = vsel %vm5726, %v6526, 0.0
        %6530 = vadd.xlane.f32.xlu0 %v6529
        %v6531 = vpop.xlane.xlu0 %6530
        %v6532 = vsel %vm5726, %v6528, 0.0
        %6533 = vadd.xlane.f32.xlu0 %v6532
        %v6534 = vpop.xlane.xlu0 %6533
        %v6535 = vrcp.pop %v6531
        %v6536 = vmul.f32 %v6531, %v6535
        %v6537 = vsub.f32 1.0, %v6536
        %v6538 = vmul.f32 %v6535, %v6537
        %v6539 = vadd.f32 %v6535, %v6538
        %vm6540 = vweird.f32 %v6531
        %vm6541 = vweird.f32 %v6535
        %vm6542 = vmor %vm6540, %vm6541
        %v6543 = vsel %vm6542, %v6535, %v6539
        %v6544 = vand.u32 2147483647, %v6531
        %vm6545 = vcmp.eq.f32.partialorder %v6544, 8.507059e+37
        %v6546 = vand.u32 %v6531, 2147483648
        %v6547 = vor.u32 1.1754944e-38, %v6546
        %v6548 = vsel %vm6545, %v6547, %v6543
        %v6549 = vmul.f32 %v6526, %v6548
        %v6550 = vrcp.pop %v6534
        %v6551 = vmul.f32 %v6534, %v6550
        %v6552 = vsub.f32 1.0, %v6551
        %v6553 = vmul.f32 %v6550, %v6552
        %v6554 = vadd.f32 %v6550, %v6553
        %vm6555 = vweird.f32 %v6534
        %vm6556 = vweird.f32 %v6550
        %vm6557 = vmor %vm6555, %vm6556
        %v6558 = vsel %vm6557, %v6550, %v6554
        %v6559 = vand.u32 2147483647, %v6534
        %vm6560 = vcmp.eq.f32.partialorder %v6559, 8.507059e+37
        %v6561 = vand.u32 %v6534, 2147483648
        %v6562 = vor.u32 1.1754944e-38, %v6561
        %v6563 = vsel %vm6560, %v6562, %v6558
        %v6564 = vmul.f32 %v6528, %v6563
        %6567 = vrot.lane.b32.xlu0 %v5131, 64
        %v6568 = vpop.permute.xlu0 %6567
        %6569 = vrot.lane.b32.xlu0 %v5269, 64
        %v6570 = vpop.permute.xlu0 %6569
        %6571 = vrot.lane.b32.xlu0 %v5134, 64
        %v6572 = vpop.permute.xlu0 %6571
        %6573 = vrot.lane.b32.xlu0 %v5272, 64
        %v6574 = vpop.permute.xlu0 %6573
        %v6575 = vsel %vm6469, %v6568, %v6570
        %v6576 = vsel %vm6469, %v6572, %v6574
        %v6580 = vsel %vm5726, %v6549, 0
        %v6583 = vsel %vm5726, %v6564, 0
        %6585 = vmatpush.msra.mxu0 0.0
        %6586 = vmatpush.msra.mxu0 0.0
        %6587 = vmatpush.msra.mxu0 0.0
        %6588 = vmatpush.msra.mxu0 0.0
        %6589 = vmatpush.msra.mxu0 0.0
        %6590 = vmatpush.msra.mxu0 0.0
        %6591 = vmatpush.msra.mxu0 0.0
        %6592 = vmatpush.msra.mxu0 0.0
        %6593 = vmatpush.msra.mxu0 0.0
        %6594 = vmatpush.msra.mxu0 0.0
        %6595 = vmatpush.msra.mxu0 0.0
        %6596 = vmatpush.msra.mxu0 0.0
        %6597 = vmatpush.msra.mxu0 0.0
        %6598 = vmatpush.msra.mxu0 0.0
        %6599 = vmatpush.msra.mxu0 %v6576
        %6600 = vmatpush.msra.mxu0 %v6575
        %6601 = vmatmul.f32.gmra.mxu0 %v6580
        %v6602 = vpop.f32.mrf.mxu0
        %v6603 = vadd.f32 0.0, %v6602
        %6604 = vmatmul.f32.gmra.mxu0 %v6583
        %v6605 = vpop.f32.mrf.mxu0
        %v6606 = vadd.f32 0.0, %v6605
        %6607 = vdwg.mxu0
        %v6608 = vld [vmem:[#allocation16 + $0x240] sm:$0xff]
        %v6609 = vld [vmem:[#allocation16 + $0x248] sm:$0xff]
        %v6610 = vld [vmem:[#allocation16 + $0x250] sm:$0xff]
        %v6611 = vld [vmem:[#allocation16 + $0x258] sm:$0xff]
        %v6612 = vld [vmem:[#allocation16 + $0x260] sm:$0xff]
        %v6613 = vld [vmem:[#allocation16 + $0x268] sm:$0xff]
        %v6614 = vld [vmem:[#allocation16 + $0x270] sm:$0xff]
        %v6615 = vld [vmem:[#allocation16 + $0x278] sm:$0xff]
        %v6616 = vld [vmem:[#allocation16 + $0x280] sm:$0xff]
        %v6617 = vld [vmem:[#allocation16 + $0x288] sm:$0xff]
        %v6618 = vld [vmem:[#allocation16 + $0x290] sm:$0xff]
        %v6619 = vld [vmem:[#allocation16 + $0x298] sm:$0xff]
        %v6620 = vld [vmem:[#allocation16 + $0x2a0] sm:$0xff]
        %v6621 = vld [vmem:[#allocation16 + $0x2a8] sm:$0xff]
        %v6622 = vld [vmem:[#allocation16 + $0x2b0] sm:$0xff]
        %v6623 = vld [vmem:[#allocation16 + $0x2b8] sm:$0xff]
        %v6624 = vld [vmem:[#allocation16 + $0x2c0] sm:$0xff]
        %v6625 = vld [vmem:[#allocation16 + $0x2c8] sm:$0xff]
        %v6626 = vld [vmem:[#allocation16 + $0x2d0] sm:$0xff]
        %v6627 = vld [vmem:[#allocation16 + $0x2d8] sm:$0xff]
        %v6628 = vld [vmem:[#allocation16 + $0x2e0] sm:$0xff]
        %v6629 = vld [vmem:[#allocation16 + $0x2e8] sm:$0xff]
        %v6630 = vld [vmem:[#allocation16 + $0x2f0] sm:$0xff]
        %v6631 = vld [vmem:[#allocation16 + $0x2f8] sm:$0xff]
        %v6632 = vld [vmem:[#allocation16 + $0x300] sm:$0xff]
        %v6633 = vld [vmem:[#allocation16 + $0x308] sm:$0xff]
        %v6634 = vld [vmem:[#allocation16 + $0x310] sm:$0xff]
        %v6635 = vld [vmem:[#allocation16 + $0x318] sm:$0xff]
        %v6636 = vld [vmem:[#allocation16 + $0x320] sm:$0xff]
        %v6637 = vld [vmem:[#allocation16 + $0x328] sm:$0xff]
        %v6638 = vld [vmem:[#allocation16 + $0x330] sm:$0xff]
        %v6639 = vld [vmem:[#allocation16 + $0x338] sm:$0xff]
        %v6640 = vld [vmem:[#allocation16 + $0x340] sm:$0xff]
        %v6641 = vld [vmem:[#allocation16 + $0x348] sm:$0xff]
        %v6642 = vld [vmem:[#allocation16 + $0x350] sm:$0xff]
        %v6643 = vld [vmem:[#allocation16 + $0x358] sm:$0xff]
        %v6644 = vunpack.c.l.bf16 %v6608
        %v6645 = vunpack.c.h.bf16 %v6608
        %v6646 = vunpack.c.l.bf16 %v6609
        %v6647 = vunpack.c.h.bf16 %v6609
        %v6648 = vunpack.c.l.bf16 %v6610
        %v6649 = vunpack.c.h.bf16 %v6610
        %v6650 = vunpack.c.l.bf16 %v6611
        %v6651 = vunpack.c.h.bf16 %v6611
        %v6652 = vunpack.c.l.bf16 %v6612
        %v6653 = vunpack.c.h.bf16 %v6612
        %v6654 = vunpack.c.l.bf16 %v6613
        %v6655 = vunpack.c.h.bf16 %v6613
        %v6656 = vunpack.c.l.bf16 %v6614
        %v6657 = vunpack.c.h.bf16 %v6614
        %v6658 = vunpack.c.l.bf16 %v6615
        %v6659 = vunpack.c.h.bf16 %v6615
        %v6660 = vunpack.c.l.bf16 %v6616
        %v6661 = vunpack.c.h.bf16 %v6616
        %v6662 = vunpack.c.l.bf16 %v6617
        %v6663 = vunpack.c.h.bf16 %v6617
        %v6664 = vunpack.c.l.bf16 %v6618
        %v6665 = vunpack.c.h.bf16 %v6618
        %v6666 = vunpack.c.l.bf16 %v6619
        %v6667 = vunpack.c.h.bf16 %v6619
        %v6668 = vunpack.c.l.bf16 %v6620
        %v6669 = vunpack.c.h.bf16 %v6620
        %v6670 = vunpack.c.l.bf16 %v6621
        %v6671 = vunpack.c.h.bf16 %v6621
        %v6672 = vunpack.c.l.bf16 %v6622
        %v6673 = vunpack.c.h.bf16 %v6622
        %v6674 = vunpack.c.l.bf16 %v6623
        %v6675 = vunpack.c.h.bf16 %v6623
        %v6676 = vunpack.c.l.bf16 %v6624
        %v6677 = vunpack.c.h.bf16 %v6624
        %v6678 = vunpack.c.l.bf16 %v6625
        %v6679 = vunpack.c.h.bf16 %v6625
        %v6680 = vunpack.c.l.bf16 %v6626
        %v6681 = vunpack.c.h.bf16 %v6626
        %v6682 = vunpack.c.l.bf16 %v6627
        %v6683 = vunpack.c.h.bf16 %v6627
        %v6684 = vunpack.c.l.bf16 %v6628
        %v6685 = vunpack.c.h.bf16 %v6628
        %v6686 = vunpack.c.l.bf16 %v6629
        %v6687 = vunpack.c.h.bf16 %v6629
        %v6688 = vunpack.c.l.bf16 %v6630
        %v6689 = vunpack.c.h.bf16 %v6630
        %v6690 = vunpack.c.l.bf16 %v6631
        %v6691 = vunpack.c.h.bf16 %v6631
        %v6692 = vunpack.c.l.bf16 %v6632
        %v6693 = vunpack.c.h.bf16 %v6632
        %v6694 = vunpack.c.l.bf16 %v6633
        %v6695 = vunpack.c.h.bf16 %v6633
        %v6696 = vunpack.c.l.bf16 %v6634
        %v6697 = vunpack.c.h.bf16 %v6634
        %v6698 = vunpack.c.l.bf16 %v6635
        %v6699 = vunpack.c.h.bf16 %v6635
        %v6700 = vunpack.c.l.bf16 %v6636
        %v6701 = vunpack.c.h.bf16 %v6636
        %v6702 = vunpack.c.l.bf16 %v6637
        %v6703 = vunpack.c.h.bf16 %v6637
        %v6704 = vunpack.c.l.bf16 %v6638
        %v6705 = vunpack.c.h.bf16 %v6638
        %v6706 = vunpack.c.l.bf16 %v6639
        %v6707 = vunpack.c.h.bf16 %v6639
        %v6708 = vunpack.c.l.bf16 %v6640
        %v6709 = vunpack.c.h.bf16 %v6640
        %v6710 = vunpack.c.l.bf16 %v6641
        %v6711 = vunpack.c.h.bf16 %v6641
        %v6712 = vunpack.c.l.bf16 %v6642
        %v6713 = vunpack.c.h.bf16 %v6642
        %v6714 = vunpack.c.l.bf16 %v6643
        %v6715 = vunpack.c.h.bf16 %v6643
        %v6717 = vsel %vm5688, %v6603, 0
        %v6720 = vsel %vm5688, %v6606, 0
        %6722 = vmatpush.msra.mxu0 0.0
        %6723 = vmatpush.msra.mxu0 0.0
        %6724 = vmatpush.msra.mxu0 0.0
        %6725 = vmatpush.msra.mxu0 0.0
        %6726 = vmatpush.msra.mxu0 %v6710
        %6727 = vmatpush.msra.mxu0 %v6704
        %6728 = vmatpush.msra.mxu0 %v6698
        %6729 = vmatpush.msra.mxu0 %v6692
        %6730 = vmatpush.msra.mxu0 %v6686
        %6731 = vmatpush.msra.mxu0 %v6680
        %6732 = vmatpush.msra.mxu0 %v6674
        %6733 = vmatpush.msra.mxu0 %v6668
        %6734 = vmatpush.msra.mxu0 %v6662
        %6735 = vmatpush.msra.mxu0 %v6656
        %6736 = vmatpush.msra.mxu0 %v6650
        %6737 = vmatpush.msra.mxu0 %v6644
        %6738 = vmatmul.f32.gmra.mxu0 %v6717
        %v6739 = vpop.f32.mrf.mxu0
        %v6740 = vadd.f32 0.0, %v6739
        %6741 = vmatmul.f32.gmra.mxu0 %v6720
        %v6742 = vpop.f32.mrf.mxu0
        %v6743 = vadd.f32 0.0, %v6742
        %6744 = vdwg.mxu0
        %6745 = vmatpush.msra.mxu0 0.0
        %6746 = vmatpush.msra.mxu0 0.0
        %6747 = vmatpush.msra.mxu0 0.0
        %6748 = vmatpush.msra.mxu0 0.0
        %6749 = vmatpush.msra.mxu0 %v6711
        %6750 = vmatpush.msra.mxu0 %v6705
        %6751 = vmatpush.msra.mxu0 %v6699
        %6752 = vmatpush.msra.mxu0 %v6693
        %6753 = vmatpush.msra.mxu0 %v6687
        %6754 = vmatpush.msra.mxu0 %v6681
        %6755 = vmatpush.msra.mxu0 %v6675
        %6756 = vmatpush.msra.mxu0 %v6669
        %6757 = vmatpush.msra.mxu0 %v6663
        %6758 = vmatpush.msra.mxu0 %v6657
        %6759 = vmatpush.msra.mxu0 %v6651
        %6760 = vmatpush.msra.mxu0 %v6645
        %6761 = vmatmul.f32.gmra.mxu0 %v6717
        %v6762 = vpop.f32.mrf.mxu0
        %v6763 = vadd.f32 0.0, %v6762
        %6764 = vmatmul.f32.gmra.mxu0 %v6720
        %v6765 = vpop.f32.mrf.mxu0
        %v6766 = vadd.f32 0.0, %v6765
        %6767 = vdwg.mxu0
        %6768 = vmatpush.msra.mxu0 0.0
        %6769 = vmatpush.msra.mxu0 0.0
        %6770 = vmatpush.msra.mxu0 0.0
        %6771 = vmatpush.msra.mxu0 0.0
        %6772 = vmatpush.msra.mxu0 %v6712
        %6773 = vmatpush.msra.mxu0 %v6706
        %6774 = vmatpush.msra.mxu0 %v6700
        %6775 = vmatpush.msra.mxu0 %v6694
        %6776 = vmatpush.msra.mxu0 %v6688
        %6777 = vmatpush.msra.mxu0 %v6682
        %6778 = vmatpush.msra.mxu0 %v6676
        %6779 = vmatpush.msra.mxu0 %v6670
        %6780 = vmatpush.msra.mxu0 %v6664
        %6781 = vmatpush.msra.mxu0 %v6658
        %6782 = vmatpush.msra.mxu0 %v6652
        %6783 = vmatpush.msra.mxu0 %v6646
        %6784 = vmatmul.f32.gmra.mxu0 %v6717
        %v6785 = vpop.f32.mrf.mxu0
        %v6786 = vadd.f32 0.0, %v6785
        %6787 = vmatmul.f32.gmra.mxu0 %v6720
        %v6788 = vpop.f32.mrf.mxu0
        %v6789 = vadd.f32 0.0, %v6788
        %6790 = vdwg.mxu0
        %6791 = vmatpush.msra.mxu0 0.0
        %6792 = vmatpush.msra.mxu0 0.0
        %6793 = vmatpush.msra.mxu0 0.0
        %6794 = vmatpush.msra.mxu0 0.0
        %6795 = vmatpush.msra.mxu0 %v6713
        %6796 = vmatpush.msra.mxu0 %v6707
        %6797 = vmatpush.msra.mxu0 %v6701
        %6798 = vmatpush.msra.mxu0 %v6695
        %6799 = vmatpush.msra.mxu0 %v6689
        %6800 = vmatpush.msra.mxu0 %v6683
        %6801 = vmatpush.msra.mxu0 %v6677
        %6802 = vmatpush.msra.mxu0 %v6671
        %6803 = vmatpush.msra.mxu0 %v6665
        %6804 = vmatpush.msra.mxu0 %v6659
        %6805 = vmatpush.msra.mxu0 %v6653
        %6806 = vmatpush.msra.mxu0 %v6647
        %6807 = vmatmul.f32.gmra.mxu0 %v6717
        %v6808 = vpop.f32.mrf.mxu0
        %v6809 = vadd.f32 0.0, %v6808
        %6810 = vmatmul.f32.gmra.mxu0 %v6720
        %v6811 = vpop.f32.mrf.mxu0
        %v6812 = vadd.f32 0.0, %v6811
        %6813 = vdwg.mxu0
        %6814 = vmatpush.msra.mxu0 0.0
        %6815 = vmatpush.msra.mxu0 0.0
        %6816 = vmatpush.msra.mxu0 0.0
        %6817 = vmatpush.msra.mxu0 0.0
        %6818 = vmatpush.msra.mxu0 %v6714
        %6819 = vmatpush.msra.mxu0 %v6708
        %6820 = vmatpush.msra.mxu0 %v6702
        %6821 = vmatpush.msra.mxu0 %v6696
        %6822 = vmatpush.msra.mxu0 %v6690
        %6823 = vmatpush.msra.mxu0 %v6684
        %6824 = vmatpush.msra.mxu0 %v6678
        %6825 = vmatpush.msra.mxu0 %v6672
        %6826 = vmatpush.msra.mxu0 %v6666
        %6827 = vmatpush.msra.mxu0 %v6660
        %6828 = vmatpush.msra.mxu0 %v6654
        %6829 = vmatpush.msra.mxu0 %v6648
        %6830 = vmatmul.f32.gmra.mxu0 %v6717
        %v6831 = vpop.f32.mrf.mxu0
        %v6832 = vadd.f32 0.0, %v6831
        %6833 = vmatmul.f32.gmra.mxu0 %v6720
        %v6834 = vpop.f32.mrf.mxu0
        %v6835 = vadd.f32 0.0, %v6834
        %6836 = vdwg.mxu0
        %6837 = vmatpush.msra.mxu0 0.0
        %6838 = vmatpush.msra.mxu0 0.0
        %6839 = vmatpush.msra.mxu0 0.0
        %6840 = vmatpush.msra.mxu0 0.0
        %6841 = vmatpush.msra.mxu0 %v6715
        %6842 = vmatpush.msra.mxu0 %v6709
        %6843 = vmatpush.msra.mxu0 %v6703
        %6844 = vmatpush.msra.mxu0 %v6697
        %6845 = vmatpush.msra.mxu0 %v6691
        %6846 = vmatpush.msra.mxu0 %v6685
        %6847 = vmatpush.msra.mxu0 %v6679
        %6848 = vmatpush.msra.mxu0 %v6673
        %6849 = vmatpush.msra.mxu0 %v6667
        %6850 = vmatpush.msra.mxu0 %v6661
        %6851 = vmatpush.msra.mxu0 %v6655
        %6852 = vmatpush.msra.mxu0 %v6649
        %6853 = vmatmul.f32.gmra.mxu0 %v6717
        %v6854 = vpop.f32.mrf.mxu0
        %v6855 = vadd.f32 0.0, %v6854
        %6856 = vmatmul.f32.gmra.mxu0 %v6720
        %v6857 = vpop.f32.mrf.mxu0
        %v6858 = vadd.f32 0.0, %v6857
        %6859 = vdwg.mxu0
        %v6860 = vadd.f32 %v6339, %v6740
        %v6861 = vadd.f32 %v6362, %v6763
        %v6862 = vadd.f32 %v6385, %v6786
        %v6863 = vadd.f32 %v6408, %v6809
        %v6864 = vadd.f32 %v6431, %v6832
        %v6865 = vadd.f32 %v6454, %v6855
        %v6866 = vadd.f32 %v6342, %v6743
        %v6867 = vadd.f32 %v6365, %v6766
        %v6868 = vadd.f32 %v6388, %v6789
        %v6869 = vadd.f32 %v6411, %v6812
        %v6870 = vadd.f32 %v6434, %v6835
        %v6871 = vadd.f32 %v6457, %v6858
        %6872 = vrot.lane.b32.xlu0 %v1857, 96
        %v6873 = vpop.permute.xlu0 %6872
        %6874 = vrot.lane.b32.xlu0 %v1860, 96
        %v6875 = vpop.permute.xlu0 %6874
        %6876 = vrot.lane.b32.xlu0 %v3563, 96
        %v6877 = vpop.permute.xlu0 %6876
        %6878 = vrot.lane.b32.xlu0 %v3566, 96
        %v6879 = vpop.permute.xlu0 %6878
        %v6880 = vsel %vm5688, %v6873, 0
        %v6882 = vsel %vm5688, %v6875, 0
        %v6884 = vsel %vm5688, %v6877, 0
        %v6886 = vsel %vm5688, %v6879, 0
        %6888 = vmatpush.xpose.msra.mxu0 0.0
        %6889 = vmatpush.xpose.msra.mxu0 0.0
        %6890 = vmatpush.xpose.msra.mxu0 0.0
        %6891 = vmatpush.xpose.msra.mxu0 0.0
        %6892 = vmatpush.xpose.msra.mxu0 0.0
        %6893 = vmatpush.xpose.msra.mxu0 0.0
        %6894 = vmatpush.xpose.msra.mxu0 0.0
        %6895 = vmatpush.xpose.msra.mxu0 0.0
        %6896 = vmatpush.xpose.msra.mxu0 0.0
        %6897 = vmatpush.xpose.msra.mxu0 0.0
        %6898 = vmatpush.xpose.msra.mxu0 0.0
        %6899 = vmatpush.xpose.msra.mxu0 0.0
        %6900 = vmatpush.xpose.msra.mxu0 0.0
        %6901 = vmatpush.xpose.msra.mxu0 0.0
        %6902 = vmatpush.xpose.msra.mxu0 %v6886
        %6903 = vmatpush.xpose.msra.mxu0 %v6884
        %6904 = vmatmul.f32.gmra.mxu0 %v6880
        %v6905 = vpop.f32.mrf.mxu0
        %v6906 = vadd.f32 0.0, %v6905
        %6907 = vmatmul.f32.gmra.mxu0 %v6882
        %v6908 = vpop.f32.mrf.mxu0
        %v6909 = vadd.f32 0.0, %v6908
        %6910 = vdwg.mxu0
        %v6911 = vmul.f32 %v6906, 0.10206208
        %v6912 = vmul.f32 %v6909, 0.10206208
        %v6913 = vsel %vm5726, %v6911, -inf
        %6914 = vmax.xlane.f32.xlu0 %v6913
        %v6915 = vpop.xlane.xlu0 %6914
        %v6916 = vsel %vm5726, %v6912, -inf
        %6917 = vmax.xlane.f32.xlu0 %v6916
        %v6918 = vpop.xlane.xlu0 %6917
        %v6919 = vsub.f32 %v6911, %v6915
        %v6920 = vsub.f32 %v6912, %v6918
        %v6921 = vmul.f32 %v6919, 1.442695
        %v6922 = vpow.pop %v6921
        %v6923 = vmul.f32 %v6920, 1.442695
        %v6924 = vpow.pop %v6923
        %v6925 = vsel %vm5726, %v6922, 0.0
        %6926 = vadd.xlane.f32.xlu0 %v6925
        %v6927 = vpop.xlane.xlu0 %6926
        %v6928 = vsel %vm5726, %v6924, 0.0
        %6929 = vadd.xlane.f32.xlu0 %v6928
        %v6930 = vpop.xlane.xlu0 %6929
        %v6931 = vrcp.pop %v6927
        %v6932 = vmul.f32 %v6927, %v6931
        %v6933 = vsub.f32 1.0, %v6932
        %v6934 = vmul.f32 %v6931, %v6933
        %v6935 = vadd.f32 %v6931, %v6934
        %vm6936 = vweird.f32 %v6927
        %vm6937 = vweird.f32 %v6931
        %vm6938 = vmor %vm6936, %vm6937
        %v6939 = vsel %vm6938, %v6931, %v6935
        %v6940 = vand.u32 2147483647, %v6927
        %vm6941 = vcmp.eq.f32.partialorder %v6940, 8.507059e+37
        %v6942 = vand.u32 %v6927, 2147483648
        %v6943 = vor.u32 1.1754944e-38, %v6942
        %v6944 = vsel %vm6941, %v6943, %v6939
        %v6945 = vmul.f32 %v6922, %v6944
        %v6946 = vrcp.pop %v6930
        %v6947 = vmul.f32 %v6930, %v6946
        %v6948 = vsub.f32 1.0, %v6947
        %v6949 = vmul.f32 %v6946, %v6948
        %v6950 = vadd.f32 %v6946, %v6949
        %vm6951 = vweird.f32 %v6930
        %vm6952 = vweird.f32 %v6946
        %vm6953 = vmor %vm6951, %vm6952
        %v6954 = vsel %vm6953, %v6946, %v6950
        %v6955 = vand.u32 2147483647, %v6930
        %vm6956 = vcmp.eq.f32.partialorder %v6955, 8.507059e+37
        %v6957 = vand.u32 %v6930, 2147483648
        %v6958 = vor.u32 1.1754944e-38, %v6957
        %v6959 = vsel %vm6956, %v6958, %v6954
        %v6960 = vmul.f32 %v6924, %v6959
        %6961 = vrot.lane.b32.xlu0 %v5269, 96
        %v6962 = vpop.permute.xlu0 %6961
        %6963 = vrot.lane.b32.xlu0 %v5272, 96
        %v6964 = vpop.permute.xlu0 %6963
        %v6968 = vsel %vm5726, %v6945, 0
        %v6971 = vsel %vm5726, %v6960, 0
        %6973 = vmatpush.msra.mxu0 0.0
        %6974 = vmatpush.msra.mxu0 0.0
        %6975 = vmatpush.msra.mxu0 0.0
        %6976 = vmatpush.msra.mxu0 0.0
        %6977 = vmatpush.msra.mxu0 0.0
        %6978 = vmatpush.msra.mxu0 0.0
        %6979 = vmatpush.msra.mxu0 0.0
        %6980 = vmatpush.msra.mxu0 0.0
        %6981 = vmatpush.msra.mxu0 0.0
        %6982 = vmatpush.msra.mxu0 0.0
        %6983 = vmatpush.msra.mxu0 0.0
        %6984 = vmatpush.msra.mxu0 0.0
        %6985 = vmatpush.msra.mxu0 0.0
        %6986 = vmatpush.msra.mxu0 0.0
        %6987 = vmatpush.msra.mxu0 %v6964
        %6988 = vmatpush.msra.mxu0 %v6962
        %6989 = vmatmul.f32.gmra.mxu0 %v6968
        %v6990 = vpop.f32.mrf.mxu0
        %v6991 = vadd.f32 0.0, %v6990
        %6992 = vmatmul.f32.gmra.mxu0 %v6971
        %v6993 = vpop.f32.mrf.mxu0
        %v6994 = vadd.f32 0.0, %v6993
        %6995 = vdwg.mxu0
        %v6996 = vld [vmem:[#allocation16 + $0x360] sm:$0xff]
        %v6997 = vld [vmem:[#allocation16 + $0x368] sm:$0xff]
        %v6998 = vld [vmem:[#allocation16 + $0x370] sm:$0xff]
        %v6999 = vld [vmem:[#allocation16 + $0x378] sm:$0xff]
        %v7000 = vld [vmem:[#allocation16 + $0x380] sm:$0xff]
        %v7001 = vld [vmem:[#allocation16 + $0x388] sm:$0xff]
        %v7002 = vld [vmem:[#allocation16 + $0x390] sm:$0xff]
        %v7003 = vld [vmem:[#allocation16 + $0x398] sm:$0xff]
        %v7004 = vld [vmem:[#allocation16 + $0x3a0] sm:$0xff]
        %v7005 = vld [vmem:[#allocation16 + $0x3a8] sm:$0xff]
        %v7006 = vld [vmem:[#allocation16 + $0x3b0] sm:$0xff]
        %v7007 = vld [vmem:[#allocation16 + $0x3b8] sm:$0xff]
        %v7008 = vld [vmem:[#allocation16 + $0x3c0] sm:$0xff]
        %v7009 = vld [vmem:[#allocation16 + $0x3c8] sm:$0xff]
        %v7010 = vld [vmem:[#allocation16 + $0x3d0] sm:$0xff]
        %v7011 = vld [vmem:[#allocation16 + $0x3d8] sm:$0xff]
        %v7012 = vld [vmem:[#allocation16 + $0x3e0] sm:$0xff]
        %v7013 = vld [vmem:[#allocation16 + $0x3e8] sm:$0xff]
        %v7014 = vld [vmem:[#allocation16 + $0x3f0] sm:$0xff]
        %v7015 = vld [vmem:[#allocation16 + $0x3f8] sm:$0xff]
        %v7016 = vld [vmem:[#allocation16 + $0x400] sm:$0xff]
        %v7017 = vld [vmem:[#allocation16 + $0x408] sm:$0xff]
        %v7018 = vld [vmem:[#allocation16 + $0x410] sm:$0xff]
        %v7019 = vld [vmem:[#allocation16 + $0x418] sm:$0xff]
        %v7020 = vld [vmem:[#allocation16 + $0x420] sm:$0xff]
        %v7021 = vld [vmem:[#allocation16 + $0x428] sm:$0xff]
        %v7022 = vld [vmem:[#allocation16 + $0x430] sm:$0xff]
        %v7023 = vld [vmem:[#allocation16 + $0x438] sm:$0xff]
        %v7024 = vld [vmem:[#allocation16 + $0x440] sm:$0xff]
        %v7025 = vld [vmem:[#allocation16 + $0x448] sm:$0xff]
        %v7026 = vld [vmem:[#allocation16 + $0x450] sm:$0xff]
        %v7027 = vld [vmem:[#allocation16 + $0x458] sm:$0xff]
        %v7028 = vld [vmem:[#allocation16 + $0x460] sm:$0xff]
        %v7029 = vld [vmem:[#allocation16 + $0x468] sm:$0xff]
        %v7030 = vld [vmem:[#allocation16 + $0x470] sm:$0xff]
        %v7031 = vld [vmem:[#allocation16 + $0x478] sm:$0xff]
        %v7032 = vunpack.c.l.bf16 %v6996
        %v7033 = vunpack.c.h.bf16 %v6996
        %v7034 = vunpack.c.l.bf16 %v6997
        %v7035 = vunpack.c.h.bf16 %v6997
        %v7036 = vunpack.c.l.bf16 %v6998
        %v7037 = vunpack.c.h.bf16 %v6998
        %v7038 = vunpack.c.l.bf16 %v6999
        %v7039 = vunpack.c.h.bf16 %v6999
        %v7040 = vunpack.c.l.bf16 %v7000
        %v7041 = vunpack.c.h.bf16 %v7000
        %v7042 = vunpack.c.l.bf16 %v7001
        %v7043 = vunpack.c.h.bf16 %v7001
        %v7044 = vunpack.c.l.bf16 %v7002
        %v7045 = vunpack.c.h.bf16 %v7002
        %v7046 = vunpack.c.l.bf16 %v7003
        %v7047 = vunpack.c.h.bf16 %v7003
        %v7048 = vunpack.c.l.bf16 %v7004
        %v7049 = vunpack.c.h.bf16 %v7004
        %v7050 = vunpack.c.l.bf16 %v7005
        %v7051 = vunpack.c.h.bf16 %v7005
        %v7052 = vunpack.c.l.bf16 %v7006
        %v7053 = vunpack.c.h.bf16 %v7006
        %v7054 = vunpack.c.l.bf16 %v7007
        %v7055 = vunpack.c.h.bf16 %v7007
        %v7056 = vunpack.c.l.bf16 %v7008
        %v7057 = vunpack.c.h.bf16 %v7008
        %v7058 = vunpack.c.l.bf16 %v7009
        %v7059 = vunpack.c.h.bf16 %v7009
        %v7060 = vunpack.c.l.bf16 %v7010
        %v7061 = vunpack.c.h.bf16 %v7010
        %v7062 = vunpack.c.l.bf16 %v7011
        %v7063 = vunpack.c.h.bf16 %v7011
        %v7064 = vunpack.c.l.bf16 %v7012
        %v7065 = vunpack.c.h.bf16 %v7012
        %v7066 = vunpack.c.l.bf16 %v7013
        %v7067 = vunpack.c.h.bf16 %v7013
        %v7068 = vunpack.c.l.bf16 %v7014
        %v7069 = vunpack.c.h.bf16 %v7014
        %v7070 = vunpack.c.l.bf16 %v7015
        %v7071 = vunpack.c.h.bf16 %v7015
        %v7072 = vunpack.c.l.bf16 %v7016
        %v7073 = vunpack.c.h.bf16 %v7016
        %v7074 = vunpack.c.l.bf16 %v7017
        %v7075 = vunpack.c.h.bf16 %v7017
        %v7076 = vunpack.c.l.bf16 %v7018
        %v7077 = vunpack.c.h.bf16 %v7018
        %v7078 = vunpack.c.l.bf16 %v7019
        %v7079 = vunpack.c.h.bf16 %v7019
        %v7080 = vunpack.c.l.bf16 %v7020
        %v7081 = vunpack.c.h.bf16 %v7020
        %v7082 = vunpack.c.l.bf16 %v7021
        %v7083 = vunpack.c.h.bf16 %v7021
        %v7084 = vunpack.c.l.bf16 %v7022
        %v7085 = vunpack.c.h.bf16 %v7022
        %v7086 = vunpack.c.l.bf16 %v7023
        %v7087 = vunpack.c.h.bf16 %v7023
        %v7088 = vunpack.c.l.bf16 %v7024
        %v7089 = vunpack.c.h.bf16 %v7024
        %v7090 = vunpack.c.l.bf16 %v7025
        %v7091 = vunpack.c.h.bf16 %v7025
        %v7092 = vunpack.c.l.bf16 %v7026
        %v7093 = vunpack.c.h.bf16 %v7026
        %v7094 = vunpack.c.l.bf16 %v7027
        %v7095 = vunpack.c.h.bf16 %v7027
        %v7096 = vunpack.c.l.bf16 %v7028
        %v7097 = vunpack.c.h.bf16 %v7028
        %v7098 = vunpack.c.l.bf16 %v7029
        %v7099 = vunpack.c.h.bf16 %v7029
        %v7100 = vunpack.c.l.bf16 %v7030
        %v7101 = vunpack.c.h.bf16 %v7030
        %v7102 = vunpack.c.l.bf16 %v7031
        %v7103 = vunpack.c.h.bf16 %v7031
        %v7105 = vsel %vm5688, %v6991, 0
        %v7108 = vsel %vm5688, %v6994, 0
        %7110 = vmatpush.msra.mxu0 0.0
        %7111 = vmatpush.msra.mxu0 0.0
        %7112 = vmatpush.msra.mxu0 0.0
        %7113 = vmatpush.msra.mxu0 0.0
        %7114 = vmatpush.msra.mxu0 %v7098
        %7115 = vmatpush.msra.mxu0 %v7092
        %7116 = vmatpush.msra.mxu0 %v7086
        %7117 = vmatpush.msra.mxu0 %v7080
        %7118 = vmatpush.msra.mxu0 %v7074
        %7119 = vmatpush.msra.mxu0 %v7068
        %7120 = vmatpush.msra.mxu0 %v7062
        %7121 = vmatpush.msra.mxu0 %v7056
        %7122 = vmatpush.msra.mxu0 %v7050
        %7123 = vmatpush.msra.mxu0 %v7044
        %7124 = vmatpush.msra.mxu0 %v7038
        %7125 = vmatpush.msra.mxu0 %v7032
        %7126 = vmatmul.f32.gmra.mxu0 %v7105
        %v7127 = vpop.f32.mrf.mxu0
        %v7128 = vadd.f32 0.0, %v7127
        %7129 = vmatmul.f32.gmra.mxu0 %v7108
        %v7130 = vpop.f32.mrf.mxu0
        %v7131 = vadd.f32 0.0, %v7130
        %7132 = vdwg.mxu0
        %7133 = vmatpush.msra.mxu0 0.0
        %7134 = vmatpush.msra.mxu0 0.0
        %7135 = vmatpush.msra.mxu0 0.0
        %7136 = vmatpush.msra.mxu0 0.0
        %7137 = vmatpush.msra.mxu0 %v7099
        %7138 = vmatpush.msra.mxu0 %v7093
        %7139 = vmatpush.msra.mxu0 %v7087
        %7140 = vmatpush.msra.mxu0 %v7081
        %7141 = vmatpush.msra.mxu0 %v7075
        %7142 = vmatpush.msra.mxu0 %v7069
        %7143 = vmatpush.msra.mxu0 %v7063
        %7144 = vmatpush.msra.mxu0 %v7057
        %7145 = vmatpush.msra.mxu0 %v7051
        %7146 = vmatpush.msra.mxu0 %v7045
        %7147 = vmatpush.msra.mxu0 %v7039
        %7148 = vmatpush.msra.mxu0 %v7033
        %7149 = vmatmul.f32.gmra.mxu0 %v7105
        %v7150 = vpop.f32.mrf.mxu0
        %v7151 = vadd.f32 0.0, %v7150
        %7152 = vmatmul.f32.gmra.mxu0 %v7108
        %v7153 = vpop.f32.mrf.mxu0
        %v7154 = vadd.f32 0.0, %v7153
        %7155 = vdwg.mxu0
        %7156 = vmatpush.msra.mxu0 0.0
        %7157 = vmatpush.msra.mxu0 0.0
        %7158 = vmatpush.msra.mxu0 0.0
        %7159 = vmatpush.msra.mxu0 0.0
        %7160 = vmatpush.msra.mxu0 %v7100
        %7161 = vmatpush.msra.mxu0 %v7094
        %7162 = vmatpush.msra.mxu0 %v7088
        %7163 = vmatpush.msra.mxu0 %v7082
        %7164 = vmatpush.msra.mxu0 %v7076
        %7165 = vmatpush.msra.mxu0 %v7070
        %7166 = vmatpush.msra.mxu0 %v7064
        %7167 = vmatpush.msra.mxu0 %v7058
        %7168 = vmatpush.msra.mxu0 %v7052
        %7169 = vmatpush.msra.mxu0 %v7046
        %7170 = vmatpush.msra.mxu0 %v7040
        %7171 = vmatpush.msra.mxu0 %v7034
        %7172 = vmatmul.f32.gmra.mxu0 %v7105
        %v7173 = vpop.f32.mrf.mxu0
        %v7174 = vadd.f32 0.0, %v7173
        %7175 = vmatmul.f32.gmra.mxu0 %v7108
        %v7176 = vpop.f32.mrf.mxu0
        %v7177 = vadd.f32 0.0, %v7176
        %7178 = vdwg.mxu0
        %7179 = vmatpush.msra.mxu0 0.0
        %7180 = vmatpush.msra.mxu0 0.0
        %7181 = vmatpush.msra.mxu0 0.0
        %7182 = vmatpush.msra.mxu0 0.0
        %7183 = vmatpush.msra.mxu0 %v7101
        %7184 = vmatpush.msra.mxu0 %v7095
        %7185 = vmatpush.msra.mxu0 %v7089
        %7186 = vmatpush.msra.mxu0 %v7083
        %7187 = vmatpush.msra.mxu0 %v7077
        %7188 = vmatpush.msra.mxu0 %v7071
        %7189 = vmatpush.msra.mxu0 %v7065
        %7190 = vmatpush.msra.mxu0 %v7059
        %7191 = vmatpush.msra.mxu0 %v7053
        %7192 = vmatpush.msra.mxu0 %v7047
        %7193 = vmatpush.msra.mxu0 %v7041
        %7194 = vmatpush.msra.mxu0 %v7035
        %7195 = vmatmul.f32.gmra.mxu0 %v7105
        %v7196 = vpop.f32.mrf.mxu0
        %v7197 = vadd.f32 0.0, %v7196
        %7198 = vmatmul.f32.gmra.mxu0 %v7108
        %v7199 = vpop.f32.mrf.mxu0
        %v7200 = vadd.f32 0.0, %v7199
        %7201 = vdwg.mxu0
        %7202 = vmatpush.msra.mxu0 0.0
        %7203 = vmatpush.msra.mxu0 0.0
        %7204 = vmatpush.msra.mxu0 0.0
        %7205 = vmatpush.msra.mxu0 0.0
        %7206 = vmatpush.msra.mxu0 %v7102
        %7207 = vmatpush.msra.mxu0 %v7096
        %7208 = vmatpush.msra.mxu0 %v7090
        %7209 = vmatpush.msra.mxu0 %v7084
        %7210 = vmatpush.msra.mxu0 %v7078
        %7211 = vmatpush.msra.mxu0 %v7072
        %7212 = vmatpush.msra.mxu0 %v7066
        %7213 = vmatpush.msra.mxu0 %v7060
        %7214 = vmatpush.msra.mxu0 %v7054
        %7215 = vmatpush.msra.mxu0 %v7048
        %7216 = vmatpush.msra.mxu0 %v7042
        %7217 = vmatpush.msra.mxu0 %v7036
        %7218 = vmatmul.f32.gmra.mxu0 %v7105
        %v7219 = vpop.f32.mrf.mxu0
        %v7220 = vadd.f32 0.0, %v7219
        %7221 = vmatmul.f32.gmra.mxu0 %v7108
        %v7222 = vpop.f32.mrf.mxu0
        %v7223 = vadd.f32 0.0, %v7222
        %7224 = vdwg.mxu0
        %7225 = vmatpush.msra.mxu0 0.0
        %7226 = vmatpush.msra.mxu0 0.0
        %7227 = vmatpush.msra.mxu0 0.0
        %7228 = vmatpush.msra.mxu0 0.0
        %7229 = vmatpush.msra.mxu0 %v7103
        %7230 = vmatpush.msra.mxu0 %v7097
        %7231 = vmatpush.msra.mxu0 %v7091
        %7232 = vmatpush.msra.mxu0 %v7085
        %7233 = vmatpush.msra.mxu0 %v7079
        %7234 = vmatpush.msra.mxu0 %v7073
        %7235 = vmatpush.msra.mxu0 %v7067
        %7236 = vmatpush.msra.mxu0 %v7061
        %7237 = vmatpush.msra.mxu0 %v7055
        %7238 = vmatpush.msra.mxu0 %v7049
        %7239 = vmatpush.msra.mxu0 %v7043
        %7240 = vmatpush.msra.mxu0 %v7037
        %7241 = vmatmul.f32.gmra.mxu0 %v7105
        %v7242 = vpop.f32.mrf.mxu0
        %v7243 = vadd.f32 0.0, %v7242
        %7244 = vmatmul.f32.gmra.mxu0 %v7108
        %v7245 = vpop.f32.mrf.mxu0
        %v7246 = vadd.f32 0.0, %v7245
        %7247 = vdwg.mxu0
        %v7248 = vadd.f32 %v6860, %v7128
        %v7249 = vadd.f32 %v6861, %v7151
        %v7250 = vadd.f32 %v6862, %v7174
        %v7251 = vadd.f32 %v6863, %v7197
        %v7252 = vadd.f32 %v6864, %v7220
        %v7253 = vadd.f32 %v6865, %v7243
        %v7254 = vadd.f32 %v6866, %v7131
        %v7255 = vadd.f32 %v6867, %v7154
        %v7256 = vadd.f32 %v6868, %v7177
        %v7257 = vadd.f32 %v6869, %v7200
        %v7258 = vadd.f32 %v6870, %v7223
        %v7259 = vadd.f32 %v6871, %v7246
        %v7261 = vsel %vm5688, %v1995, 0
        %v7264 = vsel %vm5688, %v1998, 0
        %v7267 = vsel %vm5688, %v3701, 0
        %v7270 = vsel %vm5688, %v3704, 0
        %7272 = vmatpush.xpose.msra.mxu0 0.0
        %7273 = vmatpush.xpose.msra.mxu0 0.0
        %7274 = vmatpush.xpose.msra.mxu0 0.0
        %7275 = vmatpush.xpose.msra.mxu0 0.0
        %7276 = vmatpush.xpose.msra.mxu0 0.0
        %7277 = vmatpush.xpose.msra.mxu0 0.0
        %7278 = vmatpush.xpose.msra.mxu0 0.0
        %7279 = vmatpush.xpose.msra.mxu0 0.0
        %7280 = vmatpush.xpose.msra.mxu0 0.0
        %7281 = vmatpush.xpose.msra.mxu0 0.0
        %7282 = vmatpush.xpose.msra.mxu0 0.0
        %7283 = vmatpush.xpose.msra.mxu0 0.0
        %7284 = vmatpush.xpose.msra.mxu0 0.0
        %7285 = vmatpush.xpose.msra.mxu0 0.0
        %7286 = vmatpush.xpose.msra.mxu0 %v7270
        %7287 = vmatpush.xpose.msra.mxu0 %v7267
        %7288 = vmatmul.f32.gmra.mxu0 %v7261
        %v7289 = vpop.f32.mrf.mxu0
        %v7290 = vadd.f32 0.0, %v7289
        %7291 = vmatmul.f32.gmra.mxu0 %v7264
        %v7292 = vpop.f32.mrf.mxu0
        %v7293 = vadd.f32 0.0, %v7292
        %7294 = vdwg.mxu0
        %v7295 = vmul.f32 %v7290, 0.10206208
        %v7296 = vmul.f32 %v7293, 0.10206208
        %v7297 = vsel %vm5726, %v7295, -inf
        %7298 = vmax.xlane.f32.xlu0 %v7297
        %v7299 = vpop.xlane.xlu0 %7298
        %v7300 = vsel %vm5726, %v7296, -inf
        %7301 = vmax.xlane.f32.xlu0 %v7300
        %v7302 = vpop.xlane.xlu0 %7301
        %v7303 = vsub.f32 %v7295, %v7299
        %v7304 = vsub.f32 %v7296, %v7302
        %v7305 = vmul.f32 %v7303, 1.442695
        %v7306 = vpow.pop %v7305
        %v7307 = vmul.f32 %v7304, 1.442695
        %v7308 = vpow.pop %v7307
        %v7309 = vsel %vm5726, %v7306, 0.0
        %7310 = vadd.xlane.f32.xlu0 %v7309
        %v7311 = vpop.xlane.xlu0 %7310
        %v7312 = vsel %vm5726, %v7308, 0.0
        %7313 = vadd.xlane.f32.xlu0 %v7312
        %v7314 = vpop.xlane.xlu0 %7313
        %v7315 = vrcp.pop %v7311
        %v7316 = vmul.f32 %v7311, %v7315
        %v7317 = vsub.f32 1.0, %v7316
        %v7318 = vmul.f32 %v7315, %v7317
        %v7319 = vadd.f32 %v7315, %v7318
        %vm7320 = vweird.f32 %v7311
        %vm7321 = vweird.f32 %v7315
        %vm7322 = vmor %vm7320, %vm7321
        %v7323 = vsel %vm7322, %v7315, %v7319
        %v7324 = vand.u32 2147483647, %v7311
        %vm7325 = vcmp.eq.f32.partialorder %v7324, 8.507059e+37
        %v7326 = vand.u32 %v7311, 2147483648
        %v7327 = vor.u32 1.1754944e-38, %v7326
        %v7328 = vsel %vm7325, %v7327, %v7323
        %v7329 = vmul.f32 %v7306, %v7328
        %v7330 = vrcp.pop %v7314
        %v7331 = vmul.f32 %v7314, %v7330
        %v7332 = vsub.f32 1.0, %v7331
        %v7333 = vmul.f32 %v7330, %v7332
        %v7334 = vadd.f32 %v7330, %v7333
        %vm7335 = vweird.f32 %v7314
        %vm7336 = vweird.f32 %v7330
        %vm7337 = vmor %vm7335, %vm7336
        %v7338 = vsel %vm7337, %v7330, %v7334
        %v7339 = vand.u32 2147483647, %v7314
        %vm7340 = vcmp.eq.f32.partialorder %v7339, 8.507059e+37
        %v7341 = vand.u32 %v7314, 2147483648
        %v7342 = vor.u32 1.1754944e-38, %v7341
        %v7343 = vsel %vm7340, %v7342, %v7338
        %v7344 = vmul.f32 %v7308, %v7343
        %v7346 = vsel %vm5726, %v7329, 0
        %v7349 = vsel %vm5726, %v7344, 0
        %7351 = vmatpush.msra.mxu0 0.0
        %7352 = vmatpush.msra.mxu0 0.0
        %7353 = vmatpush.msra.mxu0 0.0
        %7354 = vmatpush.msra.mxu0 0.0
        %7355 = vmatpush.msra.mxu0 0.0
        %7356 = vmatpush.msra.mxu0 0.0
        %7357 = vmatpush.msra.mxu0 0.0
        %7358 = vmatpush.msra.mxu0 0.0
        %7359 = vmatpush.msra.mxu0 0.0
        %7360 = vmatpush.msra.mxu0 0.0
        %7361 = vmatpush.msra.mxu0 0.0
        %7362 = vmatpush.msra.mxu0 0.0
        %7363 = vmatpush.msra.mxu0 0.0
        %7364 = vmatpush.msra.mxu0 0.0
        %7365 = vmatpush.msra.mxu0 %v5410
        %7366 = vmatpush.msra.mxu0 %v5407
        %7367 = vmatmul.f32.gmra.mxu0 %v7346
        %v7368 = vpop.f32.mrf.mxu0
        %v7369 = vadd.f32 0.0, %v7368
        %7370 = vmatmul.f32.gmra.mxu0 %v7349
        %v7371 = vpop.f32.mrf.mxu0
        %v7372 = vadd.f32 0.0, %v7371
        %7373 = vdwg.mxu0
        %v7374 = vld [vmem:[#allocation16 + $0x480] sm:$0xff]
        %v7375 = vld [vmem:[#allocation16 + $0x488] sm:$0xff]
        %v7376 = vld [vmem:[#allocation16 + $0x490] sm:$0xff]
        %v7377 = vld [vmem:[#allocation16 + $0x498] sm:$0xff]
        %v7378 = vld [vmem:[#allocation16 + $0x4a0] sm:$0xff]
        %v7379 = vld [vmem:[#allocation16 + $0x4a8] sm:$0xff]
        %v7380 = vld [vmem:[#allocation16 + $0x4b0] sm:$0xff]
        %v7381 = vld [vmem:[#allocation16 + $0x4b8] sm:$0xff]
        %v7382 = vld [vmem:[#allocation16 + $0x4c0] sm:$0xff]
        %v7383 = vld [vmem:[#allocation16 + $0x4c8] sm:$0xff]
        %v7384 = vld [vmem:[#allocation16 + $0x4d0] sm:$0xff]
        %v7385 = vld [vmem:[#allocation16 + $0x4d8] sm:$0xff]
        %v7386 = vld [vmem:[#allocation16 + $0x4e0] sm:$0xff]
        %v7387 = vld [vmem:[#allocation16 + $0x4e8] sm:$0xff]
        %v7388 = vld [vmem:[#allocation16 + $0x4f0] sm:$0xff]
        %v7389 = vld [vmem:[#allocation16 + $0x4f8] sm:$0xff]
        %v7390 = vld [vmem:[#allocation16 + $0x500] sm:$0xff]
        %v7391 = vld [vmem:[#allocation16 + $0x508] sm:$0xff]
        %v7392 = vld [vmem:[#allocation16 + $0x510] sm:$0xff]
        %v7393 = vld [vmem:[#allocation16 + $0x518] sm:$0xff]
        %v7394 = vld [vmem:[#allocation16 + $0x520] sm:$0xff]
        %v7395 = vld [vmem:[#allocation16 + $0x528] sm:$0xff]
        %v7396 = vld [vmem:[#allocation16 + $0x530] sm:$0xff]
        %v7397 = vld [vmem:[#allocation16 + $0x538] sm:$0xff]
        %v7398 = vld [vmem:[#allocation16 + $0x540] sm:$0xff]
        %v7399 = vld [vmem:[#allocation16 + $0x548] sm:$0xff]
        %v7400 = vld [vmem:[#allocation16 + $0x550] sm:$0xff]
        %v7401 = vld [vmem:[#allocation16 + $0x558] sm:$0xff]
        %v7402 = vld [vmem:[#allocation16 + $0x560] sm:$0xff]
        %v7403 = vld [vmem:[#allocation16 + $0x568] sm:$0xff]
        %v7404 = vld [vmem:[#allocation16 + $0x570] sm:$0xff]
        %v7405 = vld [vmem:[#allocation16 + $0x578] sm:$0xff]
        %v7406 = vld [vmem:[#allocation16 + $0x580] sm:$0xff]
        %v7407 = vld [vmem:[#allocation16 + $0x588] sm:$0xff]
        %v7408 = vld [vmem:[#allocation16 + $0x590] sm:$0xff]
        %v7409 = vld [vmem:[#allocation16 + $0x598] sm:$0xff]
        %v7410 = vunpack.c.l.bf16 %v7374
        %v7411 = vunpack.c.h.bf16 %v7374
        %v7412 = vunpack.c.l.bf16 %v7375
        %v7413 = vunpack.c.h.bf16 %v7375
        %v7414 = vunpack.c.l.bf16 %v7376
        %v7415 = vunpack.c.h.bf16 %v7376
        %v7416 = vunpack.c.l.bf16 %v7377
        %v7417 = vunpack.c.h.bf16 %v7377
        %v7418 = vunpack.c.l.bf16 %v7378
        %v7419 = vunpack.c.h.bf16 %v7378
        %v7420 = vunpack.c.l.bf16 %v7379
        %v7421 = vunpack.c.h.bf16 %v7379
        %v7422 = vunpack.c.l.bf16 %v7380
        %v7423 = vunpack.c.h.bf16 %v7380
        %v7424 = vunpack.c.l.bf16 %v7381
        %v7425 = vunpack.c.h.bf16 %v7381
        %v7426 = vunpack.c.l.bf16 %v7382
        %v7427 = vunpack.c.h.bf16 %v7382
        %v7428 = vunpack.c.l.bf16 %v7383
        %v7429 = vunpack.c.h.bf16 %v7383
        %v7430 = vunpack.c.l.bf16 %v7384
        %v7431 = vunpack.c.h.bf16 %v7384
        %v7432 = vunpack.c.l.bf16 %v7385
        %v7433 = vunpack.c.h.bf16 %v7385
        %v7434 = vunpack.c.l.bf16 %v7386
        %v7435 = vunpack.c.h.bf16 %v7386
        %v7436 = vunpack.c.l.bf16 %v7387
        %v7437 = vunpack.c.h.bf16 %v7387
        %v7438 = vunpack.c.l.bf16 %v7388
        %v7439 = vunpack.c.h.bf16 %v7388
        %v7440 = vunpack.c.l.bf16 %v7389
        %v7441 = vunpack.c.h.bf16 %v7389
        %v7442 = vunpack.c.l.bf16 %v7390
        %v7443 = vunpack.c.h.bf16 %v7390
        %v7444 = vunpack.c.l.bf16 %v7391
        %v7445 = vunpack.c.h.bf16 %v7391
        %v7446 = vunpack.c.l.bf16 %v7392
        %v7447 = vunpack.c.h.bf16 %v7392
        %v7448 = vunpack.c.l.bf16 %v7393
        %v7449 = vunpack.c.h.bf16 %v7393
        %v7450 = vunpack.c.l.bf16 %v7394
        %v7451 = vunpack.c.h.bf16 %v7394
        %v7452 = vunpack.c.l.bf16 %v7395
        %v7453 = vunpack.c.h.bf16 %v7395
        %v7454 = vunpack.c.l.bf16 %v7396
        %v7455 = vunpack.c.h.bf16 %v7396
        %v7456 = vunpack.c.l.bf16 %v7397
        %v7457 = vunpack.c.h.bf16 %v7397
        %v7458 = vunpack.c.l.bf16 %v7398
        %v7459 = vunpack.c.h.bf16 %v7398
        %v7460 = vunpack.c.l.bf16 %v7399
        %v7461 = vunpack.c.h.bf16 %v7399
        %v7462 = vunpack.c.l.bf16 %v7400
        %v7463 = vunpack.c.h.bf16 %v7400
        %v7464 = vunpack.c.l.bf16 %v7401
        %v7465 = vunpack.c.h.bf16 %v7401
        %v7466 = vunpack.c.l.bf16 %v7402
        %v7467 = vunpack.c.h.bf16 %v7402
        %v7468 = vunpack.c.l.bf16 %v7403
        %v7469 = vunpack.c.h.bf16 %v7403
        %v7470 = vunpack.c.l.bf16 %v7404
        %v7471 = vunpack.c.h.bf16 %v7404
        %v7472 = vunpack.c.l.bf16 %v7405
        %v7473 = vunpack.c.h.bf16 %v7405
        %v7474 = vunpack.c.l.bf16 %v7406
        %v7475 = vunpack.c.h.bf16 %v7406
        %v7476 = vunpack.c.l.bf16 %v7407
        %v7477 = vunpack.c.h.bf16 %v7407
        %v7478 = vunpack.c.l.bf16 %v7408
        %v7479 = vunpack.c.h.bf16 %v7408
        %v7480 = vunpack.c.l.bf16 %v7409
        %v7481 = vunpack.c.h.bf16 %v7409
        %v7483 = vsel %vm5688, %v7369, 0
        %v7486 = vsel %vm5688, %v7372, 0
        %7488 = vmatpush.msra.mxu0 0.0
        %7489 = vmatpush.msra.mxu0 0.0
        %7490 = vmatpush.msra.mxu0 0.0
        %7491 = vmatpush.msra.mxu0 0.0
        %7492 = vmatpush.msra.mxu0 %v7476
        %7493 = vmatpush.msra.mxu0 %v7470
        %7494 = vmatpush.msra.mxu0 %v7464
        %7495 = vmatpush.msra.mxu0 %v7458
        %7496 = vmatpush.msra.mxu0 %v7452
        %7497 = vmatpush.msra.mxu0 %v7446
        %7498 = vmatpush.msra.mxu0 %v7440
        %7499 = vmatpush.msra.mxu0 %v7434
        %7500 = vmatpush.msra.mxu0 %v7428
        %7501 = vmatpush.msra.mxu0 %v7422
        %7502 = vmatpush.msra.mxu0 %v7416
        %7503 = vmatpush.msra.mxu0 %v7410
        %7504 = vmatmul.f32.gmra.mxu0 %v7483
        %v7505 = vpop.f32.mrf.mxu0
        %v7506 = vadd.f32 0.0, %v7505
        %7507 = vmatmul.f32.gmra.mxu0 %v7486
        %v7508 = vpop.f32.mrf.mxu0
        %v7509 = vadd.f32 0.0, %v7508
        %7510 = vdwg.mxu0
        %7511 = vmatpush.msra.mxu0 0.0
        %7512 = vmatpush.msra.mxu0 0.0
        %7513 = vmatpush.msra.mxu0 0.0
        %7514 = vmatpush.msra.mxu0 0.0
        %7515 = vmatpush.msra.mxu0 %v7477
        %7516 = vmatpush.msra.mxu0 %v7471
        %7517 = vmatpush.msra.mxu0 %v7465
        %7518 = vmatpush.msra.mxu0 %v7459
        %7519 = vmatpush.msra.mxu0 %v7453
        %7520 = vmatpush.msra.mxu0 %v7447
        %7521 = vmatpush.msra.mxu0 %v7441
        %7522 = vmatpush.msra.mxu0 %v7435
        %7523 = vmatpush.msra.mxu0 %v7429
        %7524 = vmatpush.msra.mxu0 %v7423
        %7525 = vmatpush.msra.mxu0 %v7417
        %7526 = vmatpush.msra.mxu0 %v7411
        %7527 = vmatmul.f32.gmra.mxu0 %v7483
        %v7528 = vpop.f32.mrf.mxu0
        %v7529 = vadd.f32 0.0, %v7528
        %7530 = vmatmul.f32.gmra.mxu0 %v7486
        %v7531 = vpop.f32.mrf.mxu0
        %v7532 = vadd.f32 0.0, %v7531
        %7533 = vdwg.mxu0
        %7534 = vmatpush.msra.mxu0 0.0
        %7535 = vmatpush.msra.mxu0 0.0
        %7536 = vmatpush.msra.mxu0 0.0
        %7537 = vmatpush.msra.mxu0 0.0
        %7538 = vmatpush.msra.mxu0 %v7478
        %7539 = vmatpush.msra.mxu0 %v7472
        %7540 = vmatpush.msra.mxu0 %v7466
        %7541 = vmatpush.msra.mxu0 %v7460
        %7542 = vmatpush.msra.mxu0 %v7454
        %7543 = vmatpush.msra.mxu0 %v7448
        %7544 = vmatpush.msra.mxu0 %v7442
        %7545 = vmatpush.msra.mxu0 %v7436
        %7546 = vmatpush.msra.mxu0 %v7430
        %7547 = vmatpush.msra.mxu0 %v7424
        %7548 = vmatpush.msra.mxu0 %v7418
        %7549 = vmatpush.msra.mxu0 %v7412
        %7550 = vmatmul.f32.gmra.mxu0 %v7483
        %v7551 = vpop.f32.mrf.mxu0
        %v7552 = vadd.f32 0.0, %v7551
        %7553 = vmatmul.f32.gmra.mxu0 %v7486
        %v7554 = vpop.f32.mrf.mxu0
        %v7555 = vadd.f32 0.0, %v7554
        %7556 = vdwg.mxu0
        %7557 = vmatpush.msra.mxu0 0.0
        %7558 = vmatpush.msra.mxu0 0.0
        %7559 = vmatpush.msra.mxu0 0.0
        %7560 = vmatpush.msra.mxu0 0.0
        %7561 = vmatpush.msra.mxu0 %v7479
        %7562 = vmatpush.msra.mxu0 %v7473
        %7563 = vmatpush.msra.mxu0 %v7467
        %7564 = vmatpush.msra.mxu0 %v7461
        %7565 = vmatpush.msra.mxu0 %v7455
        %7566 = vmatpush.msra.mxu0 %v7449
        %7567 = vmatpush.msra.mxu0 %v7443
        %7568 = vmatpush.msra.mxu0 %v7437
        %7569 = vmatpush.msra.mxu0 %v7431
        %7570 = vmatpush.msra.mxu0 %v7425
        %7571 = vmatpush.msra.mxu0 %v7419
        %7572 = vmatpush.msra.mxu0 %v7413
        %7573 = vmatmul.f32.gmra.mxu0 %v7483
        %v7574 = vpop.f32.mrf.mxu0
        %v7575 = vadd.f32 0.0, %v7574
        %7576 = vmatmul.f32.gmra.mxu0 %v7486
        %v7577 = vpop.f32.mrf.mxu0
        %v7578 = vadd.f32 0.0, %v7577
        %7579 = vdwg.mxu0
        %7580 = vmatpush.msra.mxu0 0.0
        %7581 = vmatpush.msra.mxu0 0.0
        %7582 = vmatpush.msra.mxu0 0.0
        %7583 = vmatpush.msra.mxu0 0.0
        %7584 = vmatpush.msra.mxu0 %v7480
        %7585 = vmatpush.msra.mxu0 %v7474
        %7586 = vmatpush.msra.mxu0 %v7468
        %7587 = vmatpush.msra.mxu0 %v7462
        %7588 = vmatpush.msra.mxu0 %v7456
        %7589 = vmatpush.msra.mxu0 %v7450
        %7590 = vmatpush.msra.mxu0 %v7444
        %7591 = vmatpush.msra.mxu0 %v7438
        %7592 = vmatpush.msra.mxu0 %v7432
        %7593 = vmatpush.msra.mxu0 %v7426
        %7594 = vmatpush.msra.mxu0 %v7420
        %7595 = vmatpush.msra.mxu0 %v7414
        %7596 = vmatmul.f32.gmra.mxu0 %v7483
        %v7597 = vpop.f32.mrf.mxu0
        %v7598 = vadd.f32 0.0, %v7597
        %7599 = vmatmul.f32.gmra.mxu0 %v7486
        %v7600 = vpop.f32.mrf.mxu0
        %v7601 = vadd.f32 0.0, %v7600
        %7602 = vdwg.mxu0
        %7603 = vmatpush.msra.mxu0 0.0
        %7604 = vmatpush.msra.mxu0 0.0
        %7605 = vmatpush.msra.mxu0 0.0
        %7606 = vmatpush.msra.mxu0 0.0
        %7607 = vmatpush.msra.mxu0 %v7481
        %7608 = vmatpush.msra.mxu0 %v7475
        %7609 = vmatpush.msra.mxu0 %v7469
        %7610 = vmatpush.msra.mxu0 %v7463
        %7611 = vmatpush.msra.mxu0 %v7457
        %7612 = vmatpush.msra.mxu0 %v7451
        %7613 = vmatpush.msra.mxu0 %v7445
        %7614 = vmatpush.msra.mxu0 %v7439
        %7615 = vmatpush.msra.mxu0 %v7433
        %7616 = vmatpush.msra.mxu0 %v7427
        %7617 = vmatpush.msra.mxu0 %v7421
        %7618 = vmatpush.msra.mxu0 %v7415
        %7619 = vmatmul.f32.gmra.mxu0 %v7483
        %v7620 = vpop.f32.mrf.mxu0
        %v7621 = vadd.f32 0.0, %v7620
        %7622 = vmatmul.f32.gmra.mxu0 %v7486
        %v7623 = vpop.f32.mrf.mxu0
        %v7624 = vadd.f32 0.0, %v7623
        %7625 = vdwg.mxu0
        %v7626 = vadd.f32 %v7248, %v7506
        %v7627 = vadd.f32 %v7249, %v7529
        %v7628 = vadd.f32 %v7250, %v7552
        %v7629 = vadd.f32 %v7251, %v7575
        %v7630 = vadd.f32 %v7252, %v7598
        %v7631 = vadd.f32 %v7253, %v7621
        %v7632 = vadd.f32 %v7254, %v7509
        %v7633 = vadd.f32 %v7255, %v7532
        %v7634 = vadd.f32 %v7256, %v7555
        %v7635 = vadd.f32 %v7257, %v7578
        %v7636 = vadd.f32 %v7258, %v7601
        %v7637 = vadd.f32 %v7259, %v7624
        %7640 = vrot.lane.b32.xlu0 %v1995, 32
        %v7641 = vpop.permute.xlu0 %7640
        %7642 = vrot.lane.b32.xlu0 %v2133, 32
        %v7643 = vpop.permute.xlu0 %7642
        %7644 = vrot.lane.b32.xlu0 %v1998, 32
        %v7645 = vpop.permute.xlu0 %7644
        %7646 = vrot.lane.b32.xlu0 %v2136, 32
        %v7647 = vpop.permute.xlu0 %7646
        %v7648 = vsel %vm5922, %v7641, %v7643
        %v7649 = vsel %vm5922, %v7645, %v7647
        %7652 = vrot.lane.b32.xlu0 %v3701, 32
        %v7653 = vpop.permute.xlu0 %7652
        %7654 = vrot.lane.b32.xlu0 %v3839, 32
        %v7655 = vpop.permute.xlu0 %7654
        %7656 = vrot.lane.b32.xlu0 %v3704, 32
        %v7657 = vpop.permute.xlu0 %7656
        %7658 = vrot.lane.b32.xlu0 %v3842, 32
        %v7659 = vpop.permute.xlu0 %7658
        %v7660 = vsel %vm5922, %v7653, %v7655
        %v7661 = vsel %vm5922, %v7657, %v7659
        %v7662 = vsel %vm5688, %v7648, 0
        %v7664 = vsel %vm5688, %v7649, 0
        %v7666 = vsel %vm5688, %v7660, 0
        %v7668 = vsel %vm5688, %v7661, 0
        %7670 = vmatpush.xpose.msra.mxu0 0.0
        %7671 = vmatpush.xpose.msra.mxu0 0.0
        %7672 = vmatpush.xpose.msra.mxu0 0.0
        %7673 = vmatpush.xpose.msra.mxu0 0.0
        %7674 = vmatpush.xpose.msra.mxu0 0.0
        %7675 = vmatpush.xpose.msra.mxu0 0.0
        %7676 = vmatpush.xpose.msra.mxu0 0.0
        %7677 = vmatpush.xpose.msra.mxu0 0.0
        %7678 = vmatpush.xpose.msra.mxu0 0.0
        %7679 = vmatpush.xpose.msra.mxu0 0.0
        %7680 = vmatpush.xpose.msra.mxu0 0.0
        %7681 = vmatpush.xpose.msra.mxu0 0.0
        %7682 = vmatpush.xpose.msra.mxu0 0.0
        %7683 = vmatpush.xpose.msra.mxu0 0.0
        %7684 = vmatpush.xpose.msra.mxu0 %v7668
        %7685 = vmatpush.xpose.msra.mxu0 %v7666
        %7686 = vmatmul.f32.gmra.mxu0 %v7662
        %v7687 = vpop.f32.mrf.mxu0
        %v7688 = vadd.f32 0.0, %v7687
        %7689 = vmatmul.f32.gmra.mxu0 %v7664
        %v7690 = vpop.f32.mrf.mxu0
        %v7691 = vadd.f32 0.0, %v7690
        %7692 = vdwg.mxu0
        %v7693 = vmul.f32 %v7688, 0.10206208
        %v7694 = vmul.f32 %v7691, 0.10206208
        %v7695 = vsel %vm5726, %v7693, -inf
        %7696 = vmax.xlane.f32.xlu0 %v7695
        %v7697 = vpop.xlane.xlu0 %7696
        %v7698 = vsel %vm5726, %v7694, -inf
        %7699 = vmax.xlane.f32.xlu0 %v7698
        %v7700 = vpop.xlane.xlu0 %7699
        %v7701 = vsub.f32 %v7693, %v7697
        %v7702 = vsub.f32 %v7694, %v7700
        %v7703 = vmul.f32 %v7701, 1.442695
        %v7704 = vpow.pop %v7703
        %v7705 = vmul.f32 %v7702, 1.442695
        %v7706 = vpow.pop %v7705
        %v7707 = vsel %vm5726, %v7704, 0.0
        %7708 = vadd.xlane.f32.xlu0 %v7707
        %v7709 = vpop.xlane.xlu0 %7708
        %v7710 = vsel %vm5726, %v7706, 0.0
        %7711 = vadd.xlane.f32.xlu0 %v7710
        %v7712 = vpop.xlane.xlu0 %7711
        %v7713 = vrcp.pop %v7709
        %v7714 = vmul.f32 %v7709, %v7713
        %v7715 = vsub.f32 1.0, %v7714
        %v7716 = vmul.f32 %v7713, %v7715
        %v7717 = vadd.f32 %v7713, %v7716
        %vm7718 = vweird.f32 %v7709
        %vm7719 = vweird.f32 %v7713
        %vm7720 = vmor %vm7718, %vm7719
        %v7721 = vsel %vm7720, %v7713, %v7717
        %v7722 = vand.u32 2147483647, %v7709
        %vm7723 = vcmp.eq.f32.partialorder %v7722, 8.507059e+37
        %v7724 = vand.u32 %v7709, 2147483648
        %v7725 = vor.u32 1.1754944e-38, %v7724
        %v7726 = vsel %vm7723, %v7725, %v7721
        %v7727 = vmul.f32 %v7704, %v7726
        %v7728 = vrcp.pop %v7712
        %v7729 = vmul.f32 %v7712, %v7728
        %v7730 = vsub.f32 1.0, %v7729
        %v7731 = vmul.f32 %v7728, %v7730
        %v7732 = vadd.f32 %v7728, %v7731
        %vm7733 = vweird.f32 %v7712
        %vm7734 = vweird.f32 %v7728
        %vm7735 = vmor %vm7733, %vm7734
        %v7736 = vsel %vm7735, %v7728, %v7732
        %v7737 = vand.u32 2147483647, %v7712
        %vm7738 = vcmp.eq.f32.partialorder %v7737, 8.507059e+37
        %v7739 = vand.u32 %v7712, 2147483648
        %v7740 = vor.u32 1.1754944e-38, %v7739
        %v7741 = vsel %vm7738, %v7740, %v7736
        %v7742 = vmul.f32 %v7706, %v7741
        %7747 = vrot.lane.b32.xlu0 %v5407, 32
        %v7748 = vpop.permute.xlu0 %7747
        %7749 = vrot.lane.b32.xlu0 %v5545, 32
        %v7750 = vpop.permute.xlu0 %7749
        %7751 = vrot.lane.b32.xlu0 %v5410, 32
        %v7752 = vpop.permute.xlu0 %7751
        %7753 = vrot.lane.b32.xlu0 %v5548, 32
        %v7754 = vpop.permute.xlu0 %7753
        %v7755 = vsel %vm5922, %v7748, %v7750
        %v7756 = vsel %vm5922, %v7752, %v7754
        %v7760 = vsel %vm5726, %v7727, 0
        %v7763 = vsel %vm5726, %v7742, 0
        %7765 = vmatpush.msra.mxu0 0.0
        %7766 = vmatpush.msra.mxu0 0.0
        %7767 = vmatpush.msra.mxu0 0.0
        %7768 = vmatpush.msra.mxu0 0.0
        %7769 = vmatpush.msra.mxu0 0.0
        %7770 = vmatpush.msra.mxu0 0.0
        %7771 = vmatpush.msra.mxu0 0.0
        %7772 = vmatpush.msra.mxu0 0.0
        %7773 = vmatpush.msra.mxu0 0.0
        %7774 = vmatpush.msra.mxu0 0.0
        %7775 = vmatpush.msra.mxu0 0.0
        %7776 = vmatpush.msra.mxu0 0.0
        %7777 = vmatpush.msra.mxu0 0.0
        %7778 = vmatpush.msra.mxu0 0.0
        %7779 = vmatpush.msra.mxu0 %v7756
        %7780 = vmatpush.msra.mxu0 %v7755
        %7781 = vmatmul.f32.gmra.mxu0 %v7760
        %v7782 = vpop.f32.mrf.mxu0
        %v7783 = vadd.f32 0.0, %v7782
        %7784 = vmatmul.f32.gmra.mxu0 %v7763
        %v7785 = vpop.f32.mrf.mxu0
        %v7786 = vadd.f32 0.0, %v7785
        %7787 = vdwg.mxu0
        %v7788 = vld [vmem:[#allocation16 + $0x5a0] sm:$0xff]
        %v7789 = vld [vmem:[#allocation16 + $0x5a8] sm:$0xff]
        %v7790 = vld [vmem:[#allocation16 + $0x5b0] sm:$0xff]
        %v7791 = vld [vmem:[#allocation16 + $0x5b8] sm:$0xff]
        %v7792 = vld [vmem:[#allocation16 + $0x5c0] sm:$0xff]
        %v7793 = vld [vmem:[#allocation16 + $0x5c8] sm:$0xff]
        %v7794 = vld [vmem:[#allocation16 + $0x5d0] sm:$0xff]
        %v7795 = vld [vmem:[#allocation16 + $0x5d8] sm:$0xff]
        %v7796 = vld [vmem:[#allocation16 + $0x5e0] sm:$0xff]
        %v7797 = vld [vmem:[#allocation16 + $0x5e8] sm:$0xff]
        %v7798 = vld [vmem:[#allocation16 + $0x5f0] sm:$0xff]
        %v7799 = vld [vmem:[#allocation16 + $0x5f8] sm:$0xff]
        %v7800 = vld [vmem:[#allocation16 + $0x600] sm:$0xff]
        %v7801 = vld [vmem:[#allocation16 + $0x608] sm:$0xff]
        %v7802 = vld [vmem:[#allocation16 + $0x610] sm:$0xff]
        %v7803 = vld [vmem:[#allocation16 + $0x618] sm:$0xff]
        %v7804 = vld [vmem:[#allocation16 + $0x620] sm:$0xff]
        %v7805 = vld [vmem:[#allocation16 + $0x628] sm:$0xff]
        %v7806 = vld [vmem:[#allocation16 + $0x630] sm:$0xff]
        %v7807 = vld [vmem:[#allocation16 + $0x638] sm:$0xff]
        %v7808 = vld [vmem:[#allocation16 + $0x640] sm:$0xff]
        %v7809 = vld [vmem:[#allocation16 + $0x648] sm:$0xff]
        %v7810 = vld [vmem:[#allocation16 + $0x650] sm:$0xff]
        %v7811 = vld [vmem:[#allocation16 + $0x658] sm:$0xff]
        %v7812 = vld [vmem:[#allocation16 + $0x660] sm:$0xff]
        %v7813 = vld [vmem:[#allocation16 + $0x668] sm:$0xff]
        %v7814 = vld [vmem:[#allocation16 + $0x670] sm:$0xff]
        %v7815 = vld [vmem:[#allocation16 + $0x678] sm:$0xff]
        %v7816 = vld [vmem:[#allocation16 + $0x680] sm:$0xff]
        %v7817 = vld [vmem:[#allocation16 + $0x688] sm:$0xff]
        %v7818 = vld [vmem:[#allocation16 + $0x690] sm:$0xff]
        %v7819 = vld [vmem:[#allocation16 + $0x698] sm:$0xff]
        %v7820 = vld [vmem:[#allocation16 + $0x6a0] sm:$0xff]
        %v7821 = vld [vmem:[#allocation16 + $0x6a8] sm:$0xff]
        %v7822 = vld [vmem:[#allocation16 + $0x6b0] sm:$0xff]
        %v7823 = vld [vmem:[#allocation16 + $0x6b8] sm:$0xff]
        %v7824 = vunpack.c.l.bf16 %v7788
        %v7825 = vunpack.c.h.bf16 %v7788
        %v7826 = vunpack.c.l.bf16 %v7789
        %v7827 = vunpack.c.h.bf16 %v7789
        %v7828 = vunpack.c.l.bf16 %v7790
        %v7829 = vunpack.c.h.bf16 %v7790
        %v7830 = vunpack.c.l.bf16 %v7791
        %v7831 = vunpack.c.h.bf16 %v7791
        %v7832 = vunpack.c.l.bf16 %v7792
        %v7833 = vunpack.c.h.bf16 %v7792
        %v7834 = vunpack.c.l.bf16 %v7793
        %v7835 = vunpack.c.h.bf16 %v7793
        %v7836 = vunpack.c.l.bf16 %v7794
        %v7837 = vunpack.c.h.bf16 %v7794
        %v7838 = vunpack.c.l.bf16 %v7795
        %v7839 = vunpack.c.h.bf16 %v7795
        %v7840 = vunpack.c.l.bf16 %v7796
        %v7841 = vunpack.c.h.bf16 %v7796
        %v7842 = vunpack.c.l.bf16 %v7797
        %v7843 = vunpack.c.h.bf16 %v7797
        %v7844 = vunpack.c.l.bf16 %v7798
        %v7845 = vunpack.c.h.bf16 %v7798
        %v7846 = vunpack.c.l.bf16 %v7799
        %v7847 = vunpack.c.h.bf16 %v7799
        %v7848 = vunpack.c.l.bf16 %v7800
        %v7849 = vunpack.c.h.bf16 %v7800
        %v7850 = vunpack.c.l.bf16 %v7801
        %v7851 = vunpack.c.h.bf16 %v7801
        %v7852 = vunpack.c.l.bf16 %v7802
        %v7853 = vunpack.c.h.bf16 %v7802
        %v7854 = vunpack.c.l.bf16 %v7803
        %v7855 = vunpack.c.h.bf16 %v7803
        %v7856 = vunpack.c.l.bf16 %v7804
        %v7857 = vunpack.c.h.bf16 %v7804
        %v7858 = vunpack.c.l.bf16 %v7805
        %v7859 = vunpack.c.h.bf16 %v7805
        %v7860 = vunpack.c.l.bf16 %v7806
        %v7861 = vunpack.c.h.bf16 %v7806
        %v7862 = vunpack.c.l.bf16 %v7807
        %v7863 = vunpack.c.h.bf16 %v7807
        %v7864 = vunpack.c.l.bf16 %v7808
        %v7865 = vunpack.c.h.bf16 %v7808
        %v7866 = vunpack.c.l.bf16 %v7809
        %v7867 = vunpack.c.h.bf16 %v7809
        %v7868 = vunpack.c.l.bf16 %v7810
        %v7869 = vunpack.c.h.bf16 %v7810
        %v7870 = vunpack.c.l.bf16 %v7811
        %v7871 = vunpack.c.h.bf16 %v7811
        %v7872 = vunpack.c.l.bf16 %v7812
        %v7873 = vunpack.c.h.bf16 %v7812
        %v7874 = vunpack.c.l.bf16 %v7813
        %v7875 = vunpack.c.h.bf16 %v7813
        %v7876 = vunpack.c.l.bf16 %v7814
        %v7877 = vunpack.c.h.bf16 %v7814
        %v7878 = vunpack.c.l.bf16 %v7815
        %v7879 = vunpack.c.h.bf16 %v7815
        %v7880 = vunpack.c.l.bf16 %v7816
        %v7881 = vunpack.c.h.bf16 %v7816
        %v7882 = vunpack.c.l.bf16 %v7817
        %v7883 = vunpack.c.h.bf16 %v7817
        %v7884 = vunpack.c.l.bf16 %v7818
        %v7885 = vunpack.c.h.bf16 %v7818
        %v7886 = vunpack.c.l.bf16 %v7819
        %v7887 = vunpack.c.h.bf16 %v7819
        %v7888 = vunpack.c.l.bf16 %v7820
        %v7889 = vunpack.c.h.bf16 %v7820
        %v7890 = vunpack.c.l.bf16 %v7821
        %v7891 = vunpack.c.h.bf16 %v7821
        %v7892 = vunpack.c.l.bf16 %v7822
        %v7893 = vunpack.c.h.bf16 %v7822
        %v7894 = vunpack.c.l.bf16 %v7823
        %v7895 = vunpack.c.h.bf16 %v7823
        %v7897 = vsel %vm5688, %v7783, 0
        %v7900 = vsel %vm5688, %v7786, 0
        %7902 = vmatpush.msra.mxu0 0.0
        %7903 = vmatpush.msra.mxu0 0.0
        %7904 = vmatpush.msra.mxu0 0.0
        %7905 = vmatpush.msra.mxu0 0.0
        %7906 = vmatpush.msra.mxu0 %v7890
        %7907 = vmatpush.msra.mxu0 %v7884
        %7908 = vmatpush.msra.mxu0 %v7878
        %7909 = vmatpush.msra.mxu0 %v7872
        %7910 = vmatpush.msra.mxu0 %v7866
        %7911 = vmatpush.msra.mxu0 %v7860
        %7912 = vmatpush.msra.mxu0 %v7854
        %7913 = vmatpush.msra.mxu0 %v7848
        %7914 = vmatpush.msra.mxu0 %v7842
        %7915 = vmatpush.msra.mxu0 %v7836
        %7916 = vmatpush.msra.mxu0 %v7830
        %7917 = vmatpush.msra.mxu0 %v7824
        %7918 = vmatmul.f32.gmra.mxu0 %v7897
        %v7919 = vpop.f32.mrf.mxu0
        %v7920 = vadd.f32 0.0, %v7919
        %7921 = vmatmul.f32.gmra.mxu0 %v7900
        %v7922 = vpop.f32.mrf.mxu0
        %v7923 = vadd.f32 0.0, %v7922
        %7924 = vdwg.mxu0
        %7925 = vmatpush.msra.mxu0 0.0
        %7926 = vmatpush.msra.mxu0 0.0
        %7927 = vmatpush.msra.mxu0 0.0
        %7928 = vmatpush.msra.mxu0 0.0
        %7929 = vmatpush.msra.mxu0 %v7891
        %7930 = vmatpush.msra.mxu0 %v7885
        %7931 = vmatpush.msra.mxu0 %v7879
        %7932 = vmatpush.msra.mxu0 %v7873
        %7933 = vmatpush.msra.mxu0 %v7867
        %7934 = vmatpush.msra.mxu0 %v7861
        %7935 = vmatpush.msra.mxu0 %v7855
        %7936 = vmatpush.msra.mxu0 %v7849
        %7937 = vmatpush.msra.mxu0 %v7843
        %7938 = vmatpush.msra.mxu0 %v7837
        %7939 = vmatpush.msra.mxu0 %v7831
        %7940 = vmatpush.msra.mxu0 %v7825
        %7941 = vmatmul.f32.gmra.mxu0 %v7897
        %v7942 = vpop.f32.mrf.mxu0
        %v7943 = vadd.f32 0.0, %v7942
        %7944 = vmatmul.f32.gmra.mxu0 %v7900
        %v7945 = vpop.f32.mrf.mxu0
        %v7946 = vadd.f32 0.0, %v7945
        %7947 = vdwg.mxu0
        %7948 = vmatpush.msra.mxu0 0.0
        %7949 = vmatpush.msra.mxu0 0.0
        %7950 = vmatpush.msra.mxu0 0.0
        %7951 = vmatpush.msra.mxu0 0.0
        %7952 = vmatpush.msra.mxu0 %v7892
        %7953 = vmatpush.msra.mxu0 %v7886
        %7954 = vmatpush.msra.mxu0 %v7880
        %7955 = vmatpush.msra.mxu0 %v7874
        %7956 = vmatpush.msra.mxu0 %v7868
        %7957 = vmatpush.msra.mxu0 %v7862
        %7958 = vmatpush.msra.mxu0 %v7856
        %7959 = vmatpush.msra.mxu0 %v7850
        %7960 = vmatpush.msra.mxu0 %v7844
        %7961 = vmatpush.msra.mxu0 %v7838
        %7962 = vmatpush.msra.mxu0 %v7832
        %7963 = vmatpush.msra.mxu0 %v7826
        %7964 = vmatmul.f32.gmra.mxu0 %v7897
        %v7965 = vpop.f32.mrf.mxu0
        %v7966 = vadd.f32 0.0, %v7965
        %7967 = vmatmul.f32.gmra.mxu0 %v7900
        %v7968 = vpop.f32.mrf.mxu0
        %v7969 = vadd.f32 0.0, %v7968
        %7970 = vdwg.mxu0
        %7971 = vmatpush.msra.mxu0 0.0
        %7972 = vmatpush.msra.mxu0 0.0
        %7973 = vmatpush.msra.mxu0 0.0
        %7974 = vmatpush.msra.mxu0 0.0
        %7975 = vmatpush.msra.mxu0 %v7893
        %7976 = vmatpush.msra.mxu0 %v7887
        %7977 = vmatpush.msra.mxu0 %v7881
        %7978 = vmatpush.msra.mxu0 %v7875
        %7979 = vmatpush.msra.mxu0 %v7869
        %7980 = vmatpush.msra.mxu0 %v7863
        %7981 = vmatpush.msra.mxu0 %v7857
        %7982 = vmatpush.msra.mxu0 %v7851
        %7983 = vmatpush.msra.mxu0 %v7845
        %7984 = vmatpush.msra.mxu0 %v7839
        %7985 = vmatpush.msra.mxu0 %v7833
        %7986 = vmatpush.msra.mxu0 %v7827
        %7987 = vmatmul.f32.gmra.mxu0 %v7897
        %v7988 = vpop.f32.mrf.mxu0
        %v7989 = vadd.f32 0.0, %v7988
        %7990 = vmatmul.f32.gmra.mxu0 %v7900
        %v7991 = vpop.f32.mrf.mxu0
        %v7992 = vadd.f32 0.0, %v7991
        %7993 = vdwg.mxu0
        %7994 = vmatpush.msra.mxu0 0.0
        %7995 = vmatpush.msra.mxu0 0.0
        %7996 = vmatpush.msra.mxu0 0.0
        %7997 = vmatpush.msra.mxu0 0.0
        %7998 = vmatpush.msra.mxu0 %v7894
        %7999 = vmatpush.msra.mxu0 %v7888
        %8000 = vmatpush.msra.mxu0 %v7882
        %8001 = vmatpush.msra.mxu0 %v7876
        %8002 = vmatpush.msra.mxu0 %v7870
        %8003 = vmatpush.msra.mxu0 %v7864
        %8004 = vmatpush.msra.mxu0 %v7858
        %8005 = vmatpush.msra.mxu0 %v7852
        %8006 = vmatpush.msra.mxu0 %v7846
        %8007 = vmatpush.msra.mxu0 %v7840
        %8008 = vmatpush.msra.mxu0 %v7834
        %8009 = vmatpush.msra.mxu0 %v7828
        %8010 = vmatmul.f32.gmra.mxu0 %v7897
        %v8011 = vpop.f32.mrf.mxu0
        %v8012 = vadd.f32 0.0, %v8011
        %8013 = vmatmul.f32.gmra.mxu0 %v7900
        %v8014 = vpop.f32.mrf.mxu0
        %v8015 = vadd.f32 0.0, %v8014
        %8016 = vdwg.mxu0
        %8017 = vmatpush.msra.mxu0 0.0
        %8018 = vmatpush.msra.mxu0 0.0
        %8019 = vmatpush.msra.mxu0 0.0
        %8020 = vmatpush.msra.mxu0 0.0
        %8021 = vmatpush.msra.mxu0 %v7895
        %8022 = vmatpush.msra.mxu0 %v7889
        %8023 = vmatpush.msra.mxu0 %v7883
        %8024 = vmatpush.msra.mxu0 %v7877
        %8025 = vmatpush.msra.mxu0 %v7871
        %8026 = vmatpush.msra.mxu0 %v7865
        %8027 = vmatpush.msra.mxu0 %v7859
        %8028 = vmatpush.msra.mxu0 %v7853
        %8029 = vmatpush.msra.mxu0 %v7847
        %8030 = vmatpush.msra.mxu0 %v7841
        %8031 = vmatpush.msra.mxu0 %v7835
        %8032 = vmatpush.msra.mxu0 %v7829
        %8033 = vmatmul.f32.gmra.mxu0 %v7897
        %v8034 = vpop.f32.mrf.mxu0
        %v8035 = vadd.f32 0.0, %v8034
        %8036 = vmatmul.f32.gmra.mxu0 %v7900
        %v8037 = vpop.f32.mrf.mxu0
        %v8038 = vadd.f32 0.0, %v8037
        %8039 = vdwg.mxu0
        %v8040 = vadd.f32 %v7626, %v7920
        %v8041 = vadd.f32 %v7627, %v7943
        %v8042 = vadd.f32 %v7628, %v7966
        %v8043 = vadd.f32 %v7629, %v7989
        %v8044 = vadd.f32 %v7630, %v8012
        %v8045 = vadd.f32 %v7631, %v8035
        %v8046 = vadd.f32 %v7632, %v7923
        %v8047 = vadd.f32 %v7633, %v7946
        %v8048 = vadd.f32 %v7634, %v7969
        %v8049 = vadd.f32 %v7635, %v7992
        %v8050 = vadd.f32 %v7636, %v8015
        %v8051 = vadd.f32 %v7637, %v8038
        %8054 = vrot.lane.b32.xlu0 %v2133, 64
        %v8055 = vpop.permute.xlu0 %8054
        %8056 = vrot.lane.b32.xlu0 %v2271, 64
        %v8057 = vpop.permute.xlu0 %8056
        %8058 = vrot.lane.b32.xlu0 %v2136, 64
        %v8059 = vpop.permute.xlu0 %8058
        %8060 = vrot.lane.b32.xlu0 %v2274, 64
        %v8061 = vpop.permute.xlu0 %8060
        %v8062 = vsel %vm6469, %v8055, %v8057
        %v8063 = vsel %vm6469, %v8059, %v8061
        %8066 = vrot.lane.b32.xlu0 %v3839, 64
        %v8067 = vpop.permute.xlu0 %8066
        %8068 = vrot.lane.b32.xlu0 %v3977, 64
        %v8069 = vpop.permute.xlu0 %8068
        %8070 = vrot.lane.b32.xlu0 %v3842, 64
        %v8071 = vpop.permute.xlu0 %8070
        %8072 = vrot.lane.b32.xlu0 %v3980, 64
        %v8073 = vpop.permute.xlu0 %8072
        %v8074 = vsel %vm6469, %v8067, %v8069
        %v8075 = vsel %vm6469, %v8071, %v8073
        %v8076 = vsel %vm5688, %v8062, 0
        %v8078 = vsel %vm5688, %v8063, 0
        %v8080 = vsel %vm5688, %v8074, 0
        %v8082 = vsel %vm5688, %v8075, 0
        %8084 = vmatpush.xpose.msra.mxu0 0.0
        %8085 = vmatpush.xpose.msra.mxu0 0.0
        %8086 = vmatpush.xpose.msra.mxu0 0.0
        %8087 = vmatpush.xpose.msra.mxu0 0.0
        %8088 = vmatpush.xpose.msra.mxu0 0.0
        %8089 = vmatpush.xpose.msra.mxu0 0.0
        %8090 = vmatpush.xpose.msra.mxu0 0.0
        %8091 = vmatpush.xpose.msra.mxu0 0.0
        %8092 = vmatpush.xpose.msra.mxu0 0.0
        %8093 = vmatpush.xpose.msra.mxu0 0.0
        %8094 = vmatpush.xpose.msra.mxu0 0.0
        %8095 = vmatpush.xpose.msra.mxu0 0.0
        %8096 = vmatpush.xpose.msra.mxu0 0.0
        %8097 = vmatpush.xpose.msra.mxu0 0.0
        %8098 = vmatpush.xpose.msra.mxu0 %v8082
        %8099 = vmatpush.xpose.msra.mxu0 %v8080
        %8100 = vmatmul.f32.gmra.mxu0 %v8076
        %v8101 = vpop.f32.mrf.mxu0
        %v8102 = vadd.f32 0.0, %v8101
        %8103 = vmatmul.f32.gmra.mxu0 %v8078
        %v8104 = vpop.f32.mrf.mxu0
        %v8105 = vadd.f32 0.0, %v8104
        %8106 = vdwg.mxu0
        %v8107 = vmul.f32 %v8102, 0.10206208
        %v8108 = vmul.f32 %v8105, 0.10206208
        %v8109 = vsel %vm5726, %v8107, -inf
        %8110 = vmax.xlane.f32.xlu0 %v8109
        %v8111 = vpop.xlane.xlu0 %8110
        %v8112 = vsel %vm5726, %v8108, -inf
        %8113 = vmax.xlane.f32.xlu0 %v8112
        %v8114 = vpop.xlane.xlu0 %8113
        %v8115 = vsub.f32 %v8107, %v8111
        %v8116 = vsub.f32 %v8108, %v8114
        %v8117 = vmul.f32 %v8115, 1.442695
        %v8118 = vpow.pop %v8117
        %v8119 = vmul.f32 %v8116, 1.442695
        %v8120 = vpow.pop %v8119
        %v8121 = vsel %vm5726, %v8118, 0.0
        %8122 = vadd.xlane.f32.xlu0 %v8121
        %v8123 = vpop.xlane.xlu0 %8122
        %v8124 = vsel %vm5726, %v8120, 0.0
        %8125 = vadd.xlane.f32.xlu0 %v8124
        %v8126 = vpop.xlane.xlu0 %8125
        %v8127 = vrcp.pop %v8123
        %v8128 = vmul.f32 %v8123, %v8127
        %v8129 = vsub.f32 1.0, %v8128
        %v8130 = vmul.f32 %v8127, %v8129
        %v8131 = vadd.f32 %v8127, %v8130
        %vm8132 = vweird.f32 %v8123
        %vm8133 = vweird.f32 %v8127
        %vm8134 = vmor %vm8132, %vm8133
        %v8135 = vsel %vm8134, %v8127, %v8131
        %v8136 = vand.u32 2147483647, %v8123
        %vm8137 = vcmp.eq.f32.partialorder %v8136, 8.507059e+37
        %v8138 = vand.u32 %v8123, 2147483648
        %v8139 = vor.u32 1.1754944e-38, %v8138
        %v8140 = vsel %vm8137, %v8139, %v8135
        %v8141 = vmul.f32 %v8118, %v8140
        %v8142 = vrcp.pop %v8126
        %v8143 = vmul.f32 %v8126, %v8142
        %v8144 = vsub.f32 1.0, %v8143
        %v8145 = vmul.f32 %v8142, %v8144
        %v8146 = vadd.f32 %v8142, %v8145
        %vm8147 = vweird.f32 %v8126
        %vm8148 = vweird.f32 %v8142
        %vm8149 = vmor %vm8147, %vm8148
        %v8150 = vsel %vm8149, %v8142, %v8146
        %v8151 = vand.u32 2147483647, %v8126
        %vm8152 = vcmp.eq.f32.partialorder %v8151, 8.507059e+37
        %v8153 = vand.u32 %v8126, 2147483648
        %v8154 = vor.u32 1.1754944e-38, %v8153
        %v8155 = vsel %vm8152, %v8154, %v8150
        %v8156 = vmul.f32 %v8120, %v8155
        %8159 = vrot.lane.b32.xlu0 %v5545, 64
        %v8160 = vpop.permute.xlu0 %8159
        %8161 = vrot.lane.b32.xlu0 %v5683, 64
        %v8162 = vpop.permute.xlu0 %8161
        %8163 = vrot.lane.b32.xlu0 %v5548, 64
        %v8164 = vpop.permute.xlu0 %8163
        %8165 = vrot.lane.b32.xlu0 %v5686, 64
        %v8166 = vpop.permute.xlu0 %8165
        %v8167 = vsel %vm6469, %v8160, %v8162
        %v8168 = vsel %vm6469, %v8164, %v8166
        %v8172 = vsel %vm5726, %v8141, 0
        %v8175 = vsel %vm5726, %v8156, 0
        %8177 = vmatpush.msra.mxu0 0.0
        %8178 = vmatpush.msra.mxu0 0.0
        %8179 = vmatpush.msra.mxu0 0.0
        %8180 = vmatpush.msra.mxu0 0.0
        %8181 = vmatpush.msra.mxu0 0.0
        %8182 = vmatpush.msra.mxu0 0.0
        %8183 = vmatpush.msra.mxu0 0.0
        %8184 = vmatpush.msra.mxu0 0.0
        %8185 = vmatpush.msra.mxu0 0.0
        %8186 = vmatpush.msra.mxu0 0.0
        %8187 = vmatpush.msra.mxu0 0.0
        %8188 = vmatpush.msra.mxu0 0.0
        %8189 = vmatpush.msra.mxu0 0.0
        %8190 = vmatpush.msra.mxu0 0.0
        %8191 = vmatpush.msra.mxu0 %v8168
        %8192 = vmatpush.msra.mxu0 %v8167
        %8193 = vmatmul.f32.gmra.mxu0 %v8172
        %v8194 = vpop.f32.mrf.mxu0
        %v8195 = vadd.f32 0.0, %v8194
        %8196 = vmatmul.f32.gmra.mxu0 %v8175
        %v8197 = vpop.f32.mrf.mxu0
        %v8198 = vadd.f32 0.0, %v8197
        %8199 = vdwg.mxu0
        %v8200 = vld [vmem:[#allocation16 + $0x6c0] sm:$0xff]
        %v8201 = vld [vmem:[#allocation16 + $0x6c8] sm:$0xff]
        %v8202 = vld [vmem:[#allocation16 + $0x6d0] sm:$0xff]
        %v8203 = vld [vmem:[#allocation16 + $0x6d8] sm:$0xff]
        %v8204 = vld [vmem:[#allocation16 + $0x6e0] sm:$0xff]
        %v8205 = vld [vmem:[#allocation16 + $0x6e8] sm:$0xff]
        %v8206 = vld [vmem:[#allocation16 + $0x6f0] sm:$0xff]
        %v8207 = vld [vmem:[#allocation16 + $0x6f8] sm:$0xff]
        %v8208 = vld [vmem:[#allocation16 + $0x700] sm:$0xff]
        %v8209 = vld [vmem:[#allocation16 + $0x708] sm:$0xff]
        %v8210 = vld [vmem:[#allocation16 + $0x710] sm:$0xff]
        %v8211 = vld [vmem:[#allocation16 + $0x718] sm:$0xff]
        %v8212 = vld [vmem:[#allocation16 + $0x720] sm:$0xff]
        %v8213 = vld [vmem:[#allocation16 + $0x728] sm:$0xff]
        %v8214 = vld [vmem:[#allocation16 + $0x730] sm:$0xff]
        %v8215 = vld [vmem:[#allocation16 + $0x738] sm:$0xff]
        %v8216 = vld [vmem:[#allocation16 + $0x740] sm:$0xff]
        %v8217 = vld [vmem:[#allocation16 + $0x748] sm:$0xff]
        %v8218 = vld [vmem:[#allocation16 + $0x750] sm:$0xff]
        %v8219 = vld [vmem:[#allocation16 + $0x758] sm:$0xff]
        %v8220 = vld [vmem:[#allocation16 + $0x760] sm:$0xff]
        %v8221 = vld [vmem:[#allocation16 + $0x768] sm:$0xff]
        %v8222 = vld [vmem:[#allocation16 + $0x770] sm:$0xff]
        %v8223 = vld [vmem:[#allocation16 + $0x778] sm:$0xff]
        %v8224 = vld [vmem:[#allocation16 + $0x780] sm:$0xff]
        %v8225 = vld [vmem:[#allocation16 + $0x788] sm:$0xff]
        %v8226 = vld [vmem:[#allocation16 + $0x790] sm:$0xff]
        %v8227 = vld [vmem:[#allocation16 + $0x798] sm:$0xff]
        %v8228 = vld [vmem:[#allocation16 + $0x7a0] sm:$0xff]
        %v8229 = vld [vmem:[#allocation16 + $0x7a8] sm:$0xff]
        %v8230 = vld [vmem:[#allocation16 + $0x7b0] sm:$0xff]
        %v8231 = vld [vmem:[#allocation16 + $0x7b8] sm:$0xff]
        %v8232 = vld [vmem:[#allocation16 + $0x7c0] sm:$0xff]
        %v8233 = vld [vmem:[#allocation16 + $0x7c8] sm:$0xff]
        %v8234 = vld [vmem:[#allocation16 + $0x7d0] sm:$0xff]
        %v8235 = vld [vmem:[#allocation16 + $0x7d8] sm:$0xff]
        %v8236 = vunpack.c.l.bf16 %v8200
        %v8237 = vunpack.c.h.bf16 %v8200
        %v8238 = vunpack.c.l.bf16 %v8201
        %v8239 = vunpack.c.h.bf16 %v8201
        %v8240 = vunpack.c.l.bf16 %v8202
        %v8241 = vunpack.c.h.bf16 %v8202
        %v8242 = vunpack.c.l.bf16 %v8203
        %v8243 = vunpack.c.h.bf16 %v8203
        %v8244 = vunpack.c.l.bf16 %v8204
        %v8245 = vunpack.c.h.bf16 %v8204
        %v8246 = vunpack.c.l.bf16 %v8205
        %v8247 = vunpack.c.h.bf16 %v8205
        %v8248 = vunpack.c.l.bf16 %v8206
        %v8249 = vunpack.c.h.bf16 %v8206
        %v8250 = vunpack.c.l.bf16 %v8207
        %v8251 = vunpack.c.h.bf16 %v8207
        %v8252 = vunpack.c.l.bf16 %v8208
        %v8253 = vunpack.c.h.bf16 %v8208
        %v8254 = vunpack.c.l.bf16 %v8209
        %v8255 = vunpack.c.h.bf16 %v8209
        %v8256 = vunpack.c.l.bf16 %v8210
        %v8257 = vunpack.c.h.bf16 %v8210
        %v8258 = vunpack.c.l.bf16 %v8211
        %v8259 = vunpack.c.h.bf16 %v8211
        %v8260 = vunpack.c.l.bf16 %v8212
        %v8261 = vunpack.c.h.bf16 %v8212
        %v8262 = vunpack.c.l.bf16 %v8213
        %v8263 = vunpack.c.h.bf16 %v8213
        %v8264 = vunpack.c.l.bf16 %v8214
        %v8265 = vunpack.c.h.bf16 %v8214
        %v8266 = vunpack.c.l.bf16 %v8215
        %v8267 = vunpack.c.h.bf16 %v8215
        %v8268 = vunpack.c.l.bf16 %v8216
        %v8269 = vunpack.c.h.bf16 %v8216
        %v8270 = vunpack.c.l.bf16 %v8217
        %v8271 = vunpack.c.h.bf16 %v8217
        %v8272 = vunpack.c.l.bf16 %v8218
        %v8273 = vunpack.c.h.bf16 %v8218
        %v8274 = vunpack.c.l.bf16 %v8219
        %v8275 = vunpack.c.h.bf16 %v8219
        %v8276 = vunpack.c.l.bf16 %v8220
        %v8277 = vunpack.c.h.bf16 %v8220
        %v8278 = vunpack.c.l.bf16 %v8221
        %v8279 = vunpack.c.h.bf16 %v8221
        %v8280 = vunpack.c.l.bf16 %v8222
        %v8281 = vunpack.c.h.bf16 %v8222
        %v8282 = vunpack.c.l.bf16 %v8223
        %v8283 = vunpack.c.h.bf16 %v8223
        %v8284 = vunpack.c.l.bf16 %v8224
        %v8285 = vunpack.c.h.bf16 %v8224
        %v8286 = vunpack.c.l.bf16 %v8225
        %v8287 = vunpack.c.h.bf16 %v8225
        %v8288 = vunpack.c.l.bf16 %v8226
        %v8289 = vunpack.c.h.bf16 %v8226
        %v8290 = vunpack.c.l.bf16 %v8227
        %v8291 = vunpack.c.h.bf16 %v8227
        %v8292 = vunpack.c.l.bf16 %v8228
        %v8293 = vunpack.c.h.bf16 %v8228
        %v8294 = vunpack.c.l.bf16 %v8229
        %v8295 = vunpack.c.h.bf16 %v8229
        %v8296 = vunpack.c.l.bf16 %v8230
        %v8297 = vunpack.c.h.bf16 %v8230
        %v8298 = vunpack.c.l.bf16 %v8231
        %v8299 = vunpack.c.h.bf16 %v8231
        %v8300 = vunpack.c.l.bf16 %v8232
        %v8301 = vunpack.c.h.bf16 %v8232
        %v8302 = vunpack.c.l.bf16 %v8233
        %v8303 = vunpack.c.h.bf16 %v8233
        %v8304 = vunpack.c.l.bf16 %v8234
        %v8305 = vunpack.c.h.bf16 %v8234
        %v8306 = vunpack.c.l.bf16 %v8235
        %v8307 = vunpack.c.h.bf16 %v8235
        %v8309 = vsel %vm5688, %v8195, 0
        %v8312 = vsel %vm5688, %v8198, 0
        %8314 = vmatpush.msra.mxu0 0.0
        %8315 = vmatpush.msra.mxu0 0.0
        %8316 = vmatpush.msra.mxu0 0.0
        %8317 = vmatpush.msra.mxu0 0.0
        %8318 = vmatpush.msra.mxu0 %v8302
        %8319 = vmatpush.msra.mxu0 %v8296
        %8320 = vmatpush.msra.mxu0 %v8290
        %8321 = vmatpush.msra.mxu0 %v8284
        %8322 = vmatpush.msra.mxu0 %v8278
        %8323 = vmatpush.msra.mxu0 %v8272
        %8324 = vmatpush.msra.mxu0 %v8266
        %8325 = vmatpush.msra.mxu0 %v8260
        %8326 = vmatpush.msra.mxu0 %v8254
        %8327 = vmatpush.msra.mxu0 %v8248
        %8328 = vmatpush.msra.mxu0 %v8242
        %8329 = vmatpush.msra.mxu0 %v8236
        %8330 = vmatmul.f32.gmra.mxu0 %v8309
        %v8331 = vpop.f32.mrf.mxu0
        %v8332 = vadd.f32 0.0, %v8331
        %8333 = vmatmul.f32.gmra.mxu0 %v8312
        %v8334 = vpop.f32.mrf.mxu0
        %v8335 = vadd.f32 0.0, %v8334
        %8336 = vdwg.mxu0
        %8337 = vmatpush.msra.mxu0 0.0
        %8338 = vmatpush.msra.mxu0 0.0
        %8339 = vmatpush.msra.mxu0 0.0
        %8340 = vmatpush.msra.mxu0 0.0
        %8341 = vmatpush.msra.mxu0 %v8303
        %8342 = vmatpush.msra.mxu0 %v8297
        %8343 = vmatpush.msra.mxu0 %v8291
        %8344 = vmatpush.msra.mxu0 %v8285
        %8345 = vmatpush.msra.mxu0 %v8279
        %8346 = vmatpush.msra.mxu0 %v8273
        %8347 = vmatpush.msra.mxu0 %v8267
        %8348 = vmatpush.msra.mxu0 %v8261
        %8349 = vmatpush.msra.mxu0 %v8255
        %8350 = vmatpush.msra.mxu0 %v8249
        %8351 = vmatpush.msra.mxu0 %v8243
        %8352 = vmatpush.msra.mxu0 %v8237
        %8353 = vmatmul.f32.gmra.mxu0 %v8309
        %v8354 = vpop.f32.mrf.mxu0
        %v8355 = vadd.f32 0.0, %v8354
        %8356 = vmatmul.f32.gmra.mxu0 %v8312
        %v8357 = vpop.f32.mrf.mxu0
        %v8358 = vadd.f32 0.0, %v8357
        %8359 = vdwg.mxu0
        %8360 = vmatpush.msra.mxu0 0.0
        %8361 = vmatpush.msra.mxu0 0.0
        %8362 = vmatpush.msra.mxu0 0.0
        %8363 = vmatpush.msra.mxu0 0.0
        %8364 = vmatpush.msra.mxu0 %v8304
        %8365 = vmatpush.msra.mxu0 %v8298
        %8366 = vmatpush.msra.mxu0 %v8292
        %8367 = vmatpush.msra.mxu0 %v8286
        %8368 = vmatpush.msra.mxu0 %v8280
        %8369 = vmatpush.msra.mxu0 %v8274
        %8370 = vmatpush.msra.mxu0 %v8268
        %8371 = vmatpush.msra.mxu0 %v8262
        %8372 = vmatpush.msra.mxu0 %v8256
        %8373 = vmatpush.msra.mxu0 %v8250
        %8374 = vmatpush.msra.mxu0 %v8244
        %8375 = vmatpush.msra.mxu0 %v8238
        %8376 = vmatmul.f32.gmra.mxu0 %v8309
        %v8377 = vpop.f32.mrf.mxu0
        %v8378 = vadd.f32 0.0, %v8377
        %8379 = vmatmul.f32.gmra.mxu0 %v8312
        %v8380 = vpop.f32.mrf.mxu0
        %v8381 = vadd.f32 0.0, %v8380
        %8382 = vdwg.mxu0
        %8383 = vmatpush.msra.mxu0 0.0
        %8384 = vmatpush.msra.mxu0 0.0
        %8385 = vmatpush.msra.mxu0 0.0
        %8386 = vmatpush.msra.mxu0 0.0
        %8387 = vmatpush.msra.mxu0 %v8305
        %8388 = vmatpush.msra.mxu0 %v8299
        %8389 = vmatpush.msra.mxu0 %v8293
        %8390 = vmatpush.msra.mxu0 %v8287
        %8391 = vmatpush.msra.mxu0 %v8281
        %8392 = vmatpush.msra.mxu0 %v8275
        %8393 = vmatpush.msra.mxu0 %v8269
        %8394 = vmatpush.msra.mxu0 %v8263
        %8395 = vmatpush.msra.mxu0 %v8257
        %8396 = vmatpush.msra.mxu0 %v8251
        %8397 = vmatpush.msra.mxu0 %v8245
        %8398 = vmatpush.msra.mxu0 %v8239
        %8399 = vmatmul.f32.gmra.mxu0 %v8309
        %v8400 = vpop.f32.mrf.mxu0
        %v8401 = vadd.f32 0.0, %v8400
        %8402 = vmatmul.f32.gmra.mxu0 %v8312
        %v8403 = vpop.f32.mrf.mxu0
        %v8404 = vadd.f32 0.0, %v8403
        %8405 = vdwg.mxu0
        %8406 = vmatpush.msra.mxu0 0.0
        %8407 = vmatpush.msra.mxu0 0.0
        %8408 = vmatpush.msra.mxu0 0.0
        %8409 = vmatpush.msra.mxu0 0.0
        %8410 = vmatpush.msra.mxu0 %v8306
        %8411 = vmatpush.msra.mxu0 %v8300
        %8412 = vmatpush.msra.mxu0 %v8294
        %8413 = vmatpush.msra.mxu0 %v8288
        %8414 = vmatpush.msra.mxu0 %v8282
        %8415 = vmatpush.msra.mxu0 %v8276
        %8416 = vmatpush.msra.mxu0 %v8270
        %8417 = vmatpush.msra.mxu0 %v8264
        %8418 = vmatpush.msra.mxu0 %v8258
        %8419 = vmatpush.msra.mxu0 %v8252
        %8420 = vmatpush.msra.mxu0 %v8246
        %8421 = vmatpush.msra.mxu0 %v8240
        %8422 = vmatmul.f32.gmra.mxu0 %v8309
        %v8423 = vpop.f32.mrf.mxu0
        %v8424 = vadd.f32 0.0, %v8423
        %8425 = vmatmul.f32.gmra.mxu0 %v8312
        %v8426 = vpop.f32.mrf.mxu0
        %v8427 = vadd.f32 0.0, %v8426
        %8428 = vdwg.mxu0
        %8429 = vmatpush.msra.mxu0 0.0
        %8430 = vmatpush.msra.mxu0 0.0
        %8431 = vmatpush.msra.mxu0 0.0
        %8432 = vmatpush.msra.mxu0 0.0
        %8433 = vmatpush.msra.mxu0 %v8307
        %8434 = vmatpush.msra.mxu0 %v8301
        %8435 = vmatpush.msra.mxu0 %v8295
        %8436 = vmatpush.msra.mxu0 %v8289
        %8437 = vmatpush.msra.mxu0 %v8283
        %8438 = vmatpush.msra.mxu0 %v8277
        %8439 = vmatpush.msra.mxu0 %v8271
        %8440 = vmatpush.msra.mxu0 %v8265
        %8441 = vmatpush.msra.mxu0 %v8259
        %8442 = vmatpush.msra.mxu0 %v8253
        %8443 = vmatpush.msra.mxu0 %v8247
        %8444 = vmatpush.msra.mxu0 %v8241
        %8445 = vmatmul.f32.gmra.mxu0 %v8309
        %v8446 = vpop.f32.mrf.mxu0
        %v8447 = vadd.f32 0.0, %v8446
        %8448 = vmatmul.f32.gmra.mxu0 %v8312
        %v8449 = vpop.f32.mrf.mxu0
        %v8450 = vadd.f32 0.0, %v8449
        %8451 = vdwg.mxu0
        %v8452 = vadd.f32 %v8040, %v8332
        %v8453 = vadd.f32 %v8041, %v8355
        %v8454 = vadd.f32 %v8042, %v8378
        %v8455 = vadd.f32 %v8043, %v8401
        %v8456 = vadd.f32 %v8044, %v8424
        %v8457 = vadd.f32 %v8045, %v8447
        %v8458 = vadd.f32 %v8046, %v8335
        %v8459 = vadd.f32 %v8047, %v8358
        %v8460 = vadd.f32 %v8048, %v8381
        %v8461 = vadd.f32 %v8049, %v8404
        %v8462 = vadd.f32 %v8050, %v8427
        %v8463 = vadd.f32 %v8051, %v8450
        %8464 = vrot.lane.b32.xlu0 %v2271, 96
        %v8465 = vpop.permute.xlu0 %8464
        %8466 = vrot.lane.b32.xlu0 %v2274, 96
        %v8467 = vpop.permute.xlu0 %8466
        %8468 = vrot.lane.b32.xlu0 %v3977, 96
        %v8469 = vpop.permute.xlu0 %8468
        %8470 = vrot.lane.b32.xlu0 %v3980, 96
        %v8471 = vpop.permute.xlu0 %8470
        %v8472 = vsel %vm5688, %v8465, 0
        %v8474 = vsel %vm5688, %v8467, 0
        %v8476 = vsel %vm5688, %v8469, 0
        %v8478 = vsel %vm5688, %v8471, 0
        %8480 = vmatpush.xpose.msra.mxu0 0.0
        %8481 = vmatpush.xpose.msra.mxu0 0.0
        %8482 = vmatpush.xpose.msra.mxu0 0.0
        %8483 = vmatpush.xpose.msra.mxu0 0.0
        %8484 = vmatpush.xpose.msra.mxu0 0.0
        %8485 = vmatpush.xpose.msra.mxu0 0.0
        %8486 = vmatpush.xpose.msra.mxu0 0.0
        %8487 = vmatpush.xpose.msra.mxu0 0.0
        %8488 = vmatpush.xpose.msra.mxu0 0.0
        %8489 = vmatpush.xpose.msra.mxu0 0.0
        %8490 = vmatpush.xpose.msra.mxu0 0.0
        %8491 = vmatpush.xpose.msra.mxu0 0.0
        %8492 = vmatpush.xpose.msra.mxu0 0.0
        %8493 = vmatpush.xpose.msra.mxu0 0.0
        %8494 = vmatpush.xpose.msra.mxu0 %v8478
        %8495 = vmatpush.xpose.msra.mxu0 %v8476
        %8496 = vmatmul.f32.gmra.mxu0 %v8472
        %v8497 = vpop.f32.mrf.mxu0
        %v8498 = vadd.f32 0.0, %v8497
        %8499 = vmatmul.f32.gmra.mxu0 %v8474
        %v8500 = vpop.f32.mrf.mxu0
        %v8501 = vadd.f32 0.0, %v8500
        %8502 = vdwg.mxu0
        %v8503 = vmul.f32 %v8498, 0.10206208
        %v8504 = vmul.f32 %v8501, 0.10206208
        %v8505 = vsel %vm5726, %v8503, -inf
        %8506 = vmax.xlane.f32.xlu0 %v8505
        %v8507 = vpop.xlane.xlu0 %8506
        %v8508 = vsel %vm5726, %v8504, -inf
        %8509 = vmax.xlane.f32.xlu0 %v8508
        %v8510 = vpop.xlane.xlu0 %8509
        %v8511 = vsub.f32 %v8503, %v8507
        %v8512 = vsub.f32 %v8504, %v8510
        %v8513 = vmul.f32 %v8511, 1.442695
        %v8514 = vpow.pop %v8513
        %v8515 = vmul.f32 %v8512, 1.442695
        %v8516 = vpow.pop %v8515
        %v8517 = vsel %vm5726, %v8514, 0.0
        %8518 = vadd.xlane.f32.xlu0 %v8517
        %v8519 = vpop.xlane.xlu0 %8518
        %v8520 = vsel %vm5726, %v8516, 0.0
        %8521 = vadd.xlane.f32.xlu0 %v8520
        %v8522 = vpop.xlane.xlu0 %8521
        %v8523 = vrcp.pop %v8519
        %v8524 = vmul.f32 %v8519, %v8523
        %v8525 = vsub.f32 1.0, %v8524
        %v8526 = vmul.f32 %v8523, %v8525
        %v8527 = vadd.f32 %v8523, %v8526
        %vm8528 = vweird.f32 %v8519
        %vm8529 = vweird.f32 %v8523
        %vm8530 = vmor %vm8528, %vm8529
        %v8531 = vsel %vm8530, %v8523, %v8527
        %v8532 = vand.u32 2147483647, %v8519
        %vm8533 = vcmp.eq.f32.partialorder %v8532, 8.507059e+37
        %v8534 = vand.u32 %v8519, 2147483648
        %v8535 = vor.u32 1.1754944e-38, %v8534
        %v8536 = vsel %vm8533, %v8535, %v8531
        %v8537 = vmul.f32 %v8514, %v8536
        %v8538 = vrcp.pop %v8522
        %v8539 = vmul.f32 %v8522, %v8538
        %v8540 = vsub.f32 1.0, %v8539
        %v8541 = vmul.f32 %v8538, %v8540
        %v8542 = vadd.f32 %v8538, %v8541
        %vm8543 = vweird.f32 %v8522
        %vm8544 = vweird.f32 %v8538
        %vm8545 = vmor %vm8543, %vm8544
        %v8546 = vsel %vm8545, %v8538, %v8542
        %v8547 = vand.u32 2147483647, %v8522
        %vm8548 = vcmp.eq.f32.partialorder %v8547, 8.507059e+37
        %v8549 = vand.u32 %v8522, 2147483648
        %v8550 = vor.u32 1.1754944e-38, %v8549
        %v8551 = vsel %vm8548, %v8550, %v8546
        %v8552 = vmul.f32 %v8516, %v8551
        %8553 = vrot.lane.b32.xlu0 %v5683, 96
        %v8554 = vpop.permute.xlu0 %8553
        %8555 = vrot.lane.b32.xlu0 %v5686, 96
        %v8556 = vpop.permute.xlu0 %8555
        %v8560 = vsel %vm5726, %v8537, 0
        %v8563 = vsel %vm5726, %v8552, 0
        %8565 = vmatpush.msra.mxu0 0.0
        %8566 = vmatpush.msra.mxu0 0.0
        %8567 = vmatpush.msra.mxu0 0.0
        %8568 = vmatpush.msra.mxu0 0.0
        %8569 = vmatpush.msra.mxu0 0.0
        %8570 = vmatpush.msra.mxu0 0.0
        %8571 = vmatpush.msra.mxu0 0.0
        %8572 = vmatpush.msra.mxu0 0.0
        %8573 = vmatpush.msra.mxu0 0.0
        %8574 = vmatpush.msra.mxu0 0.0
        %8575 = vmatpush.msra.mxu0 0.0
        %8576 = vmatpush.msra.mxu0 0.0
        %8577 = vmatpush.msra.mxu0 0.0
        %8578 = vmatpush.msra.mxu0 0.0
        %8579 = vmatpush.msra.mxu0 %v8556
        %8580 = vmatpush.msra.mxu0 %v8554
        %8581 = vmatmul.f32.gmra.mxu0 %v8560
        %v8582 = vpop.f32.mrf.mxu0
        %v8583 = vadd.f32 0.0, %v8582
        %8584 = vmatmul.f32.gmra.mxu0 %v8563
        %v8585 = vpop.f32.mrf.mxu0
        %v8586 = vadd.f32 0.0, %v8585
        %8587 = vdwg.mxu0
        %v8588 = vld [vmem:[#allocation16 + $0x7e0] sm:$0xff]
        %v8589 = vld [vmem:[#allocation16 + $0x7e8] sm:$0xff]
        %v8590 = vld [vmem:[#allocation16 + $0x7f0] sm:$0xff]
        %v8591 = vld [vmem:[#allocation16 + $0x7f8] sm:$0xff]
        %v8592 = vld [vmem:[#allocation16 + $0x800] sm:$0xff]
        %v8593 = vld [vmem:[#allocation16 + $0x808] sm:$0xff]
        %v8594 = vld [vmem:[#allocation16 + $0x810] sm:$0xff]
        %v8595 = vld [vmem:[#allocation16 + $0x818] sm:$0xff]
        %v8596 = vld [vmem:[#allocation16 + $0x820] sm:$0xff]
        %v8597 = vld [vmem:[#allocation16 + $0x828] sm:$0xff]
        %v8598 = vld [vmem:[#allocation16 + $0x830] sm:$0xff]
        %v8599 = vld [vmem:[#allocation16 + $0x838] sm:$0xff]
        %v8600 = vld [vmem:[#allocation16 + $0x840] sm:$0xff]
        %v8601 = vld [vmem:[#allocation16 + $0x848] sm:$0xff]
        %v8602 = vld [vmem:[#allocation16 + $0x850] sm:$0xff]
        %v8603 = vld [vmem:[#allocation16 + $0x858] sm:$0xff]
        %v8604 = vld [vmem:[#allocation16 + $0x860] sm:$0xff]
        %v8605 = vld [vmem:[#allocation16 + $0x868] sm:$0xff]
        %v8606 = vld [vmem:[#allocation16 + $0x870] sm:$0xff]
        %v8607 = vld [vmem:[#allocation16 + $0x878] sm:$0xff]
        %v8608 = vld [vmem:[#allocation16 + $0x880] sm:$0xff]
        %v8609 = vld [vmem:[#allocation16 + $0x888] sm:$0xff]
        %v8610 = vld [vmem:[#allocation16 + $0x890] sm:$0xff]
        %v8611 = vld [vmem:[#allocation16 + $0x898] sm:$0xff]
        %v8612 = vld [vmem:[#allocation16 + $0x8a0] sm:$0xff]
        %v8613 = vld [vmem:[#allocation16 + $0x8a8] sm:$0xff]
        %v8614 = vld [vmem:[#allocation16 + $0x8b0] sm:$0xff]
        %v8615 = vld [vmem:[#allocation16 + $0x8b8] sm:$0xff]
        %v8616 = vld [vmem:[#allocation16 + $0x8c0] sm:$0xff]
        %v8617 = vld [vmem:[#allocation16 + $0x8c8] sm:$0xff]
        %v8618 = vld [vmem:[#allocation16 + $0x8d0] sm:$0xff]
        %v8619 = vld [vmem:[#allocation16 + $0x8d8] sm:$0xff]
        %v8620 = vld [vmem:[#allocation16 + $0x8e0] sm:$0xff]
        %v8621 = vld [vmem:[#allocation16 + $0x8e8] sm:$0xff]
        %v8622 = vld [vmem:[#allocation16 + $0x8f0] sm:$0xff]
        %v8623 = vld [vmem:[#allocation16 + $0x8f8] sm:$0xff]
        %v8624 = vunpack.c.l.bf16 %v8588
        %v8625 = vunpack.c.h.bf16 %v8588
        %v8626 = vunpack.c.l.bf16 %v8589
        %v8627 = vunpack.c.h.bf16 %v8589
        %v8628 = vunpack.c.l.bf16 %v8590
        %v8629 = vunpack.c.h.bf16 %v8590
        %v8630 = vunpack.c.l.bf16 %v8591
        %v8631 = vunpack.c.h.bf16 %v8591
        %v8632 = vunpack.c.l.bf16 %v8592
        %v8633 = vunpack.c.h.bf16 %v8592
        %v8634 = vunpack.c.l.bf16 %v8593
        %v8635 = vunpack.c.h.bf16 %v8593
        %v8636 = vunpack.c.l.bf16 %v8594
        %v8637 = vunpack.c.h.bf16 %v8594
        %v8638 = vunpack.c.l.bf16 %v8595
        %v8639 = vunpack.c.h.bf16 %v8595
        %v8640 = vunpack.c.l.bf16 %v8596
        %v8641 = vunpack.c.h.bf16 %v8596
        %v8642 = vunpack.c.l.bf16 %v8597
        %v8643 = vunpack.c.h.bf16 %v8597
        %v8644 = vunpack.c.l.bf16 %v8598
        %v8645 = vunpack.c.h.bf16 %v8598
        %v8646 = vunpack.c.l.bf16 %v8599
        %v8647 = vunpack.c.h.bf16 %v8599
        %v8648 = vunpack.c.l.bf16 %v8600
        %v8649 = vunpack.c.h.bf16 %v8600
        %v8650 = vunpack.c.l.bf16 %v8601
        %v8651 = vunpack.c.h.bf16 %v8601
        %v8652 = vunpack.c.l.bf16 %v8602
        %v8653 = vunpack.c.h.bf16 %v8602
        %v8654 = vunpack.c.l.bf16 %v8603
        %v8655 = vunpack.c.h.bf16 %v8603
        %v8656 = vunpack.c.l.bf16 %v8604
        %v8657 = vunpack.c.h.bf16 %v8604
        %v8658 = vunpack.c.l.bf16 %v8605
        %v8659 = vunpack.c.h.bf16 %v8605
        %v8660 = vunpack.c.l.bf16 %v8606
        %v8661 = vunpack.c.h.bf16 %v8606
        %v8662 = vunpack.c.l.bf16 %v8607
        %v8663 = vunpack.c.h.bf16 %v8607
        %v8664 = vunpack.c.l.bf16 %v8608
        %v8665 = vunpack.c.h.bf16 %v8608
        %v8666 = vunpack.c.l.bf16 %v8609
        %v8667 = vunpack.c.h.bf16 %v8609
        %v8668 = vunpack.c.l.bf16 %v8610
        %v8669 = vunpack.c.h.bf16 %v8610
        %v8670 = vunpack.c.l.bf16 %v8611
        %v8671 = vunpack.c.h.bf16 %v8611
        %v8672 = vunpack.c.l.bf16 %v8612
        %v8673 = vunpack.c.h.bf16 %v8612
        %v8674 = vunpack.c.l.bf16 %v8613
        %v8675 = vunpack.c.h.bf16 %v8613
        %v8676 = vunpack.c.l.bf16 %v8614
        %v8677 = vunpack.c.h.bf16 %v8614
        %v8678 = vunpack.c.l.bf16 %v8615
        %v8679 = vunpack.c.h.bf16 %v8615
        %v8680 = vunpack.c.l.bf16 %v8616
        %v8681 = vunpack.c.h.bf16 %v8616
        %v8682 = vunpack.c.l.bf16 %v8617
        %v8683 = vunpack.c.h.bf16 %v8617
        %v8684 = vunpack.c.l.bf16 %v8618
        %v8685 = vunpack.c.h.bf16 %v8618
        %v8686 = vunpack.c.l.bf16 %v8619
        %v8687 = vunpack.c.h.bf16 %v8619
        %v8688 = vunpack.c.l.bf16 %v8620
        %v8689 = vunpack.c.h.bf16 %v8620
        %v8690 = vunpack.c.l.bf16 %v8621
        %v8691 = vunpack.c.h.bf16 %v8621
        %v8692 = vunpack.c.l.bf16 %v8622
        %v8693 = vunpack.c.h.bf16 %v8622
        %v8694 = vunpack.c.l.bf16 %v8623
        %v8695 = vunpack.c.h.bf16 %v8623
        %v8697 = vsel %vm5688, %v8583, 0
        %v8700 = vsel %vm5688, %v8586, 0
        %8702 = vmatpush.msra.mxu0 0.0
        %8703 = vmatpush.msra.mxu0 0.0
        %8704 = vmatpush.msra.mxu0 0.0
        %8705 = vmatpush.msra.mxu0 0.0
        %8706 = vmatpush.msra.mxu0 %v8690
        %8707 = vmatpush.msra.mxu0 %v8684
        %8708 = vmatpush.msra.mxu0 %v8678
        %8709 = vmatpush.msra.mxu0 %v8672
        %8710 = vmatpush.msra.mxu0 %v8666
        %8711 = vmatpush.msra.mxu0 %v8660
        %8712 = vmatpush.msra.mxu0 %v8654
        %8713 = vmatpush.msra.mxu0 %v8648
        %8714 = vmatpush.msra.mxu0 %v8642
        %8715 = vmatpush.msra.mxu0 %v8636
        %8716 = vmatpush.msra.mxu0 %v8630
        %8717 = vmatpush.msra.mxu0 %v8624
        %8718 = vmatmul.f32.gmra.mxu0 %v8697
        %v8719 = vpop.f32.mrf.mxu0
        %v8720 = vadd.f32 0.0, %v8719
        %8721 = vmatmul.f32.gmra.mxu0 %v8700
        %v8722 = vpop.f32.mrf.mxu0
        %v8723 = vadd.f32 0.0, %v8722
        %8724 = vdwg.mxu0
        %8725 = vmatpush.msra.mxu0 0.0
        %8726 = vmatpush.msra.mxu0 0.0
        %8727 = vmatpush.msra.mxu0 0.0
        %8728 = vmatpush.msra.mxu0 0.0
        %8729 = vmatpush.msra.mxu0 %v8691
        %8730 = vmatpush.msra.mxu0 %v8685
        %8731 = vmatpush.msra.mxu0 %v8679
        %8732 = vmatpush.msra.mxu0 %v8673
        %8733 = vmatpush.msra.mxu0 %v8667
        %8734 = vmatpush.msra.mxu0 %v8661
        %8735 = vmatpush.msra.mxu0 %v8655
        %8736 = vmatpush.msra.mxu0 %v8649
        %8737 = vmatpush.msra.mxu0 %v8643
        %8738 = vmatpush.msra.mxu0 %v8637
        %8739 = vmatpush.msra.mxu0 %v8631
        %8740 = vmatpush.msra.mxu0 %v8625
        %8741 = vmatmul.f32.gmra.mxu0 %v8697
        %v8742 = vpop.f32.mrf.mxu0
        %v8743 = vadd.f32 0.0, %v8742
        %8744 = vmatmul.f32.gmra.mxu0 %v8700
        %v8745 = vpop.f32.mrf.mxu0
        %v8746 = vadd.f32 0.0, %v8745
        %8747 = vdwg.mxu0
        %8748 = vmatpush.msra.mxu0 0.0
        %8749 = vmatpush.msra.mxu0 0.0
        %8750 = vmatpush.msra.mxu0 0.0
        %8751 = vmatpush.msra.mxu0 0.0
        %8752 = vmatpush.msra.mxu0 %v8692
        %8753 = vmatpush.msra.mxu0 %v8686
        %8754 = vmatpush.msra.mxu0 %v8680
        %8755 = vmatpush.msra.mxu0 %v8674
        %8756 = vmatpush.msra.mxu0 %v8668
        %8757 = vmatpush.msra.mxu0 %v8662
        %8758 = vmatpush.msra.mxu0 %v8656
        %8759 = vmatpush.msra.mxu0 %v8650
        %8760 = vmatpush.msra.mxu0 %v8644
        %8761 = vmatpush.msra.mxu0 %v8638
        %8762 = vmatpush.msra.mxu0 %v8632
        %8763 = vmatpush.msra.mxu0 %v8626
        %8764 = vmatmul.f32.gmra.mxu0 %v8697
        %v8765 = vpop.f32.mrf.mxu0
        %v8766 = vadd.f32 0.0, %v8765
        %8767 = vmatmul.f32.gmra.mxu0 %v8700
        %v8768 = vpop.f32.mrf.mxu0
        %v8769 = vadd.f32 0.0, %v8768
        %8770 = vdwg.mxu0
        %8771 = vmatpush.msra.mxu0 0.0
        %8772 = vmatpush.msra.mxu0 0.0
        %8773 = vmatpush.msra.mxu0 0.0
        %8774 = vmatpush.msra.mxu0 0.0
        %8775 = vmatpush.msra.mxu0 %v8693
        %8776 = vmatpush.msra.mxu0 %v8687
        %8777 = vmatpush.msra.mxu0 %v8681
        %8778 = vmatpush.msra.mxu0 %v8675
        %8779 = vmatpush.msra.mxu0 %v8669
        %8780 = vmatpush.msra.mxu0 %v8663
        %8781 = vmatpush.msra.mxu0 %v8657
        %8782 = vmatpush.msra.mxu0 %v8651
        %8783 = vmatpush.msra.mxu0 %v8645
        %8784 = vmatpush.msra.mxu0 %v8639
        %8785 = vmatpush.msra.mxu0 %v8633
        %8786 = vmatpush.msra.mxu0 %v8627
        %8787 = vmatmul.f32.gmra.mxu0 %v8697
        %v8788 = vpop.f32.mrf.mxu0
        %v8789 = vadd.f32 0.0, %v8788
        %8790 = vmatmul.f32.gmra.mxu0 %v8700
        %v8791 = vpop.f32.mrf.mxu0
        %v8792 = vadd.f32 0.0, %v8791
        %8793 = vdwg.mxu0
        %8794 = vmatpush.msra.mxu0 0.0
        %8795 = vmatpush.msra.mxu0 0.0
        %8796 = vmatpush.msra.mxu0 0.0
        %8797 = vmatpush.msra.mxu0 0.0
        %8798 = vmatpush.msra.mxu0 %v8694
        %8799 = vmatpush.msra.mxu0 %v8688
        %8800 = vmatpush.msra.mxu0 %v8682
        %8801 = vmatpush.msra.mxu0 %v8676
        %8802 = vmatpush.msra.mxu0 %v8670
        %8803 = vmatpush.msra.mxu0 %v8664
        %8804 = vmatpush.msra.mxu0 %v8658
        %8805 = vmatpush.msra.mxu0 %v8652
        %8806 = vmatpush.msra.mxu0 %v8646
        %8807 = vmatpush.msra.mxu0 %v8640
        %8808 = vmatpush.msra.mxu0 %v8634
        %8809 = vmatpush.msra.mxu0 %v8628
        %8810 = vmatmul.f32.gmra.mxu0 %v8697
        %v8811 = vpop.f32.mrf.mxu0
        %v8812 = vadd.f32 0.0, %v8811
        %8813 = vmatmul.f32.gmra.mxu0 %v8700
        %v8814 = vpop.f32.mrf.mxu0
        %v8815 = vadd.f32 0.0, %v8814
        %8816 = vdwg.mxu0
        %8817 = vmatpush.msra.mxu0 0.0
        %8818 = vmatpush.msra.mxu0 0.0
        %8819 = vmatpush.msra.mxu0 0.0
        %8820 = vmatpush.msra.mxu0 0.0
        %8821 = vmatpush.msra.mxu0 %v8695
        %8822 = vmatpush.msra.mxu0 %v8689
        %8823 = vmatpush.msra.mxu0 %v8683
        %8824 = vmatpush.msra.mxu0 %v8677
        %8825 = vmatpush.msra.mxu0 %v8671
        %8826 = vmatpush.msra.mxu0 %v8665
        %8827 = vmatpush.msra.mxu0 %v8659
        %8828 = vmatpush.msra.mxu0 %v8653
        %8829 = vmatpush.msra.mxu0 %v8647
        %8830 = vmatpush.msra.mxu0 %v8641
        %8831 = vmatpush.msra.mxu0 %v8635
        %8832 = vmatpush.msra.mxu0 %v8629
        %8833 = vmatmul.f32.gmra.mxu0 %v8697
        %v8834 = vpop.f32.mrf.mxu0
        %v8835 = vadd.f32 0.0, %v8834
        %8836 = vmatmul.f32.gmra.mxu0 %v8700
        %v8837 = vpop.f32.mrf.mxu0
        %v8838 = vadd.f32 0.0, %v8837
        %8839 = vdwg.mxu0
        %v8840 = vadd.f32 %v8452, %v8720
        %v8841 = vadd.f32 %v8453, %v8743
        %v8842 = vadd.f32 %v8454, %v8766
        %v8843 = vadd.f32 %v8455, %v8789
        %v8844 = vadd.f32 %v8456, %v8812
        %v8845 = vadd.f32 %v8457, %v8835
        %v8846 = vadd.f32 %v8458, %v8723
        %v8847 = vadd.f32 %v8459, %v8746
        %v8848 = vadd.f32 %v8460, %v8769
        %v8849 = vadd.f32 %v8461, %v8792
        %v8850 = vadd.f32 %v8462, %v8815
        %v8851 = vadd.f32 %v8463, %v8838
        %v8852 = vld [vmem:[#allocation17] sm:$0x3f]
        %v8854 = vperm.slane %v8852, 0
        %v8855 = vperm.slane %v8852, 1
        %v8856 = vperm.slane %v8852, 2
        %v8857 = vperm.slane %v8852, 3
        %v8858 = vperm.slane %v8852, 4
        %v8859 = vperm.slane %v8852, 5
        %v8866 = vadd.f32 %v8840, %v8854
        %v8867 = vadd.f32 %v8841, %v8855
        %v8868 = vadd.f32 %v8842, %v8856
        %v8869 = vadd.f32 %v8843, %v8857
        %v8870 = vadd.f32 %v8844, %v8858
        %v8871 = vadd.f32 %v8845, %v8859
        %v8872 = vadd.f32 %v8846, %v8854
        %v8873 = vadd.f32 %v8847, %v8855
        %v8874 = vadd.f32 %v8848, %v8856
        %v8875 = vadd.f32 %v8849, %v8857
        %v8876 = vadd.f32 %v8850, %v8858
        %v8877 = vadd.f32 %v8851, %v8859
        %8878 = vst [vmem:[%s545] sm:$0xff] %v8866
        %8879 = vst [vmem:[%s545 + $0x8] sm:$0xff] %v8867
        %8880 = vst [vmem:[%s545 + $0x10] sm:$0xff] %v8868
        %8881 = vst [vmem:[%s545 + $0x18] sm:$0xff] %v8869
        %8882 = vst [vmem:[%s545 + $0x20] sm:$0xff] %v8870
        %8883 = vst [vmem:[%s545 + $0x28] sm:$0xff] %v8871
        %8884 = vst [vmem:[%s545 + $0x30] sm:$0xff] %v8872
        %8885 = vst [vmem:[%s545 + $0x38] sm:$0xff] %v8873
        %8886 = vst [vmem:[%s545 + $0x40] sm:$0xff] %v8874
        %8887 = vst [vmem:[%s545 + $0x48] sm:$0xff] %v8875
        %8888 = vst [vmem:[%s545 + $0x50] sm:$0xff] %v8876
        %8889 = vst [vmem:[%s545 + $0x58] sm:$0xff] %v8877
        %s8890 = sand.u32 %s262, 1
        %s8891 = scalar_lea.sflag [#allocation4], %s8890
        %s8892 = sand.u32 %s262, 1
        %s8893 = smul.addr %s8892, 96
        %s8894 = scalar_lea.vmem [#allocation19], %s8893
        // Predicated region
        $region101: #{tpu_custom_call.1} parent=59 // pred_check
          %p8895 = pneg %p272
        $region102: #{tpu_custom_call.1} parent=59 // pred_check_branch
          %8897 = sbr.rel (%p8895) target = $region104
        $region103: #{tpu_custom_call.1} parent=59 // pred_region
          %8899 = vsyncadd %s8891, 0
          %s8900 = smul.addr %s34, 12
          %s8901 = smul.addr %s8900, 8
          %s8902 = scalar_lea.hbm %s10, %s8901
          %s8903 = sshll.u32 %s8894, 4
          %s8904 = int_to_ptr.vmem [resolvable:$true] %s8903
          %s8905 = sshll.u32 %s8902, 4
          %s8906 = int_to_ptr.hbm [resolvable:$true] %s8905
          %8911 = dma.vmem_to_hbm [thread:$0]  %s8904, 1536, %s8906, %s8891, 768, 768, 48
        $region104: #{tpu_custom_call.1} parent=59 // pred_fallthru
          _
      $region60: #{tpu_custom_call.1} parent=5 // pred_fallthru
        _
      %p8912 = scmp.le.s32.totalorder 2, %s29
      // Predicated region
      $region105: #{tpu_custom_call.1} parent=5 // pred_check
        %p8913 = pneg %p8912
      $region106: #{tpu_custom_call.1} parent=5 // pred_check_branch
        %8915 = sbr.rel (%p8913) target = $region108
      $region107: #{tpu_custom_call.1} parent=5 // pred_region
        %s8916 = ssub.s32 %s29, 2
        // Predicated region
        $region109: #{tpu_custom_call.1} parent=107 // pred_check
          %p8917 = pneg %p278
        $region110: #{tpu_custom_call.1} parent=107 // pred_check_branch
          %8919 = sbr.rel (%p8917) target = $region112
        $region111: #{tpu_custom_call.1} parent=107 // pred_region
          %s8920 = sand.u32 %s263, 1
          %s8921 = scalar_lea.sflag [#allocation4], %s8920
          %s8922 = sand.u32 %s263, 1
          %s8923 = smul.addr %s8922, 96
          %s8924 = scalar_lea.vmem [#allocation19], %s8923
          %8926 = dma.done %s8921, 1536
        $region112: #{tpu_custom_call.1} parent=107 // pred_fallthru
          _
      $region108: #{tpu_custom_call.1} parent=5 // pred_fallthru
        _
    $region6: #{tpu_custom_call.1} parent=1 // loop_footer
      %s33 = sadd.s32 1, %s29
    $region7: #{tpu_custom_call.1} parent=1 // loop_footer_branch
      %28 = sbr.rel target = $region3
    $region8: #{tpu_custom_call.1} parent=1 // loop_exit
      _
    %8927 = vsyncpa [#allocation3], 1
    %s8928 = scalar_lea.sflag [#allocation3], 1
    %8929 = vsyncpa %s8928, 1
    %8930 = vsyncpa [#allocation6], 1
    %s8931 = scalar_lea.sflag [#allocation6], 1
    %8932 = vsyncpa %s8931, 1
    %8933 = vsyncpa [#allocation9], 1
    %8934 = vsyncpa [#allocation12], 1
    %8935 = vsyncpa [#allocation15], 1
    %8936 = vsyncpa [#allocation18], 1
    %8937 = vsyncpa [#allocation4], 1
    %s8938 = scalar_lea.sflag [#allocation4], 1
    %8939 = vsyncpa %s8938, 1

</llo_original>
